<compile_context>
chip_gen: v6e
topology: v6e:2x2x1
jax: 0.10.0
libtpu: 0.0.40
codegen_flags: <defaults>
</compile_context>

<pallas_src>
import functools

import jax
import jax.numpy as jnp
from jax import lax
from jax.experimental import pallas as pl
from jax.experimental.pallas import tpu as pltpu


PRIMITIVES = ['skip_normal', 'bimap_1_normal', 'bimap_2_normal']

_MAX_BATCH_BLOCK = 8        # per-grid-step batch block (tunable; review suggests 8..64)


def _cores_per_chip():
    """Crude TensorCore-per-chip detection: v7x has 2 TCs, v5e/v6e have 1."""
    try:
        kind = jax.devices()[0].device_kind.lower()
    except Exception:
        return 1
    return 2 if ('v7' in kind or '7x' in kind) else 1


def _blockdiag(w):
    """(C, d, d) per-channel weights -> (C*d, C*d) block-diagonal matrix."""
    C, d, _ = w.shape
    eye_c = jnp.eye(C, dtype=w.dtype)
    blocks = eye_c[:, None, :, None] * w[:, :, None, :]     # (C, d, C, d)
    return blocks.reshape(C * d, C * d)


# ---------------------------------------------------------------------------
# Fused Cell kernel
# ---------------------------------------------------------------------------

def _cell_kernel(alpha_ref, s01_ref, wslab_ref, out_ref, *,
                 steps, multiplier, C, d, nb):
    """One grid step == one batch block of `nb` samples; all channels in-kernel.

    Lane-dense layout: a state h is (nb, d, C*d) with h[n, r, c*d + q] = X[n, c, r, q].

    alpha_ref : (n_edges*3,)            SMEM  flattened sparsemax architecture weights
    s01_ref   : (2, nb, d, C*d)         VMEM  lane-dense s0 / s1 batch block (coalesced)
    wslab_ref : (n_maps, 2, K, K)       VMEM  per BiMap: [blockdiag(W^T), blockdiag(W)]
    out_ref   : (nb, d, multiplier*C*d) VMEM  lane-dense output block (128 lanes)
    """
    K = C * d

    def bimap(h, m):
        # Per-channel congruence Y[c] = W[c] @ X[c] @ W[c]^T, no in-kernel transposes.
        wbd_t = wslab_ref[m, 0]      # (K, K) blockdiag(W^T): lane-side right-multiply
        wbd = wslab_ref[m, 1]        # (K, K) blockdiag(W):   diag blocks for left-multiply
        # (1) lane-side contraction, all channels at once (one 64-wide MXU matmul):
        #     B[n, r, (c, l)] = sum_q X[n,c,r,q] * W[c,l,q]  ==  (X @ W^T) per channel
        b = jnp.dot(h.reshape(nb * d, K), wbd_t,
                    preferred_element_type=jnp.float32).reshape(nb, d, K)
        # (2) sublane-side contraction per channel: Y[c] = W[c] @ B[c]   (batched bmm)
        outs = []
        for c in range(C):
            w_c = jnp.broadcast_to(wbd[c * d:(c + 1) * d, c * d:(c + 1) * d], (nb, d, d))
            b_c = b[:, :, c * d:(c + 1) * d]
            outs.append(jnp.einsum('nik,nkl->nil', w_c, b_c,
                                   preferred_element_type=jnp.float32))
        return jnp.concatenate(outs, axis=-1)                # (nb, d, K) lane-dense

    # TODO(synk): ReEig ("ReLU") and BatchNormSPD of the preprocess blocks need an
    # eigendecomposition; only the BiMap (conv analogue) hot path is implemented.
    s0 = bimap(s01_ref[0].astype(jnp.float32), 0)
    s1 = bimap(s01_ref[1].astype(jnp.float32), 1)

    def mixed_op(h, edge):
        # Candidate ops: skip + two BiMap congruence transforms, combined with the
        # per-edge architecture weights (scalar SMEM reads, static edge index).
        a_skip = alpha_ref[3 * edge + 0]
        a_b1 = alpha_ref[3 * edge + 1]
        a_b2 = alpha_ref[3 * edge + 2]
        y1 = bimap(h, 2 + 2 * edge)
        y2 = bimap(h, 3 + 2 * edge)
        # TODO(synk): the reference `functional.bary_geom_weightedbatch` is a geometric
        # (Karcher) barycentre needing matrix log/exp via eigendecomposition; it is
        # approximated by the weighted Euclidean mean (still SPD for convex weights).
        return a_skip * h + a_b1 * y1 + a_b2 * y2

    states = [s0, s1]
    offset = 0
    for _ in range(steps):
        outs = [mixed_op(h, offset + j) for j, h in enumerate(states)]
        acc = outs[0]
        for o in outs[1:]:
            acc = acc + o
        states.append(acc * (1.0 / len(outs)))    # uniform 1/K step weights baked in
        offset += len(outs)

    # concat(states[-multiplier:], channel axis) == ONE lane-dense 128-wide store.
    out_ref[...] = jnp.concatenate(states[-multiplier:], axis=-1).astype(out_ref.dtype)


# ---------------------------------------------------------------------------
# Module-level structure (plain-Python orchestration, params init here)
# ---------------------------------------------------------------------------

class Cell:
    """SPD NAS cell; MixedOp candidates are skip + two BiMap congruence transforms."""

    def __init__(self, key, steps, multiplier, C, d):
        self._steps = steps
        self._multiplier = multiplier
        self._C = C
        self._d = d
        self._n_edges = sum(2 + i for i in range(steps))

        keys = jax.random.split(key, 2 + 2 * self._n_edges)
        eye = jnp.eye(d, dtype=jnp.float32)[None]
        # preprocess0 / preprocess1 ~ ReLUConvBNSPDNet -> BiMap weight per channel
        self.pre0 = eye + 0.1 * jax.random.normal(keys[0], (C, d, d), jnp.float32)
        self.pre1 = eye + 0.1 * jax.random.normal(keys[1], (C, d, d), jnp.float32)
        # per-edge MixedOp BiMap weights
        self.w1 = jnp.stack(
            [eye[0] + 0.1 * jax.random.normal(keys[2 + 2 * e], (C, d, d), jnp.float32)
             for e in range(self._n_edges)], axis=0)                     # (E, C, d, d)
        self.w2 = jnp.stack(
            [eye[0] + 0.1 * jax.random.normal(keys[3 + 2 * e], (C, d, d), jnp.float32)
             for e in range(self._n_edges)], axis=0)                     # (E, C, d, d)

        # One coalesced, VMEM-resident weight slab.  Per BiMap m we store both
        # blockdiag_c(W[c]^T) (lane-side right-multiply) and blockdiag_c(W[c])
        # (its diagonal blocks feed the per-channel left-multiply bmm).
        maps = [self.pre0, self.pre1]
        for e in range(self._n_edges):
            maps.append(self.w1[e])
            maps.append(self.w2[e])
        wbd_t = jnp.stack([_blockdiag(jnp.transpose(w, (0, 2, 1))) for w in maps], axis=0)
        wbd = jnp.stack([_blockdiag(w) for w in maps], axis=0)
        self.wslab = jnp.stack([wbd_t, wbd], axis=1)         # (n_maps, 2, C*d, C*d)

    def __call__(self, s0, s1, weights):
        N, C, d, _ = s0.shape
        assert (C, d) == (self._C, self._d)
        n_edges = self._n_edges
        n_prims = len(PRIMITIVES)
        assert weights.shape == (n_edges, n_prims)
        K = C * d
        mult = self._multiplier
        n_maps = self.wslab.shape[0]

        # ---- batch blocking / grid sizing (amortize per-grid-step overhead) ----
        # 1-TC chips (v5e/v6e): collapse small batches into one grid step.
        # v7x (2 TCs): keep >= 2 "parallel" steps so both cores get work.
        cores = _cores_per_chip()
        num_blocks = min(N, max(cores, -(-N // _MAX_BATCH_BLOCK)))
        nb = -(-N // num_blocks)
        n_pad = num_blocks * nb

        # ---- lane-dense layout plumbing (wrapper-side only) ----
        def to_lane_dense(x):                                  # (N, C, d, d) -> (n_pad, d, C*d)
            x = jnp.transpose(x, (0, 2, 1, 3)).reshape(N, d, K)
            if n_pad != N:
                x = jnp.concatenate(
                    [x, jnp.zeros((n_pad - N, d, K), x.dtype)], axis=0)
            return x

        s01 = jnp.stack([to_lane_dense(s0), to_lane_dense(s1)], axis=0)   # (2, n_pad, d, K)
        alpha_flat = jnp.asarray(weights, jnp.float32).reshape(n_edges * n_prims)

        kernel = functools.partial(_cell_kernel, steps=self._steps,
                                   multiplier=mult, C=C, d=d, nb=nb)
        out_ld = pl.pallas_call(
            kernel,
            out_shape=jax.ShapeDtypeStruct((n_pad, d, mult * K), s0.dtype),
            grid=(num_blocks,),
            in_specs=[
                pl.BlockSpec(memory_space=pltpu.MemorySpace.SMEM),            # alpha (flat)
                pl.BlockSpec((2, nb, d, K), lambda b: (0, b, 0, 0)),          # s0/s1 (coalesced)
                pl.BlockSpec((n_maps, 2, K, K), lambda b: (0, 0, 0, 0)),      # weight slab (resident)
            ],
            out_specs=pl.BlockSpec((nb, d, mult * K), lambda b: (b, 0, 0)),    # 128-lane store
            compiler_params=pltpu.CompilerParams(
                dimension_semantics=("parallel",)),                            # batch over TCs (v7x)
        )(alpha_flat, s01, self.wslab)

        # lane-dense (N, d, mult*C*d) -> (N, mult*C, d, d)   (layout plumbing only)
        out = out_ld[:N].reshape(N, d, mult * C, d)
        return jnp.transpose(out, (0, 2, 1, 3))


def sparsemax(z):
    """Sparsemax over the last axis (for the architecture weights)."""
    z_sorted = jnp.flip(jnp.sort(z, axis=-1), axis=-1)
    k = jnp.arange(1, z.shape[-1] + 1, dtype=z.dtype)
    z_cumsum = jnp.cumsum(z_sorted, axis=-1)
    support = 1.0 + k * z_sorted > z_cumsum
    k_z = jnp.sum(support.astype(z.dtype), axis=-1, keepdims=True)
    tau = (jnp.take_along_axis(z_cumsum, k_z.astype(jnp.int32) - 1, axis=-1) - 1.0) / k_z
    return jnp.maximum(z - tau, 0.0)


# ---------------------------------------------------------------------------
# Pure-JAX reference (same math) used for a sanity check
# ---------------------------------------------------------------------------

def _bimap_ref(x, w):
    # x: (N, C, d, d), w: (C, d, d) -> W @ X @ W^T per channel
    return jnp.einsum('cij,ncjk,clk->ncil', w, x, w,
                      precision=lax.Precision.HIGHEST)


def cell_reference(cell, s0, s1, weights):
    s0 = _bimap_ref(s0, cell.pre0)
    s1 = _bimap_ref(s1, cell.pre1)
    states = [s0, s1]
    offset = 0
    for _ in range(cell._steps):
        outs = []
        for j, h in enumerate(states):
            e = offset + j
            y = (weights[e, 0] * h
                 + weights[e, 1] * _bimap_ref(h, cell.w1[e])
                 + weights[e, 2] * _bimap_ref(h, cell.w2[e]))
            outs.append(y)
        states.append(sum(outs) / len(outs))
        offset += len(outs)
    return jnp.concatenate(states[-cell._multiplier:], axis=1)


# ---------------------------------------------------------------------------
# Demo
# ---------------------------------------------------------------------------

if __name__ == "__main__":
    key = jax.random.PRNGKey(0)
    k_in0, k_in1, k_cell, k_alpha = jax.random.split(key, 4)

    N, C, d = 2, 4, 16          # batch, channels, SPD matrix size (dim_in == dim_out)
    steps, multiplier = 2, 2

    def make_spd(k):
        a = jax.random.normal(k, (N, C, d, d), jnp.float32)
        return jnp.einsum('ncij,nckj->ncik', a, a) + 0.1 * jnp.eye(d, dtype=jnp.float32)

    s0 = make_spd(k_in0)
    s1 = make_spd(k_in1)

    num_edges = sum(2 + i for i in range(steps))   # 5
    num_prims = len(PRIMITIVES)                    # 3
    alphas = jax.random.normal(k_alpha, (num_edges, num_prims), jnp.float32)
    weights = sparsemax(alphas)                    # sparsemax architecture weights

    cell = Cell(k_cell, steps, multiplier, C, d)
    out = jax.block_until_ready(cell(s0, s1, weights))
    assert out.shape == (N, multiplier * C, d, d), out.shape

    # Sanity check against a pure-JAX reference of the same math.
    ref = jax.block_until_ready(cell_reference(cell, s0, s1, weights))
    max_err = float(jnp.max(jnp.abs(out - ref)))
    scale = float(jnp.max(jnp.abs(ref))) + 1.0
    assert max_err <= 1e-2 * scale, (max_err, scale)

    print("KERNEL_OK")
</pallas_src>

<mosaic_0001>
module attributes {stable_mosaic.version = 11 : i64} {
  func.func @_cell_kernel(%arg0: i32, %arg1: memref<15xf32, #tpu.memory_space<smem>>, %arg2: memref<2x2x16x64xf32, #tpu.memory_space<vmem>>, %arg3: memref<12x2x64x64xf32, #tpu.memory_space<vmem>>, %arg4: memref<2x16x128xf32, #tpu.memory_space<vmem>>) attributes {dimension_semantics = [#tpu.dimension_semantics<parallel>], iteration_bounds = array<i64: 1>, scalar_prefetch = 0 : i64, scratch_operands = 0 : i64, tpu.core_type = #tpu.core_type<tc>, window_params = [{transform_indices = @transform_0, window_bounds = array<i64: 15>}, {transform_indices = @transform_1, window_bounds = array<i64: 2, 2, 16, 64>}, {pipeline_mode = #tpu.pipeline_mode<synchronous>, transform_indices = @transform_2, window_bounds = array<i64: 12, 2, 64, 64>}, {transform_indices = @transform_3, window_bounds = array<i64: 2, 16, 128>}]} {
    %c0 = arith.constant 0 : index
    %c0_0 = arith.constant 0 : index
    %c0_1 = arith.constant 0 : index
    %c0_2 = arith.constant 0 : index
    %0 = vector.load %arg2[%c0, %c0_0, %c0_1, %c0_2] : memref<2x2x16x64xf32, #tpu.memory_space<vmem>>, vector<1x2x16x64xf32>
    %1 = vector.shape_cast %0 : vector<1x2x16x64xf32> to vector<2x16x64xf32>
    %c0_3 = arith.constant 0 : index
    %c0_4 = arith.constant 0 : index
    %c0_5 = arith.constant 0 : index
    %c0_6 = arith.constant 0 : index
    %2 = vector.load %arg3[%c0_3, %c0_4, %c0_5, %c0_6] : memref<12x2x64x64xf32, #tpu.memory_space<vmem>>, vector<1x1x64x64xf32>
    %3 = vector.shape_cast %2 : vector<1x1x64x64xf32> to vector<64x64xf32>
    %c0_7 = arith.constant 0 : index
    %c1 = arith.constant 1 : index
    %c0_8 = arith.constant 0 : index
    %c0_9 = arith.constant 0 : index
    %4 = vector.load %arg3[%c0_7, %c1, %c0_8, %c0_9] : memref<12x2x64x64xf32, #tpu.memory_space<vmem>>, vector<1x1x64x64xf32>
    %5 = vector.shape_cast %4 : vector<1x1x64x64xf32> to vector<64x64xf32>
    %6 = vector.shape_cast %1 : vector<2x16x64xf32> to vector<32x64xf32>
    %cst = arith.constant dense<0.000000e+00> : vector<32x64xf32>
    %7 = tpu.matmul %6, %3, %cst {dimension_numbers = #tpu.dot_dimension_numbers<[1], [0], [0], [1], [0, 0, 1, 1], [], []>} : vector<32x64xf32>, vector<64x64xf32>, vector<32x64xf32> -> vector<32x64xf32>
    %8 = vector.shape_cast %7 : vector<32x64xf32> to vector<2x16x64xf32>
    %9 = vector.extract_strided_slice %5 {offsets = [0, 0], sizes = [16, 16], strides = [1, 1]} : vector<64x64xf32> to vector<16x16xf32>
    %10 = vector.shape_cast %9 : vector<16x16xf32> to vector<1x16x16xf32>
    %11 = vector.broadcast %10 : vector<1x16x16xf32> to vector<2x16x16xf32>
    %12 = vector.extract_strided_slice %8 {offsets = [0, 0, 0], sizes = [2, 16, 16], strides = [1, 1, 1]} : vector<2x16x64xf32> to vector<2x16x16xf32>
    "tpu.trace_start"() <{level = 10 : i32, message = "nik,nkl->nil"}> : () -> ()
    %cst_10 = arith.constant dense<0.000000e+00> : vector<2x16x16xf32>
    %13 = tpu.matmul %11, %12, %cst_10 {dimension_numbers = #tpu.dot_dimension_numbers<[2], [1], [1], [2], [0, 0, 0, 1, 1, 2], [0], [0]>} : vector<2x16x16xf32>, vector<2x16x16xf32>, vector<2x16x16xf32> -> vector<2x16x16xf32>
    "tpu.trace_stop"() : () -> ()
    %14 = vector.extract_strided_slice %5 {offsets = [16, 16], sizes = [16, 16], strides = [1, 1]} : vector<64x64xf32> to vector<16x16xf32>
    %15 = vector.shape_cast %14 : vector<16x16xf32> to vector<1x16x16xf32>
    %16 = vector.broadcast %15 : vector<1x16x16xf32> to vector<2x16x16xf32>
    %17 = vector.extract_strided_slice %8 {offsets = [0, 0, 16], sizes = [2, 16, 16], strides = [1, 1, 1]} : vector<2x16x64xf32> to vector<2x16x16xf32>
    "tpu.trace_start"() <{level = 10 : i32, message = "nik,nkl->nil"}> : () -> ()
    %cst_11 = arith.constant dense<0.000000e+00> : vector<2x16x16xf32>
    %18 = tpu.matmul %16, %17, %cst_11 {dimension_numbers = #tpu.dot_dimension_numbers<[2], [1], [1], [2], [0, 0, 0, 1, 1, 2], [0], [0]>} : vector<2x16x16xf32>, vector<2x16x16xf32>, vector<2x16x16xf32> -> vector<2x16x16xf32>
    "tpu.trace_stop"() : () -> ()
    %19 = vector.extract_strided_slice %5 {offsets = [32, 32], sizes = [16, 16], strides = [1, 1]} : vector<64x64xf32> to vector<16x16xf32>
    %20 = vector.shape_cast %19 : vector<16x16xf32> to vector<1x16x16xf32>
    %21 = vector.broadcast %20 : vector<1x16x16xf32> to vector<2x16x16xf32>
    %22 = vector.extract_strided_slice %8 {offsets = [0, 0, 32], sizes = [2, 16, 16], strides = [1, 1, 1]} : vector<2x16x64xf32> to vector<2x16x16xf32>
    "tpu.trace_start"() <{level = 10 : i32, message = "nik,nkl->nil"}> : () -> ()
    %cst_12 = arith.constant dense<0.000000e+00> : vector<2x16x16xf32>
    %23 = tpu.matmul %21, %22, %cst_12 {dimension_numbers = #tpu.dot_dimension_numbers<[2], [1], [1], [2], [0, 0, 0, 1, 1, 2], [0], [0]>} : vector<2x16x16xf32>, vector<2x16x16xf32>, vector<2x16x16xf32> -> vector<2x16x16xf32>
    "tpu.trace_stop"() : () -> ()
    %24 = vector.extract_strided_slice %5 {offsets = [48, 48], sizes = [16, 16], strides = [1, 1]} : vector<64x64xf32> to vector<16x16xf32>
    %25 = vector.shape_cast %24 : vector<16x16xf32> to vector<1x16x16xf32>
    %26 = vector.broadcast %25 : vector<1x16x16xf32> to vector<2x16x16xf32>
    %27 = vector.extract_strided_slice %8 {offsets = [0, 0, 48], sizes = [2, 16, 16], strides = [1, 1, 1]} : vector<2x16x64xf32> to vector<2x16x16xf32>
    "tpu.trace_start"() <{level = 10 : i32, message = "nik,nkl->nil"}> : () -> ()
    %cst_13 = arith.constant dense<0.000000e+00> : vector<2x16x16xf32>
    %28 = tpu.matmul %26, %27, %cst_13 {dimension_numbers = #tpu.dot_dimension_numbers<[2], [1], [1], [2], [0, 0, 0, 1, 1, 2], [0], [0]>} : vector<2x16x16xf32>, vector<2x16x16xf32>, vector<2x16x16xf32> -> vector<2x16x16xf32>
    "tpu.trace_stop"() : () -> ()
    %29 = tpu.concatenate %13, %18, %23, %28 in 2 : vector<2x16x16xf32>, vector<2x16x16xf32>, vector<2x16x16xf32>, vector<2x16x16xf32> -> vector<2x16x64xf32>
    %c1_14 = arith.constant 1 : index
    %c0_15 = arith.constant 0 : index
    %c0_16 = arith.constant 0 : index
    %c0_17 = arith.constant 0 : index
    %30 = vector.load %arg2[%c1_14, %c0_15, %c0_16, %c0_17] : memref<2x2x16x64xf32, #tpu.memory_space<vmem>>, vector<1x2x16x64xf32>
    %31 = vector.shape_cast %30 : vector<1x2x16x64xf32> to vector<2x16x64xf32>
    %c1_18 = arith.constant 1 : index
    %c0_19 = arith.constant 0 : index
    %c0_20 = arith.constant 0 : index
    %c0_21 = arith.constant 0 : index
    %32 = vector.load %arg3[%c1_18, %c0_19, %c0_20, %c0_21] : memref<12x2x64x64xf32, #tpu.memory_space<vmem>>, vector<1x1x64x64xf32>
    %33 = vector.shape_cast %32 : vector<1x1x64x64xf32> to vector<64x64xf32>
    %c1_22 = arith.constant 1 : index
    %c1_23 = arith.constant 1 : index
    %c0_24 = arith.constant 0 : index
    %c0_25 = arith.constant 0 : index
    %34 = vector.load %arg3[%c1_22, %c1_23, %c0_24, %c0_25] : memref<12x2x64x64xf32, #tpu.memory_space<vmem>>, vector<1x1x64x64xf32>
    %35 = vector.shape_cast %34 : vector<1x1x64x64xf32> to vector<64x64xf32>
    %36 = vector.shape_cast %31 : vector<2x16x64xf32> to vector<32x64xf32>
    %cst_26 = arith.constant dense<0.000000e+00> : vector<32x64xf32>
    %37 = tpu.matmul %36, %33, %cst_26 {dimension_numbers = #tpu.dot_dimension_numbers<[1], [0], [0], [1], [0, 0, 1, 1], [], []>} : vector<32x64xf32>, vector<64x64xf32>, vector<32x64xf32> -> vector<32x64xf32>
    %38 = vector.shape_cast %37 : vector<32x64xf32> to vector<2x16x64xf32>
    %39 = vector.extract_strided_slice %35 {offsets = [0, 0], sizes = [16, 16], strides = [1, 1]} : vector<64x64xf32> to vector<16x16xf32>
    %40 = vector.shape_cast %39 : vector<16x16xf32> to vector<1x16x16xf32>
    %41 = vector.broadcast %40 : vector<1x16x16xf32> to vector<2x16x16xf32>
    %42 = vector.extract_strided_slice %38 {offsets = [0, 0, 0], sizes = [2, 16, 16], strides = [1, 1, 1]} : vector<2x16x64xf32> to vector<2x16x16xf32>
    "tpu.trace_start"() <{level = 10 : i32, message = "nik,nkl->nil"}> : () -> ()
    %cst_27 = arith.constant dense<0.000000e+00> : vector<2x16x16xf32>
    %43 = tpu.matmul %41, %42, %cst_27 {dimension_numbers = #tpu.dot_dimension_numbers<[2], [1], [1], [2], [0, 0, 0, 1, 1, 2], [0], [0]>} : vector<2x16x16xf32>, vector<2x16x16xf32>, vector<2x16x16xf32> -> vector<2x16x16xf32>
    "tpu.trace_stop"() : () -> ()
    %44 = vector.extract_strided_slice %35 {offsets = [16, 16], sizes = [16, 16], strides = [1, 1]} : vector<64x64xf32> to vector<16x16xf32>
    %45 = vector.shape_cast %44 : vector<16x16xf32> to vector<1x16x16xf32>
    %46 = vector.broadcast %45 : vector<1x16x16xf32> to vector<2x16x16xf32>
    %47 = vector.extract_strided_slice %38 {offsets = [0, 0, 16], sizes = [2, 16, 16], strides = [1, 1, 1]} : vector<2x16x64xf32> to vector<2x16x16xf32>
    "tpu.trace_start"() <{level = 10 : i32, message = "nik,nkl->nil"}> : () -> ()
    %cst_28 = arith.constant dense<0.000000e+00> : vector<2x16x16xf32>
    %48 = tpu.matmul %46, %47, %cst_28 {dimension_numbers = #tpu.dot_dimension_numbers<[2], [1], [1], [2], [0, 0, 0, 1, 1, 2], [0], [0]>} : vector<2x16x16xf32>, vector<2x16x16xf32>, vector<2x16x16xf32> -> vector<2x16x16xf32>
    "tpu.trace_stop"() : () -> ()
    %49 = vector.extract_strided_slice %35 {offsets = [32, 32], sizes = [16, 16], strides = [1, 1]} : vector<64x64xf32> to vector<16x16xf32>
    %50 = vector.shape_cast %49 : vector<16x16xf32> to vector<1x16x16xf32>
    %51 = vector.broadcast %50 : vector<1x16x16xf32> to vector<2x16x16xf32>
    %52 = vector.extract_strided_slice %38 {offsets = [0, 0, 32], sizes = [2, 16, 16], strides = [1, 1, 1]} : vector<2x16x64xf32> to vector<2x16x16xf32>
    "tpu.trace_start"() <{level = 10 : i32, message = "nik,nkl->nil"}> : () -> ()
    %cst_29 = arith.constant dense<0.000000e+00> : vector<2x16x16xf32>
    %53 = tpu.matmul %51, %52, %cst_29 {dimension_numbers = #tpu.dot_dimension_numbers<[2], [1], [1], [2], [0, 0, 0, 1, 1, 2], [0], [0]>} : vector<2x16x16xf32>, vector<2x16x16xf32>, vector<2x16x16xf32> -> vector<2x16x16xf32>
    "tpu.trace_stop"() : () -> ()
    %54 = vector.extract_strided_slice %35 {offsets = [48, 48], sizes = [16, 16], strides = [1, 1]} : vector<64x64xf32> to vector<16x16xf32>
    %55 = vector.shape_cast %54 : vector<16x16xf32> to vector<1x16x16xf32>
    %56 = vector.broadcast %55 : vector<1x16x16xf32> to vector<2x16x16xf32>
    %57 = vector.extract_strided_slice %38 {offsets = [0, 0, 48], sizes = [2, 16, 16], strides = [1, 1, 1]} : vector<2x16x64xf32> to vector<2x16x16xf32>
    "tpu.trace_start"() <{level = 10 : i32, message = "nik,nkl->nil"}> : () -> ()
    %cst_30 = arith.constant dense<0.000000e+00> : vector<2x16x16xf32>
    %58 = tpu.matmul %56, %57, %cst_30 {dimension_numbers = #tpu.dot_dimension_numbers<[2], [1], [1], [2], [0, 0, 0, 1, 1, 2], [0], [0]>} : vector<2x16x16xf32>, vector<2x16x16xf32>, vector<2x16x16xf32> -> vector<2x16x16xf32>
    "tpu.trace_stop"() : () -> ()
    %59 = tpu.concatenate %43, %48, %53, %58 in 2 : vector<2x16x16xf32>, vector<2x16x16xf32>, vector<2x16x16xf32>, vector<2x16x16xf32> -> vector<2x16x64xf32>
    %c0_31 = arith.constant 0 : index
    %60 = memref.load %arg1[%c0_31] : memref<15xf32, #tpu.memory_space<smem>>
    %c1_32 = arith.constant 1 : index
    %61 = memref.load %arg1[%c1_32] : memref<15xf32, #tpu.memory_space<smem>>
    %c2 = arith.constant 2 : index
    %62 = memref.load %arg1[%c2] : memref<15xf32, #tpu.memory_space<smem>>
    %c2_33 = arith.constant 2 : index
    %c0_34 = arith.constant 0 : index
    %c0_35 = arith.constant 0 : index
    %c0_36 = arith.constant 0 : index
    %63 = vector.load %arg3[%c2_33, %c0_34, %c0_35, %c0_36] : memref<12x2x64x64xf32, #tpu.memory_space<vmem>>, vector<1x1x64x64xf32>
    %64 = vector.shape_cast %63 : vector<1x1x64x64xf32> to vector<64x64xf32>
    %c2_37 = arith.constant 2 : index
    %c1_38 = arith.constant 1 : index
    %c0_39 = arith.constant 0 : index
    %c0_40 = arith.constant 0 : index
    %65 = vector.load %arg3[%c2_37, %c1_38, %c0_39, %c0_40] : memref<12x2x64x64xf32, #tpu.memory_space<vmem>>, vector<1x1x64x64xf32>
    %66 = vector.shape_cast %65 : vector<1x1x64x64xf32> to vector<64x64xf32>
    %67 = vector.shape_cast %29 : vector<2x16x64xf32> to vector<32x64xf32>
    %cst_41 = arith.constant dense<0.000000e+00> : vector<32x64xf32>
    %68 = tpu.matmul %67, %64, %cst_41 {dimension_numbers = #tpu.dot_dimension_numbers<[1], [0], [0], [1], [0, 0, 1, 1], [], []>} : vector<32x64xf32>, vector<64x64xf32>, vector<32x64xf32> -> vector<32x64xf32>
    %69 = vector.shape_cast %68 : vector<32x64xf32> to vector<2x16x64xf32>
    %70 = vector.extract_strided_slice %66 {offsets = [0, 0], sizes = [16, 16], strides = [1, 1]} : vector<64x64xf32> to vector<16x16xf32>
    %71 = vector.shape_cast %70 : vector<16x16xf32> to vector<1x16x16xf32>
    %72 = vector.broadcast %71 : vector<1x16x16xf32> to vector<2x16x16xf32>
    %73 = vector.extract_strided_slice %69 {offsets = [0, 0, 0], sizes = [2, 16, 16], strides = [1, 1, 1]} : vector<2x16x64xf32> to vector<2x16x16xf32>
    "tpu.trace_start"() <{level = 10 : i32, message = "nik,nkl->nil"}> : () -> ()
    %cst_42 = arith.constant dense<0.000000e+00> : vector<2x16x16xf32>
    %74 = tpu.matmul %72, %73, %cst_42 {dimension_numbers = #tpu.dot_dimension_numbers<[2], [1], [1], [2], [0, 0, 0, 1, 1, 2], [0], [0]>} : vector<2x16x16xf32>, vector<2x16x16xf32>, vector<2x16x16xf32> -> vector<2x16x16xf32>
    "tpu.trace_stop"() : () -> ()
    %75 = vector.extract_strided_slice %66 {offsets = [16, 16], sizes = [16, 16], strides = [1, 1]} : vector<64x64xf32> to vector<16x16xf32>
    %76 = vector.shape_cast %75 : vector<16x16xf32> to vector<1x16x16xf32>
    %77 = vector.broadcast %76 : vector<1x16x16xf32> to vector<2x16x16xf32>
    %78 = vector.extract_strided_slice %69 {offsets = [0, 0, 16], sizes = [2, 16, 16], strides = [1, 1, 1]} : vector<2x16x64xf32> to vector<2x16x16xf32>
    "tpu.trace_start"() <{level = 10 : i32, message = "nik,nkl->nil"}> : () -> ()
    %cst_43 = arith.constant dense<0.000000e+00> : vector<2x16x16xf32>
    %79 = tpu.matmul %77, %78, %cst_43 {dimension_numbers = #tpu.dot_dimension_numbers<[2], [1], [1], [2], [0, 0, 0, 1, 1, 2], [0], [0]>} : vector<2x16x16xf32>, vector<2x16x16xf32>, vector<2x16x16xf32> -> vector<2x16x16xf32>
    "tpu.trace_stop"() : () -> ()
    %80 = vector.extract_strided_slice %66 {offsets = [32, 32], sizes = [16, 16], strides = [1, 1]} : vector<64x64xf32> to vector<16x16xf32>
    %81 = vector.shape_cast %80 : vector<16x16xf32> to vector<1x16x16xf32>
    %82 = vector.broadcast %81 : vector<1x16x16xf32> to vector<2x16x16xf32>
    %83 = vector.extract_strided_slice %69 {offsets = [0, 0, 32], sizes = [2, 16, 16], strides = [1, 1, 1]} : vector<2x16x64xf32> to vector<2x16x16xf32>
    "tpu.trace_start"() <{level = 10 : i32, message = "nik,nkl->nil"}> : () -> ()
    %cst_44 = arith.constant dense<0.000000e+00> : vector<2x16x16xf32>
    %84 = tpu.matmul %82, %83, %cst_44 {dimension_numbers = #tpu.dot_dimension_numbers<[2], [1], [1], [2], [0, 0, 0, 1, 1, 2], [0], [0]>} : vector<2x16x16xf32>, vector<2x16x16xf32>, vector<2x16x16xf32> -> vector<2x16x16xf32>
    "tpu.trace_stop"() : () -> ()
    %85 = vector.extract_strided_slice %66 {offsets = [48, 48], sizes = [16, 16], strides = [1, 1]} : vector<64x64xf32> to vector<16x16xf32>
    %86 = vector.shape_cast %85 : vector<16x16xf32> to vector<1x16x16xf32>
    %87 = vector.broadcast %86 : vector<1x16x16xf32> to vector<2x16x16xf32>
    %88 = vector.extract_strided_slice %69 {offsets = [0, 0, 48], sizes = [2, 16, 16], strides = [1, 1, 1]} : vector<2x16x64xf32> to vector<2x16x16xf32>
    "tpu.trace_start"() <{level = 10 : i32, message = "nik,nkl->nil"}> : () -> ()
    %cst_45 = arith.constant dense<0.000000e+00> : vector<2x16x16xf32>
    %89 = tpu.matmul %87, %88, %cst_45 {dimension_numbers = #tpu.dot_dimension_numbers<[2], [1], [1], [2], [0, 0, 0, 1, 1, 2], [0], [0]>} : vector<2x16x16xf32>, vector<2x16x16xf32>, vector<2x16x16xf32> -> vector<2x16x16xf32>
    "tpu.trace_stop"() : () -> ()
    %90 = tpu.concatenate %74, %79, %84, %89 in 2 : vector<2x16x16xf32>, vector<2x16x16xf32>, vector<2x16x16xf32>, vector<2x16x16xf32> -> vector<2x16x64xf32>
    %c3 = arith.constant 3 : index
    %c0_46 = arith.constant 0 : index
    %c0_47 = arith.constant 0 : index
    %c0_48 = arith.constant 0 : index
    %91 = vector.load %arg3[%c3, %c0_46, %c0_47, %c0_48] : memref<12x2x64x64xf32, #tpu.memory_space<vmem>>, vector<1x1x64x64xf32>
    %92 = vector.shape_cast %91 : vector<1x1x64x64xf32> to vector<64x64xf32>
    %c3_49 = arith.constant 3 : index
    %c1_50 = arith.constant 1 : index
    %c0_51 = arith.constant 0 : index
    %c0_52 = arith.constant 0 : index
    %93 = vector.load %arg3[%c3_49, %c1_50, %c0_51, %c0_52] : memref<12x2x64x64xf32, #tpu.memory_space<vmem>>, vector<1x1x64x64xf32>
    %94 = vector.shape_cast %93 : vector<1x1x64x64xf32> to vector<64x64xf32>
    %95 = vector.shape_cast %29 : vector<2x16x64xf32> to vector<32x64xf32>
    %cst_53 = arith.constant dense<0.000000e+00> : vector<32x64xf32>
    %96 = tpu.matmul %95, %92, %cst_53 {dimension_numbers = #tpu.dot_dimension_numbers<[1], [0], [0], [1], [0, 0, 1, 1], [], []>} : vector<32x64xf32>, vector<64x64xf32>, vector<32x64xf32> -> vector<32x64xf32>
    %97 = vector.shape_cast %96 : vector<32x64xf32> to vector<2x16x64xf32>
    %98 = vector.extract_strided_slice %94 {offsets = [0, 0], sizes = [16, 16], strides = [1, 1]} : vector<64x64xf32> to vector<16x16xf32>
    %99 = vector.shape_cast %98 : vector<16x16xf32> to vector<1x16x16xf32>
    %100 = vector.broadcast %99 : vector<1x16x16xf32> to vector<2x16x16xf32>
    %101 = vector.extract_strided_slice %97 {offsets = [0, 0, 0], sizes = [2, 16, 16], strides = [1, 1, 1]} : vector<2x16x64xf32> to vector<2x16x16xf32>
    "tpu.trace_start"() <{level = 10 : i32, message = "nik,nkl->nil"}> : () -> ()
    %cst_54 = arith.constant dense<0.000000e+00> : vector<2x16x16xf32>
    %102 = tpu.matmul %100, %101, %cst_54 {dimension_numbers = #tpu.dot_dimension_numbers<[2], [1], [1], [2], [0, 0, 0, 1, 1, 2], [0], [0]>} : vector<2x16x16xf32>, vector<2x16x16xf32>, vector<2x16x16xf32> -> vector<2x16x16xf32>
    "tpu.trace_stop"() : () -> ()
    %103 = vector.extract_strided_slice %94 {offsets = [16, 16], sizes = [16, 16], strides = [1, 1]} : vector<64x64xf32> to vector<16x16xf32>
    %104 = vector.shape_cast %103 : vector<16x16xf32> to vector<1x16x16xf32>
    %105 = vector.broadcast %104 : vector<1x16x16xf32> to vector<2x16x16xf32>
    %106 = vector.extract_strided_slice %97 {offsets = [0, 0, 16], sizes = [2, 16, 16], strides = [1, 1, 1]} : vector<2x16x64xf32> to vector<2x16x16xf32>
    "tpu.trace_start"() <{level = 10 : i32, message = "nik,nkl->nil"}> : () -> ()
    %cst_55 = arith.constant dense<0.000000e+00> : vector<2x16x16xf32>
    %107 = tpu.matmul %105, %106, %cst_55 {dimension_numbers = #tpu.dot_dimension_numbers<[2], [1], [1], [2], [0, 0, 0, 1, 1, 2], [0], [0]>} : vector<2x16x16xf32>, vector<2x16x16xf32>, vector<2x16x16xf32> -> vector<2x16x16xf32>
    "tpu.trace_stop"() : () -> ()
    %108 = vector.extract_strided_slice %94 {offsets = [32, 32], sizes = [16, 16], strides = [1, 1]} : vector<64x64xf32> to vector<16x16xf32>
    %109 = vector.shape_cast %108 : vector<16x16xf32> to vector<1x16x16xf32>
    %110 = vector.broadcast %109 : vector<1x16x16xf32> to vector<2x16x16xf32>
    %111 = vector.extract_strided_slice %97 {offsets = [0, 0, 32], sizes = [2, 16, 16], strides = [1, 1, 1]} : vector<2x16x64xf32> to vector<2x16x16xf32>
    "tpu.trace_start"() <{level = 10 : i32, message = "nik,nkl->nil"}> : () -> ()
    %cst_56 = arith.constant dense<0.000000e+00> : vector<2x16x16xf32>
    %112 = tpu.matmul %110, %111, %cst_56 {dimension_numbers = #tpu.dot_dimension_numbers<[2], [1], [1], [2], [0, 0, 0, 1, 1, 2], [0], [0]>} : vector<2x16x16xf32>, vector<2x16x16xf32>, vector<2x16x16xf32> -> vector<2x16x16xf32>
    "tpu.trace_stop"() : () -> ()
    %113 = vector.extract_strided_slice %94 {offsets = [48, 48], sizes = [16, 16], strides = [1, 1]} : vector<64x64xf32> to vector<16x16xf32>
    %114 = vector.shape_cast %113 : vector<16x16xf32> to vector<1x16x16xf32>
    %115 = vector.broadcast %114 : vector<1x16x16xf32> to vector<2x16x16xf32>
    %116 = vector.extract_strided_slice %97 {offsets = [0, 0, 48], sizes = [2, 16, 16], strides = [1, 1, 1]} : vector<2x16x64xf32> to vector<2x16x16xf32>
    "tpu.trace_start"() <{level = 10 : i32, message = "nik,nkl->nil"}> : () -> ()
    %cst_57 = arith.constant dense<0.000000e+00> : vector<2x16x16xf32>
    %117 = tpu.matmul %115, %116, %cst_57 {dimension_numbers = #tpu.dot_dimension_numbers<[2], [1], [1], [2], [0, 0, 0, 1, 1, 2], [0], [0]>} : vector<2x16x16xf32>, vector<2x16x16xf32>, vector<2x16x16xf32> -> vector<2x16x16xf32>
    "tpu.trace_stop"() : () -> ()
    %118 = tpu.concatenate %102, %107, %112, %117 in 2 : vector<2x16x16xf32>, vector<2x16x16xf32>, vector<2x16x16xf32>, vector<2x16x16xf32> -> vector<2x16x64xf32>
    %119 = vector.broadcast %60 : f32 to vector<2x16x64xf32>
    %120 = arith.mulf %119, %29 : vector<2x16x64xf32>
    %121 = vector.broadcast %61 : f32 to vector<2x16x64xf32>
    %122 = arith.mulf %121, %90 : vector<2x16x64xf32>
    %123 = arith.addf %120, %122 : vector<2x16x64xf32>
    %124 = vector.broadcast %62 : f32 to vector<2x16x64xf32>
    %125 = arith.mulf %124, %118 : vector<2x16x64xf32>
    %126 = arith.addf %123, %125 : vector<2x16x64xf32>
    %c3_58 = arith.constant 3 : index
    %127 = memref.load %arg1[%c3_58] : memref<15xf32, #tpu.memory_space<smem>>
    %c4 = arith.constant 4 : index
    %128 = memref.load %arg1[%c4] : memref<15xf32, #tpu.memory_space<smem>>
    %c5 = arith.constant 5 : index
    %129 = memref.load %arg1[%c5] : memref<15xf32, #tpu.memory_space<smem>>
    %c4_59 = arith.constant 4 : index
    %c0_60 = arith.constant 0 : index
    %c0_61 = arith.constant 0 : index
    %c0_62 = arith.constant 0 : index
    %130 = vector.load %arg3[%c4_59, %c0_60, %c0_61, %c0_62] : memref<12x2x64x64xf32, #tpu.memory_space<vmem>>, vector<1x1x64x64xf32>
    %131 = vector.shape_cast %130 : vector<1x1x64x64xf32> to vector<64x64xf32>
    %c4_63 = arith.constant 4 : index
    %c1_64 = arith.constant 1 : index
    %c0_65 = arith.constant 0 : index
    %c0_66 = arith.constant 0 : index
    %132 = vector.load %arg3[%c4_63, %c1_64, %c0_65, %c0_66] : memref<12x2x64x64xf32, #tpu.memory_space<vmem>>, vector<1x1x64x64xf32>
    %133 = vector.shape_cast %132 : vector<1x1x64x64xf32> to vector<64x64xf32>
    %134 = vector.shape_cast %59 : vector<2x16x64xf32> to vector<32x64xf32>
    %cst_67 = arith.constant dense<0.000000e+00> : vector<32x64xf32>
    %135 = tpu.matmul %134, %131, %cst_67 {dimension_numbers = #tpu.dot_dimension_numbers<[1], [0], [0], [1], [0, 0, 1, 1], [], []>} : vector<32x64xf32>, vector<64x64xf32>, vector<32x64xf32> -> vector<32x64xf32>
    %136 = vector.shape_cast %135 : vector<32x64xf32> to vector<2x16x64xf32>
    %137 = vector.extract_strided_slice %133 {offsets = [0, 0], sizes = [16, 16], strides = [1, 1]} : vector<64x64xf32> to vector<16x16xf32>
    %138 = vector.shape_cast %137 : vector<16x16xf32> to vector<1x16x16xf32>
    %139 = vector.broadcast %138 : vector<1x16x16xf32> to vector<2x16x16xf32>
    %140 = vector.extract_strided_slice %136 {offsets = [0, 0, 0], sizes = [2, 16, 16], strides = [1, 1, 1]} : vector<2x16x64xf32> to vector<2x16x16xf32>
    "tpu.trace_start"() <{level = 10 : i32, message = "nik,nkl->nil"}> : () -> ()
    %cst_68 = arith.constant dense<0.000000e+00> : vector<2x16x16xf32>
    %141 = tpu.matmul %139, %140, %cst_68 {dimension_numbers = #tpu.dot_dimension_numbers<[2], [1], [1], [2], [0, 0, 0, 1, 1, 2], [0], [0]>} : vector<2x16x16xf32>, vector<2x16x16xf32>, vector<2x16x16xf32> -> vector<2x16x16xf32>
    "tpu.trace_stop"() : () -> ()
    %142 = vector.extract_strided_slice %133 {offsets = [16, 16], sizes = [16, 16], strides = [1, 1]} : vector<64x64xf32> to vector<16x16xf32>
    %143 = vector.shape_cast %142 : vector<16x16xf32> to vector<1x16x16xf32>
    %144 = vector.broadcast %143 : vector<1x16x16xf32> to vector<2x16x16xf32>
    %145 = vector.extract_strided_slice %136 {offsets = [0, 0, 16], sizes = [2, 16, 16], strides = [1, 1, 1]} : vector<2x16x64xf32> to vector<2x16x16xf32>
    "tpu.trace_start"() <{level = 10 : i32, message = "nik,nkl->nil"}> : () -> ()
    %cst_69 = arith.constant dense<0.000000e+00> : vector<2x16x16xf32>
    %146 = tpu.matmul %144, %145, %cst_69 {dimension_numbers = #tpu.dot_dimension_numbers<[2], [1], [1], [2], [0, 0, 0, 1, 1, 2], [0], [0]>} : vector<2x16x16xf32>, vector<2x16x16xf32>, vector<2x16x16xf32> -> vector<2x16x16xf32>
    "tpu.trace_stop"() : () -> ()
    %147 = vector.extract_strided_slice %133 {offsets = [32, 32], sizes = [16, 16], strides = [1, 1]} : vector<64x64xf32> to vector<16x16xf32>
    %148 = vector.shape_cast %147 : vector<16x16xf32> to vector<1x16x16xf32>
    %149 = vector.broadcast %148 : vector<1x16x16xf32> to vector<2x16x16xf32>
    %150 = vector.extract_strided_slice %136 {offsets = [0, 0, 32], sizes = [2, 16, 16], strides = [1, 1, 1]} : vector<2x16x64xf32> to vector<2x16x16xf32>
    "tpu.trace_start"() <{level = 10 : i32, message = "nik,nkl->nil"}> : () -> ()
    %cst_70 = arith.constant dense<0.000000e+00> : vector<2x16x16xf32>
    %151 = tpu.matmul %149, %150, %cst_70 {dimension_numbers = #tpu.dot_dimension_numbers<[2], [1], [1], [2], [0, 0, 0, 1, 1, 2], [0], [0]>} : vector<2x16x16xf32>, vector<2x16x16xf32>, vector<2x16x16xf32> -> vector<2x16x16xf32>
    "tpu.trace_stop"() : () -> ()
    %152 = vector.extract_strided_slice %133 {offsets = [48, 48], sizes = [16, 16], strides = [1, 1]} : vector<64x64xf32> to vector<16x16xf32>
    %153 = vector.shape_cast %152 : vector<16x16xf32> to vector<1x16x16xf32>
    %154 = vector.broadcast %153 : vector<1x16x16xf32> to vector<2x16x16xf32>
    %155 = vector.extract_strided_slice %136 {offsets = [0, 0, 48], sizes = [2, 16, 16], strides = [1, 1, 1]} : vector<2x16x64xf32> to vector<2x16x16xf32>
    "tpu.trace_start"() <{level = 10 : i32, message = "nik,nkl->nil"}> : () -> ()
    %cst_71 = arith.constant dense<0.000000e+00> : vector<2x16x16xf32>
    %156 = tpu.matmul %154, %155, %cst_71 {dimension_numbers = #tpu.dot_dimension_numbers<[2], [1], [1], [2], [0, 0, 0, 1, 1, 2], [0], [0]>} : vector<2x16x16xf32>, vector<2x16x16xf32>, vector<2x16x16xf32> -> vector<2x16x16xf32>
    "tpu.trace_stop"() : () -> ()
    %157 = tpu.concatenate %141, %146, %151, %156 in 2 : vector<2x16x16xf32>, vector<2x16x16xf32>, vector<2x16x16xf32>, vector<2x16x16xf32> -> vector<2x16x64xf32>
    %c5_72 = arith.constant 5 : index
    %c0_73 = arith.constant 0 : index
    %c0_74 = arith.constant 0 : index
    %c0_75 = arith.constant 0 : index
    %158 = vector.load %arg3[%c5_72, %c0_73, %c0_74, %c0_75] : memref<12x2x64x64xf32, #tpu.memory_space<vmem>>, vector<1x1x64x64xf32>
    %159 = vector.shape_cast %158 : vector<1x1x64x64xf32> to vector<64x64xf32>
    %c5_76 = arith.constant 5 : index
    %c1_77 = arith.constant 1 : index
    %c0_78 = arith.constant 0 : index
    %c0_79 = arith.constant 0 : index
    %160 = vector.load %arg3[%c5_76, %c1_77, %c0_78, %c0_79] : memref<12x2x64x64xf32, #tpu.memory_space<vmem>>, vector<1x1x64x64xf32>
    %161 = vector.shape_cast %160 : vector<1x1x64x64xf32> to vector<64x64xf32>
    %162 = vector.shape_cast %59 : vector<2x16x64xf32> to vector<32x64xf32>
    %cst_80 = arith.constant dense<0.000000e+00> : vector<32x64xf32>
    %163 = tpu.matmul %162, %159, %cst_80 {dimension_numbers = #tpu.dot_dimension_numbers<[1], [0], [0], [1], [0, 0, 1, 1], [], []>} : vector<32x64xf32>, vector<64x64xf32>, vector<32x64xf32> -> vector<32x64xf32>
    %164 = vector.shape_cast %163 : vector<32x64xf32> to vector<2x16x64xf32>
    %165 = vector.extract_strided_slice %161 {offsets = [0, 0], sizes = [16, 16], strides = [1, 1]} : vector<64x64xf32> to vector<16x16xf32>
    %166 = vector.shape_cast %165 : vector<16x16xf32> to vector<1x16x16xf32>
    %167 = vector.broadcast %166 : vector<1x16x16xf32> to vector<2x16x16xf32>
    %168 = vector.extract_strided_slice %164 {offsets = [0, 0, 0], sizes = [2, 16, 16], strides = [1, 1, 1]} : vector<2x16x64xf32> to vector<2x16x16xf32>
    "tpu.trace_start"() <{level = 10 : i32, message = "nik,nkl->nil"}> : () -> ()
    %cst_81 = arith.constant dense<0.000000e+00> : vector<2x16x16xf32>
    %169 = tpu.matmul %167, %168, %cst_81 {dimension_numbers = #tpu.dot_dimension_numbers<[2], [1], [1], [2], [0, 0, 0, 1, 1, 2], [0], [0]>} : vector<2x16x16xf32>, vector<2x16x16xf32>, vector<2x16x16xf32> -> vector<2x16x16xf32>
    "tpu.trace_stop"() : () -> ()
    %170 = vector.extract_strided_slice %161 {offsets = [16, 16], sizes = [16, 16], strides = [1, 1]} : vector<64x64xf32> to vector<16x16xf32>
    %171 = vector.shape_cast %170 : vector<16x16xf32> to vector<1x16x16xf32>
    %172 = vector.broadcast %171 : vector<1x16x16xf32> to vector<2x16x16xf32>
    %173 = vector.extract_strided_slice %164 {offsets = [0, 0, 16], sizes = [2, 16, 16], strides = [1, 1, 1]} : vector<2x16x64xf32> to vector<2x16x16xf32>
    "tpu.trace_start"() <{level = 10 : i32, message = "nik,nkl->nil"}> : () -> ()
    %cst_82 = arith.constant dense<0.000000e+00> : vector<2x16x16xf32>
    %174 = tpu.matmul %172, %173, %cst_82 {dimension_numbers = #tpu.dot_dimension_numbers<[2], [1], [1], [2], [0, 0, 0, 1, 1, 2], [0], [0]>} : vector<2x16x16xf32>, vector<2x16x16xf32>, vector<2x16x16xf32> -> vector<2x16x16xf32>
    "tpu.trace_stop"() : () -> ()
    %175 = vector.extract_strided_slice %161 {offsets = [32, 32], sizes = [16, 16], strides = [1, 1]} : vector<64x64xf32> to vector<16x16xf32>
    %176 = vector.shape_cast %175 : vector<16x16xf32> to vector<1x16x16xf32>
    %177 = vector.broadcast %176 : vector<1x16x16xf32> to vector<2x16x16xf32>
    %178 = vector.extract_strided_slice %164 {offsets = [0, 0, 32], sizes = [2, 16, 16], strides = [1, 1, 1]} : vector<2x16x64xf32> to vector<2x16x16xf32>
    "tpu.trace_start"() <{level = 10 : i32, message = "nik,nkl->nil"}> : () -> ()
    %cst_83 = arith.constant dense<0.000000e+00> : vector<2x16x16xf32>
    %179 = tpu.matmul %177, %178, %cst_83 {dimension_numbers = #tpu.dot_dimension_numbers<[2], [1], [1], [2], [0, 0, 0, 1, 1, 2], [0], [0]>} : vector<2x16x16xf32>, vector<2x16x16xf32>, vector<2x16x16xf32> -> vector<2x16x16xf32>
    "tpu.trace_stop"() : () -> ()
    %180 = vector.extract_strided_slice %161 {offsets = [48, 48], sizes = [16, 16], strides = [1, 1]} : vector<64x64xf32> to vector<16x16xf32>
    %181 = vector.shape_cast %180 : vector<16x16xf32> to vector<1x16x16xf32>
    %182 = vector.broadcast %181 : vector<1x16x16xf32> to vector<2x16x16xf32>
    %183 = vector.extract_strided_slice %164 {offsets = [0, 0, 48], sizes = [2, 16, 16], strides = [1, 1, 1]} : vector<2x16x64xf32> to vector<2x16x16xf32>
    "tpu.trace_start"() <{level = 10 : i32, message = "nik,nkl->nil"}> : () -> ()
    %cst_84 = arith.constant dense<0.000000e+00> : vector<2x16x16xf32>
    %184 = tpu.matmul %182, %183, %cst_84 {dimension_numbers = #tpu.dot_dimension_numbers<[2], [1], [1], [2], [0, 0, 0, 1, 1, 2], [0], [0]>} : vector<2x16x16xf32>, vector<2x16x16xf32>, vector<2x16x16xf32> -> vector<2x16x16xf32>
    "tpu.trace_stop"() : () -> ()
    %185 = tpu.concatenate %169, %174, %179, %184 in 2 : vector<2x16x16xf32>, vector<2x16x16xf32>, vector<2x16x16xf32>, vector<2x16x16xf32> -> vector<2x16x64xf32>
    %186 = vector.broadcast %127 : f32 to vector<2x16x64xf32>
    %187 = arith.mulf %186, %59 : vector<2x16x64xf32>
    %188 = vector.broadcast %128 : f32 to vector<2x16x64xf32>
    %189 = arith.mulf %188, %157 : vector<2x16x64xf32>
    %190 = arith.addf %187, %189 : vector<2x16x64xf32>
    %191 = vector.broadcast %129 : f32 to vector<2x16x64xf32>
    %192 = arith.mulf %191, %185 : vector<2x16x64xf32>
    %193 = arith.addf %190, %192 : vector<2x16x64xf32>
    %194 = arith.addf %126, %193 : vector<2x16x64xf32>
    %cst_85 = arith.constant 5.000000e-01 : f32
    %195 = vector.broadcast %cst_85 : f32 to vector<2x16x64xf32>
    %196 = arith.mulf %194, %195 : vector<2x16x64xf32>
    %c6 = arith.constant 6 : index
    %197 = memref.load %arg1[%c6] : memref<15xf32, #tpu.memory_space<smem>>
    %c7 = arith.constant 7 : index
    %198 = memref.load %arg1[%c7] : memref<15xf32, #tpu.memory_space<smem>>
    %c8 = arith.constant 8 : index
    %199 = memref.load %arg1[%c8] : memref<15xf32, #tpu.memory_space<smem>>
    %c6_86 = arith.constant 6 : index
    %c0_87 = arith.constant 0 : index
    %c0_88 = arith.constant 0 : index
    %c0_89 = arith.constant 0 : index
    %200 = vector.load %arg3[%c6_86, %c0_87, %c0_88, %c0_89] : memref<12x2x64x64xf32, #tpu.memory_space<vmem>>, vector<1x1x64x64xf32>
    %201 = vector.shape_cast %200 : vector<1x1x64x64xf32> to vector<64x64xf32>
    %c6_90 = arith.constant 6 : index
    %c1_91 = arith.constant 1 : index
    %c0_92 = arith.constant 0 : index
    %c0_93 = arith.constant 0 : index
    %202 = vector.load %arg3[%c6_90, %c1_91, %c0_92, %c0_93] : memref<12x2x64x64xf32, #tpu.memory_space<vmem>>, vector<1x1x64x64xf32>
    %203 = vector.shape_cast %202 : vector<1x1x64x64xf32> to vector<64x64xf32>
    %204 = vector.shape_cast %29 : vector<2x16x64xf32> to vector<32x64xf32>
    %cst_94 = arith.constant dense<0.000000e+00> : vector<32x64xf32>
    %205 = tpu.matmul %204, %201, %cst_94 {dimension_numbers = #tpu.dot_dimension_numbers<[1], [0], [0], [1], [0, 0, 1, 1], [], []>} : vector<32x64xf32>, vector<64x64xf32>, vector<32x64xf32> -> vector<32x64xf32>
    %206 = vector.shape_cast %205 : vector<32x64xf32> to vector<2x16x64xf32>
    %207 = vector.extract_strided_slice %203 {offsets = [0, 0], sizes = [16, 16], strides = [1, 1]} : vector<64x64xf32> to vector<16x16xf32>
    %208 = vector.shape_cast %207 : vector<16x16xf32> to vector<1x16x16xf32>
    %209 = vector.broadcast %208 : vector<1x16x16xf32> to vector<2x16x16xf32>
    %210 = vector.extract_strided_slice %206 {offsets = [0, 0, 0], sizes = [2, 16, 16], strides = [1, 1, 1]} : vector<2x16x64xf32> to vector<2x16x16xf32>
    "tpu.trace_start"() <{level = 10 : i32, message = "nik,nkl->nil"}> : () -> ()
    %cst_95 = arith.constant dense<0.000000e+00> : vector<2x16x16xf32>
    %211 = tpu.matmul %209, %210, %cst_95 {dimension_numbers = #tpu.dot_dimension_numbers<[2], [1], [1], [2], [0, 0, 0, 1, 1, 2], [0], [0]>} : vector<2x16x16xf32>, vector<2x16x16xf32>, vector<2x16x16xf32> -> vector<2x16x16xf32>
    "tpu.trace_stop"() : () -> ()
    %212 = vector.extract_strided_slice %203 {offsets = [16, 16], sizes = [16, 16], strides = [1, 1]} : vector<64x64xf32> to vector<16x16xf32>
    %213 = vector.shape_cast %212 : vector<16x16xf32> to vector<1x16x16xf32>
    %214 = vector.broadcast %213 : vector<1x16x16xf32> to vector<2x16x16xf32>
    %215 = vector.extract_strided_slice %206 {offsets = [0, 0, 16], sizes = [2, 16, 16], strides = [1, 1, 1]} : vector<2x16x64xf32> to vector<2x16x16xf32>
    "tpu.trace_start"() <{level = 10 : i32, message = "nik,nkl->nil"}> : () -> ()
    %cst_96 = arith.constant dense<0.000000e+00> : vector<2x16x16xf32>
    %216 = tpu.matmul %214, %215, %cst_96 {dimension_numbers = #tpu.dot_dimension_numbers<[2], [1], [1], [2], [0, 0, 0, 1, 1, 2], [0], [0]>} : vector<2x16x16xf32>, vector<2x16x16xf32>, vector<2x16x16xf32> -> vector<2x16x16xf32>
    "tpu.trace_stop"() : () -> ()
    %217 = vector.extract_strided_slice %203 {offsets = [32, 32], sizes = [16, 16], strides = [1, 1]} : vector<64x64xf32> to vector<16x16xf32>
    %218 = vector.shape_cast %217 : vector<16x16xf32> to vector<1x16x16xf32>
    %219 = vector.broadcast %218 : vector<1x16x16xf32> to vector<2x16x16xf32>
    %220 = vector.extract_strided_slice %206 {offsets = [0, 0, 32], sizes = [2, 16, 16], strides = [1, 1, 1]} : vector<2x16x64xf32> to vector<2x16x16xf32>
    "tpu.trace_start"() <{level = 10 : i32, message = "nik,nkl->nil"}> : () -> ()
    %cst_97 = arith.constant dense<0.000000e+00> : vector<2x16x16xf32>
    %221 = tpu.matmul %219, %220, %cst_97 {dimension_numbers = #tpu.dot_dimension_numbers<[2], [1], [1], [2], [0, 0, 0, 1, 1, 2], [0], [0]>} : vector<2x16x16xf32>, vector<2x16x16xf32>, vector<2x16x16xf32> -> vector<2x16x16xf32>
    "tpu.trace_stop"() : () -> ()
    %222 = vector.extract_strided_slice %203 {offsets = [48, 48], sizes = [16, 16], strides = [1, 1]} : vector<64x64xf32> to vector<16x16xf32>
    %223 = vector.shape_cast %222 : vector<16x16xf32> to vector<1x16x16xf32>
    %224 = vector.broadcast %223 : vector<1x16x16xf32> to vector<2x16x16xf32>
    %225 = vector.extract_strided_slice %206 {offsets = [0, 0, 48], sizes = [2, 16, 16], strides = [1, 1, 1]} : vector<2x16x64xf32> to vector<2x16x16xf32>
    "tpu.trace_start"() <{level = 10 : i32, message = "nik,nkl->nil"}> : () -> ()
    %cst_98 = arith.constant dense<0.000000e+00> : vector<2x16x16xf32>
    %226 = tpu.matmul %224, %225, %cst_98 {dimension_numbers = #tpu.dot_dimension_numbers<[2], [1], [1], [2], [0, 0, 0, 1, 1, 2], [0], [0]>} : vector<2x16x16xf32>, vector<2x16x16xf32>, vector<2x16x16xf32> -> vector<2x16x16xf32>
    "tpu.trace_stop"() : () -> ()
    %227 = tpu.concatenate %211, %216, %221, %226 in 2 : vector<2x16x16xf32>, vector<2x16x16xf32>, vector<2x16x16xf32>, vector<2x16x16xf32> -> vector<2x16x64xf32>
    %c7_99 = arith.constant 7 : index
    %c0_100 = arith.constant 0 : index
    %c0_101 = arith.constant 0 : index
    %c0_102 = arith.constant 0 : index
    %228 = vector.load %arg3[%c7_99, %c0_100, %c0_101, %c0_102] : memref<12x2x64x64xf32, #tpu.memory_space<vmem>>, vector<1x1x64x64xf32>
    %229 = vector.shape_cast %228 : vector<1x1x64x64xf32> to vector<64x64xf32>
    %c7_103 = arith.constant 7 : index
    %c1_104 = arith.constant 1 : index
    %c0_105 = arith.constant 0 : index
    %c0_106 = arith.constant 0 : index
    %230 = vector.load %arg3[%c7_103, %c1_104, %c0_105, %c0_106] : memref<12x2x64x64xf32, #tpu.memory_space<vmem>>, vector<1x1x64x64xf32>
    %231 = vector.shape_cast %230 : vector<1x1x64x64xf32> to vector<64x64xf32>
    %232 = vector.shape_cast %29 : vector<2x16x64xf32> to vector<32x64xf32>
    %cst_107 = arith.constant dense<0.000000e+00> : vector<32x64xf32>
    %233 = tpu.matmul %232, %229, %cst_107 {dimension_numbers = #tpu.dot_dimension_numbers<[1], [0], [0], [1], [0, 0, 1, 1], [], []>} : vector<32x64xf32>, vector<64x64xf32>, vector<32x64xf32> -> vector<32x64xf32>
    %234 = vector.shape_cast %233 : vector<32x64xf32> to vector<2x16x64xf32>
    %235 = vector.extract_strided_slice %231 {offsets = [0, 0], sizes = [16, 16], strides = [1, 1]} : vector<64x64xf32> to vector<16x16xf32>
    %236 = vector.shape_cast %235 : vector<16x16xf32> to vector<1x16x16xf32>
    %237 = vector.broadcast %236 : vector<1x16x16xf32> to vector<2x16x16xf32>
    %238 = vector.extract_strided_slice %234 {offsets = [0, 0, 0], sizes = [2, 16, 16], strides = [1, 1, 1]} : vector<2x16x64xf32> to vector<2x16x16xf32>
    "tpu.trace_start"() <{level = 10 : i32, message = "nik,nkl->nil"}> : () -> ()
    %cst_108 = arith.constant dense<0.000000e+00> : vector<2x16x16xf32>
    %239 = tpu.matmul %237, %238, %cst_108 {dimension_numbers = #tpu.dot_dimension_numbers<[2], [1], [1], [2], [0, 0, 0, 1, 1, 2], [0], [0]>} : vector<2x16x16xf32>, vector<2x16x16xf32>, vector<2x16x16xf32> -> vector<2x16x16xf32>
    "tpu.trace_stop"() : () -> ()
    %240 = vector.extract_strided_slice %231 {offsets = [16, 16], sizes = [16, 16], strides = [1, 1]} : vector<64x64xf32> to vector<16x16xf32>
    %241 = vector.shape_cast %240 : vector<16x16xf32> to vector<1x16x16xf32>
    %242 = vector.broadcast %241 : vector<1x16x16xf32> to vector<2x16x16xf32>
    %243 = vector.extract_strided_slice %234 {offsets = [0, 0, 16], sizes = [2, 16, 16], strides = [1, 1, 1]} : vector<2x16x64xf32> to vector<2x16x16xf32>
    "tpu.trace_start"() <{level = 10 : i32, message = "nik,nkl->nil"}> : () -> ()
    %cst_109 = arith.constant dense<0.000000e+00> : vector<2x16x16xf32>
    %244 = tpu.matmul %242, %243, %cst_109 {dimension_numbers = #tpu.dot_dimension_numbers<[2], [1], [1], [2], [0, 0, 0, 1, 1, 2], [0], [0]>} : vector<2x16x16xf32>, vector<2x16x16xf32>, vector<2x16x16xf32> -> vector<2x16x16xf32>
    "tpu.trace_stop"() : () -> ()
    %245 = vector.extract_strided_slice %231 {offsets = [32, 32], sizes = [16, 16], strides = [1, 1]} : vector<64x64xf32> to vector<16x16xf32>
    %246 = vector.shape_cast %245 : vector<16x16xf32> to vector<1x16x16xf32>
    %247 = vector.broadcast %246 : vector<1x16x16xf32> to vector<2x16x16xf32>
    %248 = vector.extract_strided_slice %234 {offsets = [0, 0, 32], sizes = [2, 16, 16], strides = [1, 1, 1]} : vector<2x16x64xf32> to vector<2x16x16xf32>
    "tpu.trace_start"() <{level = 10 : i32, message = "nik,nkl->nil"}> : () -> ()
    %cst_110 = arith.constant dense<0.000000e+00> : vector<2x16x16xf32>
    %249 = tpu.matmul %247, %248, %cst_110 {dimension_numbers = #tpu.dot_dimension_numbers<[2], [1], [1], [2], [0, 0, 0, 1, 1, 2], [0], [0]>} : vector<2x16x16xf32>, vector<2x16x16xf32>, vector<2x16x16xf32> -> vector<2x16x16xf32>
    "tpu.trace_stop"() : () -> ()
    %250 = vector.extract_strided_slice %231 {offsets = [48, 48], sizes = [16, 16], strides = [1, 1]} : vector<64x64xf32> to vector<16x16xf32>
    %251 = vector.shape_cast %250 : vector<16x16xf32> to vector<1x16x16xf32>
    %252 = vector.broadcast %251 : vector<1x16x16xf32> to vector<2x16x16xf32>
    %253 = vector.extract_strided_slice %234 {offsets = [0, 0, 48], sizes = [2, 16, 16], strides = [1, 1, 1]} : vector<2x16x64xf32> to vector<2x16x16xf32>
    "tpu.trace_start"() <{level = 10 : i32, message = "nik,nkl->nil"}> : () -> ()
    %cst_111 = arith.constant dense<0.000000e+00> : vector<2x16x16xf32>
    %254 = tpu.matmul %252, %253, %cst_111 {dimension_numbers = #tpu.dot_dimension_numbers<[2], [1], [1], [2], [0, 0, 0, 1, 1, 2], [0], [0]>} : vector<2x16x16xf32>, vector<2x16x16xf32>, vector<2x16x16xf32> -> vector<2x16x16xf32>
    "tpu.trace_stop"() : () -> ()
    %255 = tpu.concatenate %239, %244, %249, %254 in 2 : vector<2x16x16xf32>, vector<2x16x16xf32>, vector<2x16x16xf32>, vector<2x16x16xf32> -> vector<2x16x64xf32>
    %256 = vector.broadcast %197 : f32 to vector<2x16x64xf32>
    %257 = arith.mulf %256, %29 : vector<2x16x64xf32>
    %258 = vector.broadcast %198 : f32 to vector<2x16x64xf32>
    %259 = arith.mulf %258, %227 : vector<2x16x64xf32>
    %260 = arith.addf %257, %259 : vector<2x16x64xf32>
    %261 = vector.broadcast %199 : f32 to vector<2x16x64xf32>
    %262 = arith.mulf %261, %255 : vector<2x16x64xf32>
    %263 = arith.addf %260, %262 : vector<2x16x64xf32>
    %c9 = arith.constant 9 : index
    %264 = memref.load %arg1[%c9] : memref<15xf32, #tpu.memory_space<smem>>
    %c10 = arith.constant 10 : index
    %265 = memref.load %arg1[%c10] : memref<15xf32, #tpu.memory_space<smem>>
    %c11 = arith.constant 11 : index
    %266 = memref.load %arg1[%c11] : memref<15xf32, #tpu.memory_space<smem>>
    %c8_112 = arith.constant 8 : index
    %c0_113 = arith.constant 0 : index
    %c0_114 = arith.constant 0 : index
    %c0_115 = arith.constant 0 : index
    %267 = vector.load %arg3[%c8_112, %c0_113, %c0_114, %c0_115] : memref<12x2x64x64xf32, #tpu.memory_space<vmem>>, vector<1x1x64x64xf32>
    %268 = vector.shape_cast %267 : vector<1x1x64x64xf32> to vector<64x64xf32>
    %c8_116 = arith.constant 8 : index
    %c1_117 = arith.constant 1 : index
    %c0_118 = arith.constant 0 : index
    %c0_119 = arith.constant 0 : index
    %269 = vector.load %arg3[%c8_116, %c1_117, %c0_118, %c0_119] : memref<12x2x64x64xf32, #tpu.memory_space<vmem>>, vector<1x1x64x64xf32>
    %270 = vector.shape_cast %269 : vector<1x1x64x64xf32> to vector<64x64xf32>
    %271 = vector.shape_cast %59 : vector<2x16x64xf32> to vector<32x64xf32>
    %cst_120 = arith.constant dense<0.000000e+00> : vector<32x64xf32>
    %272 = tpu.matmul %271, %268, %cst_120 {dimension_numbers = #tpu.dot_dimension_numbers<[1], [0], [0], [1], [0, 0, 1, 1], [], []>} : vector<32x64xf32>, vector<64x64xf32>, vector<32x64xf32> -> vector<32x64xf32>
    %273 = vector.shape_cast %272 : vector<32x64xf32> to vector<2x16x64xf32>
    %274 = vector.extract_strided_slice %270 {offsets = [0, 0], sizes = [16, 16], strides = [1, 1]} : vector<64x64xf32> to vector<16x16xf32>
    %275 = vector.shape_cast %274 : vector<16x16xf32> to vector<1x16x16xf32>
    %276 = vector.broadcast %275 : vector<1x16x16xf32> to vector<2x16x16xf32>
    %277 = vector.extract_strided_slice %273 {offsets = [0, 0, 0], sizes = [2, 16, 16], strides = [1, 1, 1]} : vector<2x16x64xf32> to vector<2x16x16xf32>
    "tpu.trace_start"() <{level = 10 : i32, message = "nik,nkl->nil"}> : () -> ()
    %cst_121 = arith.constant dense<0.000000e+00> : vector<2x16x16xf32>
    %278 = tpu.matmul %276, %277, %cst_121 {dimension_numbers = #tpu.dot_dimension_numbers<[2], [1], [1], [2], [0, 0, 0, 1, 1, 2], [0], [0]>} : vector<2x16x16xf32>, vector<2x16x16xf32>, vector<2x16x16xf32> -> vector<2x16x16xf32>
    "tpu.trace_stop"() : () -> ()
    %279 = vector.extract_strided_slice %270 {offsets = [16, 16], sizes = [16, 16], strides = [1, 1]} : vector<64x64xf32> to vector<16x16xf32>
    %280 = vector.shape_cast %279 : vector<16x16xf32> to vector<1x16x16xf32>
    %281 = vector.broadcast %280 : vector<1x16x16xf32> to vector<2x16x16xf32>
    %282 = vector.extract_strided_slice %273 {offsets = [0, 0, 16], sizes = [2, 16, 16], strides = [1, 1, 1]} : vector<2x16x64xf32> to vector<2x16x16xf32>
    "tpu.trace_start"() <{level = 10 : i32, message = "nik,nkl->nil"}> : () -> ()
    %cst_122 = arith.constant dense<0.000000e+00> : vector<2x16x16xf32>
    %283 = tpu.matmul %281, %282, %cst_122 {dimension_numbers = #tpu.dot_dimension_numbers<[2], [1], [1], [2], [0, 0, 0, 1, 1, 2], [0], [0]>} : vector<2x16x16xf32>, vector<2x16x16xf32>, vector<2x16x16xf32> -> vector<2x16x16xf32>
    "tpu.trace_stop"() : () -> ()
    %284 = vector.extract_strided_slice %270 {offsets = [32, 32], sizes = [16, 16], strides = [1, 1]} : vector<64x64xf32> to vector<16x16xf32>
    %285 = vector.shape_cast %284 : vector<16x16xf32> to vector<1x16x16xf32>
    %286 = vector.broadcast %285 : vector<1x16x16xf32> to vector<2x16x16xf32>
    %287 = vector.extract_strided_slice %273 {offsets = [0, 0, 32], sizes = [2, 16, 16], strides = [1, 1, 1]} : vector<2x16x64xf32> to vector<2x16x16xf32>
    "tpu.trace_start"() <{level = 10 : i32, message = "nik,nkl->nil"}> : () -> ()
    %cst_123 = arith.constant dense<0.000000e+00> : vector<2x16x16xf32>
    %288 = tpu.matmul %286, %287, %cst_123 {dimension_numbers = #tpu.dot_dimension_numbers<[2], [1], [1], [2], [0, 0, 0, 1, 1, 2], [0], [0]>} : vector<2x16x16xf32>, vector<2x16x16xf32>, vector<2x16x16xf32> -> vector<2x16x16xf32>
    "tpu.trace_stop"() : () -> ()
    %289 = vector.extract_strided_slice %270 {offsets = [48, 48], sizes = [16, 16], strides = [1, 1]} : vector<64x64xf32> to vector<16x16xf32>
    %290 = vector.shape_cast %289 : vector<16x16xf32> to vector<1x16x16xf32>
    %291 = vector.broadcast %290 : vector<1x16x16xf32> to vector<2x16x16xf32>
    %292 = vector.extract_strided_slice %273 {offsets = [0, 0, 48], sizes = [2, 16, 16], strides = [1, 1, 1]} : vector<2x16x64xf32> to vector<2x16x16xf32>
    "tpu.trace_start"() <{level = 10 : i32, message = "nik,nkl->nil"}> : () -> ()
    %cst_124 = arith.constant dense<0.000000e+00> : vector<2x16x16xf32>
    %293 = tpu.matmul %291, %292, %cst_124 {dimension_numbers = #tpu.dot_dimension_numbers<[2], [1], [1], [2], [0, 0, 0, 1, 1, 2], [0], [0]>} : vector<2x16x16xf32>, vector<2x16x16xf32>, vector<2x16x16xf32> -> vector<2x16x16xf32>
    "tpu.trace_stop"() : () -> ()
    %294 = tpu.concatenate %278, %283, %288, %293 in 2 : vector<2x16x16xf32>, vector<2x16x16xf32>, vector<2x16x16xf32>, vector<2x16x16xf32> -> vector<2x16x64xf32>
    %c9_125 = arith.constant 9 : index
    %c0_126 = arith.constant 0 : index
    %c0_127 = arith.constant 0 : index
    %c0_128 = arith.constant 0 : index
    %295 = vector.load %arg3[%c9_125, %c0_126, %c0_127, %c0_128] : memref<12x2x64x64xf32, #tpu.memory_space<vmem>>, vector<1x1x64x64xf32>
    %296 = vector.shape_cast %295 : vector<1x1x64x64xf32> to vector<64x64xf32>
    %c9_129 = arith.constant 9 : index
    %c1_130 = arith.constant 1 : index
    %c0_131 = arith.constant 0 : index
    %c0_132 = arith.constant 0 : index
    %297 = vector.load %arg3[%c9_129, %c1_130, %c0_131, %c0_132] : memref<12x2x64x64xf32, #tpu.memory_space<vmem>>, vector<1x1x64x64xf32>
    %298 = vector.shape_cast %297 : vector<1x1x64x64xf32> to vector<64x64xf32>
    %299 = vector.shape_cast %59 : vector<2x16x64xf32> to vector<32x64xf32>
    %cst_133 = arith.constant dense<0.000000e+00> : vector<32x64xf32>
    %300 = tpu.matmul %299, %296, %cst_133 {dimension_numbers = #tpu.dot_dimension_numbers<[1], [0], [0], [1], [0, 0, 1, 1], [], []>} : vector<32x64xf32>, vector<64x64xf32>, vector<32x64xf32> -> vector<32x64xf32>
    %301 = vector.shape_cast %300 : vector<32x64xf32> to vector<2x16x64xf32>
    %302 = vector.extract_strided_slice %298 {offsets = [0, 0], sizes = [16, 16], strides = [1, 1]} : vector<64x64xf32> to vector<16x16xf32>
    %303 = vector.shape_cast %302 : vector<16x16xf32> to vector<1x16x16xf32>
    %304 = vector.broadcast %303 : vector<1x16x16xf32> to vector<2x16x16xf32>
    %305 = vector.extract_strided_slice %301 {offsets = [0, 0, 0], sizes = [2, 16, 16], strides = [1, 1, 1]} : vector<2x16x64xf32> to vector<2x16x16xf32>
    "tpu.trace_start"() <{level = 10 : i32, message = "nik,nkl->nil"}> : () -> ()
    %cst_134 = arith.constant dense<0.000000e+00> : vector<2x16x16xf32>
    %306 = tpu.matmul %304, %305, %cst_134 {dimension_numbers = #tpu.dot_dimension_numbers<[2], [1], [1], [2], [0, 0, 0, 1, 1, 2], [0], [0]>} : vector<2x16x16xf32>, vector<2x16x16xf32>, vector<2x16x16xf32> -> vector<2x16x16xf32>
    "tpu.trace_stop"() : () -> ()
    %307 = vector.extract_strided_slice %298 {offsets = [16, 16], sizes = [16, 16], strides = [1, 1]} : vector<64x64xf32> to vector<16x16xf32>
    %308 = vector.shape_cast %307 : vector<16x16xf32> to vector<1x16x16xf32>
    %309 = vector.broadcast %308 : vector<1x16x16xf32> to vector<2x16x16xf32>
    %310 = vector.extract_strided_slice %301 {offsets = [0, 0, 16], sizes = [2, 16, 16], strides = [1, 1, 1]} : vector<2x16x64xf32> to vector<2x16x16xf32>
    "tpu.trace_start"() <{level = 10 : i32, message = "nik,nkl->nil"}> : () -> ()
    %cst_135 = arith.constant dense<0.000000e+00> : vector<2x16x16xf32>
    %311 = tpu.matmul %309, %310, %cst_135 {dimension_numbers = #tpu.dot_dimension_numbers<[2], [1], [1], [2], [0, 0, 0, 1, 1, 2], [0], [0]>} : vector<2x16x16xf32>, vector<2x16x16xf32>, vector<2x16x16xf32> -> vector<2x16x16xf32>
    "tpu.trace_stop"() : () -> ()
    %312 = vector.extract_strided_slice %298 {offsets = [32, 32], sizes = [16, 16], strides = [1, 1]} : vector<64x64xf32> to vector<16x16xf32>
    %313 = vector.shape_cast %312 : vector<16x16xf32> to vector<1x16x16xf32>
    %314 = vector.broadcast %313 : vector<1x16x16xf32> to vector<2x16x16xf32>
    %315 = vector.extract_strided_slice %301 {offsets = [0, 0, 32], sizes = [2, 16, 16], strides = [1, 1, 1]} : vector<2x16x64xf32> to vector<2x16x16xf32>
    "tpu.trace_start"() <{level = 10 : i32, message = "nik,nkl->nil"}> : () -> ()
    %cst_136 = arith.constant dense<0.000000e+00> : vector<2x16x16xf32>
    %316 = tpu.matmul %314, %315, %cst_136 {dimension_numbers = #tpu.dot_dimension_numbers<[2], [1], [1], [2], [0, 0, 0, 1, 1, 2], [0], [0]>} : vector<2x16x16xf32>, vector<2x16x16xf32>, vector<2x16x16xf32> -> vector<2x16x16xf32>
    "tpu.trace_stop"() : () -> ()
    %317 = vector.extract_strided_slice %298 {offsets = [48, 48], sizes = [16, 16], strides = [1, 1]} : vector<64x64xf32> to vector<16x16xf32>
    %318 = vector.shape_cast %317 : vector<16x16xf32> to vector<1x16x16xf32>
    %319 = vector.broadcast %318 : vector<1x16x16xf32> to vector<2x16x16xf32>
    %320 = vector.extract_strided_slice %301 {offsets = [0, 0, 48], sizes = [2, 16, 16], strides = [1, 1, 1]} : vector<2x16x64xf32> to vector<2x16x16xf32>
    "tpu.trace_start"() <{level = 10 : i32, message = "nik,nkl->nil"}> : () -> ()
    %cst_137 = arith.constant dense<0.000000e+00> : vector<2x16x16xf32>
    %321 = tpu.matmul %319, %320, %cst_137 {dimension_numbers = #tpu.dot_dimension_numbers<[2], [1], [1], [2], [0, 0, 0, 1, 1, 2], [0], [0]>} : vector<2x16x16xf32>, vector<2x16x16xf32>, vector<2x16x16xf32> -> vector<2x16x16xf32>
    "tpu.trace_stop"() : () -> ()
    %322 = tpu.concatenate %306, %311, %316, %321 in 2 : vector<2x16x16xf32>, vector<2x16x16xf32>, vector<2x16x16xf32>, vector<2x16x16xf32> -> vector<2x16x64xf32>
    %323 = vector.broadcast %264 : f32 to vector<2x16x64xf32>
    %324 = arith.mulf %323, %59 : vector<2x16x64xf32>
    %325 = vector.broadcast %265 : f32 to vector<2x16x64xf32>
    %326 = arith.mulf %325, %294 : vector<2x16x64xf32>
    %327 = arith.addf %324, %326 : vector<2x16x64xf32>
    %328 = vector.broadcast %266 : f32 to vector<2x16x64xf32>
    %329 = arith.mulf %328, %322 : vector<2x16x64xf32>
    %330 = arith.addf %327, %329 : vector<2x16x64xf32>
    %c12 = arith.constant 12 : index
    %331 = memref.load %arg1[%c12] : memref<15xf32, #tpu.memory_space<smem>>
    %c13 = arith.constant 13 : index
    %332 = memref.load %arg1[%c13] : memref<15xf32, #tpu.memory_space<smem>>
    %c14 = arith.constant 14 : index
    %333 = memref.load %arg1[%c14] : memref<15xf32, #tpu.memory_space<smem>>
    %c10_138 = arith.constant 10 : index
    %c0_139 = arith.constant 0 : index
    %c0_140 = arith.constant 0 : index
    %c0_141 = arith.constant 0 : index
    %334 = vector.load %arg3[%c10_138, %c0_139, %c0_140, %c0_141] : memref<12x2x64x64xf32, #tpu.memory_space<vmem>>, vector<1x1x64x64xf32>
    %335 = vector.shape_cast %334 : vector<1x1x64x64xf32> to vector<64x64xf32>
    %c10_142 = arith.constant 10 : index
    %c1_143 = arith.constant 1 : index
    %c0_144 = arith.constant 0 : index
    %c0_145 = arith.constant 0 : index
    %336 = vector.load %arg3[%c10_142, %c1_143, %c0_144, %c0_145] : memref<12x2x64x64xf32, #tpu.memory_space<vmem>>, vector<1x1x64x64xf32>
    %337 = vector.shape_cast %336 : vector<1x1x64x64xf32> to vector<64x64xf32>
    %338 = vector.shape_cast %196 : vector<2x16x64xf32> to vector<32x64xf32>
    %cst_146 = arith.constant dense<0.000000e+00> : vector<32x64xf32>
    %339 = tpu.matmul %338, %335, %cst_146 {dimension_numbers = #tpu.dot_dimension_numbers<[1], [0], [0], [1], [0, 0, 1, 1], [], []>} : vector<32x64xf32>, vector<64x64xf32>, vector<32x64xf32> -> vector<32x64xf32>
    %340 = vector.shape_cast %339 : vector<32x64xf32> to vector<2x16x64xf32>
    %341 = vector.extract_strided_slice %337 {offsets = [0, 0], sizes = [16, 16], strides = [1, 1]} : vector<64x64xf32> to vector<16x16xf32>
    %342 = vector.shape_cast %341 : vector<16x16xf32> to vector<1x16x16xf32>
    %343 = vector.broadcast %342 : vector<1x16x16xf32> to vector<2x16x16xf32>
    %344 = vector.extract_strided_slice %340 {offsets = [0, 0, 0], sizes = [2, 16, 16], strides = [1, 1, 1]} : vector<2x16x64xf32> to vector<2x16x16xf32>
    "tpu.trace_start"() <{level = 10 : i32, message = "nik,nkl->nil"}> : () -> ()
    %cst_147 = arith.constant dense<0.000000e+00> : vector<2x16x16xf32>
    %345 = tpu.matmul %343, %344, %cst_147 {dimension_numbers = #tpu.dot_dimension_numbers<[2], [1], [1], [2], [0, 0, 0, 1, 1, 2], [0], [0]>} : vector<2x16x16xf32>, vector<2x16x16xf32>, vector<2x16x16xf32> -> vector<2x16x16xf32>
    "tpu.trace_stop"() : () -> ()
    %346 = vector.extract_strided_slice %337 {offsets = [16, 16], sizes = [16, 16], strides = [1, 1]} : vector<64x64xf32> to vector<16x16xf32>
    %347 = vector.shape_cast %346 : vector<16x16xf32> to vector<1x16x16xf32>
    %348 = vector.broadcast %347 : vector<1x16x16xf32> to vector<2x16x16xf32>
    %349 = vector.extract_strided_slice %340 {offsets = [0, 0, 16], sizes = [2, 16, 16], strides = [1, 1, 1]} : vector<2x16x64xf32> to vector<2x16x16xf32>
    "tpu.trace_start"() <{level = 10 : i32, message = "nik,nkl->nil"}> : () -> ()
    %cst_148 = arith.constant dense<0.000000e+00> : vector<2x16x16xf32>
    %350 = tpu.matmul %348, %349, %cst_148 {dimension_numbers = #tpu.dot_dimension_numbers<[2], [1], [1], [2], [0, 0, 0, 1, 1, 2], [0], [0]>} : vector<2x16x16xf32>, vector<2x16x16xf32>, vector<2x16x16xf32> -> vector<2x16x16xf32>
    "tpu.trace_stop"() : () -> ()
    %351 = vector.extract_strided_slice %337 {offsets = [32, 32], sizes = [16, 16], strides = [1, 1]} : vector<64x64xf32> to vector<16x16xf32>
    %352 = vector.shape_cast %351 : vector<16x16xf32> to vector<1x16x16xf32>
    %353 = vector.broadcast %352 : vector<1x16x16xf32> to vector<2x16x16xf32>
    %354 = vector.extract_strided_slice %340 {offsets = [0, 0, 32], sizes = [2, 16, 16], strides = [1, 1, 1]} : vector<2x16x64xf32> to vector<2x16x16xf32>
    "tpu.trace_start"() <{level = 10 : i32, message = "nik,nkl->nil"}> : () -> ()
    %cst_149 = arith.constant dense<0.000000e+00> : vector<2x16x16xf32>
    %355 = tpu.matmul %353, %354, %cst_149 {dimension_numbers = #tpu.dot_dimension_numbers<[2], [1], [1], [2], [0, 0, 0, 1, 1, 2], [0], [0]>} : vector<2x16x16xf32>, vector<2x16x16xf32>, vector<2x16x16xf32> -> vector<2x16x16xf32>
    "tpu.trace_stop"() : () -> ()
    %356 = vector.extract_strided_slice %337 {offsets = [48, 48], sizes = [16, 16], strides = [1, 1]} : vector<64x64xf32> to vector<16x16xf32>
    %357 = vector.shape_cast %356 : vector<16x16xf32> to vector<1x16x16xf32>
    %358 = vector.broadcast %357 : vector<1x16x16xf32> to vector<2x16x16xf32>
    %359 = vector.extract_strided_slice %340 {offsets = [0, 0, 48], sizes = [2, 16, 16], strides = [1, 1, 1]} : vector<2x16x64xf32> to vector<2x16x16xf32>
    "tpu.trace_start"() <{level = 10 : i32, message = "nik,nkl->nil"}> : () -> ()
    %cst_150 = arith.constant dense<0.000000e+00> : vector<2x16x16xf32>
    %360 = tpu.matmul %358, %359, %cst_150 {dimension_numbers = #tpu.dot_dimension_numbers<[2], [1], [1], [2], [0, 0, 0, 1, 1, 2], [0], [0]>} : vector<2x16x16xf32>, vector<2x16x16xf32>, vector<2x16x16xf32> -> vector<2x16x16xf32>
    "tpu.trace_stop"() : () -> ()
    %361 = tpu.concatenate %345, %350, %355, %360 in 2 : vector<2x16x16xf32>, vector<2x16x16xf32>, vector<2x16x16xf32>, vector<2x16x16xf32> -> vector<2x16x64xf32>
    %c11_151 = arith.constant 11 : index
    %c0_152 = arith.constant 0 : index
    %c0_153 = arith.constant 0 : index
    %c0_154 = arith.constant 0 : index
    %362 = vector.load %arg3[%c11_151, %c0_152, %c0_153, %c0_154] : memref<12x2x64x64xf32, #tpu.memory_space<vmem>>, vector<1x1x64x64xf32>
    %363 = vector.shape_cast %362 : vector<1x1x64x64xf32> to vector<64x64xf32>
    %c11_155 = arith.constant 11 : index
    %c1_156 = arith.constant 1 : index
    %c0_157 = arith.constant 0 : index
    %c0_158 = arith.constant 0 : index
    %364 = vector.load %arg3[%c11_155, %c1_156, %c0_157, %c0_158] : memref<12x2x64x64xf32, #tpu.memory_space<vmem>>, vector<1x1x64x64xf32>
    %365 = vector.shape_cast %364 : vector<1x1x64x64xf32> to vector<64x64xf32>
    %366 = vector.shape_cast %196 : vector<2x16x64xf32> to vector<32x64xf32>
    %cst_159 = arith.constant dense<0.000000e+00> : vector<32x64xf32>
    %367 = tpu.matmul %366, %363, %cst_159 {dimension_numbers = #tpu.dot_dimension_numbers<[1], [0], [0], [1], [0, 0, 1, 1], [], []>} : vector<32x64xf32>, vector<64x64xf32>, vector<32x64xf32> -> vector<32x64xf32>
    %368 = vector.shape_cast %367 : vector<32x64xf32> to vector<2x16x64xf32>
    %369 = vector.extract_strided_slice %365 {offsets = [0, 0], sizes = [16, 16], strides = [1, 1]} : vector<64x64xf32> to vector<16x16xf32>
    %370 = vector.shape_cast %369 : vector<16x16xf32> to vector<1x16x16xf32>
    %371 = vector.broadcast %370 : vector<1x16x16xf32> to vector<2x16x16xf32>
    %372 = vector.extract_strided_slice %368 {offsets = [0, 0, 0], sizes = [2, 16, 16], strides = [1, 1, 1]} : vector<2x16x64xf32> to vector<2x16x16xf32>
    "tpu.trace_start"() <{level = 10 : i32, message = "nik,nkl->nil"}> : () -> ()
    %cst_160 = arith.constant dense<0.000000e+00> : vector<2x16x16xf32>
    %373 = tpu.matmul %371, %372, %cst_160 {dimension_numbers = #tpu.dot_dimension_numbers<[2], [1], [1], [2], [0, 0, 0, 1, 1, 2], [0], [0]>} : vector<2x16x16xf32>, vector<2x16x16xf32>, vector<2x16x16xf32> -> vector<2x16x16xf32>
    "tpu.trace_stop"() : () -> ()
    %374 = vector.extract_strided_slice %365 {offsets = [16, 16], sizes = [16, 16], strides = [1, 1]} : vector<64x64xf32> to vector<16x16xf32>
    %375 = vector.shape_cast %374 : vector<16x16xf32> to vector<1x16x16xf32>
    %376 = vector.broadcast %375 : vector<1x16x16xf32> to vector<2x16x16xf32>
    %377 = vector.extract_strided_slice %368 {offsets = [0, 0, 16], sizes = [2, 16, 16], strides = [1, 1, 1]} : vector<2x16x64xf32> to vector<2x16x16xf32>
    "tpu.trace_start"() <{level = 10 : i32, message = "nik,nkl->nil"}> : () -> ()
    %cst_161 = arith.constant dense<0.000000e+00> : vector<2x16x16xf32>
    %378 = tpu.matmul %376, %377, %cst_161 {dimension_numbers = #tpu.dot_dimension_numbers<[2], [1], [1], [2], [0, 0, 0, 1, 1, 2], [0], [0]>} : vector<2x16x16xf32>, vector<2x16x16xf32>, vector<2x16x16xf32> -> vector<2x16x16xf32>
    "tpu.trace_stop"() : () -> ()
    %379 = vector.extract_strided_slice %365 {offsets = [32, 32], sizes = [16, 16], strides = [1, 1]} : vector<64x64xf32> to vector<16x16xf32>
    %380 = vector.shape_cast %379 : vector<16x16xf32> to vector<1x16x16xf32>
    %381 = vector.broadcast %380 : vector<1x16x16xf32> to vector<2x16x16xf32>
    %382 = vector.extract_strided_slice %368 {offsets = [0, 0, 32], sizes = [2, 16, 16], strides = [1, 1, 1]} : vector<2x16x64xf32> to vector<2x16x16xf32>
    "tpu.trace_start"() <{level = 10 : i32, message = "nik,nkl->nil"}> : () -> ()
    %cst_162 = arith.constant dense<0.000000e+00> : vector<2x16x16xf32>
    %383 = tpu.matmul %381, %382, %cst_162 {dimension_numbers = #tpu.dot_dimension_numbers<[2], [1], [1], [2], [0, 0, 0, 1, 1, 2], [0], [0]>} : vector<2x16x16xf32>, vector<2x16x16xf32>, vector<2x16x16xf32> -> vector<2x16x16xf32>
    "tpu.trace_stop"() : () -> ()
    %384 = vector.extract_strided_slice %365 {offsets = [48, 48], sizes = [16, 16], strides = [1, 1]} : vector<64x64xf32> to vector<16x16xf32>
    %385 = vector.shape_cast %384 : vector<16x16xf32> to vector<1x16x16xf32>
    %386 = vector.broadcast %385 : vector<1x16x16xf32> to vector<2x16x16xf32>
    %387 = vector.extract_strided_slice %368 {offsets = [0, 0, 48], sizes = [2, 16, 16], strides = [1, 1, 1]} : vector<2x16x64xf32> to vector<2x16x16xf32>
    "tpu.trace_start"() <{level = 10 : i32, message = "nik,nkl->nil"}> : () -> ()
    %cst_163 = arith.constant dense<0.000000e+00> : vector<2x16x16xf32>
    %388 = tpu.matmul %386, %387, %cst_163 {dimension_numbers = #tpu.dot_dimension_numbers<[2], [1], [1], [2], [0, 0, 0, 1, 1, 2], [0], [0]>} : vector<2x16x16xf32>, vector<2x16x16xf32>, vector<2x16x16xf32> -> vector<2x16x16xf32>
    "tpu.trace_stop"() : () -> ()
    %389 = tpu.concatenate %373, %378, %383, %388 in 2 : vector<2x16x16xf32>, vector<2x16x16xf32>, vector<2x16x16xf32>, vector<2x16x16xf32> -> vector<2x16x64xf32>
    %390 = vector.broadcast %331 : f32 to vector<2x16x64xf32>
    %391 = arith.mulf %390, %196 : vector<2x16x64xf32>
    %392 = vector.broadcast %332 : f32 to vector<2x16x64xf32>
    %393 = arith.mulf %392, %361 : vector<2x16x64xf32>
    %394 = arith.addf %391, %393 : vector<2x16x64xf32>
    %395 = vector.broadcast %333 : f32 to vector<2x16x64xf32>
    %396 = arith.mulf %395, %389 : vector<2x16x64xf32>
    %397 = arith.addf %394, %396 : vector<2x16x64xf32>
    %398 = arith.addf %263, %330 : vector<2x16x64xf32>
    %399 = arith.addf %398, %397 : vector<2x16x64xf32>
    %cst_164 = arith.constant 0.333333343 : f32
    %400 = vector.broadcast %cst_164 : f32 to vector<2x16x64xf32>
    %401 = arith.mulf %399, %400 : vector<2x16x64xf32>
    %402 = tpu.concatenate %196, %401 in 2 : vector<2x16x64xf32>, vector<2x16x64xf32> -> vector<2x16x128xf32>
    %c0_165 = arith.constant 0 : index
    %c0_166 = arith.constant 0 : index
    %c0_167 = arith.constant 0 : index
    %403 = vector.load %arg4[%c0_165, %c0_166, %c0_167] : memref<2x16x128xf32, #tpu.memory_space<vmem>>, vector<2x16x128xf32>
    tpu.vector_store %arg4[%c0_165, %c0_166, %c0_167], %402 {strides = array<i32>} : memref<2x16x128xf32, #tpu.memory_space<vmem>>, vector<2x16x128xf32>,
    return
  }
  func.func @transform_0(%arg0: i32) -> i32 {
    %c0_i32 = arith.constant 0 : i32
    %c0_i32_0 = arith.constant 0 : i32
    return %c0_i32 : i32
  }
  func.func @transform_1(%arg0: i32) -> (i32, i32, i32, i32) {
    %c0_i32 = arith.constant 0 : i32
    %c0_i32_0 = arith.constant 0 : i32
    %c0_i32_1 = arith.constant 0 : i32
    %c0_i32_2 = arith.constant 0 : i32
    return %c0_i32, %arg0, %c0_i32_0, %c0_i32_1 : i32, i32, i32, i32
  }
  func.func @transform_2(%arg0: i32) -> (i32, i32, i32, i32) {
    %c0_i32 = arith.constant 0 : i32
    %c0_i32_0 = arith.constant 0 : i32
    %c0_i32_1 = arith.constant 0 : i32
    %c0_i32_2 = arith.constant 0 : i32
    %c0_i32_3 = arith.constant 0 : i32
    return %c0_i32, %c0_i32_0, %c0_i32_1, %c0_i32_2 : i32, i32, i32, i32
  }
  func.func @transform_3(%arg0: i32) -> (i32, i32, i32) {
    %c0_i32 = arith.constant 0 : i32
    %c0_i32_0 = arith.constant 0 : i32
    %c0_i32_1 = arith.constant 0 : i32
    return %arg0, %c0_i32, %c0_i32_0 : i32, i32, i32
  }
}

</mosaic_0001>

<llo_original>
// kernel: tpu_custom_call.1
$region0: #{tpu_custom_call.1}
  #allocation0 [shape = 'u32[]', space=smem, size = 0x4, offset = 0x4, fixed_abs, tag = 'smem constant byte address 0x4 - core index']
  #allocation1 [shape = 'u32[144,128]{1,0:T(1,128)}', space=vmem, size = 0x12000, scoped, tag = 'internal scratch']
  %s0 = inlined_call_operand.hbm [shape: f32[15], index: 0, kind: input, shape index: {}]
  %s1 = inlined_call_operand.hbm [shape: f32[2,2,16,64], index: 1, kind: input, shape index: {}]
  %s2 = inlined_call_operand.hbm [shape: f32[12,2,64,64], index: 2, kind: input, shape index: {}]
  %s3 = inlined_call_operand.hbm [shape: f32[2,16,128], index: 3, kind: output, shape index: {}]
  %s4 = sld [smem:[#allocation0]]
  $region34: #{tpu_custom_call.1} parent=0
    _
  %s6 = ssub.s32 1, %s4
  %s7 = scalar_select 0, %s6, %s4
  $region1: #{tpu_custom_call.1} parent=0
    #allocation2 [shape = 'u8[512]{0}', space=smem, size = 0x200, scoped, tag = 'input window, operand 0, single buffered']
    #allocation3 [shape = 's32[1]{0}', space=sflag, size = 0x4, scoped, tag = 'scoped memory for tpu_custom_call.1']
    #allocation4 [shape = 's32[1]{0}', space=sflag, size = 0x4, scoped, tag = 'scoped memory for tpu_custom_call.1']
    #allocation5 [shape = 's32[1]{0}', space=sflag, size = 0x4, scoped, tag = 'scoped memory for tpu_custom_call.1']
    #allocation6 [shape = 'u8[32768]{0}', space=vmem, size = 0x8000, scoped, tag = 'input window, operand 1, single buffered']
    #allocation7 [shape = 'u8[786432]{0}', space=vmem, size = 0xc0000, scoped, tag = 'input window, operand 2, single buffered']
    #allocation8 [shape = 's32[1]{0}', space=sflag, size = 0x4, scoped, tag = 'scoped memory for tpu_custom_call.1']
    #allocation9 [shape = 'u8[16384]{0}', space=vmem, size = 0x4000, scoped, tag = 'output window, operand 0, single buffered']
    %8 = vsyncpa [#allocation5], 0
    %9 = vsyncpa [#allocation3], 0
    %10 = vsyncpa [#allocation8], 0
    %11 = vsyncpa [#allocation4], 0
    // Predicated region
    $region2: #{tpu_custom_call.1} parent=1 // pred_check
      _
    $region3: #{tpu_custom_call.1} parent=1 // pred_check_branch
      %13 = sbr.rel (0) target = $region5
    $region4: #{tpu_custom_call.1} parent=1 // pred_region
      %s15 = ssub.s32 16, 16
      %16 = vsyncadd [#allocation5], %s15
      %19 = dma.hbm_to_smem %s0, 16, [#allocation2], [#allocation5]
    $region5: #{tpu_custom_call.1} parent=1 // pred_fallthru
      _
    // Predicated region
    $region6: #{tpu_custom_call.1} parent=1 // pred_check
      _
    $region7: #{tpu_custom_call.1} parent=1 // pred_check_branch
      %21 = sbr.rel (0) target = $region9
    $region8: #{tpu_custom_call.1} parent=1 // pred_region
      %s23 = ssub.s32 1024, 1024
      %24 = vsyncadd [#allocation3], %s23
      %s25 = sshll.u32 [#allocation6], 4
      %s26 = int_to_ptr.vmem [resolvable:$true] %s25
      %31 = dma.hbm_to_vmem [thread:$0]  %s1, 1024, %s26, [#allocation3], 128, 128, 8
    $region9: #{tpu_custom_call.1} parent=1 // pred_fallthru
      _
    // Predicated region
    $region10: #{tpu_custom_call.1} parent=1 // pred_check
      _
    $region11: #{tpu_custom_call.1} parent=1 // pred_check_branch
      %33 = sbr.rel (0) target = $region13
    $region12: #{tpu_custom_call.1} parent=1 // pred_region
      %s35 = ssub.s32 24576, 24576
      %36 = vsyncadd [#allocation8], %s35
      %s37 = sshll.u32 [#allocation7], 4
      %s38 = int_to_ptr.vmem [resolvable:$true] %s37
      %43 = dma.hbm_to_vmem [thread:$0]  %s2, 24576, %s38, [#allocation8], 128, 128, 8
    $region13: #{tpu_custom_call.1} parent=1 // pred_fallthru
      _
    // Predicated region
    $region14: #{tpu_custom_call.1} parent=1 // pred_check
      _
    $region15: #{tpu_custom_call.1} parent=1 // pred_check_branch
      %45 = sbr.rel (0) target = $region17
    $region16: #{tpu_custom_call.1} parent=1 // pred_region
      %46 = dma.done [#allocation5], 16
    $region17: #{tpu_custom_call.1} parent=1 // pred_fallthru
      _
    // Predicated region
    $region18: #{tpu_custom_call.1} parent=1 // pred_check
      _
    $region19: #{tpu_custom_call.1} parent=1 // pred_check_branch
      %48 = sbr.rel (0) target = $region21
    $region20: #{tpu_custom_call.1} parent=1 // pred_region
      %49 = dma.done [#allocation3], 1024
    $region21: #{tpu_custom_call.1} parent=1 // pred_fallthru
      _
    // Predicated region
    $region22: #{tpu_custom_call.1} parent=1 // pred_check
      _
    $region23: #{tpu_custom_call.1} parent=1 // pred_check_branch
      %51 = sbr.rel (0) target = $region25
    $region24: #{tpu_custom_call.1} parent=1 // pred_region
      %52 = dma.done [#allocation8], 24576
    $region25: #{tpu_custom_call.1} parent=1 // pred_fallthru
      _
    %53 = sfence
    %v54 = vld [vmem:[#allocation6] sm:$0xff]
    %v55 = vld [vmem:[#allocation6 + $0x8] sm:$0xff]
    %v56 = vld [vmem:[#allocation6 + $0x10] sm:$0xff]
    %v57 = vld [vmem:[#allocation6 + $0x18] sm:$0xff]
    %v58 = vld [vmem:[#allocation7] sm:$0xff]
    %v59 = vld [vmem:[#allocation7 + $0x8] sm:$0xff]
    %v60 = vld [vmem:[#allocation7 + $0x10] sm:$0xff]
    %v61 = vld [vmem:[#allocation7 + $0x18] sm:$0xff]
    %v62 = vld [vmem:[#allocation7 + $0x20] sm:$0xff]
    %v63 = vld [vmem:[#allocation7 + $0x28] sm:$0xff]
    %v64 = vld [vmem:[#allocation7 + $0x30] sm:$0xff]
    %v65 = vld [vmem:[#allocation7 + $0x38] sm:$0xff]
    %s66 = scalar_lea.vmem [#allocation7], 64
    %v67 = vld [vmem:[%s66] sm:$0xff]
    %v68 = vld [vmem:[%s66 + $0x8] sm:$0xff]
    %v69 = vld [vmem:[%s66 + $0x10] sm:$0xff]
    %v70 = vld [vmem:[%s66 + $0x18] sm:$0xff]
    %v71 = vld [vmem:[%s66 + $0x20] sm:$0xff]
    %v72 = vld [vmem:[%s66 + $0x28] sm:$0xff]
    %v73 = vld [vmem:[%s66 + $0x30] sm:$0xff]
    %v74 = vld [vmem:[%s66 + $0x38] sm:$0xff]
    %vm75 = vcmask 523264
    %v77 = vsel %vm75, %v54, 0
    %v80 = vsel %vm75, %v55, 0
    %v83 = vsel %vm75, %v56, 0
    %v86 = vsel %vm75, %v57, 0
    %88 = vmatprep.subr.mxu0 0.0
    %89 = vmatpush1.msra.mxu0 0.0
    %90 = vmatprep.subr.mxu0 0.0
    %91 = vmatpush1.msra.mxu0 0.0
    %92 = vmatprep.subr.mxu0 0.0
    %93 = vmatpush1.msra.mxu0 0.0
    %94 = vmatprep.subr.mxu0 0.0
    %95 = vmatpush1.msra.mxu0 0.0
    %96 = vmatprep.subr.mxu0 0.0
    %97 = vmatpush1.msra.mxu0 0.0
    %98 = vmatprep.subr.mxu0 0.0
    %99 = vmatpush1.msra.mxu0 0.0
    %100 = vmatprep.subr.mxu0 0.0
    %101 = vmatpush1.msra.mxu0 0.0
    %102 = vmatprep.subr.mxu0 0.0
    %103 = vmatpush1.msra.mxu0 0.0
    %104 = vmatprep.subr.mxu0 0.0
    %105 = vmatpush1.msra.mxu0 %v65
    %106 = vmatprep.subr.mxu0 0.0
    %107 = vmatpush1.msra.mxu0 %v64
    %108 = vmatprep.subr.mxu0 0.0
    %109 = vmatpush1.msra.mxu0 %v63
    %110 = vmatprep.subr.mxu0 0.0
    %111 = vmatpush1.msra.mxu0 %v62
    %112 = vmatprep.subr.mxu0 0.0
    %113 = vmatpush1.msra.mxu0 %v61
    %114 = vmatprep.subr.mxu0 0.0
    %115 = vmatpush1.msra.mxu0 %v60
    %116 = vmatprep.subr.mxu0 0.0
    %117 = vmatpush1.msra.mxu0 %v59
    %118 = vmatprep.subr.mxu0 0.0
    %119 = vmatpush1.msra.mxu0 %v58
    %120 = vmatprep.subr.mxu0 0.0
    %121 = vmatpush2.msra.mxu0 0.0
    %122 = vmatprep.subr.mxu0 0.0
    %123 = vmatpush2.msra.mxu0 0.0
    %124 = vmatprep.subr.mxu0 0.0
    %125 = vmatpush2.msra.mxu0 0.0
    %126 = vmatprep.subr.mxu0 0.0
    %127 = vmatpush2.msra.mxu0 0.0
    %128 = vmatprep.subr.mxu0 0.0
    %129 = vmatpush2.msra.mxu0 0.0
    %130 = vmatprep.subr.mxu0 0.0
    %131 = vmatpush2.msra.mxu0 0.0
    %132 = vmatprep.subr.mxu0 0.0
    %133 = vmatpush2.msra.mxu0 0.0
    %134 = vmatprep.subr.mxu0 0.0
    %135 = vmatpush2.msra.mxu0 0.0
    %136 = vmatprep.subr.mxu0 0.0
    %137 = vmatpush2.msra.mxu0 0.0
    %138 = vmatprep.subr.mxu0 0.0
    %139 = vmatpush2.msra.mxu0 0.0
    %140 = vmatprep.subr.mxu0 0.0
    %141 = vmatpush2.msra.mxu0 0.0
    %142 = vmatprep.subr.mxu0 0.0
    %143 = vmatpush2.msra.mxu0 0.0
    %144 = vmatprep.subr.mxu0 0.0
    %145 = vmatpush2.msra.mxu0 0.0
    %146 = vmatprep.subr.mxu0 0.0
    %147 = vmatpush2.msra.mxu0 0.0
    %148 = vmatprep.subr.mxu0 0.0
    %149 = vmatpush2.msra.mxu0 0.0
    %150 = vmatprep.subr.mxu0 0.0
    %151 = vmatpush2.msra.mxu0 0.0
    %152 = vmatprep.mubr.f32.mxu0 0.0
    %153 = vmatmul.mubr.f32.gmra.mxu0 %v77
    %v154 = vpop.f32.mrf.mxu0
    %v155 = vadd.f32 0.0, %v154
    %v156 = vpop.f32.mrf.mxu0
    %157 = vmatprep.mubr.f32.mxu0 0.0
    %158 = vmatmul.mubr.f32.gmra.mxu0 %v80
    %v159 = vpop.f32.mrf.mxu0
    %v160 = vadd.f32 0.0, %v159
    %v161 = vpop.f32.mrf.mxu0
    %162 = vmatprep.mubr.f32.mxu0 0.0
    %163 = vmatmul.mubr.f32.gmra.mxu0 %v83
    %v164 = vpop.f32.mrf.mxu0
    %v165 = vadd.f32 0.0, %v164
    %v166 = vpop.f32.mrf.mxu0
    %167 = vmatprep.mubr.f32.mxu0 0.0
    %168 = vmatmul.mubr.f32.gmra.mxu0 %v86
    %v169 = vpop.f32.mrf.mxu0
    %v170 = vadd.f32 0.0, %v169
    %v171 = vpop.f32.mrf.mxu0
    %172 = vdwg.mxu0
    %vm173 = vcmask 130048
    %v175 = vsel %vm173, %v67, 0
    %v178 = vsel %vm173, %v68, 0
    %180 = vmatprep.subr.mxu0 0.0
    %181 = vmatpush1.msra.mxu0 0.0
    %182 = vmatprep.subr.mxu0 0.0
    %183 = vmatpush1.msra.mxu0 0.0
    %184 = vmatprep.subr.mxu0 0.0
    %185 = vmatpush1.msra.mxu0 0.0
    %186 = vmatprep.subr.mxu0 0.0
    %187 = vmatpush1.msra.mxu0 0.0
    %188 = vmatprep.subr.mxu0 0.0
    %189 = vmatpush1.msra.mxu0 0.0
    %190 = vmatprep.subr.mxu0 0.0
    %191 = vmatpush1.msra.mxu0 0.0
    %192 = vmatprep.subr.mxu0 0.0
    %193 = vmatpush1.msra.mxu0 0.0
    %194 = vmatprep.subr.mxu0 0.0
    %195 = vmatpush1.msra.mxu0 0.0
    %196 = vmatprep.subr.mxu0 0.0
    %197 = vmatpush1.msra.mxu0 0.0
    %198 = vmatprep.subr.mxu0 0.0
    %199 = vmatpush1.msra.mxu0 0.0
    %200 = vmatprep.subr.mxu0 0.0
    %201 = vmatpush1.msra.mxu0 0.0
    %202 = vmatprep.subr.mxu0 0.0
    %203 = vmatpush1.msra.mxu0 0.0
    %204 = vmatprep.subr.mxu0 0.0
    %205 = vmatpush1.msra.mxu0 0.0
    %206 = vmatprep.subr.mxu0 0.0
    %207 = vmatpush1.msra.mxu0 0.0
    %208 = vmatprep.subr.mxu0 0.0
    %209 = vmatpush1.msra.mxu0 %v160
    %210 = vmatprep.subr.mxu0 0.0
    %211 = vmatpush1.msra.mxu0 %v155
    %212 = vmatprep.subr.mxu0 0.0
    %213 = vmatpush2.msra.mxu0 0.0
    %214 = vmatprep.subr.mxu0 0.0
    %215 = vmatpush2.msra.mxu0 0.0
    %216 = vmatprep.subr.mxu0 0.0
    %217 = vmatpush2.msra.mxu0 0.0
    %218 = vmatprep.subr.mxu0 0.0
    %219 = vmatpush2.msra.mxu0 0.0
    %220 = vmatprep.subr.mxu0 0.0
    %221 = vmatpush2.msra.mxu0 0.0
    %222 = vmatprep.subr.mxu0 0.0
    %223 = vmatpush2.msra.mxu0 0.0
    %224 = vmatprep.subr.mxu0 0.0
    %225 = vmatpush2.msra.mxu0 0.0
    %226 = vmatprep.subr.mxu0 0.0
    %227 = vmatpush2.msra.mxu0 0.0
    %228 = vmatprep.subr.mxu0 0.0
    %229 = vmatpush2.msra.mxu0 0.0
    %230 = vmatprep.subr.mxu0 0.0
    %231 = vmatpush2.msra.mxu0 0.0
    %232 = vmatprep.subr.mxu0 0.0
    %233 = vmatpush2.msra.mxu0 0.0
    %234 = vmatprep.subr.mxu0 0.0
    %235 = vmatpush2.msra.mxu0 0.0
    %236 = vmatprep.subr.mxu0 0.0
    %237 = vmatpush2.msra.mxu0 0.0
    %238 = vmatprep.subr.mxu0 0.0
    %239 = vmatpush2.msra.mxu0 0.0
    %240 = vmatprep.subr.mxu0 0.0
    %241 = vmatpush2.msra.mxu0 0.0
    %242 = vmatprep.subr.mxu0 0.0
    %243 = vmatpush2.msra.mxu0 0.0
    %244 = vmatprep.mubr.f32.mxu0 0.0
    %245 = vmatmul.mubr.f32.gmra.mxu0 %v175
    %v246 = vpop.f32.mrf.mxu0
    %v247 = vadd.f32 0.0, %v246
    %v248 = vpop.f32.mrf.mxu0
    %249 = vmatprep.mubr.f32.mxu0 0.0
    %250 = vmatmul.mubr.f32.gmra.mxu0 %v178
    %v251 = vpop.f32.mrf.mxu0
    %v252 = vadd.f32 0.0, %v251
    %v253 = vpop.f32.mrf.mxu0
    %254 = vdwg.mxu0
    %255 = vmatprep.subr.mxu0 0.0
    %256 = vmatpush1.msra.mxu0 0.0
    %257 = vmatprep.subr.mxu0 0.0
    %258 = vmatpush1.msra.mxu0 0.0
    %259 = vmatprep.subr.mxu0 0.0
    %260 = vmatpush1.msra.mxu0 0.0
    %261 = vmatprep.subr.mxu0 0.0
    %262 = vmatpush1.msra.mxu0 0.0
    %263 = vmatprep.subr.mxu0 0.0
    %264 = vmatpush1.msra.mxu0 0.0
    %265 = vmatprep.subr.mxu0 0.0
    %266 = vmatpush1.msra.mxu0 0.0
    %267 = vmatprep.subr.mxu0 0.0
    %268 = vmatpush1.msra.mxu0 0.0
    %269 = vmatprep.subr.mxu0 0.0
    %270 = vmatpush1.msra.mxu0 0.0
    %271 = vmatprep.subr.mxu0 0.0
    %272 = vmatpush1.msra.mxu0 0.0
    %273 = vmatprep.subr.mxu0 0.0
    %274 = vmatpush1.msra.mxu0 0.0
    %275 = vmatprep.subr.mxu0 0.0
    %276 = vmatpush1.msra.mxu0 0.0
    %277 = vmatprep.subr.mxu0 0.0
    %278 = vmatpush1.msra.mxu0 0.0
    %279 = vmatprep.subr.mxu0 0.0
    %280 = vmatpush1.msra.mxu0 0.0
    %281 = vmatprep.subr.mxu0 0.0
    %282 = vmatpush1.msra.mxu0 0.0
    %283 = vmatprep.subr.mxu0 0.0
    %284 = vmatpush1.msra.mxu0 %v170
    %285 = vmatprep.subr.mxu0 0.0
    %286 = vmatpush1.msra.mxu0 %v165
    %287 = vmatprep.subr.mxu0 0.0
    %288 = vmatpush2.msra.mxu0 0.0
    %289 = vmatprep.subr.mxu0 0.0
    %290 = vmatpush2.msra.mxu0 0.0
    %291 = vmatprep.subr.mxu0 0.0
    %292 = vmatpush2.msra.mxu0 0.0
    %293 = vmatprep.subr.mxu0 0.0
    %294 = vmatpush2.msra.mxu0 0.0
    %295 = vmatprep.subr.mxu0 0.0
    %296 = vmatpush2.msra.mxu0 0.0
    %297 = vmatprep.subr.mxu0 0.0
    %298 = vmatpush2.msra.mxu0 0.0
    %299 = vmatprep.subr.mxu0 0.0
    %300 = vmatpush2.msra.mxu0 0.0
    %301 = vmatprep.subr.mxu0 0.0
    %302 = vmatpush2.msra.mxu0 0.0
    %303 = vmatprep.subr.mxu0 0.0
    %304 = vmatpush2.msra.mxu0 0.0
    %305 = vmatprep.subr.mxu0 0.0
    %306 = vmatpush2.msra.mxu0 0.0
    %307 = vmatprep.subr.mxu0 0.0
    %308 = vmatpush2.msra.mxu0 0.0
    %309 = vmatprep.subr.mxu0 0.0
    %310 = vmatpush2.msra.mxu0 0.0
    %311 = vmatprep.subr.mxu0 0.0
    %312 = vmatpush2.msra.mxu0 0.0
    %313 = vmatprep.subr.mxu0 0.0
    %314 = vmatpush2.msra.mxu0 0.0
    %315 = vmatprep.subr.mxu0 0.0
    %316 = vmatpush2.msra.mxu0 0.0
    %317 = vmatprep.subr.mxu0 0.0
    %318 = vmatpush2.msra.mxu0 0.0
    %319 = vmatprep.mubr.f32.mxu0 0.0
    %320 = vmatmul.mubr.f32.gmra.mxu0 %v175
    %v321 = vpop.f32.mrf.mxu0
    %v322 = vadd.f32 0.0, %v321
    %v323 = vpop.f32.mrf.mxu0
    %324 = vmatprep.mubr.f32.mxu0 0.0
    %325 = vmatmul.mubr.f32.gmra.mxu0 %v178
    %v326 = vpop.f32.mrf.mxu0
    %v327 = vadd.f32 0.0, %v326
    %v328 = vpop.f32.mrf.mxu0
    %329 = vdwg.mxu0
    %332 = vrot.lane.b32.xlu0 %v69, 112
    %v333 = vpop.permute.xlu0 %332
    %334 = vrot.lane.b32.xlu0 %v70, 112
    %v335 = vpop.permute.xlu0 %334
    %338 = vrot.lane.b32.xlu0 %v155, 112
    %v339 = vpop.permute.xlu0 %338
    %340 = vrot.lane.b32.xlu0 %v160, 112
    %v341 = vpop.permute.xlu0 %340
    %v344 = vsel %vm173, %v333, 0
    %v346 = vsel %vm173, %v335, 0
    %348 = vmatprep.subr.mxu0 0.0
    %349 = vmatpush1.msra.mxu0 0.0
    %350 = vmatprep.subr.mxu0 0.0
    %351 = vmatpush1.msra.mxu0 0.0
    %352 = vmatprep.subr.mxu0 0.0
    %353 = vmatpush1.msra.mxu0 0.0
    %354 = vmatprep.subr.mxu0 0.0
    %355 = vmatpush1.msra.mxu0 0.0
    %356 = vmatprep.subr.mxu0 0.0
    %357 = vmatpush1.msra.mxu0 0.0
    %358 = vmatprep.subr.mxu0 0.0
    %359 = vmatpush1.msra.mxu0 0.0
    %360 = vmatprep.subr.mxu0 0.0
    %361 = vmatpush1.msra.mxu0 0.0
    %362 = vmatprep.subr.mxu0 0.0
    %363 = vmatpush1.msra.mxu0 0.0
    %364 = vmatprep.subr.mxu0 0.0
    %365 = vmatpush1.msra.mxu0 0.0
    %366 = vmatprep.subr.mxu0 0.0
    %367 = vmatpush1.msra.mxu0 0.0
    %368 = vmatprep.subr.mxu0 0.0
    %369 = vmatpush1.msra.mxu0 0.0
    %370 = vmatprep.subr.mxu0 0.0
    %371 = vmatpush1.msra.mxu0 0.0
    %372 = vmatprep.subr.mxu0 0.0
    %373 = vmatpush1.msra.mxu0 0.0
    %374 = vmatprep.subr.mxu0 0.0
    %375 = vmatpush1.msra.mxu0 0.0
    %376 = vmatprep.subr.mxu0 0.0
    %377 = vmatpush1.msra.mxu0 %v341
    %378 = vmatprep.subr.mxu0 0.0
    %379 = vmatpush1.msra.mxu0 %v339
    %380 = vmatprep.subr.mxu0 0.0
    %381 = vmatpush2.msra.mxu0 0.0
    %382 = vmatprep.subr.mxu0 0.0
    %383 = vmatpush2.msra.mxu0 0.0
    %384 = vmatprep.subr.mxu0 0.0
    %385 = vmatpush2.msra.mxu0 0.0
    %386 = vmatprep.subr.mxu0 0.0
    %387 = vmatpush2.msra.mxu0 0.0
    %388 = vmatprep.subr.mxu0 0.0
    %389 = vmatpush2.msra.mxu0 0.0
    %390 = vmatprep.subr.mxu0 0.0
    %391 = vmatpush2.msra.mxu0 0.0
    %392 = vmatprep.subr.mxu0 0.0
    %393 = vmatpush2.msra.mxu0 0.0
    %394 = vmatprep.subr.mxu0 0.0
    %395 = vmatpush2.msra.mxu0 0.0
    %396 = vmatprep.subr.mxu0 0.0
    %397 = vmatpush2.msra.mxu0 0.0
    %398 = vmatprep.subr.mxu0 0.0
    %399 = vmatpush2.msra.mxu0 0.0
    %400 = vmatprep.subr.mxu0 0.0
    %401 = vmatpush2.msra.mxu0 0.0
    %402 = vmatprep.subr.mxu0 0.0
    %403 = vmatpush2.msra.mxu0 0.0
    %404 = vmatprep.subr.mxu0 0.0
    %405 = vmatpush2.msra.mxu0 0.0
    %406 = vmatprep.subr.mxu0 0.0
    %407 = vmatpush2.msra.mxu0 0.0
    %408 = vmatprep.subr.mxu0 0.0
    %409 = vmatpush2.msra.mxu0 0.0
    %410 = vmatprep.subr.mxu0 0.0
    %411 = vmatpush2.msra.mxu0 0.0
    %412 = vmatprep.mubr.f32.mxu0 0.0
    %413 = vmatmul.mubr.f32.gmra.mxu0 %v344
    %v414 = vpop.f32.mrf.mxu0
    %v415 = vadd.f32 0.0, %v414
    %v416 = vpop.f32.mrf.mxu0
    %417 = vmatprep.mubr.f32.mxu0 0.0
    %418 = vmatmul.mubr.f32.gmra.mxu0 %v346
    %v419 = vpop.f32.mrf.mxu0
    %v420 = vadd.f32 0.0, %v419
    %v421 = vpop.f32.mrf.mxu0
    %422 = vdwg.mxu0
    %425 = vrot.lane.b32.xlu0 %v165, 112
    %v426 = vpop.permute.xlu0 %425
    %427 = vrot.lane.b32.xlu0 %v170, 112
    %v428 = vpop.permute.xlu0 %427
    %431 = vmatprep.subr.mxu0 0.0
    %432 = vmatpush1.msra.mxu0 0.0
    %433 = vmatprep.subr.mxu0 0.0
    %434 = vmatpush1.msra.mxu0 0.0
    %435 = vmatprep.subr.mxu0 0.0
    %436 = vmatpush1.msra.mxu0 0.0
    %437 = vmatprep.subr.mxu0 0.0
    %438 = vmatpush1.msra.mxu0 0.0
    %439 = vmatprep.subr.mxu0 0.0
    %440 = vmatpush1.msra.mxu0 0.0
    %441 = vmatprep.subr.mxu0 0.0
    %442 = vmatpush1.msra.mxu0 0.0
    %443 = vmatprep.subr.mxu0 0.0
    %444 = vmatpush1.msra.mxu0 0.0
    %445 = vmatprep.subr.mxu0 0.0
    %446 = vmatpush1.msra.mxu0 0.0
    %447 = vmatprep.subr.mxu0 0.0
    %448 = vmatpush1.msra.mxu0 0.0
    %449 = vmatprep.subr.mxu0 0.0
    %450 = vmatpush1.msra.mxu0 0.0
    %451 = vmatprep.subr.mxu0 0.0
    %452 = vmatpush1.msra.mxu0 0.0
    %453 = vmatprep.subr.mxu0 0.0
    %454 = vmatpush1.msra.mxu0 0.0
    %455 = vmatprep.subr.mxu0 0.0
    %456 = vmatpush1.msra.mxu0 0.0
    %457 = vmatprep.subr.mxu0 0.0
    %458 = vmatpush1.msra.mxu0 0.0
    %459 = vmatprep.subr.mxu0 0.0
    %460 = vmatpush1.msra.mxu0 %v428
    %461 = vmatprep.subr.mxu0 0.0
    %462 = vmatpush1.msra.mxu0 %v426
    %463 = vmatprep.subr.mxu0 0.0
    %464 = vmatpush2.msra.mxu0 0.0
    %465 = vmatprep.subr.mxu0 0.0
    %466 = vmatpush2.msra.mxu0 0.0
    %467 = vmatprep.subr.mxu0 0.0
    %468 = vmatpush2.msra.mxu0 0.0
    %469 = vmatprep.subr.mxu0 0.0
    %470 = vmatpush2.msra.mxu0 0.0
    %471 = vmatprep.subr.mxu0 0.0
    %472 = vmatpush2.msra.mxu0 0.0
    %473 = vmatprep.subr.mxu0 0.0
    %474 = vmatpush2.msra.mxu0 0.0
    %475 = vmatprep.subr.mxu0 0.0
    %476 = vmatpush2.msra.mxu0 0.0
    %477 = vmatprep.subr.mxu0 0.0
    %478 = vmatpush2.msra.mxu0 0.0
    %479 = vmatprep.subr.mxu0 0.0
    %480 = vmatpush2.msra.mxu0 0.0
    %481 = vmatprep.subr.mxu0 0.0
    %482 = vmatpush2.msra.mxu0 0.0
    %483 = vmatprep.subr.mxu0 0.0
    %484 = vmatpush2.msra.mxu0 0.0
    %485 = vmatprep.subr.mxu0 0.0
    %486 = vmatpush2.msra.mxu0 0.0
    %487 = vmatprep.subr.mxu0 0.0
    %488 = vmatpush2.msra.mxu0 0.0
    %489 = vmatprep.subr.mxu0 0.0
    %490 = vmatpush2.msra.mxu0 0.0
    %491 = vmatprep.subr.mxu0 0.0
    %492 = vmatpush2.msra.mxu0 0.0
    %493 = vmatprep.subr.mxu0 0.0
    %494 = vmatpush2.msra.mxu0 0.0
    %495 = vmatprep.mubr.f32.mxu0 0.0
    %496 = vmatmul.mubr.f32.gmra.mxu0 %v344
    %v497 = vpop.f32.mrf.mxu0
    %v498 = vadd.f32 0.0, %v497
    %v499 = vpop.f32.mrf.mxu0
    %500 = vmatprep.mubr.f32.mxu0 0.0
    %501 = vmatmul.mubr.f32.gmra.mxu0 %v346
    %v502 = vpop.f32.mrf.mxu0
    %v503 = vadd.f32 0.0, %v502
    %v504 = vpop.f32.mrf.mxu0
    %505 = vdwg.mxu0
    %508 = vrot.lane.b32.xlu0 %v71, 96
    %v509 = vpop.permute.xlu0 %508
    %510 = vrot.lane.b32.xlu0 %v72, 96
    %v511 = vpop.permute.xlu0 %510
    %512 = vrot.lane.b32.xlu0 %v155, 96
    %v513 = vpop.permute.xlu0 %512
    %514 = vrot.lane.b32.xlu0 %v160, 96
    %v515 = vpop.permute.xlu0 %514
    %v518 = vsel %vm173, %v509, 0
    %v520 = vsel %vm173, %v511, 0
    %522 = vmatprep.subr.mxu0 0.0
    %523 = vmatpush1.msra.mxu0 0.0
    %524 = vmatprep.subr.mxu0 0.0
    %525 = vmatpush1.msra.mxu0 0.0
    %526 = vmatprep.subr.mxu0 0.0
    %527 = vmatpush1.msra.mxu0 0.0
    %528 = vmatprep.subr.mxu0 0.0
    %529 = vmatpush1.msra.mxu0 0.0
    %530 = vmatprep.subr.mxu0 0.0
    %531 = vmatpush1.msra.mxu0 0.0
    %532 = vmatprep.subr.mxu0 0.0
    %533 = vmatpush1.msra.mxu0 0.0
    %534 = vmatprep.subr.mxu0 0.0
    %535 = vmatpush1.msra.mxu0 0.0
    %536 = vmatprep.subr.mxu0 0.0
    %537 = vmatpush1.msra.mxu0 0.0
    %538 = vmatprep.subr.mxu0 0.0
    %539 = vmatpush1.msra.mxu0 0.0
    %540 = vmatprep.subr.mxu0 0.0
    %541 = vmatpush1.msra.mxu0 0.0
    %542 = vmatprep.subr.mxu0 0.0
    %543 = vmatpush1.msra.mxu0 0.0
    %544 = vmatprep.subr.mxu0 0.0
    %545 = vmatpush1.msra.mxu0 0.0
    %546 = vmatprep.subr.mxu0 0.0
    %547 = vmatpush1.msra.mxu0 0.0
    %548 = vmatprep.subr.mxu0 0.0
    %549 = vmatpush1.msra.mxu0 0.0
    %550 = vmatprep.subr.mxu0 0.0
    %551 = vmatpush1.msra.mxu0 %v515
    %552 = vmatprep.subr.mxu0 0.0
    %553 = vmatpush1.msra.mxu0 %v513
    %554 = vmatprep.subr.mxu0 0.0
    %555 = vmatpush2.msra.mxu0 0.0
    %556 = vmatprep.subr.mxu0 0.0
    %557 = vmatpush2.msra.mxu0 0.0
    %558 = vmatprep.subr.mxu0 0.0
    %559 = vmatpush2.msra.mxu0 0.0
    %560 = vmatprep.subr.mxu0 0.0
    %561 = vmatpush2.msra.mxu0 0.0
    %562 = vmatprep.subr.mxu0 0.0
    %563 = vmatpush2.msra.mxu0 0.0
    %564 = vmatprep.subr.mxu0 0.0
    %565 = vmatpush2.msra.mxu0 0.0
    %566 = vmatprep.subr.mxu0 0.0
    %567 = vmatpush2.msra.mxu0 0.0
    %568 = vmatprep.subr.mxu0 0.0
    %569 = vmatpush2.msra.mxu0 0.0
    %570 = vmatprep.subr.mxu0 0.0
    %571 = vmatpush2.msra.mxu0 0.0
    %572 = vmatprep.subr.mxu0 0.0
    %573 = vmatpush2.msra.mxu0 0.0
    %574 = vmatprep.subr.mxu0 0.0
    %575 = vmatpush2.msra.mxu0 0.0
    %576 = vmatprep.subr.mxu0 0.0
    %577 = vmatpush2.msra.mxu0 0.0
    %578 = vmatprep.subr.mxu0 0.0
    %579 = vmatpush2.msra.mxu0 0.0
    %580 = vmatprep.subr.mxu0 0.0
    %581 = vmatpush2.msra.mxu0 0.0
    %582 = vmatprep.subr.mxu0 0.0
    %583 = vmatpush2.msra.mxu0 0.0
    %584 = vmatprep.subr.mxu0 0.0
    %585 = vmatpush2.msra.mxu0 0.0
    %586 = vmatprep.mubr.f32.mxu0 0.0
    %587 = vmatmul.mubr.f32.gmra.mxu0 %v518
    %v588 = vpop.f32.mrf.mxu0
    %v589 = vadd.f32 0.0, %v588
    %v590 = vpop.f32.mrf.mxu0
    %591 = vmatprep.mubr.f32.mxu0 0.0
    %592 = vmatmul.mubr.f32.gmra.mxu0 %v520
    %v593 = vpop.f32.mrf.mxu0
    %v594 = vadd.f32 0.0, %v593
    %v595 = vpop.f32.mrf.mxu0
    %596 = vdwg.mxu0
    %597 = vrot.lane.b32.xlu0 %v165, 96
    %v598 = vpop.permute.xlu0 %597
    %599 = vrot.lane.b32.xlu0 %v170, 96
    %v600 = vpop.permute.xlu0 %599
    %603 = vmatprep.subr.mxu0 0.0
    %604 = vmatpush1.msra.mxu0 0.0
    %605 = vmatprep.subr.mxu0 0.0
    %606 = vmatpush1.msra.mxu0 0.0
    %607 = vmatprep.subr.mxu0 0.0
    %608 = vmatpush1.msra.mxu0 0.0
    %609 = vmatprep.subr.mxu0 0.0
    %610 = vmatpush1.msra.mxu0 0.0
    %611 = vmatprep.subr.mxu0 0.0
    %612 = vmatpush1.msra.mxu0 0.0
    %613 = vmatprep.subr.mxu0 0.0
    %614 = vmatpush1.msra.mxu0 0.0
    %615 = vmatprep.subr.mxu0 0.0
    %616 = vmatpush1.msra.mxu0 0.0
    %617 = vmatprep.subr.mxu0 0.0
    %618 = vmatpush1.msra.mxu0 0.0
    %619 = vmatprep.subr.mxu0 0.0
    %620 = vmatpush1.msra.mxu0 0.0
    %621 = vmatprep.subr.mxu0 0.0
    %622 = vmatpush1.msra.mxu0 0.0
    %623 = vmatprep.subr.mxu0 0.0
    %624 = vmatpush1.msra.mxu0 0.0
    %625 = vmatprep.subr.mxu0 0.0
    %626 = vmatpush1.msra.mxu0 0.0
    %627 = vmatprep.subr.mxu0 0.0
    %628 = vmatpush1.msra.mxu0 0.0
    %629 = vmatprep.subr.mxu0 0.0
    %630 = vmatpush1.msra.mxu0 0.0
    %631 = vmatprep.subr.mxu0 0.0
    %632 = vmatpush1.msra.mxu0 %v600
    %633 = vmatprep.subr.mxu0 0.0
    %634 = vmatpush1.msra.mxu0 %v598
    %635 = vmatprep.subr.mxu0 0.0
    %636 = vmatpush2.msra.mxu0 0.0
    %637 = vmatprep.subr.mxu0 0.0
    %638 = vmatpush2.msra.mxu0 0.0
    %639 = vmatprep.subr.mxu0 0.0
    %640 = vmatpush2.msra.mxu0 0.0
    %641 = vmatprep.subr.mxu0 0.0
    %642 = vmatpush2.msra.mxu0 0.0
    %643 = vmatprep.subr.mxu0 0.0
    %644 = vmatpush2.msra.mxu0 0.0
    %645 = vmatprep.subr.mxu0 0.0
    %646 = vmatpush2.msra.mxu0 0.0
    %647 = vmatprep.subr.mxu0 0.0
    %648 = vmatpush2.msra.mxu0 0.0
    %649 = vmatprep.subr.mxu0 0.0
    %650 = vmatpush2.msra.mxu0 0.0
    %651 = vmatprep.subr.mxu0 0.0
    %652 = vmatpush2.msra.mxu0 0.0
    %653 = vmatprep.subr.mxu0 0.0
    %654 = vmatpush2.msra.mxu0 0.0
    %655 = vmatprep.subr.mxu0 0.0
    %656 = vmatpush2.msra.mxu0 0.0
    %657 = vmatprep.subr.mxu0 0.0
    %658 = vmatpush2.msra.mxu0 0.0
    %659 = vmatprep.subr.mxu0 0.0
    %660 = vmatpush2.msra.mxu0 0.0
    %661 = vmatprep.subr.mxu0 0.0
    %662 = vmatpush2.msra.mxu0 0.0
    %663 = vmatprep.subr.mxu0 0.0
    %664 = vmatpush2.msra.mxu0 0.0
    %665 = vmatprep.subr.mxu0 0.0
    %666 = vmatpush2.msra.mxu0 0.0
    %667 = vmatprep.mubr.f32.mxu0 0.0
    %668 = vmatmul.mubr.f32.gmra.mxu0 %v518
    %v669 = vpop.f32.mrf.mxu0
    %v670 = vadd.f32 0.0, %v669
    %v671 = vpop.f32.mrf.mxu0
    %672 = vmatprep.mubr.f32.mxu0 0.0
    %673 = vmatmul.mubr.f32.gmra.mxu0 %v520
    %v674 = vpop.f32.mrf.mxu0
    %v675 = vadd.f32 0.0, %v674
    %v676 = vpop.f32.mrf.mxu0
    %677 = vdwg.mxu0
    %680 = vrot.lane.b32.xlu0 %v73, 80
    %v681 = vpop.permute.xlu0 %680
    %682 = vrot.lane.b32.xlu0 %v74, 80
    %v683 = vpop.permute.xlu0 %682
    %684 = vrot.lane.b32.xlu0 %v155, 80
    %v685 = vpop.permute.xlu0 %684
    %686 = vrot.lane.b32.xlu0 %v160, 80
    %v687 = vpop.permute.xlu0 %686
    %v690 = vsel %vm173, %v681, 0
    %v692 = vsel %vm173, %v683, 0
    %694 = vmatprep.subr.mxu0 0.0
    %695 = vmatpush1.msra.mxu0 0.0
    %696 = vmatprep.subr.mxu0 0.0
    %697 = vmatpush1.msra.mxu0 0.0
    %698 = vmatprep.subr.mxu0 0.0
    %699 = vmatpush1.msra.mxu0 0.0
    %700 = vmatprep.subr.mxu0 0.0
    %701 = vmatpush1.msra.mxu0 0.0
    %702 = vmatprep.subr.mxu0 0.0
    %703 = vmatpush1.msra.mxu0 0.0
    %704 = vmatprep.subr.mxu0 0.0
    %705 = vmatpush1.msra.mxu0 0.0
    %706 = vmatprep.subr.mxu0 0.0
    %707 = vmatpush1.msra.mxu0 0.0
    %708 = vmatprep.subr.mxu0 0.0
    %709 = vmatpush1.msra.mxu0 0.0
    %710 = vmatprep.subr.mxu0 0.0
    %711 = vmatpush1.msra.mxu0 0.0
    %712 = vmatprep.subr.mxu0 0.0
    %713 = vmatpush1.msra.mxu0 0.0
    %714 = vmatprep.subr.mxu0 0.0
    %715 = vmatpush1.msra.mxu0 0.0
    %716 = vmatprep.subr.mxu0 0.0
    %717 = vmatpush1.msra.mxu0 0.0
    %718 = vmatprep.subr.mxu0 0.0
    %719 = vmatpush1.msra.mxu0 0.0
    %720 = vmatprep.subr.mxu0 0.0
    %721 = vmatpush1.msra.mxu0 0.0
    %722 = vmatprep.subr.mxu0 0.0
    %723 = vmatpush1.msra.mxu0 %v687
    %724 = vmatprep.subr.mxu0 0.0
    %725 = vmatpush1.msra.mxu0 %v685
    %726 = vmatprep.subr.mxu0 0.0
    %727 = vmatpush2.msra.mxu0 0.0
    %728 = vmatprep.subr.mxu0 0.0
    %729 = vmatpush2.msra.mxu0 0.0
    %730 = vmatprep.subr.mxu0 0.0
    %731 = vmatpush2.msra.mxu0 0.0
    %732 = vmatprep.subr.mxu0 0.0
    %733 = vmatpush2.msra.mxu0 0.0
    %734 = vmatprep.subr.mxu0 0.0
    %735 = vmatpush2.msra.mxu0 0.0
    %736 = vmatprep.subr.mxu0 0.0
    %737 = vmatpush2.msra.mxu0 0.0
    %738 = vmatprep.subr.mxu0 0.0
    %739 = vmatpush2.msra.mxu0 0.0
    %740 = vmatprep.subr.mxu0 0.0
    %741 = vmatpush2.msra.mxu0 0.0
    %742 = vmatprep.subr.mxu0 0.0
    %743 = vmatpush2.msra.mxu0 0.0
    %744 = vmatprep.subr.mxu0 0.0
    %745 = vmatpush2.msra.mxu0 0.0
    %746 = vmatprep.subr.mxu0 0.0
    %747 = vmatpush2.msra.mxu0 0.0
    %748 = vmatprep.subr.mxu0 0.0
    %749 = vmatpush2.msra.mxu0 0.0
    %750 = vmatprep.subr.mxu0 0.0
    %751 = vmatpush2.msra.mxu0 0.0
    %752 = vmatprep.subr.mxu0 0.0
    %753 = vmatpush2.msra.mxu0 0.0
    %754 = vmatprep.subr.mxu0 0.0
    %755 = vmatpush2.msra.mxu0 0.0
    %756 = vmatprep.subr.mxu0 0.0
    %757 = vmatpush2.msra.mxu0 0.0
    %758 = vmatprep.mubr.f32.mxu0 0.0
    %759 = vmatmul.mubr.f32.gmra.mxu0 %v690
    %v760 = vpop.f32.mrf.mxu0
    %v761 = vadd.f32 0.0, %v760
    %v762 = vpop.f32.mrf.mxu0
    %763 = vmatprep.mubr.f32.mxu0 0.0
    %764 = vmatmul.mubr.f32.gmra.mxu0 %v692
    %v765 = vpop.f32.mrf.mxu0
    %v766 = vadd.f32 0.0, %v765
    %v767 = vpop.f32.mrf.mxu0
    %768 = vdwg.mxu0
    %769 = vrot.lane.b32.xlu0 %v165, 80
    %v770 = vpop.permute.xlu0 %769
    %771 = vrot.lane.b32.xlu0 %v170, 80
    %v772 = vpop.permute.xlu0 %771
    %775 = vmatprep.subr.mxu0 0.0
    %776 = vmatpush1.msra.mxu0 0.0
    %777 = vmatprep.subr.mxu0 0.0
    %778 = vmatpush1.msra.mxu0 0.0
    %779 = vmatprep.subr.mxu0 0.0
    %780 = vmatpush1.msra.mxu0 0.0
    %781 = vmatprep.subr.mxu0 0.0
    %782 = vmatpush1.msra.mxu0 0.0
    %783 = vmatprep.subr.mxu0 0.0
    %784 = vmatpush1.msra.mxu0 0.0
    %785 = vmatprep.subr.mxu0 0.0
    %786 = vmatpush1.msra.mxu0 0.0
    %787 = vmatprep.subr.mxu0 0.0
    %788 = vmatpush1.msra.mxu0 0.0
    %789 = vmatprep.subr.mxu0 0.0
    %790 = vmatpush1.msra.mxu0 0.0
    %791 = vmatprep.subr.mxu0 0.0
    %792 = vmatpush1.msra.mxu0 0.0
    %793 = vmatprep.subr.mxu0 0.0
    %794 = vmatpush1.msra.mxu0 0.0
    %795 = vmatprep.subr.mxu0 0.0
    %796 = vmatpush1.msra.mxu0 0.0
    %797 = vmatprep.subr.mxu0 0.0
    %798 = vmatpush1.msra.mxu0 0.0
    %799 = vmatprep.subr.mxu0 0.0
    %800 = vmatpush1.msra.mxu0 0.0
    %801 = vmatprep.subr.mxu0 0.0
    %802 = vmatpush1.msra.mxu0 0.0
    %803 = vmatprep.subr.mxu0 0.0
    %804 = vmatpush1.msra.mxu0 %v772
    %805 = vmatprep.subr.mxu0 0.0
    %806 = vmatpush1.msra.mxu0 %v770
    %807 = vmatprep.subr.mxu0 0.0
    %808 = vmatpush2.msra.mxu0 0.0
    %809 = vmatprep.subr.mxu0 0.0
    %810 = vmatpush2.msra.mxu0 0.0
    %811 = vmatprep.subr.mxu0 0.0
    %812 = vmatpush2.msra.mxu0 0.0
    %813 = vmatprep.subr.mxu0 0.0
    %814 = vmatpush2.msra.mxu0 0.0
    %815 = vmatprep.subr.mxu0 0.0
    %816 = vmatpush2.msra.mxu0 0.0
    %817 = vmatprep.subr.mxu0 0.0
    %818 = vmatpush2.msra.mxu0 0.0
    %819 = vmatprep.subr.mxu0 0.0
    %820 = vmatpush2.msra.mxu0 0.0
    %821 = vmatprep.subr.mxu0 0.0
    %822 = vmatpush2.msra.mxu0 0.0
    %823 = vmatprep.subr.mxu0 0.0
    %824 = vmatpush2.msra.mxu0 0.0
    %825 = vmatprep.subr.mxu0 0.0
    %826 = vmatpush2.msra.mxu0 0.0
    %827 = vmatprep.subr.mxu0 0.0
    %828 = vmatpush2.msra.mxu0 0.0
    %829 = vmatprep.subr.mxu0 0.0
    %830 = vmatpush2.msra.mxu0 0.0
    %831 = vmatprep.subr.mxu0 0.0
    %832 = vmatpush2.msra.mxu0 0.0
    %833 = vmatprep.subr.mxu0 0.0
    %834 = vmatpush2.msra.mxu0 0.0
    %835 = vmatprep.subr.mxu0 0.0
    %836 = vmatpush2.msra.mxu0 0.0
    %837 = vmatprep.subr.mxu0 0.0
    %838 = vmatpush2.msra.mxu0 0.0
    %839 = vmatprep.mubr.f32.mxu0 0.0
    %840 = vmatmul.mubr.f32.gmra.mxu0 %v690
    %v841 = vpop.f32.mrf.mxu0
    %v842 = vadd.f32 0.0, %v841
    %v843 = vpop.f32.mrf.mxu0
    %844 = vmatprep.mubr.f32.mxu0 0.0
    %845 = vmatmul.mubr.f32.gmra.mxu0 %v692
    %v846 = vpop.f32.mrf.mxu0
    %v847 = vadd.f32 0.0, %v846
    %v848 = vpop.f32.mrf.mxu0
    %849 = vdwg.mxu0
    %854 = vrot.lane.b32.xlu0 %v415, 16
    %v855 = vpop.permute.xlu0 %854
    %856 = vrot.lane.b32.xlu0 %v420, 16
    %v857 = vpop.permute.xlu0 %856
    %858 = vrot.lane.b32.xlu0 %v498, 16
    %v859 = vpop.permute.xlu0 %858
    %860 = vrot.lane.b32.xlu0 %v503, 16
    %v861 = vpop.permute.xlu0 %860
    %870 = vrot.lane.b32.xlu0 %v589, 32
    %v871 = vpop.permute.xlu0 %870
    %872 = vrot.lane.b32.xlu0 %v594, 32
    %v873 = vpop.permute.xlu0 %872
    %874 = vrot.lane.b32.xlu0 %v670, 32
    %v875 = vpop.permute.xlu0 %874
    %876 = vrot.lane.b32.xlu0 %v675, 32
    %v877 = vpop.permute.xlu0 %876
    %886 = vrot.lane.b32.xlu0 %v761, 48
    %v887 = vpop.permute.xlu0 %886
    %888 = vrot.lane.b32.xlu0 %v766, 48
    %v889 = vpop.permute.xlu0 %888
    %890 = vrot.lane.b32.xlu0 %v842, 48
    %v891 = vpop.permute.xlu0 %890
    %892 = vrot.lane.b32.xlu0 %v847, 48
    %v893 = vpop.permute.xlu0 %892
    %v898 = vsel %vm173, %v247, %v855
    %v899 = vsel %vm173, %v252, %v857
    %v900 = vsel %vm173, %v322, %v859
    %v901 = vsel %vm173, %v327, %v861
    %vm902 = vcmask 261120
    %v903 = vsel %vm902, %v898, %v871
    %v904 = vsel %vm902, %v899, %v873
    %v905 = vsel %vm902, %v900, %v875
    %v906 = vsel %vm902, %v901, %v877
    %vm907 = vcmask 392192
    %v908 = vsel %vm907, %v903, %v887
    %v909 = vsel %vm907, %v904, %v889
    %v910 = vsel %vm907, %v905, %v891
    %v911 = vsel %vm907, %v906, %v893
    %s912 = scalar_lea.vmem [#allocation6], 32
    %v913 = vld [vmem:[%s912] sm:$0xff]
    %v914 = vld [vmem:[%s912 + $0x8] sm:$0xff]
    %v915 = vld [vmem:[%s912 + $0x10] sm:$0xff]
    %v916 = vld [vmem:[%s912 + $0x18] sm:$0xff]
    %s917 = scalar_lea.vmem [#allocation7], 128
    %v918 = vld [vmem:[%s917] sm:$0xff]
    %v919 = vld [vmem:[%s917 + $0x8] sm:$0xff]
    %v920 = vld [vmem:[%s917 + $0x10] sm:$0xff]
    %v921 = vld [vmem:[%s917 + $0x18] sm:$0xff]
    %v922 = vld [vmem:[%s917 + $0x20] sm:$0xff]
    %v923 = vld [vmem:[%s917 + $0x28] sm:$0xff]
    %v924 = vld [vmem:[%s917 + $0x30] sm:$0xff]
    %v925 = vld [vmem:[%s917 + $0x38] sm:$0xff]
    %s926 = scalar_lea.vmem [#allocation7], 192
    %v927 = vld [vmem:[%s926] sm:$0xff]
    %v928 = vld [vmem:[%s926 + $0x8] sm:$0xff]
    %v929 = vld [vmem:[%s926 + $0x10] sm:$0xff]
    %v930 = vld [vmem:[%s926 + $0x18] sm:$0xff]
    %v931 = vld [vmem:[%s926 + $0x20] sm:$0xff]
    %v932 = vld [vmem:[%s926 + $0x28] sm:$0xff]
    %v933 = vld [vmem:[%s926 + $0x30] sm:$0xff]
    %v934 = vld [vmem:[%s926 + $0x38] sm:$0xff]
    %v936 = vsel %vm75, %v913, 0
    %v939 = vsel %vm75, %v914, 0
    %v942 = vsel %vm75, %v915, 0
    %v945 = vsel %vm75, %v916, 0
    %947 = vmatprep.subr.mxu0 0.0
    %948 = vmatpush1.msra.mxu0 0.0
    %949 = vmatprep.subr.mxu0 0.0
    %950 = vmatpush1.msra.mxu0 0.0
    %951 = vmatprep.subr.mxu0 0.0
    %952 = vmatpush1.msra.mxu0 0.0
    %953 = vmatprep.subr.mxu0 0.0
    %954 = vmatpush1.msra.mxu0 0.0
    %955 = vmatprep.subr.mxu0 0.0
    %956 = vmatpush1.msra.mxu0 0.0
    %957 = vmatprep.subr.mxu0 0.0
    %958 = vmatpush1.msra.mxu0 0.0
    %959 = vmatprep.subr.mxu0 0.0
    %960 = vmatpush1.msra.mxu0 0.0
    %961 = vmatprep.subr.mxu0 0.0
    %962 = vmatpush1.msra.mxu0 0.0
    %963 = vmatprep.subr.mxu0 0.0
    %964 = vmatpush1.msra.mxu0 %v925
    %965 = vmatprep.subr.mxu0 0.0
    %966 = vmatpush1.msra.mxu0 %v924
    %967 = vmatprep.subr.mxu0 0.0
    %968 = vmatpush1.msra.mxu0 %v923
    %969 = vmatprep.subr.mxu0 0.0
    %970 = vmatpush1.msra.mxu0 %v922
    %971 = vmatprep.subr.mxu0 0.0
    %972 = vmatpush1.msra.mxu0 %v921
    %973 = vmatprep.subr.mxu0 0.0
    %974 = vmatpush1.msra.mxu0 %v920
    %975 = vmatprep.subr.mxu0 0.0
    %976 = vmatpush1.msra.mxu0 %v919
    %977 = vmatprep.subr.mxu0 0.0
    %978 = vmatpush1.msra.mxu0 %v918
    %979 = vmatprep.subr.mxu0 0.0
    %980 = vmatpush2.msra.mxu0 0.0
    %981 = vmatprep.subr.mxu0 0.0
    %982 = vmatpush2.msra.mxu0 0.0
    %983 = vmatprep.subr.mxu0 0.0
    %984 = vmatpush2.msra.mxu0 0.0
    %985 = vmatprep.subr.mxu0 0.0
    %986 = vmatpush2.msra.mxu0 0.0
    %987 = vmatprep.subr.mxu0 0.0
    %988 = vmatpush2.msra.mxu0 0.0
    %989 = vmatprep.subr.mxu0 0.0
    %990 = vmatpush2.msra.mxu0 0.0
    %991 = vmatprep.subr.mxu0 0.0
    %992 = vmatpush2.msra.mxu0 0.0
    %993 = vmatprep.subr.mxu0 0.0
    %994 = vmatpush2.msra.mxu0 0.0
    %995 = vmatprep.subr.mxu0 0.0
    %996 = vmatpush2.msra.mxu0 0.0
    %997 = vmatprep.subr.mxu0 0.0
    %998 = vmatpush2.msra.mxu0 0.0
    %999 = vmatprep.subr.mxu0 0.0
    %1000 = vmatpush2.msra.mxu0 0.0
    %1001 = vmatprep.subr.mxu0 0.0
    %1002 = vmatpush2.msra.mxu0 0.0
    %1003 = vmatprep.subr.mxu0 0.0
    %1004 = vmatpush2.msra.mxu0 0.0
    %1005 = vmatprep.subr.mxu0 0.0
    %1006 = vmatpush2.msra.mxu0 0.0
    %1007 = vmatprep.subr.mxu0 0.0
    %1008 = vmatpush2.msra.mxu0 0.0
    %1009 = vmatprep.subr.mxu0 0.0
    %1010 = vmatpush2.msra.mxu0 0.0
    %1011 = vmatprep.mubr.f32.mxu0 0.0
    %1012 = vmatmul.mubr.f32.gmra.mxu0 %v936
    %v1013 = vpop.f32.mrf.mxu0
    %v1014 = vadd.f32 0.0, %v1013
    %v1015 = vpop.f32.mrf.mxu0
    %1016 = vmatprep.mubr.f32.mxu0 0.0
    %1017 = vmatmul.mubr.f32.gmra.mxu0 %v939
    %v1018 = vpop.f32.mrf.mxu0
    %v1019 = vadd.f32 0.0, %v1018
    %v1020 = vpop.f32.mrf.mxu0
    %1021 = vmatprep.mubr.f32.mxu0 0.0
    %1022 = vmatmul.mubr.f32.gmra.mxu0 %v942
    %v1023 = vpop.f32.mrf.mxu0
    %v1024 = vadd.f32 0.0, %v1023
    %v1025 = vpop.f32.mrf.mxu0
    %1026 = vmatprep.mubr.f32.mxu0 0.0
    %1027 = vmatmul.mubr.f32.gmra.mxu0 %v945
    %v1028 = vpop.f32.mrf.mxu0
    %v1029 = vadd.f32 0.0, %v1028
    %v1030 = vpop.f32.mrf.mxu0
    %1031 = vdwg.mxu0
    %v1033 = vsel %vm173, %v927, 0
    %v1036 = vsel %vm173, %v928, 0
    %1038 = vmatprep.subr.mxu0 0.0
    %1039 = vmatpush1.msra.mxu0 0.0
    %1040 = vmatprep.subr.mxu0 0.0
    %1041 = vmatpush1.msra.mxu0 0.0
    %1042 = vmatprep.subr.mxu0 0.0
    %1043 = vmatpush1.msra.mxu0 0.0
    %1044 = vmatprep.subr.mxu0 0.0
    %1045 = vmatpush1.msra.mxu0 0.0
    %1046 = vmatprep.subr.mxu0 0.0
    %1047 = vmatpush1.msra.mxu0 0.0
    %1048 = vmatprep.subr.mxu0 0.0
    %1049 = vmatpush1.msra.mxu0 0.0
    %1050 = vmatprep.subr.mxu0 0.0
    %1051 = vmatpush1.msra.mxu0 0.0
    %1052 = vmatprep.subr.mxu0 0.0
    %1053 = vmatpush1.msra.mxu0 0.0
    %1054 = vmatprep.subr.mxu0 0.0
    %1055 = vmatpush1.msra.mxu0 0.0
    %1056 = vmatprep.subr.mxu0 0.0
    %1057 = vmatpush1.msra.mxu0 0.0
    %1058 = vmatprep.subr.mxu0 0.0
    %1059 = vmatpush1.msra.mxu0 0.0
    %1060 = vmatprep.subr.mxu0 0.0
    %1061 = vmatpush1.msra.mxu0 0.0
    %1062 = vmatprep.subr.mxu0 0.0
    %1063 = vmatpush1.msra.mxu0 0.0
    %1064 = vmatprep.subr.mxu0 0.0
    %1065 = vmatpush1.msra.mxu0 0.0
    %1066 = vmatprep.subr.mxu0 0.0
    %1067 = vmatpush1.msra.mxu0 %v1019
    %1068 = vmatprep.subr.mxu0 0.0
    %1069 = vmatpush1.msra.mxu0 %v1014
    %1070 = vmatprep.subr.mxu0 0.0
    %1071 = vmatpush2.msra.mxu0 0.0
    %1072 = vmatprep.subr.mxu0 0.0
    %1073 = vmatpush2.msra.mxu0 0.0
    %1074 = vmatprep.subr.mxu0 0.0
    %1075 = vmatpush2.msra.mxu0 0.0
    %1076 = vmatprep.subr.mxu0 0.0
    %1077 = vmatpush2.msra.mxu0 0.0
    %1078 = vmatprep.subr.mxu0 0.0
    %1079 = vmatpush2.msra.mxu0 0.0
    %1080 = vmatprep.subr.mxu0 0.0
    %1081 = vmatpush2.msra.mxu0 0.0
    %1082 = vmatprep.subr.mxu0 0.0
    %1083 = vmatpush2.msra.mxu0 0.0
    %1084 = vmatprep.subr.mxu0 0.0
    %1085 = vmatpush2.msra.mxu0 0.0
    %1086 = vmatprep.subr.mxu0 0.0
    %1087 = vmatpush2.msra.mxu0 0.0
    %1088 = vmatprep.subr.mxu0 0.0
    %1089 = vmatpush2.msra.mxu0 0.0
    %1090 = vmatprep.subr.mxu0 0.0
    %1091 = vmatpush2.msra.mxu0 0.0
    %1092 = vmatprep.subr.mxu0 0.0
    %1093 = vmatpush2.msra.mxu0 0.0
    %1094 = vmatprep.subr.mxu0 0.0
    %1095 = vmatpush2.msra.mxu0 0.0
    %1096 = vmatprep.subr.mxu0 0.0
    %1097 = vmatpush2.msra.mxu0 0.0
    %1098 = vmatprep.subr.mxu0 0.0
    %1099 = vmatpush2.msra.mxu0 0.0
    %1100 = vmatprep.subr.mxu0 0.0
    %1101 = vmatpush2.msra.mxu0 0.0
    %1102 = vmatprep.mubr.f32.mxu0 0.0
    %1103 = vmatmul.mubr.f32.gmra.mxu0 %v1033
    %v1104 = vpop.f32.mrf.mxu0
    %v1105 = vadd.f32 0.0, %v1104
    %v1106 = vpop.f32.mrf.mxu0
    %1107 = vmatprep.mubr.f32.mxu0 0.0
    %1108 = vmatmul.mubr.f32.gmra.mxu0 %v1036
    %v1109 = vpop.f32.mrf.mxu0
    %v1110 = vadd.f32 0.0, %v1109
    %v1111 = vpop.f32.mrf.mxu0
    %1112 = vdwg.mxu0
    %1113 = vmatprep.subr.mxu0 0.0
    %1114 = vmatpush1.msra.mxu0 0.0
    %1115 = vmatprep.subr.mxu0 0.0
    %1116 = vmatpush1.msra.mxu0 0.0
    %1117 = vmatprep.subr.mxu0 0.0
    %1118 = vmatpush1.msra.mxu0 0.0
    %1119 = vmatprep.subr.mxu0 0.0
    %1120 = vmatpush1.msra.mxu0 0.0
    %1121 = vmatprep.subr.mxu0 0.0
    %1122 = vmatpush1.msra.mxu0 0.0
    %1123 = vmatprep.subr.mxu0 0.0
    %1124 = vmatpush1.msra.mxu0 0.0
    %1125 = vmatprep.subr.mxu0 0.0
    %1126 = vmatpush1.msra.mxu0 0.0
    %1127 = vmatprep.subr.mxu0 0.0
    %1128 = vmatpush1.msra.mxu0 0.0
    %1129 = vmatprep.subr.mxu0 0.0
    %1130 = vmatpush1.msra.mxu0 0.0
    %1131 = vmatprep.subr.mxu0 0.0
    %1132 = vmatpush1.msra.mxu0 0.0
    %1133 = vmatprep.subr.mxu0 0.0
    %1134 = vmatpush1.msra.mxu0 0.0
    %1135 = vmatprep.subr.mxu0 0.0
    %1136 = vmatpush1.msra.mxu0 0.0
    %1137 = vmatprep.subr.mxu0 0.0
    %1138 = vmatpush1.msra.mxu0 0.0
    %1139 = vmatprep.subr.mxu0 0.0
    %1140 = vmatpush1.msra.mxu0 0.0
    %1141 = vmatprep.subr.mxu0 0.0
    %1142 = vmatpush1.msra.mxu0 %v1029
    %1143 = vmatprep.subr.mxu0 0.0
    %1144 = vmatpush1.msra.mxu0 %v1024
    %1145 = vmatprep.subr.mxu0 0.0
    %1146 = vmatpush2.msra.mxu0 0.0
    %1147 = vmatprep.subr.mxu0 0.0
    %1148 = vmatpush2.msra.mxu0 0.0
    %1149 = vmatprep.subr.mxu0 0.0
    %1150 = vmatpush2.msra.mxu0 0.0
    %1151 = vmatprep.subr.mxu0 0.0
    %1152 = vmatpush2.msra.mxu0 0.0
    %1153 = vmatprep.subr.mxu0 0.0
    %1154 = vmatpush2.msra.mxu0 0.0
    %1155 = vmatprep.subr.mxu0 0.0
    %1156 = vmatpush2.msra.mxu0 0.0
    %1157 = vmatprep.subr.mxu0 0.0
    %1158 = vmatpush2.msra.mxu0 0.0
    %1159 = vmatprep.subr.mxu0 0.0
    %1160 = vmatpush2.msra.mxu0 0.0
    %1161 = vmatprep.subr.mxu0 0.0
    %1162 = vmatpush2.msra.mxu0 0.0
    %1163 = vmatprep.subr.mxu0 0.0
    %1164 = vmatpush2.msra.mxu0 0.0
    %1165 = vmatprep.subr.mxu0 0.0
    %1166 = vmatpush2.msra.mxu0 0.0
    %1167 = vmatprep.subr.mxu0 0.0
    %1168 = vmatpush2.msra.mxu0 0.0
    %1169 = vmatprep.subr.mxu0 0.0
    %1170 = vmatpush2.msra.mxu0 0.0
    %1171 = vmatprep.subr.mxu0 0.0
    %1172 = vmatpush2.msra.mxu0 0.0
    %1173 = vmatprep.subr.mxu0 0.0
    %1174 = vmatpush2.msra.mxu0 0.0
    %1175 = vmatprep.subr.mxu0 0.0
    %1176 = vmatpush2.msra.mxu0 0.0
    %1177 = vmatprep.mubr.f32.mxu0 0.0
    %1178 = vmatmul.mubr.f32.gmra.mxu0 %v1033
    %v1179 = vpop.f32.mrf.mxu0
    %v1180 = vadd.f32 0.0, %v1179
    %v1181 = vpop.f32.mrf.mxu0
    %1182 = vmatprep.mubr.f32.mxu0 0.0
    %1183 = vmatmul.mubr.f32.gmra.mxu0 %v1036
    %v1184 = vpop.f32.mrf.mxu0
    %v1185 = vadd.f32 0.0, %v1184
    %v1186 = vpop.f32.mrf.mxu0
    %1187 = vdwg.mxu0
    %1190 = vrot.lane.b32.xlu0 %v929, 112
    %v1191 = vpop.permute.xlu0 %1190
    %1192 = vrot.lane.b32.xlu0 %v930, 112
    %v1193 = vpop.permute.xlu0 %1192
    %1196 = vrot.lane.b32.xlu0 %v1014, 112
    %v1197 = vpop.permute.xlu0 %1196
    %1198 = vrot.lane.b32.xlu0 %v1019, 112
    %v1199 = vpop.permute.xlu0 %1198
    %v1202 = vsel %vm173, %v1191, 0
    %v1204 = vsel %vm173, %v1193, 0
    %1206 = vmatprep.subr.mxu0 0.0
    %1207 = vmatpush1.msra.mxu0 0.0
    %1208 = vmatprep.subr.mxu0 0.0
    %1209 = vmatpush1.msra.mxu0 0.0
    %1210 = vmatprep.subr.mxu0 0.0
    %1211 = vmatpush1.msra.mxu0 0.0
    %1212 = vmatprep.subr.mxu0 0.0
    %1213 = vmatpush1.msra.mxu0 0.0
    %1214 = vmatprep.subr.mxu0 0.0
    %1215 = vmatpush1.msra.mxu0 0.0
    %1216 = vmatprep.subr.mxu0 0.0
    %1217 = vmatpush1.msra.mxu0 0.0
    %1218 = vmatprep.subr.mxu0 0.0
    %1219 = vmatpush1.msra.mxu0 0.0
    %1220 = vmatprep.subr.mxu0 0.0
    %1221 = vmatpush1.msra.mxu0 0.0
    %1222 = vmatprep.subr.mxu0 0.0
    %1223 = vmatpush1.msra.mxu0 0.0
    %1224 = vmatprep.subr.mxu0 0.0
    %1225 = vmatpush1.msra.mxu0 0.0
    %1226 = vmatprep.subr.mxu0 0.0
    %1227 = vmatpush1.msra.mxu0 0.0
    %1228 = vmatprep.subr.mxu0 0.0
    %1229 = vmatpush1.msra.mxu0 0.0
    %1230 = vmatprep.subr.mxu0 0.0
    %1231 = vmatpush1.msra.mxu0 0.0
    %1232 = vmatprep.subr.mxu0 0.0
    %1233 = vmatpush1.msra.mxu0 0.0
    %1234 = vmatprep.subr.mxu0 0.0
    %1235 = vmatpush1.msra.mxu0 %v1199
    %1236 = vmatprep.subr.mxu0 0.0
    %1237 = vmatpush1.msra.mxu0 %v1197
    %1238 = vmatprep.subr.mxu0 0.0
    %1239 = vmatpush2.msra.mxu0 0.0
    %1240 = vmatprep.subr.mxu0 0.0
    %1241 = vmatpush2.msra.mxu0 0.0
    %1242 = vmatprep.subr.mxu0 0.0
    %1243 = vmatpush2.msra.mxu0 0.0
    %1244 = vmatprep.subr.mxu0 0.0
    %1245 = vmatpush2.msra.mxu0 0.0
    %1246 = vmatprep.subr.mxu0 0.0
    %1247 = vmatpush2.msra.mxu0 0.0
    %1248 = vmatprep.subr.mxu0 0.0
    %1249 = vmatpush2.msra.mxu0 0.0
    %1250 = vmatprep.subr.mxu0 0.0
    %1251 = vmatpush2.msra.mxu0 0.0
    %1252 = vmatprep.subr.mxu0 0.0
    %1253 = vmatpush2.msra.mxu0 0.0
    %1254 = vmatprep.subr.mxu0 0.0
    %1255 = vmatpush2.msra.mxu0 0.0
    %1256 = vmatprep.subr.mxu0 0.0
    %1257 = vmatpush2.msra.mxu0 0.0
    %1258 = vmatprep.subr.mxu0 0.0
    %1259 = vmatpush2.msra.mxu0 0.0
    %1260 = vmatprep.subr.mxu0 0.0
    %1261 = vmatpush2.msra.mxu0 0.0
    %1262 = vmatprep.subr.mxu0 0.0
    %1263 = vmatpush2.msra.mxu0 0.0
    %1264 = vmatprep.subr.mxu0 0.0
    %1265 = vmatpush2.msra.mxu0 0.0
    %1266 = vmatprep.subr.mxu0 0.0
    %1267 = vmatpush2.msra.mxu0 0.0
    %1268 = vmatprep.subr.mxu0 0.0
    %1269 = vmatpush2.msra.mxu0 0.0
    %1270 = vmatprep.mubr.f32.mxu0 0.0
    %1271 = vmatmul.mubr.f32.gmra.mxu0 %v1202
    %v1272 = vpop.f32.mrf.mxu0
    %v1273 = vadd.f32 0.0, %v1272
    %v1274 = vpop.f32.mrf.mxu0
    %1275 = vmatprep.mubr.f32.mxu0 0.0
    %1276 = vmatmul.mubr.f32.gmra.mxu0 %v1204
    %v1277 = vpop.f32.mrf.mxu0
    %v1278 = vadd.f32 0.0, %v1277
    %v1279 = vpop.f32.mrf.mxu0
    %1280 = vdwg.mxu0
    %1283 = vrot.lane.b32.xlu0 %v1024, 112
    %v1284 = vpop.permute.xlu0 %1283
    %1285 = vrot.lane.b32.xlu0 %v1029, 112
    %v1286 = vpop.permute.xlu0 %1285
    %1289 = vmatprep.subr.mxu0 0.0
    %1290 = vmatpush1.msra.mxu0 0.0
    %1291 = vmatprep.subr.mxu0 0.0
    %1292 = vmatpush1.msra.mxu0 0.0
    %1293 = vmatprep.subr.mxu0 0.0
    %1294 = vmatpush1.msra.mxu0 0.0
    %1295 = vmatprep.subr.mxu0 0.0
    %1296 = vmatpush1.msra.mxu0 0.0
    %1297 = vmatprep.subr.mxu0 0.0
    %1298 = vmatpush1.msra.mxu0 0.0
    %1299 = vmatprep.subr.mxu0 0.0
    %1300 = vmatpush1.msra.mxu0 0.0
    %1301 = vmatprep.subr.mxu0 0.0
    %1302 = vmatpush1.msra.mxu0 0.0
    %1303 = vmatprep.subr.mxu0 0.0
    %1304 = vmatpush1.msra.mxu0 0.0
    %1305 = vmatprep.subr.mxu0 0.0
    %1306 = vmatpush1.msra.mxu0 0.0
    %1307 = vmatprep.subr.mxu0 0.0
    %1308 = vmatpush1.msra.mxu0 0.0
    %1309 = vmatprep.subr.mxu0 0.0
    %1310 = vmatpush1.msra.mxu0 0.0
    %1311 = vmatprep.subr.mxu0 0.0
    %1312 = vmatpush1.msra.mxu0 0.0
    %1313 = vmatprep.subr.mxu0 0.0
    %1314 = vmatpush1.msra.mxu0 0.0
    %1315 = vmatprep.subr.mxu0 0.0
    %1316 = vmatpush1.msra.mxu0 0.0
    %1317 = vmatprep.subr.mxu0 0.0
    %1318 = vmatpush1.msra.mxu0 %v1286
    %1319 = vmatprep.subr.mxu0 0.0
    %1320 = vmatpush1.msra.mxu0 %v1284
    %1321 = vmatprep.subr.mxu0 0.0
    %1322 = vmatpush2.msra.mxu0 0.0
    %1323 = vmatprep.subr.mxu0 0.0
    %1324 = vmatpush2.msra.mxu0 0.0
    %1325 = vmatprep.subr.mxu0 0.0
    %1326 = vmatpush2.msra.mxu0 0.0
    %1327 = vmatprep.subr.mxu0 0.0
    %1328 = vmatpush2.msra.mxu0 0.0
    %1329 = vmatprep.subr.mxu0 0.0
    %1330 = vmatpush2.msra.mxu0 0.0
    %1331 = vmatprep.subr.mxu0 0.0
    %1332 = vmatpush2.msra.mxu0 0.0
    %1333 = vmatprep.subr.mxu0 0.0
    %1334 = vmatpush2.msra.mxu0 0.0
    %1335 = vmatprep.subr.mxu0 0.0
    %1336 = vmatpush2.msra.mxu0 0.0
    %1337 = vmatprep.subr.mxu0 0.0
    %1338 = vmatpush2.msra.mxu0 0.0
    %1339 = vmatprep.subr.mxu0 0.0
    %1340 = vmatpush2.msra.mxu0 0.0
    %1341 = vmatprep.subr.mxu0 0.0
    %1342 = vmatpush2.msra.mxu0 0.0
    %1343 = vmatprep.subr.mxu0 0.0
    %1344 = vmatpush2.msra.mxu0 0.0
    %1345 = vmatprep.subr.mxu0 0.0
    %1346 = vmatpush2.msra.mxu0 0.0
    %1347 = vmatprep.subr.mxu0 0.0
    %1348 = vmatpush2.msra.mxu0 0.0
    %1349 = vmatprep.subr.mxu0 0.0
    %1350 = vmatpush2.msra.mxu0 0.0
    %1351 = vmatprep.subr.mxu0 0.0
    %1352 = vmatpush2.msra.mxu0 0.0
    %1353 = vmatprep.mubr.f32.mxu0 0.0
    %1354 = vmatmul.mubr.f32.gmra.mxu0 %v1202
    %v1355 = vpop.f32.mrf.mxu0
    %v1356 = vadd.f32 0.0, %v1355
    %v1357 = vpop.f32.mrf.mxu0
    %1358 = vmatprep.mubr.f32.mxu0 0.0
    %1359 = vmatmul.mubr.f32.gmra.mxu0 %v1204
    %v1360 = vpop.f32.mrf.mxu0
    %v1361 = vadd.f32 0.0, %v1360
    %v1362 = vpop.f32.mrf.mxu0
    %1363 = vdwg.mxu0
    %1366 = vrot.lane.b32.xlu0 %v931, 96
    %v1367 = vpop.permute.xlu0 %1366
    %1368 = vrot.lane.b32.xlu0 %v932, 96
    %v1369 = vpop.permute.xlu0 %1368
    %1370 = vrot.lane.b32.xlu0 %v1014, 96
    %v1371 = vpop.permute.xlu0 %1370
    %1372 = vrot.lane.b32.xlu0 %v1019, 96
    %v1373 = vpop.permute.xlu0 %1372
    %v1376 = vsel %vm173, %v1367, 0
    %v1378 = vsel %vm173, %v1369, 0
    %1380 = vmatprep.subr.mxu0 0.0
    %1381 = vmatpush1.msra.mxu0 0.0
    %1382 = vmatprep.subr.mxu0 0.0
    %1383 = vmatpush1.msra.mxu0 0.0
    %1384 = vmatprep.subr.mxu0 0.0
    %1385 = vmatpush1.msra.mxu0 0.0
    %1386 = vmatprep.subr.mxu0 0.0
    %1387 = vmatpush1.msra.mxu0 0.0
    %1388 = vmatprep.subr.mxu0 0.0
    %1389 = vmatpush1.msra.mxu0 0.0
    %1390 = vmatprep.subr.mxu0 0.0
    %1391 = vmatpush1.msra.mxu0 0.0
    %1392 = vmatprep.subr.mxu0 0.0
    %1393 = vmatpush1.msra.mxu0 0.0
    %1394 = vmatprep.subr.mxu0 0.0
    %1395 = vmatpush1.msra.mxu0 0.0
    %1396 = vmatprep.subr.mxu0 0.0
    %1397 = vmatpush1.msra.mxu0 0.0
    %1398 = vmatprep.subr.mxu0 0.0
    %1399 = vmatpush1.msra.mxu0 0.0
    %1400 = vmatprep.subr.mxu0 0.0
    %1401 = vmatpush1.msra.mxu0 0.0
    %1402 = vmatprep.subr.mxu0 0.0
    %1403 = vmatpush1.msra.mxu0 0.0
    %1404 = vmatprep.subr.mxu0 0.0
    %1405 = vmatpush1.msra.mxu0 0.0
    %1406 = vmatprep.subr.mxu0 0.0
    %1407 = vmatpush1.msra.mxu0 0.0
    %1408 = vmatprep.subr.mxu0 0.0
    %1409 = vmatpush1.msra.mxu0 %v1373
    %1410 = vmatprep.subr.mxu0 0.0
    %1411 = vmatpush1.msra.mxu0 %v1371
    %1412 = vmatprep.subr.mxu0 0.0
    %1413 = vmatpush2.msra.mxu0 0.0
    %1414 = vmatprep.subr.mxu0 0.0
    %1415 = vmatpush2.msra.mxu0 0.0
    %1416 = vmatprep.subr.mxu0 0.0
    %1417 = vmatpush2.msra.mxu0 0.0
    %1418 = vmatprep.subr.mxu0 0.0
    %1419 = vmatpush2.msra.mxu0 0.0
    %1420 = vmatprep.subr.mxu0 0.0
    %1421 = vmatpush2.msra.mxu0 0.0
    %1422 = vmatprep.subr.mxu0 0.0
    %1423 = vmatpush2.msra.mxu0 0.0
    %1424 = vmatprep.subr.mxu0 0.0
    %1425 = vmatpush2.msra.mxu0 0.0
    %1426 = vmatprep.subr.mxu0 0.0
    %1427 = vmatpush2.msra.mxu0 0.0
    %1428 = vmatprep.subr.mxu0 0.0
    %1429 = vmatpush2.msra.mxu0 0.0
    %1430 = vmatprep.subr.mxu0 0.0
    %1431 = vmatpush2.msra.mxu0 0.0
    %1432 = vmatprep.subr.mxu0 0.0
    %1433 = vmatpush2.msra.mxu0 0.0
    %1434 = vmatprep.subr.mxu0 0.0
    %1435 = vmatpush2.msra.mxu0 0.0
    %1436 = vmatprep.subr.mxu0 0.0
    %1437 = vmatpush2.msra.mxu0 0.0
    %1438 = vmatprep.subr.mxu0 0.0
    %1439 = vmatpush2.msra.mxu0 0.0
    %1440 = vmatprep.subr.mxu0 0.0
    %1441 = vmatpush2.msra.mxu0 0.0
    %1442 = vmatprep.subr.mxu0 0.0
    %1443 = vmatpush2.msra.mxu0 0.0
    %1444 = vmatprep.mubr.f32.mxu0 0.0
    %1445 = vmatmul.mubr.f32.gmra.mxu0 %v1376
    %v1446 = vpop.f32.mrf.mxu0
    %v1447 = vadd.f32 0.0, %v1446
    %v1448 = vpop.f32.mrf.mxu0
    %1449 = vmatprep.mubr.f32.mxu0 0.0
    %1450 = vmatmul.mubr.f32.gmra.mxu0 %v1378
    %v1451 = vpop.f32.mrf.mxu0
    %v1452 = vadd.f32 0.0, %v1451
    %v1453 = vpop.f32.mrf.mxu0
    %1454 = vdwg.mxu0
    %1455 = vrot.lane.b32.xlu0 %v1024, 96
    %v1456 = vpop.permute.xlu0 %1455
    %1457 = vrot.lane.b32.xlu0 %v1029, 96
    %v1458 = vpop.permute.xlu0 %1457
    %1461 = vmatprep.subr.mxu0 0.0
    %1462 = vmatpush1.msra.mxu0 0.0
    %1463 = vmatprep.subr.mxu0 0.0
    %1464 = vmatpush1.msra.mxu0 0.0
    %1465 = vmatprep.subr.mxu0 0.0
    %1466 = vmatpush1.msra.mxu0 0.0
    %1467 = vmatprep.subr.mxu0 0.0
    %1468 = vmatpush1.msra.mxu0 0.0
    %1469 = vmatprep.subr.mxu0 0.0
    %1470 = vmatpush1.msra.mxu0 0.0
    %1471 = vmatprep.subr.mxu0 0.0
    %1472 = vmatpush1.msra.mxu0 0.0
    %1473 = vmatprep.subr.mxu0 0.0
    %1474 = vmatpush1.msra.mxu0 0.0
    %1475 = vmatprep.subr.mxu0 0.0
    %1476 = vmatpush1.msra.mxu0 0.0
    %1477 = vmatprep.subr.mxu0 0.0
    %1478 = vmatpush1.msra.mxu0 0.0
    %1479 = vmatprep.subr.mxu0 0.0
    %1480 = vmatpush1.msra.mxu0 0.0
    %1481 = vmatprep.subr.mxu0 0.0
    %1482 = vmatpush1.msra.mxu0 0.0
    %1483 = vmatprep.subr.mxu0 0.0
    %1484 = vmatpush1.msra.mxu0 0.0
    %1485 = vmatprep.subr.mxu0 0.0
    %1486 = vmatpush1.msra.mxu0 0.0
    %1487 = vmatprep.subr.mxu0 0.0
    %1488 = vmatpush1.msra.mxu0 0.0
    %1489 = vmatprep.subr.mxu0 0.0
    %1490 = vmatpush1.msra.mxu0 %v1458
    %1491 = vmatprep.subr.mxu0 0.0
    %1492 = vmatpush1.msra.mxu0 %v1456
    %1493 = vmatprep.subr.mxu0 0.0
    %1494 = vmatpush2.msra.mxu0 0.0
    %1495 = vmatprep.subr.mxu0 0.0
    %1496 = vmatpush2.msra.mxu0 0.0
    %1497 = vmatprep.subr.mxu0 0.0
    %1498 = vmatpush2.msra.mxu0 0.0
    %1499 = vmatprep.subr.mxu0 0.0
    %1500 = vmatpush2.msra.mxu0 0.0
    %1501 = vmatprep.subr.mxu0 0.0
    %1502 = vmatpush2.msra.mxu0 0.0
    %1503 = vmatprep.subr.mxu0 0.0
    %1504 = vmatpush2.msra.mxu0 0.0
    %1505 = vmatprep.subr.mxu0 0.0
    %1506 = vmatpush2.msra.mxu0 0.0
    %1507 = vmatprep.subr.mxu0 0.0
    %1508 = vmatpush2.msra.mxu0 0.0
    %1509 = vmatprep.subr.mxu0 0.0
    %1510 = vmatpush2.msra.mxu0 0.0
    %1511 = vmatprep.subr.mxu0 0.0
    %1512 = vmatpush2.msra.mxu0 0.0
    %1513 = vmatprep.subr.mxu0 0.0
    %1514 = vmatpush2.msra.mxu0 0.0
    %1515 = vmatprep.subr.mxu0 0.0
    %1516 = vmatpush2.msra.mxu0 0.0
    %1517 = vmatprep.subr.mxu0 0.0
    %1518 = vmatpush2.msra.mxu0 0.0
    %1519 = vmatprep.subr.mxu0 0.0
    %1520 = vmatpush2.msra.mxu0 0.0
    %1521 = vmatprep.subr.mxu0 0.0
    %1522 = vmatpush2.msra.mxu0 0.0
    %1523 = vmatprep.subr.mxu0 0.0
    %1524 = vmatpush2.msra.mxu0 0.0
    %1525 = vmatprep.mubr.f32.mxu0 0.0
    %1526 = vmatmul.mubr.f32.gmra.mxu0 %v1376
    %v1527 = vpop.f32.mrf.mxu0
    %v1528 = vadd.f32 0.0, %v1527
    %v1529 = vpop.f32.mrf.mxu0
    %1530 = vmatprep.mubr.f32.mxu0 0.0
    %1531 = vmatmul.mubr.f32.gmra.mxu0 %v1378
    %v1532 = vpop.f32.mrf.mxu0
    %v1533 = vadd.f32 0.0, %v1532
    %v1534 = vpop.f32.mrf.mxu0
    %1535 = vdwg.mxu0
    %1538 = vrot.lane.b32.xlu0 %v933, 80
    %v1539 = vpop.permute.xlu0 %1538
    %1540 = vrot.lane.b32.xlu0 %v934, 80
    %v1541 = vpop.permute.xlu0 %1540
    %1542 = vrot.lane.b32.xlu0 %v1014, 80
    %v1543 = vpop.permute.xlu0 %1542
    %1544 = vrot.lane.b32.xlu0 %v1019, 80
    %v1545 = vpop.permute.xlu0 %1544
    %v1548 = vsel %vm173, %v1539, 0
    %v1550 = vsel %vm173, %v1541, 0
    %1552 = vmatprep.subr.mxu0 0.0
    %1553 = vmatpush1.msra.mxu0 0.0
    %1554 = vmatprep.subr.mxu0 0.0
    %1555 = vmatpush1.msra.mxu0 0.0
    %1556 = vmatprep.subr.mxu0 0.0
    %1557 = vmatpush1.msra.mxu0 0.0
    %1558 = vmatprep.subr.mxu0 0.0
    %1559 = vmatpush1.msra.mxu0 0.0
    %1560 = vmatprep.subr.mxu0 0.0
    %1561 = vmatpush1.msra.mxu0 0.0
    %1562 = vmatprep.subr.mxu0 0.0
    %1563 = vmatpush1.msra.mxu0 0.0
    %1564 = vmatprep.subr.mxu0 0.0
    %1565 = vmatpush1.msra.mxu0 0.0
    %1566 = vmatprep.subr.mxu0 0.0
    %1567 = vmatpush1.msra.mxu0 0.0
    %1568 = vmatprep.subr.mxu0 0.0
    %1569 = vmatpush1.msra.mxu0 0.0
    %1570 = vmatprep.subr.mxu0 0.0
    %1571 = vmatpush1.msra.mxu0 0.0
    %1572 = vmatprep.subr.mxu0 0.0
    %1573 = vmatpush1.msra.mxu0 0.0
    %1574 = vmatprep.subr.mxu0 0.0
    %1575 = vmatpush1.msra.mxu0 0.0
    %1576 = vmatprep.subr.mxu0 0.0
    %1577 = vmatpush1.msra.mxu0 0.0
    %1578 = vmatprep.subr.mxu0 0.0
    %1579 = vmatpush1.msra.mxu0 0.0
    %1580 = vmatprep.subr.mxu0 0.0
    %1581 = vmatpush1.msra.mxu0 %v1545
    %1582 = vmatprep.subr.mxu0 0.0
    %1583 = vmatpush1.msra.mxu0 %v1543
    %1584 = vmatprep.subr.mxu0 0.0
    %1585 = vmatpush2.msra.mxu0 0.0
    %1586 = vmatprep.subr.mxu0 0.0
    %1587 = vmatpush2.msra.mxu0 0.0
    %1588 = vmatprep.subr.mxu0 0.0
    %1589 = vmatpush2.msra.mxu0 0.0
    %1590 = vmatprep.subr.mxu0 0.0
    %1591 = vmatpush2.msra.mxu0 0.0
    %1592 = vmatprep.subr.mxu0 0.0
    %1593 = vmatpush2.msra.mxu0 0.0
    %1594 = vmatprep.subr.mxu0 0.0
    %1595 = vmatpush2.msra.mxu0 0.0
    %1596 = vmatprep.subr.mxu0 0.0
    %1597 = vmatpush2.msra.mxu0 0.0
    %1598 = vmatprep.subr.mxu0 0.0
    %1599 = vmatpush2.msra.mxu0 0.0
    %1600 = vmatprep.subr.mxu0 0.0
    %1601 = vmatpush2.msra.mxu0 0.0
    %1602 = vmatprep.subr.mxu0 0.0
    %1603 = vmatpush2.msra.mxu0 0.0
    %1604 = vmatprep.subr.mxu0 0.0
    %1605 = vmatpush2.msra.mxu0 0.0
    %1606 = vmatprep.subr.mxu0 0.0
    %1607 = vmatpush2.msra.mxu0 0.0
    %1608 = vmatprep.subr.mxu0 0.0
    %1609 = vmatpush2.msra.mxu0 0.0
    %1610 = vmatprep.subr.mxu0 0.0
    %1611 = vmatpush2.msra.mxu0 0.0
    %1612 = vmatprep.subr.mxu0 0.0
    %1613 = vmatpush2.msra.mxu0 0.0
    %1614 = vmatprep.subr.mxu0 0.0
    %1615 = vmatpush2.msra.mxu0 0.0
    %1616 = vmatprep.mubr.f32.mxu0 0.0
    %1617 = vmatmul.mubr.f32.gmra.mxu0 %v1548
    %v1618 = vpop.f32.mrf.mxu0
    %v1619 = vadd.f32 0.0, %v1618
    %v1620 = vpop.f32.mrf.mxu0
    %1621 = vmatprep.mubr.f32.mxu0 0.0
    %1622 = vmatmul.mubr.f32.gmra.mxu0 %v1550
    %v1623 = vpop.f32.mrf.mxu0
    %v1624 = vadd.f32 0.0, %v1623
    %v1625 = vpop.f32.mrf.mxu0
    %1626 = vdwg.mxu0
    %1627 = vrot.lane.b32.xlu0 %v1024, 80
    %v1628 = vpop.permute.xlu0 %1627
    %1629 = vrot.lane.b32.xlu0 %v1029, 80
    %v1630 = vpop.permute.xlu0 %1629
    %1633 = vmatprep.subr.mxu0 0.0
    %1634 = vmatpush1.msra.mxu0 0.0
    %1635 = vmatprep.subr.mxu0 0.0
    %1636 = vmatpush1.msra.mxu0 0.0
    %1637 = vmatprep.subr.mxu0 0.0
    %1638 = vmatpush1.msra.mxu0 0.0
    %1639 = vmatprep.subr.mxu0 0.0
    %1640 = vmatpush1.msra.mxu0 0.0
    %1641 = vmatprep.subr.mxu0 0.0
    %1642 = vmatpush1.msra.mxu0 0.0
    %1643 = vmatprep.subr.mxu0 0.0
    %1644 = vmatpush1.msra.mxu0 0.0
    %1645 = vmatprep.subr.mxu0 0.0
    %1646 = vmatpush1.msra.mxu0 0.0
    %1647 = vmatprep.subr.mxu0 0.0
    %1648 = vmatpush1.msra.mxu0 0.0
    %1649 = vmatprep.subr.mxu0 0.0
    %1650 = vmatpush1.msra.mxu0 0.0
    %1651 = vmatprep.subr.mxu0 0.0
    %1652 = vmatpush1.msra.mxu0 0.0
    %1653 = vmatprep.subr.mxu0 0.0
    %1654 = vmatpush1.msra.mxu0 0.0
    %1655 = vmatprep.subr.mxu0 0.0
    %1656 = vmatpush1.msra.mxu0 0.0
    %1657 = vmatprep.subr.mxu0 0.0
    %1658 = vmatpush1.msra.mxu0 0.0
    %1659 = vmatprep.subr.mxu0 0.0
    %1660 = vmatpush1.msra.mxu0 0.0
    %1661 = vmatprep.subr.mxu0 0.0
    %1662 = vmatpush1.msra.mxu0 %v1630
    %1663 = vmatprep.subr.mxu0 0.0
    %1664 = vmatpush1.msra.mxu0 %v1628
    %1665 = vmatprep.subr.mxu0 0.0
    %1666 = vmatpush2.msra.mxu0 0.0
    %1667 = vmatprep.subr.mxu0 0.0
    %1668 = vmatpush2.msra.mxu0 0.0
    %1669 = vmatprep.subr.mxu0 0.0
    %1670 = vmatpush2.msra.mxu0 0.0
    %1671 = vmatprep.subr.mxu0 0.0
    %1672 = vmatpush2.msra.mxu0 0.0
    %1673 = vmatprep.subr.mxu0 0.0
    %1674 = vmatpush2.msra.mxu0 0.0
    %1675 = vmatprep.subr.mxu0 0.0
    %1676 = vmatpush2.msra.mxu0 0.0
    %1677 = vmatprep.subr.mxu0 0.0
    %1678 = vmatpush2.msra.mxu0 0.0
    %1679 = vmatprep.subr.mxu0 0.0
    %1680 = vmatpush2.msra.mxu0 0.0
    %1681 = vmatprep.subr.mxu0 0.0
    %1682 = vmatpush2.msra.mxu0 0.0
    %1683 = vmatprep.subr.mxu0 0.0
    %1684 = vmatpush2.msra.mxu0 0.0
    %1685 = vmatprep.subr.mxu0 0.0
    %1686 = vmatpush2.msra.mxu0 0.0
    %1687 = vmatprep.subr.mxu0 0.0
    %1688 = vmatpush2.msra.mxu0 0.0
    %1689 = vmatprep.subr.mxu0 0.0
    %1690 = vmatpush2.msra.mxu0 0.0
    %1691 = vmatprep.subr.mxu0 0.0
    %1692 = vmatpush2.msra.mxu0 0.0
    %1693 = vmatprep.subr.mxu0 0.0
    %1694 = vmatpush2.msra.mxu0 0.0
    %1695 = vmatprep.subr.mxu0 0.0
    %1696 = vmatpush2.msra.mxu0 0.0
    %1697 = vmatprep.mubr.f32.mxu0 0.0
    %1698 = vmatmul.mubr.f32.gmra.mxu0 %v1548
    %v1699 = vpop.f32.mrf.mxu0
    %v1700 = vadd.f32 0.0, %v1699
    %v1701 = vpop.f32.mrf.mxu0
    %1702 = vmatprep.mubr.f32.mxu0 0.0
    %1703 = vmatmul.mubr.f32.gmra.mxu0 %v1550
    %v1704 = vpop.f32.mrf.mxu0
    %v1705 = vadd.f32 0.0, %v1704
    %v1706 = vpop.f32.mrf.mxu0
    %1707 = vdwg.mxu0
    %1712 = vrot.lane.b32.xlu0 %v1273, 16
    %v1713 = vpop.permute.xlu0 %1712
    %1714 = vrot.lane.b32.xlu0 %v1278, 16
    %v1715 = vpop.permute.xlu0 %1714
    %1716 = vrot.lane.b32.xlu0 %v1356, 16
    %v1717 = vpop.permute.xlu0 %1716
    %1718 = vrot.lane.b32.xlu0 %v1361, 16
    %v1719 = vpop.permute.xlu0 %1718
    %1728 = vrot.lane.b32.xlu0 %v1447, 32
    %v1729 = vpop.permute.xlu0 %1728
    %1730 = vrot.lane.b32.xlu0 %v1452, 32
    %v1731 = vpop.permute.xlu0 %1730
    %1732 = vrot.lane.b32.xlu0 %v1528, 32
    %v1733 = vpop.permute.xlu0 %1732
    %1734 = vrot.lane.b32.xlu0 %v1533, 32
    %v1735 = vpop.permute.xlu0 %1734
    %1744 = vrot.lane.b32.xlu0 %v1619, 48
    %v1745 = vpop.permute.xlu0 %1744
    %1746 = vrot.lane.b32.xlu0 %v1624, 48
    %v1747 = vpop.permute.xlu0 %1746
    %1748 = vrot.lane.b32.xlu0 %v1700, 48
    %v1749 = vpop.permute.xlu0 %1748
    %1750 = vrot.lane.b32.xlu0 %v1705, 48
    %v1751 = vpop.permute.xlu0 %1750
    %v1756 = vsel %vm173, %v1105, %v1713
    %v1757 = vsel %vm173, %v1110, %v1715
    %v1758 = vsel %vm173, %v1180, %v1717
    %v1759 = vsel %vm173, %v1185, %v1719
    %v1760 = vsel %vm902, %v1756, %v1729
    %v1761 = vsel %vm902, %v1757, %v1731
    %v1762 = vsel %vm902, %v1758, %v1733
    %v1763 = vsel %vm902, %v1759, %v1735
    %v1764 = vsel %vm907, %v1760, %v1745
    %v1765 = vsel %vm907, %v1761, %v1747
    %v1766 = vsel %vm907, %v1762, %v1749
    %v1767 = vsel %vm907, %v1763, %v1751
    %s1768 = sld [smem:[#allocation2]]
    %s1769 = sld [smem:[#allocation2 + $0x1]]
    %s1770 = sld [smem:[#allocation2 + $0x2]]
    %s1771 = scalar_lea.vmem [#allocation7], 256
    %v1772 = vld [vmem:[%s1771] sm:$0xff]
    %v1773 = vld [vmem:[%s1771 + $0x8] sm:$0xff]
    %v1774 = vld [vmem:[%s1771 + $0x10] sm:$0xff]
    %v1775 = vld [vmem:[%s1771 + $0x18] sm:$0xff]
    %v1776 = vld [vmem:[%s1771 + $0x20] sm:$0xff]
    %v1777 = vld [vmem:[%s1771 + $0x28] sm:$0xff]
    %v1778 = vld [vmem:[%s1771 + $0x30] sm:$0xff]
    %v1779 = vld [vmem:[%s1771 + $0x38] sm:$0xff]
    %s1780 = scalar_lea.vmem [#allocation7], 320
    %v1781 = vld [vmem:[%s1780] sm:$0xff]
    %v1782 = vld [vmem:[%s1780 + $0x8] sm:$0xff]
    %v1783 = vld [vmem:[%s1780 + $0x10] sm:$0xff]
    %v1784 = vld [vmem:[%s1780 + $0x18] sm:$0xff]
    %v1785 = vld [vmem:[%s1780 + $0x20] sm:$0xff]
    %v1786 = vld [vmem:[%s1780 + $0x28] sm:$0xff]
    %v1787 = vld [vmem:[%s1780 + $0x30] sm:$0xff]
    %v1788 = vld [vmem:[%s1780 + $0x38] sm:$0xff]
    %v1790 = vsel %vm75, %v908, 0
    %v1793 = vsel %vm75, %v909, 0
    %v1796 = vsel %vm75, %v910, 0
    %v1799 = vsel %vm75, %v911, 0
    %1801 = vmatprep.subr.mxu0 0.0
    %1802 = vmatpush1.msra.mxu0 0.0
    %1803 = vmatprep.subr.mxu0 0.0
    %1804 = vmatpush1.msra.mxu0 0.0
    %1805 = vmatprep.subr.mxu0 0.0
    %1806 = vmatpush1.msra.mxu0 0.0
    %1807 = vmatprep.subr.mxu0 0.0
    %1808 = vmatpush1.msra.mxu0 0.0
    %1809 = vmatprep.subr.mxu0 0.0
    %1810 = vmatpush1.msra.mxu0 0.0
    %1811 = vmatprep.subr.mxu0 0.0
    %1812 = vmatpush1.msra.mxu0 0.0
    %1813 = vmatprep.subr.mxu0 0.0
    %1814 = vmatpush1.msra.mxu0 0.0
    %1815 = vmatprep.subr.mxu0 0.0
    %1816 = vmatpush1.msra.mxu0 0.0
    %1817 = vmatprep.subr.mxu0 0.0
    %1818 = vmatpush1.msra.mxu0 %v1779
    %1819 = vmatprep.subr.mxu0 0.0
    %1820 = vmatpush1.msra.mxu0 %v1778
    %1821 = vmatprep.subr.mxu0 0.0
    %1822 = vmatpush1.msra.mxu0 %v1777
    %1823 = vmatprep.subr.mxu0 0.0
    %1824 = vmatpush1.msra.mxu0 %v1776
    %1825 = vmatprep.subr.mxu0 0.0
    %1826 = vmatpush1.msra.mxu0 %v1775
    %1827 = vmatprep.subr.mxu0 0.0
    %1828 = vmatpush1.msra.mxu0 %v1774
    %1829 = vmatprep.subr.mxu0 0.0
    %1830 = vmatpush1.msra.mxu0 %v1773
    %1831 = vmatprep.subr.mxu0 0.0
    %1832 = vmatpush1.msra.mxu0 %v1772
    %1833 = vmatprep.subr.mxu0 0.0
    %1834 = vmatpush2.msra.mxu0 0.0
    %1835 = vmatprep.subr.mxu0 0.0
    %1836 = vmatpush2.msra.mxu0 0.0
    %1837 = vmatprep.subr.mxu0 0.0
    %1838 = vmatpush2.msra.mxu0 0.0
    %1839 = vmatprep.subr.mxu0 0.0
    %1840 = vmatpush2.msra.mxu0 0.0
    %1841 = vmatprep.subr.mxu0 0.0
    %1842 = vmatpush2.msra.mxu0 0.0
    %1843 = vmatprep.subr.mxu0 0.0
    %1844 = vmatpush2.msra.mxu0 0.0
    %1845 = vmatprep.subr.mxu0 0.0
    %1846 = vmatpush2.msra.mxu0 0.0
    %1847 = vmatprep.subr.mxu0 0.0
    %1848 = vmatpush2.msra.mxu0 0.0
    %1849 = vmatprep.subr.mxu0 0.0
    %1850 = vmatpush2.msra.mxu0 0.0
    %1851 = vmatprep.subr.mxu0 0.0
    %1852 = vmatpush2.msra.mxu0 0.0
    %1853 = vmatprep.subr.mxu0 0.0
    %1854 = vmatpush2.msra.mxu0 0.0
    %1855 = vmatprep.subr.mxu0 0.0
    %1856 = vmatpush2.msra.mxu0 0.0
    %1857 = vmatprep.subr.mxu0 0.0
    %1858 = vmatpush2.msra.mxu0 0.0
    %1859 = vmatprep.subr.mxu0 0.0
    %1860 = vmatpush2.msra.mxu0 0.0
    %1861 = vmatprep.subr.mxu0 0.0
    %1862 = vmatpush2.msra.mxu0 0.0
    %1863 = vmatprep.subr.mxu0 0.0
    %1864 = vmatpush2.msra.mxu0 0.0
    %1865 = vmatprep.mubr.f32.mxu0 0.0
    %1866 = vmatmul.mubr.f32.gmra.mxu0 %v1790
    %v1867 = vpop.f32.mrf.mxu0
    %v1868 = vadd.f32 0.0, %v1867
    %v1869 = vpop.f32.mrf.mxu0
    %1870 = vmatprep.mubr.f32.mxu0 0.0
    %1871 = vmatmul.mubr.f32.gmra.mxu0 %v1793
    %v1872 = vpop.f32.mrf.mxu0
    %v1873 = vadd.f32 0.0, %v1872
    %v1874 = vpop.f32.mrf.mxu0
    %1875 = vmatprep.mubr.f32.mxu0 0.0
    %1876 = vmatmul.mubr.f32.gmra.mxu0 %v1796
    %v1877 = vpop.f32.mrf.mxu0
    %v1878 = vadd.f32 0.0, %v1877
    %v1879 = vpop.f32.mrf.mxu0
    %1880 = vmatprep.mubr.f32.mxu0 0.0
    %1881 = vmatmul.mubr.f32.gmra.mxu0 %v1799
    %v1882 = vpop.f32.mrf.mxu0
    %v1883 = vadd.f32 0.0, %v1882
    %v1884 = vpop.f32.mrf.mxu0
    %1885 = vdwg.mxu0
    %v1887 = vsel %vm173, %v1781, 0
    %v1890 = vsel %vm173, %v1782, 0
    %1892 = vmatprep.subr.mxu0 0.0
    %1893 = vmatpush1.msra.mxu0 0.0
    %1894 = vmatprep.subr.mxu0 0.0
    %1895 = vmatpush1.msra.mxu0 0.0
    %1896 = vmatprep.subr.mxu0 0.0
    %1897 = vmatpush1.msra.mxu0 0.0
    %1898 = vmatprep.subr.mxu0 0.0
    %1899 = vmatpush1.msra.mxu0 0.0
    %1900 = vmatprep.subr.mxu0 0.0
    %1901 = vmatpush1.msra.mxu0 0.0
    %1902 = vmatprep.subr.mxu0 0.0
    %1903 = vmatpush1.msra.mxu0 0.0
    %1904 = vmatprep.subr.mxu0 0.0
    %1905 = vmatpush1.msra.mxu0 0.0
    %1906 = vmatprep.subr.mxu0 0.0
    %1907 = vmatpush1.msra.mxu0 0.0
    %1908 = vmatprep.subr.mxu0 0.0
    %1909 = vmatpush1.msra.mxu0 0.0
    %1910 = vmatprep.subr.mxu0 0.0
    %1911 = vmatpush1.msra.mxu0 0.0
    %1912 = vmatprep.subr.mxu0 0.0
    %1913 = vmatpush1.msra.mxu0 0.0
    %1914 = vmatprep.subr.mxu0 0.0
    %1915 = vmatpush1.msra.mxu0 0.0
    %1916 = vmatprep.subr.mxu0 0.0
    %1917 = vmatpush1.msra.mxu0 0.0
    %1918 = vmatprep.subr.mxu0 0.0
    %1919 = vmatpush1.msra.mxu0 0.0
    %1920 = vmatprep.subr.mxu0 0.0
    %1921 = vmatpush1.msra.mxu0 %v1873
    %1922 = vmatprep.subr.mxu0 0.0
    %1923 = vmatpush1.msra.mxu0 %v1868
    %1924 = vmatprep.subr.mxu0 0.0
    %1925 = vmatpush2.msra.mxu0 0.0
    %1926 = vmatprep.subr.mxu0 0.0
    %1927 = vmatpush2.msra.mxu0 0.0
    %1928 = vmatprep.subr.mxu0 0.0
    %1929 = vmatpush2.msra.mxu0 0.0
    %1930 = vmatprep.subr.mxu0 0.0
    %1931 = vmatpush2.msra.mxu0 0.0
    %1932 = vmatprep.subr.mxu0 0.0
    %1933 = vmatpush2.msra.mxu0 0.0
    %1934 = vmatprep.subr.mxu0 0.0
    %1935 = vmatpush2.msra.mxu0 0.0
    %1936 = vmatprep.subr.mxu0 0.0
    %1937 = vmatpush2.msra.mxu0 0.0
    %1938 = vmatprep.subr.mxu0 0.0
    %1939 = vmatpush2.msra.mxu0 0.0
    %1940 = vmatprep.subr.mxu0 0.0
    %1941 = vmatpush2.msra.mxu0 0.0
    %1942 = vmatprep.subr.mxu0 0.0
    %1943 = vmatpush2.msra.mxu0 0.0
    %1944 = vmatprep.subr.mxu0 0.0
    %1945 = vmatpush2.msra.mxu0 0.0
    %1946 = vmatprep.subr.mxu0 0.0
    %1947 = vmatpush2.msra.mxu0 0.0
    %1948 = vmatprep.subr.mxu0 0.0
    %1949 = vmatpush2.msra.mxu0 0.0
    %1950 = vmatprep.subr.mxu0 0.0
    %1951 = vmatpush2.msra.mxu0 0.0
    %1952 = vmatprep.subr.mxu0 0.0
    %1953 = vmatpush2.msra.mxu0 0.0
    %1954 = vmatprep.subr.mxu0 0.0
    %1955 = vmatpush2.msra.mxu0 0.0
    %1956 = vmatprep.mubr.f32.mxu0 0.0
    %1957 = vmatmul.mubr.f32.gmra.mxu0 %v1887
    %v1958 = vpop.f32.mrf.mxu0
    %v1959 = vadd.f32 0.0, %v1958
    %v1960 = vpop.f32.mrf.mxu0
    %1961 = vmatprep.mubr.f32.mxu0 0.0
    %1962 = vmatmul.mubr.f32.gmra.mxu0 %v1890
    %v1963 = vpop.f32.mrf.mxu0
    %v1964 = vadd.f32 0.0, %v1963
    %v1965 = vpop.f32.mrf.mxu0
    %1966 = vdwg.mxu0
    %1967 = vmatprep.subr.mxu0 0.0
    %1968 = vmatpush1.msra.mxu0 0.0
    %1969 = vmatprep.subr.mxu0 0.0
    %1970 = vmatpush1.msra.mxu0 0.0
    %1971 = vmatprep.subr.mxu0 0.0
    %1972 = vmatpush1.msra.mxu0 0.0
    %1973 = vmatprep.subr.mxu0 0.0
    %1974 = vmatpush1.msra.mxu0 0.0
    %1975 = vmatprep.subr.mxu0 0.0
    %1976 = vmatpush1.msra.mxu0 0.0
    %1977 = vmatprep.subr.mxu0 0.0
    %1978 = vmatpush1.msra.mxu0 0.0
    %1979 = vmatprep.subr.mxu0 0.0
    %1980 = vmatpush1.msra.mxu0 0.0
    %1981 = vmatprep.subr.mxu0 0.0
    %1982 = vmatpush1.msra.mxu0 0.0
    %1983 = vmatprep.subr.mxu0 0.0
    %1984 = vmatpush1.msra.mxu0 0.0
    %1985 = vmatprep.subr.mxu0 0.0
    %1986 = vmatpush1.msra.mxu0 0.0
    %1987 = vmatprep.subr.mxu0 0.0
    %1988 = vmatpush1.msra.mxu0 0.0
    %1989 = vmatprep.subr.mxu0 0.0
    %1990 = vmatpush1.msra.mxu0 0.0
    %1991 = vmatprep.subr.mxu0 0.0
    %1992 = vmatpush1.msra.mxu0 0.0
    %1993 = vmatprep.subr.mxu0 0.0
    %1994 = vmatpush1.msra.mxu0 0.0
    %1995 = vmatprep.subr.mxu0 0.0
    %1996 = vmatpush1.msra.mxu0 %v1883
    %1997 = vmatprep.subr.mxu0 0.0
    %1998 = vmatpush1.msra.mxu0 %v1878
    %1999 = vmatprep.subr.mxu0 0.0
    %2000 = vmatpush2.msra.mxu0 0.0
    %2001 = vmatprep.subr.mxu0 0.0
    %2002 = vmatpush2.msra.mxu0 0.0
    %2003 = vmatprep.subr.mxu0 0.0
    %2004 = vmatpush2.msra.mxu0 0.0
    %2005 = vmatprep.subr.mxu0 0.0
    %2006 = vmatpush2.msra.mxu0 0.0
    %2007 = vmatprep.subr.mxu0 0.0
    %2008 = vmatpush2.msra.mxu0 0.0
    %2009 = vmatprep.subr.mxu0 0.0
    %2010 = vmatpush2.msra.mxu0 0.0
    %2011 = vmatprep.subr.mxu0 0.0
    %2012 = vmatpush2.msra.mxu0 0.0
    %2013 = vmatprep.subr.mxu0 0.0
    %2014 = vmatpush2.msra.mxu0 0.0
    %2015 = vmatprep.subr.mxu0 0.0
    %2016 = vmatpush2.msra.mxu0 0.0
    %2017 = vmatprep.subr.mxu0 0.0
    %2018 = vmatpush2.msra.mxu0 0.0
    %2019 = vmatprep.subr.mxu0 0.0
    %2020 = vmatpush2.msra.mxu0 0.0
    %2021 = vmatprep.subr.mxu0 0.0
    %2022 = vmatpush2.msra.mxu0 0.0
    %2023 = vmatprep.subr.mxu0 0.0
    %2024 = vmatpush2.msra.mxu0 0.0
    %2025 = vmatprep.subr.mxu0 0.0
    %2026 = vmatpush2.msra.mxu0 0.0
    %2027 = vmatprep.subr.mxu0 0.0
    %2028 = vmatpush2.msra.mxu0 0.0
    %2029 = vmatprep.subr.mxu0 0.0
    %2030 = vmatpush2.msra.mxu0 0.0
    %2031 = vmatprep.mubr.f32.mxu0 0.0
    %2032 = vmatmul.mubr.f32.gmra.mxu0 %v1887
    %v2033 = vpop.f32.mrf.mxu0
    %v2034 = vadd.f32 0.0, %v2033
    %v2035 = vpop.f32.mrf.mxu0
    %2036 = vmatprep.mubr.f32.mxu0 0.0
    %2037 = vmatmul.mubr.f32.gmra.mxu0 %v1890
    %v2038 = vpop.f32.mrf.mxu0
    %v2039 = vadd.f32 0.0, %v2038
    %v2040 = vpop.f32.mrf.mxu0
    %2041 = vdwg.mxu0
    %2044 = vrot.lane.b32.xlu0 %v1783, 112
    %v2045 = vpop.permute.xlu0 %2044
    %2046 = vrot.lane.b32.xlu0 %v1784, 112
    %v2047 = vpop.permute.xlu0 %2046
    %2050 = vrot.lane.b32.xlu0 %v1868, 112
    %v2051 = vpop.permute.xlu0 %2050
    %2052 = vrot.lane.b32.xlu0 %v1873, 112
    %v2053 = vpop.permute.xlu0 %2052
    %v2056 = vsel %vm173, %v2045, 0
    %v2058 = vsel %vm173, %v2047, 0
    %2060 = vmatprep.subr.mxu0 0.0
    %2061 = vmatpush1.msra.mxu0 0.0
    %2062 = vmatprep.subr.mxu0 0.0
    %2063 = vmatpush1.msra.mxu0 0.0
    %2064 = vmatprep.subr.mxu0 0.0
    %2065 = vmatpush1.msra.mxu0 0.0
    %2066 = vmatprep.subr.mxu0 0.0
    %2067 = vmatpush1.msra.mxu0 0.0
    %2068 = vmatprep.subr.mxu0 0.0
    %2069 = vmatpush1.msra.mxu0 0.0
    %2070 = vmatprep.subr.mxu0 0.0
    %2071 = vmatpush1.msra.mxu0 0.0
    %2072 = vmatprep.subr.mxu0 0.0
    %2073 = vmatpush1.msra.mxu0 0.0
    %2074 = vmatprep.subr.mxu0 0.0
    %2075 = vmatpush1.msra.mxu0 0.0
    %2076 = vmatprep.subr.mxu0 0.0
    %2077 = vmatpush1.msra.mxu0 0.0
    %2078 = vmatprep.subr.mxu0 0.0
    %2079 = vmatpush1.msra.mxu0 0.0
    %2080 = vmatprep.subr.mxu0 0.0
    %2081 = vmatpush1.msra.mxu0 0.0
    %2082 = vmatprep.subr.mxu0 0.0
    %2083 = vmatpush1.msra.mxu0 0.0
    %2084 = vmatprep.subr.mxu0 0.0
    %2085 = vmatpush1.msra.mxu0 0.0
    %2086 = vmatprep.subr.mxu0 0.0
    %2087 = vmatpush1.msra.mxu0 0.0
    %2088 = vmatprep.subr.mxu0 0.0
    %2089 = vmatpush1.msra.mxu0 %v2053
    %2090 = vmatprep.subr.mxu0 0.0
    %2091 = vmatpush1.msra.mxu0 %v2051
    %2092 = vmatprep.subr.mxu0 0.0
    %2093 = vmatpush2.msra.mxu0 0.0
    %2094 = vmatprep.subr.mxu0 0.0
    %2095 = vmatpush2.msra.mxu0 0.0
    %2096 = vmatprep.subr.mxu0 0.0
    %2097 = vmatpush2.msra.mxu0 0.0
    %2098 = vmatprep.subr.mxu0 0.0
    %2099 = vmatpush2.msra.mxu0 0.0
    %2100 = vmatprep.subr.mxu0 0.0
    %2101 = vmatpush2.msra.mxu0 0.0
    %2102 = vmatprep.subr.mxu0 0.0
    %2103 = vmatpush2.msra.mxu0 0.0
    %2104 = vmatprep.subr.mxu0 0.0
    %2105 = vmatpush2.msra.mxu0 0.0
    %2106 = vmatprep.subr.mxu0 0.0
    %2107 = vmatpush2.msra.mxu0 0.0
    %2108 = vmatprep.subr.mxu0 0.0
    %2109 = vmatpush2.msra.mxu0 0.0
    %2110 = vmatprep.subr.mxu0 0.0
    %2111 = vmatpush2.msra.mxu0 0.0
    %2112 = vmatprep.subr.mxu0 0.0
    %2113 = vmatpush2.msra.mxu0 0.0
    %2114 = vmatprep.subr.mxu0 0.0
    %2115 = vmatpush2.msra.mxu0 0.0
    %2116 = vmatprep.subr.mxu0 0.0
    %2117 = vmatpush2.msra.mxu0 0.0
    %2118 = vmatprep.subr.mxu0 0.0
    %2119 = vmatpush2.msra.mxu0 0.0
    %2120 = vmatprep.subr.mxu0 0.0
    %2121 = vmatpush2.msra.mxu0 0.0
    %2122 = vmatprep.subr.mxu0 0.0
    %2123 = vmatpush2.msra.mxu0 0.0
    %2124 = vmatprep.mubr.f32.mxu0 0.0
    %2125 = vmatmul.mubr.f32.gmra.mxu0 %v2056
    %v2126 = vpop.f32.mrf.mxu0
    %v2127 = vadd.f32 0.0, %v2126
    %v2128 = vpop.f32.mrf.mxu0
    %2129 = vmatprep.mubr.f32.mxu0 0.0
    %2130 = vmatmul.mubr.f32.gmra.mxu0 %v2058
    %v2131 = vpop.f32.mrf.mxu0
    %v2132 = vadd.f32 0.0, %v2131
    %v2133 = vpop.f32.mrf.mxu0
    %2134 = vdwg.mxu0
    %2137 = vrot.lane.b32.xlu0 %v1878, 112
    %v2138 = vpop.permute.xlu0 %2137
    %2139 = vrot.lane.b32.xlu0 %v1883, 112
    %v2140 = vpop.permute.xlu0 %2139
    %2143 = vmatprep.subr.mxu0 0.0
    %2144 = vmatpush1.msra.mxu0 0.0
    %2145 = vmatprep.subr.mxu0 0.0
    %2146 = vmatpush1.msra.mxu0 0.0
    %2147 = vmatprep.subr.mxu0 0.0
    %2148 = vmatpush1.msra.mxu0 0.0
    %2149 = vmatprep.subr.mxu0 0.0
    %2150 = vmatpush1.msra.mxu0 0.0
    %2151 = vmatprep.subr.mxu0 0.0
    %2152 = vmatpush1.msra.mxu0 0.0
    %2153 = vmatprep.subr.mxu0 0.0
    %2154 = vmatpush1.msra.mxu0 0.0
    %2155 = vmatprep.subr.mxu0 0.0
    %2156 = vmatpush1.msra.mxu0 0.0
    %2157 = vmatprep.subr.mxu0 0.0
    %2158 = vmatpush1.msra.mxu0 0.0
    %2159 = vmatprep.subr.mxu0 0.0
    %2160 = vmatpush1.msra.mxu0 0.0
    %2161 = vmatprep.subr.mxu0 0.0
    %2162 = vmatpush1.msra.mxu0 0.0
    %2163 = vmatprep.subr.mxu0 0.0
    %2164 = vmatpush1.msra.mxu0 0.0
    %2165 = vmatprep.subr.mxu0 0.0
    %2166 = vmatpush1.msra.mxu0 0.0
    %2167 = vmatprep.subr.mxu0 0.0
    %2168 = vmatpush1.msra.mxu0 0.0
    %2169 = vmatprep.subr.mxu0 0.0
    %2170 = vmatpush1.msra.mxu0 0.0
    %2171 = vmatprep.subr.mxu0 0.0
    %2172 = vmatpush1.msra.mxu0 %v2140
    %2173 = vmatprep.subr.mxu0 0.0
    %2174 = vmatpush1.msra.mxu0 %v2138
    %2175 = vmatprep.subr.mxu0 0.0
    %2176 = vmatpush2.msra.mxu0 0.0
    %2177 = vmatprep.subr.mxu0 0.0
    %2178 = vmatpush2.msra.mxu0 0.0
    %2179 = vmatprep.subr.mxu0 0.0
    %2180 = vmatpush2.msra.mxu0 0.0
    %2181 = vmatprep.subr.mxu0 0.0
    %2182 = vmatpush2.msra.mxu0 0.0
    %2183 = vmatprep.subr.mxu0 0.0
    %2184 = vmatpush2.msra.mxu0 0.0
    %2185 = vmatprep.subr.mxu0 0.0
    %2186 = vmatpush2.msra.mxu0 0.0
    %2187 = vmatprep.subr.mxu0 0.0
    %2188 = vmatpush2.msra.mxu0 0.0
    %2189 = vmatprep.subr.mxu0 0.0
    %2190 = vmatpush2.msra.mxu0 0.0
    %2191 = vmatprep.subr.mxu0 0.0
    %2192 = vmatpush2.msra.mxu0 0.0
    %2193 = vmatprep.subr.mxu0 0.0
    %2194 = vmatpush2.msra.mxu0 0.0
    %2195 = vmatprep.subr.mxu0 0.0
    %2196 = vmatpush2.msra.mxu0 0.0
    %2197 = vmatprep.subr.mxu0 0.0
    %2198 = vmatpush2.msra.mxu0 0.0
    %2199 = vmatprep.subr.mxu0 0.0
    %2200 = vmatpush2.msra.mxu0 0.0
    %2201 = vmatprep.subr.mxu0 0.0
    %2202 = vmatpush2.msra.mxu0 0.0
    %2203 = vmatprep.subr.mxu0 0.0
    %2204 = vmatpush2.msra.mxu0 0.0
    %2205 = vmatprep.subr.mxu0 0.0
    %2206 = vmatpush2.msra.mxu0 0.0
    %2207 = vmatprep.mubr.f32.mxu0 0.0
    %2208 = vmatmul.mubr.f32.gmra.mxu0 %v2056
    %v2209 = vpop.f32.mrf.mxu0
    %v2210 = vadd.f32 0.0, %v2209
    %v2211 = vpop.f32.mrf.mxu0
    %2212 = vmatprep.mubr.f32.mxu0 0.0
    %2213 = vmatmul.mubr.f32.gmra.mxu0 %v2058
    %v2214 = vpop.f32.mrf.mxu0
    %v2215 = vadd.f32 0.0, %v2214
    %v2216 = vpop.f32.mrf.mxu0
    %2217 = vdwg.mxu0
    %2220 = vrot.lane.b32.xlu0 %v1785, 96
    %v2221 = vpop.permute.xlu0 %2220
    %2222 = vrot.lane.b32.xlu0 %v1786, 96
    %v2223 = vpop.permute.xlu0 %2222
    %2224 = vrot.lane.b32.xlu0 %v1868, 96
    %v2225 = vpop.permute.xlu0 %2224
    %2226 = vrot.lane.b32.xlu0 %v1873, 96
    %v2227 = vpop.permute.xlu0 %2226
    %v2230 = vsel %vm173, %v2221, 0
    %v2232 = vsel %vm173, %v2223, 0
    %2234 = vmatprep.subr.mxu0 0.0
    %2235 = vmatpush1.msra.mxu0 0.0
    %2236 = vmatprep.subr.mxu0 0.0
    %2237 = vmatpush1.msra.mxu0 0.0
    %2238 = vmatprep.subr.mxu0 0.0
    %2239 = vmatpush1.msra.mxu0 0.0
    %2240 = vmatprep.subr.mxu0 0.0
    %2241 = vmatpush1.msra.mxu0 0.0
    %2242 = vmatprep.subr.mxu0 0.0
    %2243 = vmatpush1.msra.mxu0 0.0
    %2244 = vmatprep.subr.mxu0 0.0
    %2245 = vmatpush1.msra.mxu0 0.0
    %2246 = vmatprep.subr.mxu0 0.0
    %2247 = vmatpush1.msra.mxu0 0.0
    %2248 = vmatprep.subr.mxu0 0.0
    %2249 = vmatpush1.msra.mxu0 0.0
    %2250 = vmatprep.subr.mxu0 0.0
    %2251 = vmatpush1.msra.mxu0 0.0
    %2252 = vmatprep.subr.mxu0 0.0
    %2253 = vmatpush1.msra.mxu0 0.0
    %2254 = vmatprep.subr.mxu0 0.0
    %2255 = vmatpush1.msra.mxu0 0.0
    %2256 = vmatprep.subr.mxu0 0.0
    %2257 = vmatpush1.msra.mxu0 0.0
    %2258 = vmatprep.subr.mxu0 0.0
    %2259 = vmatpush1.msra.mxu0 0.0
    %2260 = vmatprep.subr.mxu0 0.0
    %2261 = vmatpush1.msra.mxu0 0.0
    %2262 = vmatprep.subr.mxu0 0.0
    %2263 = vmatpush1.msra.mxu0 %v2227
    %2264 = vmatprep.subr.mxu0 0.0
    %2265 = vmatpush1.msra.mxu0 %v2225
    %2266 = vmatprep.subr.mxu0 0.0
    %2267 = vmatpush2.msra.mxu0 0.0
    %2268 = vmatprep.subr.mxu0 0.0
    %2269 = vmatpush2.msra.mxu0 0.0
    %2270 = vmatprep.subr.mxu0 0.0
    %2271 = vmatpush2.msra.mxu0 0.0
    %2272 = vmatprep.subr.mxu0 0.0
    %2273 = vmatpush2.msra.mxu0 0.0
    %2274 = vmatprep.subr.mxu0 0.0
    %2275 = vmatpush2.msra.mxu0 0.0
    %2276 = vmatprep.subr.mxu0 0.0
    %2277 = vmatpush2.msra.mxu0 0.0
    %2278 = vmatprep.subr.mxu0 0.0
    %2279 = vmatpush2.msra.mxu0 0.0
    %2280 = vmatprep.subr.mxu0 0.0
    %2281 = vmatpush2.msra.mxu0 0.0
    %2282 = vmatprep.subr.mxu0 0.0
    %2283 = vmatpush2.msra.mxu0 0.0
    %2284 = vmatprep.subr.mxu0 0.0
    %2285 = vmatpush2.msra.mxu0 0.0
    %2286 = vmatprep.subr.mxu0 0.0
    %2287 = vmatpush2.msra.mxu0 0.0
    %2288 = vmatprep.subr.mxu0 0.0
    %2289 = vmatpush2.msra.mxu0 0.0
    %2290 = vmatprep.subr.mxu0 0.0
    %2291 = vmatpush2.msra.mxu0 0.0
    %2292 = vmatprep.subr.mxu0 0.0
    %2293 = vmatpush2.msra.mxu0 0.0
    %2294 = vmatprep.subr.mxu0 0.0
    %2295 = vmatpush2.msra.mxu0 0.0
    %2296 = vmatprep.subr.mxu0 0.0
    %2297 = vmatpush2.msra.mxu0 0.0
    %2298 = vmatprep.mubr.f32.mxu0 0.0
    %2299 = vmatmul.mubr.f32.gmra.mxu0 %v2230
    %v2300 = vpop.f32.mrf.mxu0
    %v2301 = vadd.f32 0.0, %v2300
    %v2302 = vpop.f32.mrf.mxu0
    %2303 = vmatprep.mubr.f32.mxu0 0.0
    %2304 = vmatmul.mubr.f32.gmra.mxu0 %v2232
    %v2305 = vpop.f32.mrf.mxu0
    %v2306 = vadd.f32 0.0, %v2305
    %v2307 = vpop.f32.mrf.mxu0
    %2308 = vdwg.mxu0
    %2309 = vrot.lane.b32.xlu0 %v1878, 96
    %v2310 = vpop.permute.xlu0 %2309
    %2311 = vrot.lane.b32.xlu0 %v1883, 96
    %v2312 = vpop.permute.xlu0 %2311
    %2315 = vmatprep.subr.mxu0 0.0
    %2316 = vmatpush1.msra.mxu0 0.0
    %2317 = vmatprep.subr.mxu0 0.0
    %2318 = vmatpush1.msra.mxu0 0.0
    %2319 = vmatprep.subr.mxu0 0.0
    %2320 = vmatpush1.msra.mxu0 0.0
    %2321 = vmatprep.subr.mxu0 0.0
    %2322 = vmatpush1.msra.mxu0 0.0
    %2323 = vmatprep.subr.mxu0 0.0
    %2324 = vmatpush1.msra.mxu0 0.0
    %2325 = vmatprep.subr.mxu0 0.0
    %2326 = vmatpush1.msra.mxu0 0.0
    %2327 = vmatprep.subr.mxu0 0.0
    %2328 = vmatpush1.msra.mxu0 0.0
    %2329 = vmatprep.subr.mxu0 0.0
    %2330 = vmatpush1.msra.mxu0 0.0
    %2331 = vmatprep.subr.mxu0 0.0
    %2332 = vmatpush1.msra.mxu0 0.0
    %2333 = vmatprep.subr.mxu0 0.0
    %2334 = vmatpush1.msra.mxu0 0.0
    %2335 = vmatprep.subr.mxu0 0.0
    %2336 = vmatpush1.msra.mxu0 0.0
    %2337 = vmatprep.subr.mxu0 0.0
    %2338 = vmatpush1.msra.mxu0 0.0
    %2339 = vmatprep.subr.mxu0 0.0
    %2340 = vmatpush1.msra.mxu0 0.0
    %2341 = vmatprep.subr.mxu0 0.0
    %2342 = vmatpush1.msra.mxu0 0.0
    %2343 = vmatprep.subr.mxu0 0.0
    %2344 = vmatpush1.msra.mxu0 %v2312
    %2345 = vmatprep.subr.mxu0 0.0
    %2346 = vmatpush1.msra.mxu0 %v2310
    %2347 = vmatprep.subr.mxu0 0.0
    %2348 = vmatpush2.msra.mxu0 0.0
    %2349 = vmatprep.subr.mxu0 0.0
    %2350 = vmatpush2.msra.mxu0 0.0
    %2351 = vmatprep.subr.mxu0 0.0
    %2352 = vmatpush2.msra.mxu0 0.0
    %2353 = vmatprep.subr.mxu0 0.0
    %2354 = vmatpush2.msra.mxu0 0.0
    %2355 = vmatprep.subr.mxu0 0.0
    %2356 = vmatpush2.msra.mxu0 0.0
    %2357 = vmatprep.subr.mxu0 0.0
    %2358 = vmatpush2.msra.mxu0 0.0
    %2359 = vmatprep.subr.mxu0 0.0
    %2360 = vmatpush2.msra.mxu0 0.0
    %2361 = vmatprep.subr.mxu0 0.0
    %2362 = vmatpush2.msra.mxu0 0.0
    %2363 = vmatprep.subr.mxu0 0.0
    %2364 = vmatpush2.msra.mxu0 0.0
    %2365 = vmatprep.subr.mxu0 0.0
    %2366 = vmatpush2.msra.mxu0 0.0
    %2367 = vmatprep.subr.mxu0 0.0
    %2368 = vmatpush2.msra.mxu0 0.0
    %2369 = vmatprep.subr.mxu0 0.0
    %2370 = vmatpush2.msra.mxu0 0.0
    %2371 = vmatprep.subr.mxu0 0.0
    %2372 = vmatpush2.msra.mxu0 0.0
    %2373 = vmatprep.subr.mxu0 0.0
    %2374 = vmatpush2.msra.mxu0 0.0
    %2375 = vmatprep.subr.mxu0 0.0
    %2376 = vmatpush2.msra.mxu0 0.0
    %2377 = vmatprep.subr.mxu0 0.0
    %2378 = vmatpush2.msra.mxu0 0.0
    %2379 = vmatprep.mubr.f32.mxu0 0.0
    %2380 = vmatmul.mubr.f32.gmra.mxu0 %v2230
    %v2381 = vpop.f32.mrf.mxu0
    %v2382 = vadd.f32 0.0, %v2381
    %v2383 = vpop.f32.mrf.mxu0
    %2384 = vmatprep.mubr.f32.mxu0 0.0
    %2385 = vmatmul.mubr.f32.gmra.mxu0 %v2232
    %v2386 = vpop.f32.mrf.mxu0
    %v2387 = vadd.f32 0.0, %v2386
    %v2388 = vpop.f32.mrf.mxu0
    %2389 = vdwg.mxu0
    %2392 = vrot.lane.b32.xlu0 %v1787, 80
    %v2393 = vpop.permute.xlu0 %2392
    %2394 = vrot.lane.b32.xlu0 %v1788, 80
    %v2395 = vpop.permute.xlu0 %2394
    %2396 = vrot.lane.b32.xlu0 %v1868, 80
    %v2397 = vpop.permute.xlu0 %2396
    %2398 = vrot.lane.b32.xlu0 %v1873, 80
    %v2399 = vpop.permute.xlu0 %2398
    %v2402 = vsel %vm173, %v2393, 0
    %v2404 = vsel %vm173, %v2395, 0
    %2406 = vmatprep.subr.mxu0 0.0
    %2407 = vmatpush1.msra.mxu0 0.0
    %2408 = vmatprep.subr.mxu0 0.0
    %2409 = vmatpush1.msra.mxu0 0.0
    %2410 = vmatprep.subr.mxu0 0.0
    %2411 = vmatpush1.msra.mxu0 0.0
    %2412 = vmatprep.subr.mxu0 0.0
    %2413 = vmatpush1.msra.mxu0 0.0
    %2414 = vmatprep.subr.mxu0 0.0
    %2415 = vmatpush1.msra.mxu0 0.0
    %2416 = vmatprep.subr.mxu0 0.0
    %2417 = vmatpush1.msra.mxu0 0.0
    %2418 = vmatprep.subr.mxu0 0.0
    %2419 = vmatpush1.msra.mxu0 0.0
    %2420 = vmatprep.subr.mxu0 0.0
    %2421 = vmatpush1.msra.mxu0 0.0
    %2422 = vmatprep.subr.mxu0 0.0
    %2423 = vmatpush1.msra.mxu0 0.0
    %2424 = vmatprep.subr.mxu0 0.0
    %2425 = vmatpush1.msra.mxu0 0.0
    %2426 = vmatprep.subr.mxu0 0.0
    %2427 = vmatpush1.msra.mxu0 0.0
    %2428 = vmatprep.subr.mxu0 0.0
    %2429 = vmatpush1.msra.mxu0 0.0
    %2430 = vmatprep.subr.mxu0 0.0
    %2431 = vmatpush1.msra.mxu0 0.0
    %2432 = vmatprep.subr.mxu0 0.0
    %2433 = vmatpush1.msra.mxu0 0.0
    %2434 = vmatprep.subr.mxu0 0.0
    %2435 = vmatpush1.msra.mxu0 %v2399
    %2436 = vmatprep.subr.mxu0 0.0
    %2437 = vmatpush1.msra.mxu0 %v2397
    %2438 = vmatprep.subr.mxu0 0.0
    %2439 = vmatpush2.msra.mxu0 0.0
    %2440 = vmatprep.subr.mxu0 0.0
    %2441 = vmatpush2.msra.mxu0 0.0
    %2442 = vmatprep.subr.mxu0 0.0
    %2443 = vmatpush2.msra.mxu0 0.0
    %2444 = vmatprep.subr.mxu0 0.0
    %2445 = vmatpush2.msra.mxu0 0.0
    %2446 = vmatprep.subr.mxu0 0.0
    %2447 = vmatpush2.msra.mxu0 0.0
    %2448 = vmatprep.subr.mxu0 0.0
    %2449 = vmatpush2.msra.mxu0 0.0
    %2450 = vmatprep.subr.mxu0 0.0
    %2451 = vmatpush2.msra.mxu0 0.0
    %2452 = vmatprep.subr.mxu0 0.0
    %2453 = vmatpush2.msra.mxu0 0.0
    %2454 = vmatprep.subr.mxu0 0.0
    %2455 = vmatpush2.msra.mxu0 0.0
    %2456 = vmatprep.subr.mxu0 0.0
    %2457 = vmatpush2.msra.mxu0 0.0
    %2458 = vmatprep.subr.mxu0 0.0
    %2459 = vmatpush2.msra.mxu0 0.0
    %2460 = vmatprep.subr.mxu0 0.0
    %2461 = vmatpush2.msra.mxu0 0.0
    %2462 = vmatprep.subr.mxu0 0.0
    %2463 = vmatpush2.msra.mxu0 0.0
    %2464 = vmatprep.subr.mxu0 0.0
    %2465 = vmatpush2.msra.mxu0 0.0
    %2466 = vmatprep.subr.mxu0 0.0
    %2467 = vmatpush2.msra.mxu0 0.0
    %2468 = vmatprep.subr.mxu0 0.0
    %2469 = vmatpush2.msra.mxu0 0.0
    %2470 = vmatprep.mubr.f32.mxu0 0.0
    %2471 = vmatmul.mubr.f32.gmra.mxu0 %v2402
    %v2472 = vpop.f32.mrf.mxu0
    %v2473 = vadd.f32 0.0, %v2472
    %v2474 = vpop.f32.mrf.mxu0
    %2475 = vmatprep.mubr.f32.mxu0 0.0
    %2476 = vmatmul.mubr.f32.gmra.mxu0 %v2404
    %v2477 = vpop.f32.mrf.mxu0
    %v2478 = vadd.f32 0.0, %v2477
    %v2479 = vpop.f32.mrf.mxu0
    %2480 = vdwg.mxu0
    %2481 = vrot.lane.b32.xlu0 %v1878, 80
    %v2482 = vpop.permute.xlu0 %2481
    %2483 = vrot.lane.b32.xlu0 %v1883, 80
    %v2484 = vpop.permute.xlu0 %2483
    %2487 = vmatprep.subr.mxu0 0.0
    %2488 = vmatpush1.msra.mxu0 0.0
    %2489 = vmatprep.subr.mxu0 0.0
    %2490 = vmatpush1.msra.mxu0 0.0
    %2491 = vmatprep.subr.mxu0 0.0
    %2492 = vmatpush1.msra.mxu0 0.0
    %2493 = vmatprep.subr.mxu0 0.0
    %2494 = vmatpush1.msra.mxu0 0.0
    %2495 = vmatprep.subr.mxu0 0.0
    %2496 = vmatpush1.msra.mxu0 0.0
    %2497 = vmatprep.subr.mxu0 0.0
    %2498 = vmatpush1.msra.mxu0 0.0
    %2499 = vmatprep.subr.mxu0 0.0
    %2500 = vmatpush1.msra.mxu0 0.0
    %2501 = vmatprep.subr.mxu0 0.0
    %2502 = vmatpush1.msra.mxu0 0.0
    %2503 = vmatprep.subr.mxu0 0.0
    %2504 = vmatpush1.msra.mxu0 0.0
    %2505 = vmatprep.subr.mxu0 0.0
    %2506 = vmatpush1.msra.mxu0 0.0
    %2507 = vmatprep.subr.mxu0 0.0
    %2508 = vmatpush1.msra.mxu0 0.0
    %2509 = vmatprep.subr.mxu0 0.0
    %2510 = vmatpush1.msra.mxu0 0.0
    %2511 = vmatprep.subr.mxu0 0.0
    %2512 = vmatpush1.msra.mxu0 0.0
    %2513 = vmatprep.subr.mxu0 0.0
    %2514 = vmatpush1.msra.mxu0 0.0
    %2515 = vmatprep.subr.mxu0 0.0
    %2516 = vmatpush1.msra.mxu0 %v2484
    %2517 = vmatprep.subr.mxu0 0.0
    %2518 = vmatpush1.msra.mxu0 %v2482
    %2519 = vmatprep.subr.mxu0 0.0
    %2520 = vmatpush2.msra.mxu0 0.0
    %2521 = vmatprep.subr.mxu0 0.0
    %2522 = vmatpush2.msra.mxu0 0.0
    %2523 = vmatprep.subr.mxu0 0.0
    %2524 = vmatpush2.msra.mxu0 0.0
    %2525 = vmatprep.subr.mxu0 0.0
    %2526 = vmatpush2.msra.mxu0 0.0
    %2527 = vmatprep.subr.mxu0 0.0
    %2528 = vmatpush2.msra.mxu0 0.0
    %2529 = vmatprep.subr.mxu0 0.0
    %2530 = vmatpush2.msra.mxu0 0.0
    %2531 = vmatprep.subr.mxu0 0.0
    %2532 = vmatpush2.msra.mxu0 0.0
    %2533 = vmatprep.subr.mxu0 0.0
    %2534 = vmatpush2.msra.mxu0 0.0
    %2535 = vmatprep.subr.mxu0 0.0
    %2536 = vmatpush2.msra.mxu0 0.0
    %2537 = vmatprep.subr.mxu0 0.0
    %2538 = vmatpush2.msra.mxu0 0.0
    %2539 = vmatprep.subr.mxu0 0.0
    %2540 = vmatpush2.msra.mxu0 0.0
    %2541 = vmatprep.subr.mxu0 0.0
    %2542 = vmatpush2.msra.mxu0 0.0
    %2543 = vmatprep.subr.mxu0 0.0
    %2544 = vmatpush2.msra.mxu0 0.0
    %2545 = vmatprep.subr.mxu0 0.0
    %2546 = vmatpush2.msra.mxu0 0.0
    %2547 = vmatprep.subr.mxu0 0.0
    %2548 = vmatpush2.msra.mxu0 0.0
    %2549 = vmatprep.subr.mxu0 0.0
    %2550 = vmatpush2.msra.mxu0 0.0
    %2551 = vmatprep.mubr.f32.mxu0 0.0
    %2552 = vmatmul.mubr.f32.gmra.mxu0 %v2402
    %v2553 = vpop.f32.mrf.mxu0
    %v2554 = vadd.f32 0.0, %v2553
    %v2555 = vpop.f32.mrf.mxu0
    %2556 = vmatprep.mubr.f32.mxu0 0.0
    %2557 = vmatmul.mubr.f32.gmra.mxu0 %v2404
    %v2558 = vpop.f32.mrf.mxu0
    %v2559 = vadd.f32 0.0, %v2558
    %v2560 = vpop.f32.mrf.mxu0
    %2561 = vdwg.mxu0
    %2566 = vrot.lane.b32.xlu0 %v2127, 16
    %v2567 = vpop.permute.xlu0 %2566
    %2568 = vrot.lane.b32.xlu0 %v2132, 16
    %v2569 = vpop.permute.xlu0 %2568
    %2570 = vrot.lane.b32.xlu0 %v2210, 16
    %v2571 = vpop.permute.xlu0 %2570
    %2572 = vrot.lane.b32.xlu0 %v2215, 16
    %v2573 = vpop.permute.xlu0 %2572
    %2582 = vrot.lane.b32.xlu0 %v2301, 32
    %v2583 = vpop.permute.xlu0 %2582
    %2584 = vrot.lane.b32.xlu0 %v2306, 32
    %v2585 = vpop.permute.xlu0 %2584
    %2586 = vrot.lane.b32.xlu0 %v2382, 32
    %v2587 = vpop.permute.xlu0 %2586
    %2588 = vrot.lane.b32.xlu0 %v2387, 32
    %v2589 = vpop.permute.xlu0 %2588
    %2598 = vrot.lane.b32.xlu0 %v2473, 48
    %v2599 = vpop.permute.xlu0 %2598
    %2600 = vrot.lane.b32.xlu0 %v2478, 48
    %v2601 = vpop.permute.xlu0 %2600
    %2602 = vrot.lane.b32.xlu0 %v2554, 48
    %v2603 = vpop.permute.xlu0 %2602
    %2604 = vrot.lane.b32.xlu0 %v2559, 48
    %v2605 = vpop.permute.xlu0 %2604
    %v2610 = vsel %vm173, %v1959, %v2567
    %v2611 = vsel %vm173, %v1964, %v2569
    %v2612 = vsel %vm173, %v2034, %v2571
    %v2613 = vsel %vm173, %v2039, %v2573
    %v2614 = vsel %vm902, %v2610, %v2583
    %v2615 = vsel %vm902, %v2611, %v2585
    %v2616 = vsel %vm902, %v2612, %v2587
    %v2617 = vsel %vm902, %v2613, %v2589
    %v2618 = vsel %vm907, %v2614, %v2599
    %v2619 = vsel %vm907, %v2615, %v2601
    %v2620 = vsel %vm907, %v2616, %v2603
    %v2621 = vsel %vm907, %v2617, %v2605
    %s2622 = scalar_lea.vmem [#allocation7], 384
    %v2623 = vld [vmem:[%s2622] sm:$0xff]
    %v2624 = vld [vmem:[%s2622 + $0x8] sm:$0xff]
    %v2625 = vld [vmem:[%s2622 + $0x10] sm:$0xff]
    %v2626 = vld [vmem:[%s2622 + $0x18] sm:$0xff]
    %v2627 = vld [vmem:[%s2622 + $0x20] sm:$0xff]
    %v2628 = vld [vmem:[%s2622 + $0x28] sm:$0xff]
    %v2629 = vld [vmem:[%s2622 + $0x30] sm:$0xff]
    %v2630 = vld [vmem:[%s2622 + $0x38] sm:$0xff]
    %s2631 = scalar_lea.vmem [#allocation7], 448
    %v2632 = vld [vmem:[%s2631] sm:$0xff]
    %v2633 = vld [vmem:[%s2631 + $0x8] sm:$0xff]
    %v2634 = vld [vmem:[%s2631 + $0x10] sm:$0xff]
    %v2635 = vld [vmem:[%s2631 + $0x18] sm:$0xff]
    %v2636 = vld [vmem:[%s2631 + $0x20] sm:$0xff]
    %v2637 = vld [vmem:[%s2631 + $0x28] sm:$0xff]
    %v2638 = vld [vmem:[%s2631 + $0x30] sm:$0xff]
    %v2639 = vld [vmem:[%s2631 + $0x38] sm:$0xff]
    %2640 = vmatprep.subr.mxu0 0.0
    %2641 = vmatpush1.msra.mxu0 0.0
    %2642 = vmatprep.subr.mxu0 0.0
    %2643 = vmatpush1.msra.mxu0 0.0
    %2644 = vmatprep.subr.mxu0 0.0
    %2645 = vmatpush1.msra.mxu0 0.0
    %2646 = vmatprep.subr.mxu0 0.0
    %2647 = vmatpush1.msra.mxu0 0.0
    %2648 = vmatprep.subr.mxu0 0.0
    %2649 = vmatpush1.msra.mxu0 0.0
    %2650 = vmatprep.subr.mxu0 0.0
    %2651 = vmatpush1.msra.mxu0 0.0
    %2652 = vmatprep.subr.mxu0 0.0
    %2653 = vmatpush1.msra.mxu0 0.0
    %2654 = vmatprep.subr.mxu0 0.0
    %2655 = vmatpush1.msra.mxu0 0.0
    %2656 = vmatprep.subr.mxu0 0.0
    %2657 = vmatpush1.msra.mxu0 %v2630
    %2658 = vmatprep.subr.mxu0 0.0
    %2659 = vmatpush1.msra.mxu0 %v2629
    %2660 = vmatprep.subr.mxu0 0.0
    %2661 = vmatpush1.msra.mxu0 %v2628
    %2662 = vmatprep.subr.mxu0 0.0
    %2663 = vmatpush1.msra.mxu0 %v2627
    %2664 = vmatprep.subr.mxu0 0.0
    %2665 = vmatpush1.msra.mxu0 %v2626
    %2666 = vmatprep.subr.mxu0 0.0
    %2667 = vmatpush1.msra.mxu0 %v2625
    %2668 = vmatprep.subr.mxu0 0.0
    %2669 = vmatpush1.msra.mxu0 %v2624
    %2670 = vmatprep.subr.mxu0 0.0
    %2671 = vmatpush1.msra.mxu0 %v2623
    %2672 = vmatprep.subr.mxu0 0.0
    %2673 = vmatpush2.msra.mxu0 0.0
    %2674 = vmatprep.subr.mxu0 0.0
    %2675 = vmatpush2.msra.mxu0 0.0
    %2676 = vmatprep.subr.mxu0 0.0
    %2677 = vmatpush2.msra.mxu0 0.0
    %2678 = vmatprep.subr.mxu0 0.0
    %2679 = vmatpush2.msra.mxu0 0.0
    %2680 = vmatprep.subr.mxu0 0.0
    %2681 = vmatpush2.msra.mxu0 0.0
    %2682 = vmatprep.subr.mxu0 0.0
    %2683 = vmatpush2.msra.mxu0 0.0
    %2684 = vmatprep.subr.mxu0 0.0
    %2685 = vmatpush2.msra.mxu0 0.0
    %2686 = vmatprep.subr.mxu0 0.0
    %2687 = vmatpush2.msra.mxu0 0.0
    %2688 = vmatprep.subr.mxu0 0.0
    %2689 = vmatpush2.msra.mxu0 0.0
    %2690 = vmatprep.subr.mxu0 0.0
    %2691 = vmatpush2.msra.mxu0 0.0
    %2692 = vmatprep.subr.mxu0 0.0
    %2693 = vmatpush2.msra.mxu0 0.0
    %2694 = vmatprep.subr.mxu0 0.0
    %2695 = vmatpush2.msra.mxu0 0.0
    %2696 = vmatprep.subr.mxu0 0.0
    %2697 = vmatpush2.msra.mxu0 0.0
    %2698 = vmatprep.subr.mxu0 0.0
    %2699 = vmatpush2.msra.mxu0 0.0
    %2700 = vmatprep.subr.mxu0 0.0
    %2701 = vmatpush2.msra.mxu0 0.0
    %2702 = vmatprep.subr.mxu0 0.0
    %2703 = vmatpush2.msra.mxu0 0.0
    %2704 = vmatprep.mubr.f32.mxu0 0.0
    %2705 = vmatmul.mubr.f32.gmra.mxu0 %v1790
    %v2706 = vpop.f32.mrf.mxu0
    %v2707 = vadd.f32 0.0, %v2706
    %v2708 = vpop.f32.mrf.mxu0
    %2709 = vmatprep.mubr.f32.mxu0 0.0
    %2710 = vmatmul.mubr.f32.gmra.mxu0 %v1793
    %v2711 = vpop.f32.mrf.mxu0
    %v2712 = vadd.f32 0.0, %v2711
    %v2713 = vpop.f32.mrf.mxu0
    %2714 = vmatprep.mubr.f32.mxu0 0.0
    %2715 = vmatmul.mubr.f32.gmra.mxu0 %v1796
    %v2716 = vpop.f32.mrf.mxu0
    %v2717 = vadd.f32 0.0, %v2716
    %v2718 = vpop.f32.mrf.mxu0
    %2719 = vmatprep.mubr.f32.mxu0 0.0
    %2720 = vmatmul.mubr.f32.gmra.mxu0 %v1799
    %v2721 = vpop.f32.mrf.mxu0
    %v2722 = vadd.f32 0.0, %v2721
    %v2723 = vpop.f32.mrf.mxu0
    %2724 = vdwg.mxu0
    %v2726 = vsel %vm173, %v2632, 0
    %v2729 = vsel %vm173, %v2633, 0
    %2731 = vmatprep.subr.mxu0 0.0
    %2732 = vmatpush1.msra.mxu0 0.0
    %2733 = vmatprep.subr.mxu0 0.0
    %2734 = vmatpush1.msra.mxu0 0.0
    %2735 = vmatprep.subr.mxu0 0.0
    %2736 = vmatpush1.msra.mxu0 0.0
    %2737 = vmatprep.subr.mxu0 0.0
    %2738 = vmatpush1.msra.mxu0 0.0
    %2739 = vmatprep.subr.mxu0 0.0
    %2740 = vmatpush1.msra.mxu0 0.0
    %2741 = vmatprep.subr.mxu0 0.0
    %2742 = vmatpush1.msra.mxu0 0.0
    %2743 = vmatprep.subr.mxu0 0.0
    %2744 = vmatpush1.msra.mxu0 0.0
    %2745 = vmatprep.subr.mxu0 0.0
    %2746 = vmatpush1.msra.mxu0 0.0
    %2747 = vmatprep.subr.mxu0 0.0
    %2748 = vmatpush1.msra.mxu0 0.0
    %2749 = vmatprep.subr.mxu0 0.0
    %2750 = vmatpush1.msra.mxu0 0.0
    %2751 = vmatprep.subr.mxu0 0.0
    %2752 = vmatpush1.msra.mxu0 0.0
    %2753 = vmatprep.subr.mxu0 0.0
    %2754 = vmatpush1.msra.mxu0 0.0
    %2755 = vmatprep.subr.mxu0 0.0
    %2756 = vmatpush1.msra.mxu0 0.0
    %2757 = vmatprep.subr.mxu0 0.0
    %2758 = vmatpush1.msra.mxu0 0.0
    %2759 = vmatprep.subr.mxu0 0.0
    %2760 = vmatpush1.msra.mxu0 %v2712
    %2761 = vmatprep.subr.mxu0 0.0
    %2762 = vmatpush1.msra.mxu0 %v2707
    %2763 = vmatprep.subr.mxu0 0.0
    %2764 = vmatpush2.msra.mxu0 0.0
    %2765 = vmatprep.subr.mxu0 0.0
    %2766 = vmatpush2.msra.mxu0 0.0
    %2767 = vmatprep.subr.mxu0 0.0
    %2768 = vmatpush2.msra.mxu0 0.0
    %2769 = vmatprep.subr.mxu0 0.0
    %2770 = vmatpush2.msra.mxu0 0.0
    %2771 = vmatprep.subr.mxu0 0.0
    %2772 = vmatpush2.msra.mxu0 0.0
    %2773 = vmatprep.subr.mxu0 0.0
    %2774 = vmatpush2.msra.mxu0 0.0
    %2775 = vmatprep.subr.mxu0 0.0
    %2776 = vmatpush2.msra.mxu0 0.0
    %2777 = vmatprep.subr.mxu0 0.0
    %2778 = vmatpush2.msra.mxu0 0.0
    %2779 = vmatprep.subr.mxu0 0.0
    %2780 = vmatpush2.msra.mxu0 0.0
    %2781 = vmatprep.subr.mxu0 0.0
    %2782 = vmatpush2.msra.mxu0 0.0
    %2783 = vmatprep.subr.mxu0 0.0
    %2784 = vmatpush2.msra.mxu0 0.0
    %2785 = vmatprep.subr.mxu0 0.0
    %2786 = vmatpush2.msra.mxu0 0.0
    %2787 = vmatprep.subr.mxu0 0.0
    %2788 = vmatpush2.msra.mxu0 0.0
    %2789 = vmatprep.subr.mxu0 0.0
    %2790 = vmatpush2.msra.mxu0 0.0
    %2791 = vmatprep.subr.mxu0 0.0
    %2792 = vmatpush2.msra.mxu0 0.0
    %2793 = vmatprep.subr.mxu0 0.0
    %2794 = vmatpush2.msra.mxu0 0.0
    %2795 = vmatprep.mubr.f32.mxu0 0.0
    %2796 = vmatmul.mubr.f32.gmra.mxu0 %v2726
    %v2797 = vpop.f32.mrf.mxu0
    %v2798 = vadd.f32 0.0, %v2797
    %v2799 = vpop.f32.mrf.mxu0
    %2800 = vmatprep.mubr.f32.mxu0 0.0
    %2801 = vmatmul.mubr.f32.gmra.mxu0 %v2729
    %v2802 = vpop.f32.mrf.mxu0
    %v2803 = vadd.f32 0.0, %v2802
    %v2804 = vpop.f32.mrf.mxu0
    %2805 = vdwg.mxu0
    %2806 = vmatprep.subr.mxu0 0.0
    %2807 = vmatpush1.msra.mxu0 0.0
    %2808 = vmatprep.subr.mxu0 0.0
    %2809 = vmatpush1.msra.mxu0 0.0
    %2810 = vmatprep.subr.mxu0 0.0
    %2811 = vmatpush1.msra.mxu0 0.0
    %2812 = vmatprep.subr.mxu0 0.0
    %2813 = vmatpush1.msra.mxu0 0.0
    %2814 = vmatprep.subr.mxu0 0.0
    %2815 = vmatpush1.msra.mxu0 0.0
    %2816 = vmatprep.subr.mxu0 0.0
    %2817 = vmatpush1.msra.mxu0 0.0
    %2818 = vmatprep.subr.mxu0 0.0
    %2819 = vmatpush1.msra.mxu0 0.0
    %2820 = vmatprep.subr.mxu0 0.0
    %2821 = vmatpush1.msra.mxu0 0.0
    %2822 = vmatprep.subr.mxu0 0.0
    %2823 = vmatpush1.msra.mxu0 0.0
    %2824 = vmatprep.subr.mxu0 0.0
    %2825 = vmatpush1.msra.mxu0 0.0
    %2826 = vmatprep.subr.mxu0 0.0
    %2827 = vmatpush1.msra.mxu0 0.0
    %2828 = vmatprep.subr.mxu0 0.0
    %2829 = vmatpush1.msra.mxu0 0.0
    %2830 = vmatprep.subr.mxu0 0.0
    %2831 = vmatpush1.msra.mxu0 0.0
    %2832 = vmatprep.subr.mxu0 0.0
    %2833 = vmatpush1.msra.mxu0 0.0
    %2834 = vmatprep.subr.mxu0 0.0
    %2835 = vmatpush1.msra.mxu0 %v2722
    %2836 = vmatprep.subr.mxu0 0.0
    %2837 = vmatpush1.msra.mxu0 %v2717
    %2838 = vmatprep.subr.mxu0 0.0
    %2839 = vmatpush2.msra.mxu0 0.0
    %2840 = vmatprep.subr.mxu0 0.0
    %2841 = vmatpush2.msra.mxu0 0.0
    %2842 = vmatprep.subr.mxu0 0.0
    %2843 = vmatpush2.msra.mxu0 0.0
    %2844 = vmatprep.subr.mxu0 0.0
    %2845 = vmatpush2.msra.mxu0 0.0
    %2846 = vmatprep.subr.mxu0 0.0
    %2847 = vmatpush2.msra.mxu0 0.0
    %2848 = vmatprep.subr.mxu0 0.0
    %2849 = vmatpush2.msra.mxu0 0.0
    %2850 = vmatprep.subr.mxu0 0.0
    %2851 = vmatpush2.msra.mxu0 0.0
    %2852 = vmatprep.subr.mxu0 0.0
    %2853 = vmatpush2.msra.mxu0 0.0
    %2854 = vmatprep.subr.mxu0 0.0
    %2855 = vmatpush2.msra.mxu0 0.0
    %2856 = vmatprep.subr.mxu0 0.0
    %2857 = vmatpush2.msra.mxu0 0.0
    %2858 = vmatprep.subr.mxu0 0.0
    %2859 = vmatpush2.msra.mxu0 0.0
    %2860 = vmatprep.subr.mxu0 0.0
    %2861 = vmatpush2.msra.mxu0 0.0
    %2862 = vmatprep.subr.mxu0 0.0
    %2863 = vmatpush2.msra.mxu0 0.0
    %2864 = vmatprep.subr.mxu0 0.0
    %2865 = vmatpush2.msra.mxu0 0.0
    %2866 = vmatprep.subr.mxu0 0.0
    %2867 = vmatpush2.msra.mxu0 0.0
    %2868 = vmatprep.subr.mxu0 0.0
    %2869 = vmatpush2.msra.mxu0 0.0
    %2870 = vmatprep.mubr.f32.mxu0 0.0
    %2871 = vmatmul.mubr.f32.gmra.mxu0 %v2726
    %v2872 = vpop.f32.mrf.mxu0
    %v2873 = vadd.f32 0.0, %v2872
    %v2874 = vpop.f32.mrf.mxu0
    %2875 = vmatprep.mubr.f32.mxu0 0.0
    %2876 = vmatmul.mubr.f32.gmra.mxu0 %v2729
    %v2877 = vpop.f32.mrf.mxu0
    %v2878 = vadd.f32 0.0, %v2877
    %v2879 = vpop.f32.mrf.mxu0
    %2880 = vdwg.mxu0
    %2883 = vrot.lane.b32.xlu0 %v2634, 112
    %v2884 = vpop.permute.xlu0 %2883
    %2885 = vrot.lane.b32.xlu0 %v2635, 112
    %v2886 = vpop.permute.xlu0 %2885
    %2889 = vrot.lane.b32.xlu0 %v2707, 112
    %v2890 = vpop.permute.xlu0 %2889
    %2891 = vrot.lane.b32.xlu0 %v2712, 112
    %v2892 = vpop.permute.xlu0 %2891
    %v2895 = vsel %vm173, %v2884, 0
    %v2897 = vsel %vm173, %v2886, 0
    %2899 = vmatprep.subr.mxu0 0.0
    %2900 = vmatpush1.msra.mxu0 0.0
    %2901 = vmatprep.subr.mxu0 0.0
    %2902 = vmatpush1.msra.mxu0 0.0
    %2903 = vmatprep.subr.mxu0 0.0
    %2904 = vmatpush1.msra.mxu0 0.0
    %2905 = vmatprep.subr.mxu0 0.0
    %2906 = vmatpush1.msra.mxu0 0.0
    %2907 = vmatprep.subr.mxu0 0.0
    %2908 = vmatpush1.msra.mxu0 0.0
    %2909 = vmatprep.subr.mxu0 0.0
    %2910 = vmatpush1.msra.mxu0 0.0
    %2911 = vmatprep.subr.mxu0 0.0
    %2912 = vmatpush1.msra.mxu0 0.0
    %2913 = vmatprep.subr.mxu0 0.0
    %2914 = vmatpush1.msra.mxu0 0.0
    %2915 = vmatprep.subr.mxu0 0.0
    %2916 = vmatpush1.msra.mxu0 0.0
    %2917 = vmatprep.subr.mxu0 0.0
    %2918 = vmatpush1.msra.mxu0 0.0
    %2919 = vmatprep.subr.mxu0 0.0
    %2920 = vmatpush1.msra.mxu0 0.0
    %2921 = vmatprep.subr.mxu0 0.0
    %2922 = vmatpush1.msra.mxu0 0.0
    %2923 = vmatprep.subr.mxu0 0.0
    %2924 = vmatpush1.msra.mxu0 0.0
    %2925 = vmatprep.subr.mxu0 0.0
    %2926 = vmatpush1.msra.mxu0 0.0
    %2927 = vmatprep.subr.mxu0 0.0
    %2928 = vmatpush1.msra.mxu0 %v2892
    %2929 = vmatprep.subr.mxu0 0.0
    %2930 = vmatpush1.msra.mxu0 %v2890
    %2931 = vmatprep.subr.mxu0 0.0
    %2932 = vmatpush2.msra.mxu0 0.0
    %2933 = vmatprep.subr.mxu0 0.0
    %2934 = vmatpush2.msra.mxu0 0.0
    %2935 = vmatprep.subr.mxu0 0.0
    %2936 = vmatpush2.msra.mxu0 0.0
    %2937 = vmatprep.subr.mxu0 0.0
    %2938 = vmatpush2.msra.mxu0 0.0
    %2939 = vmatprep.subr.mxu0 0.0
    %2940 = vmatpush2.msra.mxu0 0.0
    %2941 = vmatprep.subr.mxu0 0.0
    %2942 = vmatpush2.msra.mxu0 0.0
    %2943 = vmatprep.subr.mxu0 0.0
    %2944 = vmatpush2.msra.mxu0 0.0
    %2945 = vmatprep.subr.mxu0 0.0
    %2946 = vmatpush2.msra.mxu0 0.0
    %2947 = vmatprep.subr.mxu0 0.0
    %2948 = vmatpush2.msra.mxu0 0.0
    %2949 = vmatprep.subr.mxu0 0.0
    %2950 = vmatpush2.msra.mxu0 0.0
    %2951 = vmatprep.subr.mxu0 0.0
    %2952 = vmatpush2.msra.mxu0 0.0
    %2953 = vmatprep.subr.mxu0 0.0
    %2954 = vmatpush2.msra.mxu0 0.0
    %2955 = vmatprep.subr.mxu0 0.0
    %2956 = vmatpush2.msra.mxu0 0.0
    %2957 = vmatprep.subr.mxu0 0.0
    %2958 = vmatpush2.msra.mxu0 0.0
    %2959 = vmatprep.subr.mxu0 0.0
    %2960 = vmatpush2.msra.mxu0 0.0
    %2961 = vmatprep.subr.mxu0 0.0
    %2962 = vmatpush2.msra.mxu0 0.0
    %2963 = vmatprep.mubr.f32.mxu0 0.0
    %2964 = vmatmul.mubr.f32.gmra.mxu0 %v2895
    %v2965 = vpop.f32.mrf.mxu0
    %v2966 = vadd.f32 0.0, %v2965
    %v2967 = vpop.f32.mrf.mxu0
    %2968 = vmatprep.mubr.f32.mxu0 0.0
    %2969 = vmatmul.mubr.f32.gmra.mxu0 %v2897
    %v2970 = vpop.f32.mrf.mxu0
    %v2971 = vadd.f32 0.0, %v2970
    %v2972 = vpop.f32.mrf.mxu0
    %2973 = vdwg.mxu0
    %2976 = vrot.lane.b32.xlu0 %v2717, 112
    %v2977 = vpop.permute.xlu0 %2976
    %2978 = vrot.lane.b32.xlu0 %v2722, 112
    %v2979 = vpop.permute.xlu0 %2978
    %2982 = vmatprep.subr.mxu0 0.0
    %2983 = vmatpush1.msra.mxu0 0.0
    %2984 = vmatprep.subr.mxu0 0.0
    %2985 = vmatpush1.msra.mxu0 0.0
    %2986 = vmatprep.subr.mxu0 0.0
    %2987 = vmatpush1.msra.mxu0 0.0
    %2988 = vmatprep.subr.mxu0 0.0
    %2989 = vmatpush1.msra.mxu0 0.0
    %2990 = vmatprep.subr.mxu0 0.0
    %2991 = vmatpush1.msra.mxu0 0.0
    %2992 = vmatprep.subr.mxu0 0.0
    %2993 = vmatpush1.msra.mxu0 0.0
    %2994 = vmatprep.subr.mxu0 0.0
    %2995 = vmatpush1.msra.mxu0 0.0
    %2996 = vmatprep.subr.mxu0 0.0
    %2997 = vmatpush1.msra.mxu0 0.0
    %2998 = vmatprep.subr.mxu0 0.0
    %2999 = vmatpush1.msra.mxu0 0.0
    %3000 = vmatprep.subr.mxu0 0.0
    %3001 = vmatpush1.msra.mxu0 0.0
    %3002 = vmatprep.subr.mxu0 0.0
    %3003 = vmatpush1.msra.mxu0 0.0
    %3004 = vmatprep.subr.mxu0 0.0
    %3005 = vmatpush1.msra.mxu0 0.0
    %3006 = vmatprep.subr.mxu0 0.0
    %3007 = vmatpush1.msra.mxu0 0.0
    %3008 = vmatprep.subr.mxu0 0.0
    %3009 = vmatpush1.msra.mxu0 0.0
    %3010 = vmatprep.subr.mxu0 0.0
    %3011 = vmatpush1.msra.mxu0 %v2979
    %3012 = vmatprep.subr.mxu0 0.0
    %3013 = vmatpush1.msra.mxu0 %v2977
    %3014 = vmatprep.subr.mxu0 0.0
    %3015 = vmatpush2.msra.mxu0 0.0
    %3016 = vmatprep.subr.mxu0 0.0
    %3017 = vmatpush2.msra.mxu0 0.0
    %3018 = vmatprep.subr.mxu0 0.0
    %3019 = vmatpush2.msra.mxu0 0.0
    %3020 = vmatprep.subr.mxu0 0.0
    %3021 = vmatpush2.msra.mxu0 0.0
    %3022 = vmatprep.subr.mxu0 0.0
    %3023 = vmatpush2.msra.mxu0 0.0
    %3024 = vmatprep.subr.mxu0 0.0
    %3025 = vmatpush2.msra.mxu0 0.0
    %3026 = vmatprep.subr.mxu0 0.0
    %3027 = vmatpush2.msra.mxu0 0.0
    %3028 = vmatprep.subr.mxu0 0.0
    %3029 = vmatpush2.msra.mxu0 0.0
    %3030 = vmatprep.subr.mxu0 0.0
    %3031 = vmatpush2.msra.mxu0 0.0
    %3032 = vmatprep.subr.mxu0 0.0
    %3033 = vmatpush2.msra.mxu0 0.0
    %3034 = vmatprep.subr.mxu0 0.0
    %3035 = vmatpush2.msra.mxu0 0.0
    %3036 = vmatprep.subr.mxu0 0.0
    %3037 = vmatpush2.msra.mxu0 0.0
    %3038 = vmatprep.subr.mxu0 0.0
    %3039 = vmatpush2.msra.mxu0 0.0
    %3040 = vmatprep.subr.mxu0 0.0
    %3041 = vmatpush2.msra.mxu0 0.0
    %3042 = vmatprep.subr.mxu0 0.0
    %3043 = vmatpush2.msra.mxu0 0.0
    %3044 = vmatprep.subr.mxu0 0.0
    %3045 = vmatpush2.msra.mxu0 0.0
    %3046 = vmatprep.mubr.f32.mxu0 0.0
    %3047 = vmatmul.mubr.f32.gmra.mxu0 %v2895
    %v3048 = vpop.f32.mrf.mxu0
    %v3049 = vadd.f32 0.0, %v3048
    %v3050 = vpop.f32.mrf.mxu0
    %3051 = vmatprep.mubr.f32.mxu0 0.0
    %3052 = vmatmul.mubr.f32.gmra.mxu0 %v2897
    %v3053 = vpop.f32.mrf.mxu0
    %v3054 = vadd.f32 0.0, %v3053
    %v3055 = vpop.f32.mrf.mxu0
    %3056 = vdwg.mxu0
    %3059 = vrot.lane.b32.xlu0 %v2636, 96
    %v3060 = vpop.permute.xlu0 %3059
    %3061 = vrot.lane.b32.xlu0 %v2637, 96
    %v3062 = vpop.permute.xlu0 %3061
    %3063 = vrot.lane.b32.xlu0 %v2707, 96
    %v3064 = vpop.permute.xlu0 %3063
    %3065 = vrot.lane.b32.xlu0 %v2712, 96
    %v3066 = vpop.permute.xlu0 %3065
    %v3069 = vsel %vm173, %v3060, 0
    %v3071 = vsel %vm173, %v3062, 0
    %3073 = vmatprep.subr.mxu0 0.0
    %3074 = vmatpush1.msra.mxu0 0.0
    %3075 = vmatprep.subr.mxu0 0.0
    %3076 = vmatpush1.msra.mxu0 0.0
    %3077 = vmatprep.subr.mxu0 0.0
    %3078 = vmatpush1.msra.mxu0 0.0
    %3079 = vmatprep.subr.mxu0 0.0
    %3080 = vmatpush1.msra.mxu0 0.0
    %3081 = vmatprep.subr.mxu0 0.0
    %3082 = vmatpush1.msra.mxu0 0.0
    %3083 = vmatprep.subr.mxu0 0.0
    %3084 = vmatpush1.msra.mxu0 0.0
    %3085 = vmatprep.subr.mxu0 0.0
    %3086 = vmatpush1.msra.mxu0 0.0
    %3087 = vmatprep.subr.mxu0 0.0
    %3088 = vmatpush1.msra.mxu0 0.0
    %3089 = vmatprep.subr.mxu0 0.0
    %3090 = vmatpush1.msra.mxu0 0.0
    %3091 = vmatprep.subr.mxu0 0.0
    %3092 = vmatpush1.msra.mxu0 0.0
    %3093 = vmatprep.subr.mxu0 0.0
    %3094 = vmatpush1.msra.mxu0 0.0
    %3095 = vmatprep.subr.mxu0 0.0
    %3096 = vmatpush1.msra.mxu0 0.0
    %3097 = vmatprep.subr.mxu0 0.0
    %3098 = vmatpush1.msra.mxu0 0.0
    %3099 = vmatprep.subr.mxu0 0.0
    %3100 = vmatpush1.msra.mxu0 0.0
    %3101 = vmatprep.subr.mxu0 0.0
    %3102 = vmatpush1.msra.mxu0 %v3066
    %3103 = vmatprep.subr.mxu0 0.0
    %3104 = vmatpush1.msra.mxu0 %v3064
    %3105 = vmatprep.subr.mxu0 0.0
    %3106 = vmatpush2.msra.mxu0 0.0
    %3107 = vmatprep.subr.mxu0 0.0
    %3108 = vmatpush2.msra.mxu0 0.0
    %3109 = vmatprep.subr.mxu0 0.0
    %3110 = vmatpush2.msra.mxu0 0.0
    %3111 = vmatprep.subr.mxu0 0.0
    %3112 = vmatpush2.msra.mxu0 0.0
    %3113 = vmatprep.subr.mxu0 0.0
    %3114 = vmatpush2.msra.mxu0 0.0
    %3115 = vmatprep.subr.mxu0 0.0
    %3116 = vmatpush2.msra.mxu0 0.0
    %3117 = vmatprep.subr.mxu0 0.0
    %3118 = vmatpush2.msra.mxu0 0.0
    %3119 = vmatprep.subr.mxu0 0.0
    %3120 = vmatpush2.msra.mxu0 0.0
    %3121 = vmatprep.subr.mxu0 0.0
    %3122 = vmatpush2.msra.mxu0 0.0
    %3123 = vmatprep.subr.mxu0 0.0
    %3124 = vmatpush2.msra.mxu0 0.0
    %3125 = vmatprep.subr.mxu0 0.0
    %3126 = vmatpush2.msra.mxu0 0.0
    %3127 = vmatprep.subr.mxu0 0.0
    %3128 = vmatpush2.msra.mxu0 0.0
    %3129 = vmatprep.subr.mxu0 0.0
    %3130 = vmatpush2.msra.mxu0 0.0
    %3131 = vmatprep.subr.mxu0 0.0
    %3132 = vmatpush2.msra.mxu0 0.0
    %3133 = vmatprep.subr.mxu0 0.0
    %3134 = vmatpush2.msra.mxu0 0.0
    %3135 = vmatprep.subr.mxu0 0.0
    %3136 = vmatpush2.msra.mxu0 0.0
    %3137 = vmatprep.mubr.f32.mxu0 0.0
    %3138 = vmatmul.mubr.f32.gmra.mxu0 %v3069
    %v3139 = vpop.f32.mrf.mxu0
    %v3140 = vadd.f32 0.0, %v3139
    %v3141 = vpop.f32.mrf.mxu0
    %3142 = vmatprep.mubr.f32.mxu0 0.0
    %3143 = vmatmul.mubr.f32.gmra.mxu0 %v3071
    %v3144 = vpop.f32.mrf.mxu0
    %v3145 = vadd.f32 0.0, %v3144
    %v3146 = vpop.f32.mrf.mxu0
    %3147 = vdwg.mxu0
    %3148 = vrot.lane.b32.xlu0 %v2717, 96
    %v3149 = vpop.permute.xlu0 %3148
    %3150 = vrot.lane.b32.xlu0 %v2722, 96
    %v3151 = vpop.permute.xlu0 %3150
    %3154 = vmatprep.subr.mxu0 0.0
    %3155 = vmatpush1.msra.mxu0 0.0
    %3156 = vmatprep.subr.mxu0 0.0
    %3157 = vmatpush1.msra.mxu0 0.0
    %3158 = vmatprep.subr.mxu0 0.0
    %3159 = vmatpush1.msra.mxu0 0.0
    %3160 = vmatprep.subr.mxu0 0.0
    %3161 = vmatpush1.msra.mxu0 0.0
    %3162 = vmatprep.subr.mxu0 0.0
    %3163 = vmatpush1.msra.mxu0 0.0
    %3164 = vmatprep.subr.mxu0 0.0
    %3165 = vmatpush1.msra.mxu0 0.0
    %3166 = vmatprep.subr.mxu0 0.0
    %3167 = vmatpush1.msra.mxu0 0.0
    %3168 = vmatprep.subr.mxu0 0.0
    %3169 = vmatpush1.msra.mxu0 0.0
    %3170 = vmatprep.subr.mxu0 0.0
    %3171 = vmatpush1.msra.mxu0 0.0
    %3172 = vmatprep.subr.mxu0 0.0
    %3173 = vmatpush1.msra.mxu0 0.0
    %3174 = vmatprep.subr.mxu0 0.0
    %3175 = vmatpush1.msra.mxu0 0.0
    %3176 = vmatprep.subr.mxu0 0.0
    %3177 = vmatpush1.msra.mxu0 0.0
    %3178 = vmatprep.subr.mxu0 0.0
    %3179 = vmatpush1.msra.mxu0 0.0
    %3180 = vmatprep.subr.mxu0 0.0
    %3181 = vmatpush1.msra.mxu0 0.0
    %3182 = vmatprep.subr.mxu0 0.0
    %3183 = vmatpush1.msra.mxu0 %v3151
    %3184 = vmatprep.subr.mxu0 0.0
    %3185 = vmatpush1.msra.mxu0 %v3149
    %3186 = vmatprep.subr.mxu0 0.0
    %3187 = vmatpush2.msra.mxu0 0.0
    %3188 = vmatprep.subr.mxu0 0.0
    %3189 = vmatpush2.msra.mxu0 0.0
    %3190 = vmatprep.subr.mxu0 0.0
    %3191 = vmatpush2.msra.mxu0 0.0
    %3192 = vmatprep.subr.mxu0 0.0
    %3193 = vmatpush2.msra.mxu0 0.0
    %3194 = vmatprep.subr.mxu0 0.0
    %3195 = vmatpush2.msra.mxu0 0.0
    %3196 = vmatprep.subr.mxu0 0.0
    %3197 = vmatpush2.msra.mxu0 0.0
    %3198 = vmatprep.subr.mxu0 0.0
    %3199 = vmatpush2.msra.mxu0 0.0
    %3200 = vmatprep.subr.mxu0 0.0
    %3201 = vmatpush2.msra.mxu0 0.0
    %3202 = vmatprep.subr.mxu0 0.0
    %3203 = vmatpush2.msra.mxu0 0.0
    %3204 = vmatprep.subr.mxu0 0.0
    %3205 = vmatpush2.msra.mxu0 0.0
    %3206 = vmatprep.subr.mxu0 0.0
    %3207 = vmatpush2.msra.mxu0 0.0
    %3208 = vmatprep.subr.mxu0 0.0
    %3209 = vmatpush2.msra.mxu0 0.0
    %3210 = vmatprep.subr.mxu0 0.0
    %3211 = vmatpush2.msra.mxu0 0.0
    %3212 = vmatprep.subr.mxu0 0.0
    %3213 = vmatpush2.msra.mxu0 0.0
    %3214 = vmatprep.subr.mxu0 0.0
    %3215 = vmatpush2.msra.mxu0 0.0
    %3216 = vmatprep.subr.mxu0 0.0
    %3217 = vmatpush2.msra.mxu0 0.0
    %3218 = vmatprep.mubr.f32.mxu0 0.0
    %3219 = vmatmul.mubr.f32.gmra.mxu0 %v3069
    %v3220 = vpop.f32.mrf.mxu0
    %v3221 = vadd.f32 0.0, %v3220
    %v3222 = vpop.f32.mrf.mxu0
    %3223 = vmatprep.mubr.f32.mxu0 0.0
    %3224 = vmatmul.mubr.f32.gmra.mxu0 %v3071
    %v3225 = vpop.f32.mrf.mxu0
    %v3226 = vadd.f32 0.0, %v3225
    %v3227 = vpop.f32.mrf.mxu0
    %3228 = vdwg.mxu0
    %3231 = vrot.lane.b32.xlu0 %v2638, 80
    %v3232 = vpop.permute.xlu0 %3231
    %3233 = vrot.lane.b32.xlu0 %v2639, 80
    %v3234 = vpop.permute.xlu0 %3233
    %3235 = vrot.lane.b32.xlu0 %v2707, 80
    %v3236 = vpop.permute.xlu0 %3235
    %3237 = vrot.lane.b32.xlu0 %v2712, 80
    %v3238 = vpop.permute.xlu0 %3237
    %v3241 = vsel %vm173, %v3232, 0
    %v3243 = vsel %vm173, %v3234, 0
    %3245 = vmatprep.subr.mxu0 0.0
    %3246 = vmatpush1.msra.mxu0 0.0
    %3247 = vmatprep.subr.mxu0 0.0
    %3248 = vmatpush1.msra.mxu0 0.0
    %3249 = vmatprep.subr.mxu0 0.0
    %3250 = vmatpush1.msra.mxu0 0.0
    %3251 = vmatprep.subr.mxu0 0.0
    %3252 = vmatpush1.msra.mxu0 0.0
    %3253 = vmatprep.subr.mxu0 0.0
    %3254 = vmatpush1.msra.mxu0 0.0
    %3255 = vmatprep.subr.mxu0 0.0
    %3256 = vmatpush1.msra.mxu0 0.0
    %3257 = vmatprep.subr.mxu0 0.0
    %3258 = vmatpush1.msra.mxu0 0.0
    %3259 = vmatprep.subr.mxu0 0.0
    %3260 = vmatpush1.msra.mxu0 0.0
    %3261 = vmatprep.subr.mxu0 0.0
    %3262 = vmatpush1.msra.mxu0 0.0
    %3263 = vmatprep.subr.mxu0 0.0
    %3264 = vmatpush1.msra.mxu0 0.0
    %3265 = vmatprep.subr.mxu0 0.0
    %3266 = vmatpush1.msra.mxu0 0.0
    %3267 = vmatprep.subr.mxu0 0.0
    %3268 = vmatpush1.msra.mxu0 0.0
    %3269 = vmatprep.subr.mxu0 0.0
    %3270 = vmatpush1.msra.mxu0 0.0
    %3271 = vmatprep.subr.mxu0 0.0
    %3272 = vmatpush1.msra.mxu0 0.0
    %3273 = vmatprep.subr.mxu0 0.0
    %3274 = vmatpush1.msra.mxu0 %v3238
    %3275 = vmatprep.subr.mxu0 0.0
    %3276 = vmatpush1.msra.mxu0 %v3236
    %3277 = vmatprep.subr.mxu0 0.0
    %3278 = vmatpush2.msra.mxu0 0.0
    %3279 = vmatprep.subr.mxu0 0.0
    %3280 = vmatpush2.msra.mxu0 0.0
    %3281 = vmatprep.subr.mxu0 0.0
    %3282 = vmatpush2.msra.mxu0 0.0
    %3283 = vmatprep.subr.mxu0 0.0
    %3284 = vmatpush2.msra.mxu0 0.0
    %3285 = vmatprep.subr.mxu0 0.0
    %3286 = vmatpush2.msra.mxu0 0.0
    %3287 = vmatprep.subr.mxu0 0.0
    %3288 = vmatpush2.msra.mxu0 0.0
    %3289 = vmatprep.subr.mxu0 0.0
    %3290 = vmatpush2.msra.mxu0 0.0
    %3291 = vmatprep.subr.mxu0 0.0
    %3292 = vmatpush2.msra.mxu0 0.0
    %3293 = vmatprep.subr.mxu0 0.0
    %3294 = vmatpush2.msra.mxu0 0.0
    %3295 = vmatprep.subr.mxu0 0.0
    %3296 = vmatpush2.msra.mxu0 0.0
    %3297 = vmatprep.subr.mxu0 0.0
    %3298 = vmatpush2.msra.mxu0 0.0
    %3299 = vmatprep.subr.mxu0 0.0
    %3300 = vmatpush2.msra.mxu0 0.0
    %3301 = vmatprep.subr.mxu0 0.0
    %3302 = vmatpush2.msra.mxu0 0.0
    %3303 = vmatprep.subr.mxu0 0.0
    %3304 = vmatpush2.msra.mxu0 0.0
    %3305 = vmatprep.subr.mxu0 0.0
    %3306 = vmatpush2.msra.mxu0 0.0
    %3307 = vmatprep.subr.mxu0 0.0
    %3308 = vmatpush2.msra.mxu0 0.0
    %3309 = vmatprep.mubr.f32.mxu0 0.0
    %3310 = vmatmul.mubr.f32.gmra.mxu0 %v3241
    %v3311 = vpop.f32.mrf.mxu0
    %v3312 = vadd.f32 0.0, %v3311
    %v3313 = vpop.f32.mrf.mxu0
    %3314 = vmatprep.mubr.f32.mxu0 0.0
    %3315 = vmatmul.mubr.f32.gmra.mxu0 %v3243
    %v3316 = vpop.f32.mrf.mxu0
    %v3317 = vadd.f32 0.0, %v3316
    %v3318 = vpop.f32.mrf.mxu0
    %3319 = vdwg.mxu0
    %3320 = vrot.lane.b32.xlu0 %v2717, 80
    %v3321 = vpop.permute.xlu0 %3320
    %3322 = vrot.lane.b32.xlu0 %v2722, 80
    %v3323 = vpop.permute.xlu0 %3322
    %3326 = vmatprep.subr.mxu0 0.0
    %3327 = vmatpush1.msra.mxu0 0.0
    %3328 = vmatprep.subr.mxu0 0.0
    %3329 = vmatpush1.msra.mxu0 0.0
    %3330 = vmatprep.subr.mxu0 0.0
    %3331 = vmatpush1.msra.mxu0 0.0
    %3332 = vmatprep.subr.mxu0 0.0
    %3333 = vmatpush1.msra.mxu0 0.0
    %3334 = vmatprep.subr.mxu0 0.0
    %3335 = vmatpush1.msra.mxu0 0.0
    %3336 = vmatprep.subr.mxu0 0.0
    %3337 = vmatpush1.msra.mxu0 0.0
    %3338 = vmatprep.subr.mxu0 0.0
    %3339 = vmatpush1.msra.mxu0 0.0
    %3340 = vmatprep.subr.mxu0 0.0
    %3341 = vmatpush1.msra.mxu0 0.0
    %3342 = vmatprep.subr.mxu0 0.0
    %3343 = vmatpush1.msra.mxu0 0.0
    %3344 = vmatprep.subr.mxu0 0.0
    %3345 = vmatpush1.msra.mxu0 0.0
    %3346 = vmatprep.subr.mxu0 0.0
    %3347 = vmatpush1.msra.mxu0 0.0
    %3348 = vmatprep.subr.mxu0 0.0
    %3349 = vmatpush1.msra.mxu0 0.0
    %3350 = vmatprep.subr.mxu0 0.0
    %3351 = vmatpush1.msra.mxu0 0.0
    %3352 = vmatprep.subr.mxu0 0.0
    %3353 = vmatpush1.msra.mxu0 0.0
    %3354 = vmatprep.subr.mxu0 0.0
    %3355 = vmatpush1.msra.mxu0 %v3323
    %3356 = vmatprep.subr.mxu0 0.0
    %3357 = vmatpush1.msra.mxu0 %v3321
    %3358 = vmatprep.subr.mxu0 0.0
    %3359 = vmatpush2.msra.mxu0 0.0
    %3360 = vmatprep.subr.mxu0 0.0
    %3361 = vmatpush2.msra.mxu0 0.0
    %3362 = vmatprep.subr.mxu0 0.0
    %3363 = vmatpush2.msra.mxu0 0.0
    %3364 = vmatprep.subr.mxu0 0.0
    %3365 = vmatpush2.msra.mxu0 0.0
    %3366 = vmatprep.subr.mxu0 0.0
    %3367 = vmatpush2.msra.mxu0 0.0
    %3368 = vmatprep.subr.mxu0 0.0
    %3369 = vmatpush2.msra.mxu0 0.0
    %3370 = vmatprep.subr.mxu0 0.0
    %3371 = vmatpush2.msra.mxu0 0.0
    %3372 = vmatprep.subr.mxu0 0.0
    %3373 = vmatpush2.msra.mxu0 0.0
    %3374 = vmatprep.subr.mxu0 0.0
    %3375 = vmatpush2.msra.mxu0 0.0
    %3376 = vmatprep.subr.mxu0 0.0
    %3377 = vmatpush2.msra.mxu0 0.0
    %3378 = vmatprep.subr.mxu0 0.0
    %3379 = vmatpush2.msra.mxu0 0.0
    %3380 = vmatprep.subr.mxu0 0.0
    %3381 = vmatpush2.msra.mxu0 0.0
    %3382 = vmatprep.subr.mxu0 0.0
    %3383 = vmatpush2.msra.mxu0 0.0
    %3384 = vmatprep.subr.mxu0 0.0
    %3385 = vmatpush2.msra.mxu0 0.0
    %3386 = vmatprep.subr.mxu0 0.0
    %3387 = vmatpush2.msra.mxu0 0.0
    %3388 = vmatprep.subr.mxu0 0.0
    %3389 = vmatpush2.msra.mxu0 0.0
    %3390 = vmatprep.mubr.f32.mxu0 0.0
    %3391 = vmatmul.mubr.f32.gmra.mxu0 %v3241
    %v3392 = vpop.f32.mrf.mxu0
    %v3393 = vadd.f32 0.0, %v3392
    %v3394 = vpop.f32.mrf.mxu0
    %3395 = vmatprep.mubr.f32.mxu0 0.0
    %3396 = vmatmul.mubr.f32.gmra.mxu0 %v3243
    %v3397 = vpop.f32.mrf.mxu0
    %v3398 = vadd.f32 0.0, %v3397
    %v3399 = vpop.f32.mrf.mxu0
    %3400 = vdwg.mxu0
    %3405 = vrot.lane.b32.xlu0 %v2966, 16
    %v3406 = vpop.permute.xlu0 %3405
    %3407 = vrot.lane.b32.xlu0 %v2971, 16
    %v3408 = vpop.permute.xlu0 %3407
    %3409 = vrot.lane.b32.xlu0 %v3049, 16
    %v3410 = vpop.permute.xlu0 %3409
    %3411 = vrot.lane.b32.xlu0 %v3054, 16
    %v3412 = vpop.permute.xlu0 %3411
    %3421 = vrot.lane.b32.xlu0 %v3140, 32
    %v3422 = vpop.permute.xlu0 %3421
    %3423 = vrot.lane.b32.xlu0 %v3145, 32
    %v3424 = vpop.permute.xlu0 %3423
    %3425 = vrot.lane.b32.xlu0 %v3221, 32
    %v3426 = vpop.permute.xlu0 %3425
    %3427 = vrot.lane.b32.xlu0 %v3226, 32
    %v3428 = vpop.permute.xlu0 %3427
    %3437 = vrot.lane.b32.xlu0 %v3312, 48
    %v3438 = vpop.permute.xlu0 %3437
    %3439 = vrot.lane.b32.xlu0 %v3317, 48
    %v3440 = vpop.permute.xlu0 %3439
    %3441 = vrot.lane.b32.xlu0 %v3393, 48
    %v3442 = vpop.permute.xlu0 %3441
    %3443 = vrot.lane.b32.xlu0 %v3398, 48
    %v3444 = vpop.permute.xlu0 %3443
    %v3449 = vsel %vm173, %v2798, %v3406
    %v3450 = vsel %vm173, %v2803, %v3408
    %v3451 = vsel %vm173, %v2873, %v3410
    %v3452 = vsel %vm173, %v2878, %v3412
    %v3453 = vsel %vm902, %v3449, %v3422
    %v3454 = vsel %vm902, %v3450, %v3424
    %v3455 = vsel %vm902, %v3451, %v3426
    %v3456 = vsel %vm902, %v3452, %v3428
    %v3457 = vsel %vm907, %v3453, %v3438
    %v3458 = vsel %vm907, %v3454, %v3440
    %v3459 = vsel %vm907, %v3455, %v3442
    %v3460 = vsel %vm907, %v3456, %v3444
    %v3461 = vstv %s1768
    %v3462 = vmul.f32 %v3461, %v908
    %v3463 = vmul.f32 %v3461, %v909
    %v3464 = vmul.f32 %v3461, %v910
    %v3465 = vmul.f32 %v3461, %v911
    %v3466 = vstv %s1769
    %v3467 = vmul.f32 %v3466, %v2618
    %v3468 = vmul.f32 %v3466, %v2619
    %v3469 = vmul.f32 %v3466, %v2620
    %v3470 = vmul.f32 %v3466, %v2621
    %v3471 = vadd.f32 %v3462, %v3467
    %v3472 = vadd.f32 %v3463, %v3468
    %v3473 = vadd.f32 %v3464, %v3469
    %v3474 = vadd.f32 %v3465, %v3470
    %v3475 = vstv %s1770
    %v3476 = vmul.f32 %v3475, %v3457
    %v3477 = vmul.f32 %v3475, %v3458
    %v3478 = vmul.f32 %v3475, %v3459
    %v3479 = vmul.f32 %v3475, %v3460
    %v3480 = vadd.f32 %v3471, %v3476
    %v3481 = vadd.f32 %v3472, %v3477
    %v3482 = vadd.f32 %v3473, %v3478
    %v3483 = vadd.f32 %v3474, %v3479
    %s3484 = sld [smem:[#allocation2 + $0x3]]
    %s3485 = sld [smem:[#allocation2 + $0x4]]
    %s3486 = sld [smem:[#allocation2 + $0x5]]
    %s3487 = scalar_lea.vmem [#allocation7], 512
    %v3488 = vld [vmem:[%s3487] sm:$0xff]
    %v3489 = vld [vmem:[%s3487 + $0x8] sm:$0xff]
    %v3490 = vld [vmem:[%s3487 + $0x10] sm:$0xff]
    %v3491 = vld [vmem:[%s3487 + $0x18] sm:$0xff]
    %v3492 = vld [vmem:[%s3487 + $0x20] sm:$0xff]
    %v3493 = vld [vmem:[%s3487 + $0x28] sm:$0xff]
    %v3494 = vld [vmem:[%s3487 + $0x30] sm:$0xff]
    %v3495 = vld [vmem:[%s3487 + $0x38] sm:$0xff]
    %s3496 = scalar_lea.vmem [#allocation7], 576
    %v3497 = vld [vmem:[%s3496] sm:$0xff]
    %v3498 = vld [vmem:[%s3496 + $0x8] sm:$0xff]
    %v3499 = vld [vmem:[%s3496 + $0x10] sm:$0xff]
    %v3500 = vld [vmem:[%s3496 + $0x18] sm:$0xff]
    %v3501 = vld [vmem:[%s3496 + $0x20] sm:$0xff]
    %v3502 = vld [vmem:[%s3496 + $0x28] sm:$0xff]
    %v3503 = vld [vmem:[%s3496 + $0x30] sm:$0xff]
    %v3504 = vld [vmem:[%s3496 + $0x38] sm:$0xff]
    %v3506 = vsel %vm75, %v1764, 0
    %v3509 = vsel %vm75, %v1765, 0
    %v3512 = vsel %vm75, %v1766, 0
    %v3515 = vsel %vm75, %v1767, 0
    %3517 = vmatprep.subr.mxu0 0.0
    %3518 = vmatpush1.msra.mxu0 0.0
    %3519 = vmatprep.subr.mxu0 0.0
    %3520 = vmatpush1.msra.mxu0 0.0
    %3521 = vmatprep.subr.mxu0 0.0
    %3522 = vmatpush1.msra.mxu0 0.0
    %3523 = vmatprep.subr.mxu0 0.0
    %3524 = vmatpush1.msra.mxu0 0.0
    %3525 = vmatprep.subr.mxu0 0.0
    %3526 = vmatpush1.msra.mxu0 0.0
    %3527 = vmatprep.subr.mxu0 0.0
    %3528 = vmatpush1.msra.mxu0 0.0
    %3529 = vmatprep.subr.mxu0 0.0
    %3530 = vmatpush1.msra.mxu0 0.0
    %3531 = vmatprep.subr.mxu0 0.0
    %3532 = vmatpush1.msra.mxu0 0.0
    %3533 = vmatprep.subr.mxu0 0.0
    %3534 = vmatpush1.msra.mxu0 %v3495
    %3535 = vmatprep.subr.mxu0 0.0
    %3536 = vmatpush1.msra.mxu0 %v3494
    %3537 = vmatprep.subr.mxu0 0.0
    %3538 = vmatpush1.msra.mxu0 %v3493
    %3539 = vmatprep.subr.mxu0 0.0
    %3540 = vmatpush1.msra.mxu0 %v3492
    %3541 = vmatprep.subr.mxu0 0.0
    %3542 = vmatpush1.msra.mxu0 %v3491
    %3543 = vmatprep.subr.mxu0 0.0
    %3544 = vmatpush1.msra.mxu0 %v3490
    %3545 = vmatprep.subr.mxu0 0.0
    %3546 = vmatpush1.msra.mxu0 %v3489
    %3547 = vmatprep.subr.mxu0 0.0
    %3548 = vmatpush1.msra.mxu0 %v3488
    %3549 = vmatprep.subr.mxu0 0.0
    %3550 = vmatpush2.msra.mxu0 0.0
    %3551 = vmatprep.subr.mxu0 0.0
    %3552 = vmatpush2.msra.mxu0 0.0
    %3553 = vmatprep.subr.mxu0 0.0
    %3554 = vmatpush2.msra.mxu0 0.0
    %3555 = vmatprep.subr.mxu0 0.0
    %3556 = vmatpush2.msra.mxu0 0.0
    %3557 = vmatprep.subr.mxu0 0.0
    %3558 = vmatpush2.msra.mxu0 0.0
    %3559 = vmatprep.subr.mxu0 0.0
    %3560 = vmatpush2.msra.mxu0 0.0
    %3561 = vmatprep.subr.mxu0 0.0
    %3562 = vmatpush2.msra.mxu0 0.0
    %3563 = vmatprep.subr.mxu0 0.0
    %3564 = vmatpush2.msra.mxu0 0.0
    %3565 = vmatprep.subr.mxu0 0.0
    %3566 = vmatpush2.msra.mxu0 0.0
    %3567 = vmatprep.subr.mxu0 0.0
    %3568 = vmatpush2.msra.mxu0 0.0
    %3569 = vmatprep.subr.mxu0 0.0
    %3570 = vmatpush2.msra.mxu0 0.0
    %3571 = vmatprep.subr.mxu0 0.0
    %3572 = vmatpush2.msra.mxu0 0.0
    %3573 = vmatprep.subr.mxu0 0.0
    %3574 = vmatpush2.msra.mxu0 0.0
    %3575 = vmatprep.subr.mxu0 0.0
    %3576 = vmatpush2.msra.mxu0 0.0
    %3577 = vmatprep.subr.mxu0 0.0
    %3578 = vmatpush2.msra.mxu0 0.0
    %3579 = vmatprep.subr.mxu0 0.0
    %3580 = vmatpush2.msra.mxu0 0.0
    %3581 = vmatprep.mubr.f32.mxu0 0.0
    %3582 = vmatmul.mubr.f32.gmra.mxu0 %v3506
    %v3583 = vpop.f32.mrf.mxu0
    %v3584 = vadd.f32 0.0, %v3583
    %v3585 = vpop.f32.mrf.mxu0
    %3586 = vmatprep.mubr.f32.mxu0 0.0
    %3587 = vmatmul.mubr.f32.gmra.mxu0 %v3509
    %v3588 = vpop.f32.mrf.mxu0
    %v3589 = vadd.f32 0.0, %v3588
    %v3590 = vpop.f32.mrf.mxu0
    %3591 = vmatprep.mubr.f32.mxu0 0.0
    %3592 = vmatmul.mubr.f32.gmra.mxu0 %v3512
    %v3593 = vpop.f32.mrf.mxu0
    %v3594 = vadd.f32 0.0, %v3593
    %v3595 = vpop.f32.mrf.mxu0
    %3596 = vmatprep.mubr.f32.mxu0 0.0
    %3597 = vmatmul.mubr.f32.gmra.mxu0 %v3515
    %v3598 = vpop.f32.mrf.mxu0
    %v3599 = vadd.f32 0.0, %v3598
    %v3600 = vpop.f32.mrf.mxu0
    %3601 = vdwg.mxu0
    %v3603 = vsel %vm173, %v3497, 0
    %v3606 = vsel %vm173, %v3498, 0
    %3608 = vmatprep.subr.mxu0 0.0
    %3609 = vmatpush1.msra.mxu0 0.0
    %3610 = vmatprep.subr.mxu0 0.0
    %3611 = vmatpush1.msra.mxu0 0.0
    %3612 = vmatprep.subr.mxu0 0.0
    %3613 = vmatpush1.msra.mxu0 0.0
    %3614 = vmatprep.subr.mxu0 0.0
    %3615 = vmatpush1.msra.mxu0 0.0
    %3616 = vmatprep.subr.mxu0 0.0
    %3617 = vmatpush1.msra.mxu0 0.0
    %3618 = vmatprep.subr.mxu0 0.0
    %3619 = vmatpush1.msra.mxu0 0.0
    %3620 = vmatprep.subr.mxu0 0.0
    %3621 = vmatpush1.msra.mxu0 0.0
    %3622 = vmatprep.subr.mxu0 0.0
    %3623 = vmatpush1.msra.mxu0 0.0
    %3624 = vmatprep.subr.mxu0 0.0
    %3625 = vmatpush1.msra.mxu0 0.0
    %3626 = vmatprep.subr.mxu0 0.0
    %3627 = vmatpush1.msra.mxu0 0.0
    %3628 = vmatprep.subr.mxu0 0.0
    %3629 = vmatpush1.msra.mxu0 0.0
    %3630 = vmatprep.subr.mxu0 0.0
    %3631 = vmatpush1.msra.mxu0 0.0
    %3632 = vmatprep.subr.mxu0 0.0
    %3633 = vmatpush1.msra.mxu0 0.0
    %3634 = vmatprep.subr.mxu0 0.0
    %3635 = vmatpush1.msra.mxu0 0.0
    %3636 = vmatprep.subr.mxu0 0.0
    %3637 = vmatpush1.msra.mxu0 %v3589
    %3638 = vmatprep.subr.mxu0 0.0
    %3639 = vmatpush1.msra.mxu0 %v3584
    %3640 = vmatprep.subr.mxu0 0.0
    %3641 = vmatpush2.msra.mxu0 0.0
    %3642 = vmatprep.subr.mxu0 0.0
    %3643 = vmatpush2.msra.mxu0 0.0
    %3644 = vmatprep.subr.mxu0 0.0
    %3645 = vmatpush2.msra.mxu0 0.0
    %3646 = vmatprep.subr.mxu0 0.0
    %3647 = vmatpush2.msra.mxu0 0.0
    %3648 = vmatprep.subr.mxu0 0.0
    %3649 = vmatpush2.msra.mxu0 0.0
    %3650 = vmatprep.subr.mxu0 0.0
    %3651 = vmatpush2.msra.mxu0 0.0
    %3652 = vmatprep.subr.mxu0 0.0
    %3653 = vmatpush2.msra.mxu0 0.0
    %3654 = vmatprep.subr.mxu0 0.0
    %3655 = vmatpush2.msra.mxu0 0.0
    %3656 = vmatprep.subr.mxu0 0.0
    %3657 = vmatpush2.msra.mxu0 0.0
    %3658 = vmatprep.subr.mxu0 0.0
    %3659 = vmatpush2.msra.mxu0 0.0
    %3660 = vmatprep.subr.mxu0 0.0
    %3661 = vmatpush2.msra.mxu0 0.0
    %3662 = vmatprep.subr.mxu0 0.0
    %3663 = vmatpush2.msra.mxu0 0.0
    %3664 = vmatprep.subr.mxu0 0.0
    %3665 = vmatpush2.msra.mxu0 0.0
    %3666 = vmatprep.subr.mxu0 0.0
    %3667 = vmatpush2.msra.mxu0 0.0
    %3668 = vmatprep.subr.mxu0 0.0
    %3669 = vmatpush2.msra.mxu0 0.0
    %3670 = vmatprep.subr.mxu0 0.0
    %3671 = vmatpush2.msra.mxu0 0.0
    %3672 = vmatprep.mubr.f32.mxu0 0.0
    %3673 = vmatmul.mubr.f32.gmra.mxu0 %v3603
    %v3674 = vpop.f32.mrf.mxu0
    %v3675 = vadd.f32 0.0, %v3674
    %v3676 = vpop.f32.mrf.mxu0
    %3677 = vmatprep.mubr.f32.mxu0 0.0
    %3678 = vmatmul.mubr.f32.gmra.mxu0 %v3606
    %v3679 = vpop.f32.mrf.mxu0
    %v3680 = vadd.f32 0.0, %v3679
    %v3681 = vpop.f32.mrf.mxu0
    %3682 = vdwg.mxu0
    %3683 = vmatprep.subr.mxu0 0.0
    %3684 = vmatpush1.msra.mxu0 0.0
    %3685 = vmatprep.subr.mxu0 0.0
    %3686 = vmatpush1.msra.mxu0 0.0
    %3687 = vmatprep.subr.mxu0 0.0
    %3688 = vmatpush1.msra.mxu0 0.0
    %3689 = vmatprep.subr.mxu0 0.0
    %3690 = vmatpush1.msra.mxu0 0.0
    %3691 = vmatprep.subr.mxu0 0.0
    %3692 = vmatpush1.msra.mxu0 0.0
    %3693 = vmatprep.subr.mxu0 0.0
    %3694 = vmatpush1.msra.mxu0 0.0
    %3695 = vmatprep.subr.mxu0 0.0
    %3696 = vmatpush1.msra.mxu0 0.0
    %3697 = vmatprep.subr.mxu0 0.0
    %3698 = vmatpush1.msra.mxu0 0.0
    %3699 = vmatprep.subr.mxu0 0.0
    %3700 = vmatpush1.msra.mxu0 0.0
    %3701 = vmatprep.subr.mxu0 0.0
    %3702 = vmatpush1.msra.mxu0 0.0
    %3703 = vmatprep.subr.mxu0 0.0
    %3704 = vmatpush1.msra.mxu0 0.0
    %3705 = vmatprep.subr.mxu0 0.0
    %3706 = vmatpush1.msra.mxu0 0.0
    %3707 = vmatprep.subr.mxu0 0.0
    %3708 = vmatpush1.msra.mxu0 0.0
    %3709 = vmatprep.subr.mxu0 0.0
    %3710 = vmatpush1.msra.mxu0 0.0
    %3711 = vmatprep.subr.mxu0 0.0
    %3712 = vmatpush1.msra.mxu0 %v3599
    %3713 = vmatprep.subr.mxu0 0.0
    %3714 = vmatpush1.msra.mxu0 %v3594
    %3715 = vmatprep.subr.mxu0 0.0
    %3716 = vmatpush2.msra.mxu0 0.0
    %3717 = vmatprep.subr.mxu0 0.0
    %3718 = vmatpush2.msra.mxu0 0.0
    %3719 = vmatprep.subr.mxu0 0.0
    %3720 = vmatpush2.msra.mxu0 0.0
    %3721 = vmatprep.subr.mxu0 0.0
    %3722 = vmatpush2.msra.mxu0 0.0
    %3723 = vmatprep.subr.mxu0 0.0
    %3724 = vmatpush2.msra.mxu0 0.0
    %3725 = vmatprep.subr.mxu0 0.0
    %3726 = vmatpush2.msra.mxu0 0.0
    %3727 = vmatprep.subr.mxu0 0.0
    %3728 = vmatpush2.msra.mxu0 0.0
    %3729 = vmatprep.subr.mxu0 0.0
    %3730 = vmatpush2.msra.mxu0 0.0
    %3731 = vmatprep.subr.mxu0 0.0
    %3732 = vmatpush2.msra.mxu0 0.0
    %3733 = vmatprep.subr.mxu0 0.0
    %3734 = vmatpush2.msra.mxu0 0.0
    %3735 = vmatprep.subr.mxu0 0.0
    %3736 = vmatpush2.msra.mxu0 0.0
    %3737 = vmatprep.subr.mxu0 0.0
    %3738 = vmatpush2.msra.mxu0 0.0
    %3739 = vmatprep.subr.mxu0 0.0
    %3740 = vmatpush2.msra.mxu0 0.0
    %3741 = vmatprep.subr.mxu0 0.0
    %3742 = vmatpush2.msra.mxu0 0.0
    %3743 = vmatprep.subr.mxu0 0.0
    %3744 = vmatpush2.msra.mxu0 0.0
    %3745 = vmatprep.subr.mxu0 0.0
    %3746 = vmatpush2.msra.mxu0 0.0
    %3747 = vmatprep.mubr.f32.mxu0 0.0
    %3748 = vmatmul.mubr.f32.gmra.mxu0 %v3603
    %v3749 = vpop.f32.mrf.mxu0
    %v3750 = vadd.f32 0.0, %v3749
    %v3751 = vpop.f32.mrf.mxu0
    %3752 = vmatprep.mubr.f32.mxu0 0.0
    %3753 = vmatmul.mubr.f32.gmra.mxu0 %v3606
    %v3754 = vpop.f32.mrf.mxu0
    %v3755 = vadd.f32 0.0, %v3754
    %v3756 = vpop.f32.mrf.mxu0
    %3757 = vdwg.mxu0
    %3760 = vrot.lane.b32.xlu0 %v3499, 112
    %v3761 = vpop.permute.xlu0 %3760
    %3762 = vrot.lane.b32.xlu0 %v3500, 112
    %v3763 = vpop.permute.xlu0 %3762
    %3766 = vrot.lane.b32.xlu0 %v3584, 112
    %v3767 = vpop.permute.xlu0 %3766
    %3768 = vrot.lane.b32.xlu0 %v3589, 112
    %v3769 = vpop.permute.xlu0 %3768
    %v3772 = vsel %vm173, %v3761, 0
    %v3774 = vsel %vm173, %v3763, 0
    %3776 = vmatprep.subr.mxu0 0.0
    %3777 = vmatpush1.msra.mxu0 0.0
    %3778 = vmatprep.subr.mxu0 0.0
    %3779 = vmatpush1.msra.mxu0 0.0
    %3780 = vmatprep.subr.mxu0 0.0
    %3781 = vmatpush1.msra.mxu0 0.0
    %3782 = vmatprep.subr.mxu0 0.0
    %3783 = vmatpush1.msra.mxu0 0.0
    %3784 = vmatprep.subr.mxu0 0.0
    %3785 = vmatpush1.msra.mxu0 0.0
    %3786 = vmatprep.subr.mxu0 0.0
    %3787 = vmatpush1.msra.mxu0 0.0
    %3788 = vmatprep.subr.mxu0 0.0
    %3789 = vmatpush1.msra.mxu0 0.0
    %3790 = vmatprep.subr.mxu0 0.0
    %3791 = vmatpush1.msra.mxu0 0.0
    %3792 = vmatprep.subr.mxu0 0.0
    %3793 = vmatpush1.msra.mxu0 0.0
    %3794 = vmatprep.subr.mxu0 0.0
    %3795 = vmatpush1.msra.mxu0 0.0
    %3796 = vmatprep.subr.mxu0 0.0
    %3797 = vmatpush1.msra.mxu0 0.0
    %3798 = vmatprep.subr.mxu0 0.0
    %3799 = vmatpush1.msra.mxu0 0.0
    %3800 = vmatprep.subr.mxu0 0.0
    %3801 = vmatpush1.msra.mxu0 0.0
    %3802 = vmatprep.subr.mxu0 0.0
    %3803 = vmatpush1.msra.mxu0 0.0
    %3804 = vmatprep.subr.mxu0 0.0
    %3805 = vmatpush1.msra.mxu0 %v3769
    %3806 = vmatprep.subr.mxu0 0.0
    %3807 = vmatpush1.msra.mxu0 %v3767
    %3808 = vmatprep.subr.mxu0 0.0
    %3809 = vmatpush2.msra.mxu0 0.0
    %3810 = vmatprep.subr.mxu0 0.0
    %3811 = vmatpush2.msra.mxu0 0.0
    %3812 = vmatprep.subr.mxu0 0.0
    %3813 = vmatpush2.msra.mxu0 0.0
    %3814 = vmatprep.subr.mxu0 0.0
    %3815 = vmatpush2.msra.mxu0 0.0
    %3816 = vmatprep.subr.mxu0 0.0
    %3817 = vmatpush2.msra.mxu0 0.0
    %3818 = vmatprep.subr.mxu0 0.0
    %3819 = vmatpush2.msra.mxu0 0.0
    %3820 = vmatprep.subr.mxu0 0.0
    %3821 = vmatpush2.msra.mxu0 0.0
    %3822 = vmatprep.subr.mxu0 0.0
    %3823 = vmatpush2.msra.mxu0 0.0
    %3824 = vmatprep.subr.mxu0 0.0
    %3825 = vmatpush2.msra.mxu0 0.0
    %3826 = vmatprep.subr.mxu0 0.0
    %3827 = vmatpush2.msra.mxu0 0.0
    %3828 = vmatprep.subr.mxu0 0.0
    %3829 = vmatpush2.msra.mxu0 0.0
    %3830 = vmatprep.subr.mxu0 0.0
    %3831 = vmatpush2.msra.mxu0 0.0
    %3832 = vmatprep.subr.mxu0 0.0
    %3833 = vmatpush2.msra.mxu0 0.0
    %3834 = vmatprep.subr.mxu0 0.0
    %3835 = vmatpush2.msra.mxu0 0.0
    %3836 = vmatprep.subr.mxu0 0.0
    %3837 = vmatpush2.msra.mxu0 0.0
    %3838 = vmatprep.subr.mxu0 0.0
    %3839 = vmatpush2.msra.mxu0 0.0
    %3840 = vmatprep.mubr.f32.mxu0 0.0
    %3841 = vmatmul.mubr.f32.gmra.mxu0 %v3772
    %v3842 = vpop.f32.mrf.mxu0
    %v3843 = vadd.f32 0.0, %v3842
    %v3844 = vpop.f32.mrf.mxu0
    %3845 = vmatprep.mubr.f32.mxu0 0.0
    %3846 = vmatmul.mubr.f32.gmra.mxu0 %v3774
    %v3847 = vpop.f32.mrf.mxu0
    %v3848 = vadd.f32 0.0, %v3847
    %v3849 = vpop.f32.mrf.mxu0
    %3850 = vdwg.mxu0
    %3853 = vrot.lane.b32.xlu0 %v3594, 112
    %v3854 = vpop.permute.xlu0 %3853
    %3855 = vrot.lane.b32.xlu0 %v3599, 112
    %v3856 = vpop.permute.xlu0 %3855
    %3859 = vmatprep.subr.mxu0 0.0
    %3860 = vmatpush1.msra.mxu0 0.0
    %3861 = vmatprep.subr.mxu0 0.0
    %3862 = vmatpush1.msra.mxu0 0.0
    %3863 = vmatprep.subr.mxu0 0.0
    %3864 = vmatpush1.msra.mxu0 0.0
    %3865 = vmatprep.subr.mxu0 0.0
    %3866 = vmatpush1.msra.mxu0 0.0
    %3867 = vmatprep.subr.mxu0 0.0
    %3868 = vmatpush1.msra.mxu0 0.0
    %3869 = vmatprep.subr.mxu0 0.0
    %3870 = vmatpush1.msra.mxu0 0.0
    %3871 = vmatprep.subr.mxu0 0.0
    %3872 = vmatpush1.msra.mxu0 0.0
    %3873 = vmatprep.subr.mxu0 0.0
    %3874 = vmatpush1.msra.mxu0 0.0
    %3875 = vmatprep.subr.mxu0 0.0
    %3876 = vmatpush1.msra.mxu0 0.0
    %3877 = vmatprep.subr.mxu0 0.0
    %3878 = vmatpush1.msra.mxu0 0.0
    %3879 = vmatprep.subr.mxu0 0.0
    %3880 = vmatpush1.msra.mxu0 0.0
    %3881 = vmatprep.subr.mxu0 0.0
    %3882 = vmatpush1.msra.mxu0 0.0
    %3883 = vmatprep.subr.mxu0 0.0
    %3884 = vmatpush1.msra.mxu0 0.0
    %3885 = vmatprep.subr.mxu0 0.0
    %3886 = vmatpush1.msra.mxu0 0.0
    %3887 = vmatprep.subr.mxu0 0.0
    %3888 = vmatpush1.msra.mxu0 %v3856
    %3889 = vmatprep.subr.mxu0 0.0
    %3890 = vmatpush1.msra.mxu0 %v3854
    %3891 = vmatprep.subr.mxu0 0.0
    %3892 = vmatpush2.msra.mxu0 0.0
    %3893 = vmatprep.subr.mxu0 0.0
    %3894 = vmatpush2.msra.mxu0 0.0
    %3895 = vmatprep.subr.mxu0 0.0
    %3896 = vmatpush2.msra.mxu0 0.0
    %3897 = vmatprep.subr.mxu0 0.0
    %3898 = vmatpush2.msra.mxu0 0.0
    %3899 = vmatprep.subr.mxu0 0.0
    %3900 = vmatpush2.msra.mxu0 0.0
    %3901 = vmatprep.subr.mxu0 0.0
    %3902 = vmatpush2.msra.mxu0 0.0
    %3903 = vmatprep.subr.mxu0 0.0
    %3904 = vmatpush2.msra.mxu0 0.0
    %3905 = vmatprep.subr.mxu0 0.0
    %3906 = vmatpush2.msra.mxu0 0.0
    %3907 = vmatprep.subr.mxu0 0.0
    %3908 = vmatpush2.msra.mxu0 0.0
    %3909 = vmatprep.subr.mxu0 0.0
    %3910 = vmatpush2.msra.mxu0 0.0
    %3911 = vmatprep.subr.mxu0 0.0
    %3912 = vmatpush2.msra.mxu0 0.0
    %3913 = vmatprep.subr.mxu0 0.0
    %3914 = vmatpush2.msra.mxu0 0.0
    %3915 = vmatprep.subr.mxu0 0.0
    %3916 = vmatpush2.msra.mxu0 0.0
    %3917 = vmatprep.subr.mxu0 0.0
    %3918 = vmatpush2.msra.mxu0 0.0
    %3919 = vmatprep.subr.mxu0 0.0
    %3920 = vmatpush2.msra.mxu0 0.0
    %3921 = vmatprep.subr.mxu0 0.0
    %3922 = vmatpush2.msra.mxu0 0.0
    %3923 = vmatprep.mubr.f32.mxu0 0.0
    %3924 = vmatmul.mubr.f32.gmra.mxu0 %v3772
    %v3925 = vpop.f32.mrf.mxu0
    %v3926 = vadd.f32 0.0, %v3925
    %v3927 = vpop.f32.mrf.mxu0
    %3928 = vmatprep.mubr.f32.mxu0 0.0
    %3929 = vmatmul.mubr.f32.gmra.mxu0 %v3774
    %v3930 = vpop.f32.mrf.mxu0
    %v3931 = vadd.f32 0.0, %v3930
    %v3932 = vpop.f32.mrf.mxu0
    %3933 = vdwg.mxu0
    %3936 = vrot.lane.b32.xlu0 %v3501, 96
    %v3937 = vpop.permute.xlu0 %3936
    %3938 = vrot.lane.b32.xlu0 %v3502, 96
    %v3939 = vpop.permute.xlu0 %3938
    %3940 = vrot.lane.b32.xlu0 %v3584, 96
    %v3941 = vpop.permute.xlu0 %3940
    %3942 = vrot.lane.b32.xlu0 %v3589, 96
    %v3943 = vpop.permute.xlu0 %3942
    %v3946 = vsel %vm173, %v3937, 0
    %v3948 = vsel %vm173, %v3939, 0
    %3950 = vmatprep.subr.mxu0 0.0
    %3951 = vmatpush1.msra.mxu0 0.0
    %3952 = vmatprep.subr.mxu0 0.0
    %3953 = vmatpush1.msra.mxu0 0.0
    %3954 = vmatprep.subr.mxu0 0.0
    %3955 = vmatpush1.msra.mxu0 0.0
    %3956 = vmatprep.subr.mxu0 0.0
    %3957 = vmatpush1.msra.mxu0 0.0
    %3958 = vmatprep.subr.mxu0 0.0
    %3959 = vmatpush1.msra.mxu0 0.0
    %3960 = vmatprep.subr.mxu0 0.0
    %3961 = vmatpush1.msra.mxu0 0.0
    %3962 = vmatprep.subr.mxu0 0.0
    %3963 = vmatpush1.msra.mxu0 0.0
    %3964 = vmatprep.subr.mxu0 0.0
    %3965 = vmatpush1.msra.mxu0 0.0
    %3966 = vmatprep.subr.mxu0 0.0
    %3967 = vmatpush1.msra.mxu0 0.0
    %3968 = vmatprep.subr.mxu0 0.0
    %3969 = vmatpush1.msra.mxu0 0.0
    %3970 = vmatprep.subr.mxu0 0.0
    %3971 = vmatpush1.msra.mxu0 0.0
    %3972 = vmatprep.subr.mxu0 0.0
    %3973 = vmatpush1.msra.mxu0 0.0
    %3974 = vmatprep.subr.mxu0 0.0
    %3975 = vmatpush1.msra.mxu0 0.0
    %3976 = vmatprep.subr.mxu0 0.0
    %3977 = vmatpush1.msra.mxu0 0.0
    %3978 = vmatprep.subr.mxu0 0.0
    %3979 = vmatpush1.msra.mxu0 %v3943
    %3980 = vmatprep.subr.mxu0 0.0
    %3981 = vmatpush1.msra.mxu0 %v3941
    %3982 = vmatprep.subr.mxu0 0.0
    %3983 = vmatpush2.msra.mxu0 0.0
    %3984 = vmatprep.subr.mxu0 0.0
    %3985 = vmatpush2.msra.mxu0 0.0
    %3986 = vmatprep.subr.mxu0 0.0
    %3987 = vmatpush2.msra.mxu0 0.0
    %3988 = vmatprep.subr.mxu0 0.0
    %3989 = vmatpush2.msra.mxu0 0.0
    %3990 = vmatprep.subr.mxu0 0.0
    %3991 = vmatpush2.msra.mxu0 0.0
    %3992 = vmatprep.subr.mxu0 0.0
    %3993 = vmatpush2.msra.mxu0 0.0
    %3994 = vmatprep.subr.mxu0 0.0
    %3995 = vmatpush2.msra.mxu0 0.0
    %3996 = vmatprep.subr.mxu0 0.0
    %3997 = vmatpush2.msra.mxu0 0.0
    %3998 = vmatprep.subr.mxu0 0.0
    %3999 = vmatpush2.msra.mxu0 0.0
    %4000 = vmatprep.subr.mxu0 0.0
    %4001 = vmatpush2.msra.mxu0 0.0
    %4002 = vmatprep.subr.mxu0 0.0
    %4003 = vmatpush2.msra.mxu0 0.0
    %4004 = vmatprep.subr.mxu0 0.0
    %4005 = vmatpush2.msra.mxu0 0.0
    %4006 = vmatprep.subr.mxu0 0.0
    %4007 = vmatpush2.msra.mxu0 0.0
    %4008 = vmatprep.subr.mxu0 0.0
    %4009 = vmatpush2.msra.mxu0 0.0
    %4010 = vmatprep.subr.mxu0 0.0
    %4011 = vmatpush2.msra.mxu0 0.0
    %4012 = vmatprep.subr.mxu0 0.0
    %4013 = vmatpush2.msra.mxu0 0.0
    %4014 = vmatprep.mubr.f32.mxu0 0.0
    %4015 = vmatmul.mubr.f32.gmra.mxu0 %v3946
    %v4016 = vpop.f32.mrf.mxu0
    %v4017 = vadd.f32 0.0, %v4016
    %v4018 = vpop.f32.mrf.mxu0
    %4019 = vmatprep.mubr.f32.mxu0 0.0
    %4020 = vmatmul.mubr.f32.gmra.mxu0 %v3948
    %v4021 = vpop.f32.mrf.mxu0
    %v4022 = vadd.f32 0.0, %v4021
    %v4023 = vpop.f32.mrf.mxu0
    %4024 = vdwg.mxu0
    %4025 = vrot.lane.b32.xlu0 %v3594, 96
    %v4026 = vpop.permute.xlu0 %4025
    %4027 = vrot.lane.b32.xlu0 %v3599, 96
    %v4028 = vpop.permute.xlu0 %4027
    %4031 = vmatprep.subr.mxu0 0.0
    %4032 = vmatpush1.msra.mxu0 0.0
    %4033 = vmatprep.subr.mxu0 0.0
    %4034 = vmatpush1.msra.mxu0 0.0
    %4035 = vmatprep.subr.mxu0 0.0
    %4036 = vmatpush1.msra.mxu0 0.0
    %4037 = vmatprep.subr.mxu0 0.0
    %4038 = vmatpush1.msra.mxu0 0.0
    %4039 = vmatprep.subr.mxu0 0.0
    %4040 = vmatpush1.msra.mxu0 0.0
    %4041 = vmatprep.subr.mxu0 0.0
    %4042 = vmatpush1.msra.mxu0 0.0
    %4043 = vmatprep.subr.mxu0 0.0
    %4044 = vmatpush1.msra.mxu0 0.0
    %4045 = vmatprep.subr.mxu0 0.0
    %4046 = vmatpush1.msra.mxu0 0.0
    %4047 = vmatprep.subr.mxu0 0.0
    %4048 = vmatpush1.msra.mxu0 0.0
    %4049 = vmatprep.subr.mxu0 0.0
    %4050 = vmatpush1.msra.mxu0 0.0
    %4051 = vmatprep.subr.mxu0 0.0
    %4052 = vmatpush1.msra.mxu0 0.0
    %4053 = vmatprep.subr.mxu0 0.0
    %4054 = vmatpush1.msra.mxu0 0.0
    %4055 = vmatprep.subr.mxu0 0.0
    %4056 = vmatpush1.msra.mxu0 0.0
    %4057 = vmatprep.subr.mxu0 0.0
    %4058 = vmatpush1.msra.mxu0 0.0
    %4059 = vmatprep.subr.mxu0 0.0
    %4060 = vmatpush1.msra.mxu0 %v4028
    %4061 = vmatprep.subr.mxu0 0.0
    %4062 = vmatpush1.msra.mxu0 %v4026
    %4063 = vmatprep.subr.mxu0 0.0
    %4064 = vmatpush2.msra.mxu0 0.0
    %4065 = vmatprep.subr.mxu0 0.0
    %4066 = vmatpush2.msra.mxu0 0.0
    %4067 = vmatprep.subr.mxu0 0.0
    %4068 = vmatpush2.msra.mxu0 0.0
    %4069 = vmatprep.subr.mxu0 0.0
    %4070 = vmatpush2.msra.mxu0 0.0
    %4071 = vmatprep.subr.mxu0 0.0
    %4072 = vmatpush2.msra.mxu0 0.0
    %4073 = vmatprep.subr.mxu0 0.0
    %4074 = vmatpush2.msra.mxu0 0.0
    %4075 = vmatprep.subr.mxu0 0.0
    %4076 = vmatpush2.msra.mxu0 0.0
    %4077 = vmatprep.subr.mxu0 0.0
    %4078 = vmatpush2.msra.mxu0 0.0
    %4079 = vmatprep.subr.mxu0 0.0
    %4080 = vmatpush2.msra.mxu0 0.0
    %4081 = vmatprep.subr.mxu0 0.0
    %4082 = vmatpush2.msra.mxu0 0.0
    %4083 = vmatprep.subr.mxu0 0.0
    %4084 = vmatpush2.msra.mxu0 0.0
    %4085 = vmatprep.subr.mxu0 0.0
    %4086 = vmatpush2.msra.mxu0 0.0
    %4087 = vmatprep.subr.mxu0 0.0
    %4088 = vmatpush2.msra.mxu0 0.0
    %4089 = vmatprep.subr.mxu0 0.0
    %4090 = vmatpush2.msra.mxu0 0.0
    %4091 = vmatprep.subr.mxu0 0.0
    %4092 = vmatpush2.msra.mxu0 0.0
    %4093 = vmatprep.subr.mxu0 0.0
    %4094 = vmatpush2.msra.mxu0 0.0
    %4095 = vmatprep.mubr.f32.mxu0 0.0
    %4096 = vmatmul.mubr.f32.gmra.mxu0 %v3946
    %v4097 = vpop.f32.mrf.mxu0
    %v4098 = vadd.f32 0.0, %v4097
    %v4099 = vpop.f32.mrf.mxu0
    %4100 = vmatprep.mubr.f32.mxu0 0.0
    %4101 = vmatmul.mubr.f32.gmra.mxu0 %v3948
    %v4102 = vpop.f32.mrf.mxu0
    %v4103 = vadd.f32 0.0, %v4102
    %v4104 = vpop.f32.mrf.mxu0
    %4105 = vdwg.mxu0
    %4108 = vrot.lane.b32.xlu0 %v3503, 80
    %v4109 = vpop.permute.xlu0 %4108
    %4110 = vrot.lane.b32.xlu0 %v3504, 80
    %v4111 = vpop.permute.xlu0 %4110
    %4112 = vrot.lane.b32.xlu0 %v3584, 80
    %v4113 = vpop.permute.xlu0 %4112
    %4114 = vrot.lane.b32.xlu0 %v3589, 80
    %v4115 = vpop.permute.xlu0 %4114
    %v4118 = vsel %vm173, %v4109, 0
    %v4120 = vsel %vm173, %v4111, 0
    %4122 = vmatprep.subr.mxu0 0.0
    %4123 = vmatpush1.msra.mxu0 0.0
    %4124 = vmatprep.subr.mxu0 0.0
    %4125 = vmatpush1.msra.mxu0 0.0
    %4126 = vmatprep.subr.mxu0 0.0
    %4127 = vmatpush1.msra.mxu0 0.0
    %4128 = vmatprep.subr.mxu0 0.0
    %4129 = vmatpush1.msra.mxu0 0.0
    %4130 = vmatprep.subr.mxu0 0.0
    %4131 = vmatpush1.msra.mxu0 0.0
    %4132 = vmatprep.subr.mxu0 0.0
    %4133 = vmatpush1.msra.mxu0 0.0
    %4134 = vmatprep.subr.mxu0 0.0
    %4135 = vmatpush1.msra.mxu0 0.0
    %4136 = vmatprep.subr.mxu0 0.0
    %4137 = vmatpush1.msra.mxu0 0.0
    %4138 = vmatprep.subr.mxu0 0.0
    %4139 = vmatpush1.msra.mxu0 0.0
    %4140 = vmatprep.subr.mxu0 0.0
    %4141 = vmatpush1.msra.mxu0 0.0
    %4142 = vmatprep.subr.mxu0 0.0
    %4143 = vmatpush1.msra.mxu0 0.0
    %4144 = vmatprep.subr.mxu0 0.0
    %4145 = vmatpush1.msra.mxu0 0.0
    %4146 = vmatprep.subr.mxu0 0.0
    %4147 = vmatpush1.msra.mxu0 0.0
    %4148 = vmatprep.subr.mxu0 0.0
    %4149 = vmatpush1.msra.mxu0 0.0
    %4150 = vmatprep.subr.mxu0 0.0
    %4151 = vmatpush1.msra.mxu0 %v4115
    %4152 = vmatprep.subr.mxu0 0.0
    %4153 = vmatpush1.msra.mxu0 %v4113
    %4154 = vmatprep.subr.mxu0 0.0
    %4155 = vmatpush2.msra.mxu0 0.0
    %4156 = vmatprep.subr.mxu0 0.0
    %4157 = vmatpush2.msra.mxu0 0.0
    %4158 = vmatprep.subr.mxu0 0.0
    %4159 = vmatpush2.msra.mxu0 0.0
    %4160 = vmatprep.subr.mxu0 0.0
    %4161 = vmatpush2.msra.mxu0 0.0
    %4162 = vmatprep.subr.mxu0 0.0
    %4163 = vmatpush2.msra.mxu0 0.0
    %4164 = vmatprep.subr.mxu0 0.0
    %4165 = vmatpush2.msra.mxu0 0.0
    %4166 = vmatprep.subr.mxu0 0.0
    %4167 = vmatpush2.msra.mxu0 0.0
    %4168 = vmatprep.subr.mxu0 0.0
    %4169 = vmatpush2.msra.mxu0 0.0
    %4170 = vmatprep.subr.mxu0 0.0
    %4171 = vmatpush2.msra.mxu0 0.0
    %4172 = vmatprep.subr.mxu0 0.0
    %4173 = vmatpush2.msra.mxu0 0.0
    %4174 = vmatprep.subr.mxu0 0.0
    %4175 = vmatpush2.msra.mxu0 0.0
    %4176 = vmatprep.subr.mxu0 0.0
    %4177 = vmatpush2.msra.mxu0 0.0
    %4178 = vmatprep.subr.mxu0 0.0
    %4179 = vmatpush2.msra.mxu0 0.0
    %4180 = vmatprep.subr.mxu0 0.0
    %4181 = vmatpush2.msra.mxu0 0.0
    %4182 = vmatprep.subr.mxu0 0.0
    %4183 = vmatpush2.msra.mxu0 0.0
    %4184 = vmatprep.subr.mxu0 0.0
    %4185 = vmatpush2.msra.mxu0 0.0
    %4186 = vmatprep.mubr.f32.mxu0 0.0
    %4187 = vmatmul.mubr.f32.gmra.mxu0 %v4118
    %v4188 = vpop.f32.mrf.mxu0
    %v4189 = vadd.f32 0.0, %v4188
    %v4190 = vpop.f32.mrf.mxu0
    %4191 = vmatprep.mubr.f32.mxu0 0.0
    %4192 = vmatmul.mubr.f32.gmra.mxu0 %v4120
    %v4193 = vpop.f32.mrf.mxu0
    %v4194 = vadd.f32 0.0, %v4193
    %v4195 = vpop.f32.mrf.mxu0
    %4196 = vdwg.mxu0
    %4197 = vrot.lane.b32.xlu0 %v3594, 80
    %v4198 = vpop.permute.xlu0 %4197
    %4199 = vrot.lane.b32.xlu0 %v3599, 80
    %v4200 = vpop.permute.xlu0 %4199
    %4203 = vmatprep.subr.mxu0 0.0
    %4204 = vmatpush1.msra.mxu0 0.0
    %4205 = vmatprep.subr.mxu0 0.0
    %4206 = vmatpush1.msra.mxu0 0.0
    %4207 = vmatprep.subr.mxu0 0.0
    %4208 = vmatpush1.msra.mxu0 0.0
    %4209 = vmatprep.subr.mxu0 0.0
    %4210 = vmatpush1.msra.mxu0 0.0
    %4211 = vmatprep.subr.mxu0 0.0
    %4212 = vmatpush1.msra.mxu0 0.0
    %4213 = vmatprep.subr.mxu0 0.0
    %4214 = vmatpush1.msra.mxu0 0.0
    %4215 = vmatprep.subr.mxu0 0.0
    %4216 = vmatpush1.msra.mxu0 0.0
    %4217 = vmatprep.subr.mxu0 0.0
    %4218 = vmatpush1.msra.mxu0 0.0
    %4219 = vmatprep.subr.mxu0 0.0
    %4220 = vmatpush1.msra.mxu0 0.0
    %4221 = vmatprep.subr.mxu0 0.0
    %4222 = vmatpush1.msra.mxu0 0.0
    %4223 = vmatprep.subr.mxu0 0.0
    %4224 = vmatpush1.msra.mxu0 0.0
    %4225 = vmatprep.subr.mxu0 0.0
    %4226 = vmatpush1.msra.mxu0 0.0
    %4227 = vmatprep.subr.mxu0 0.0
    %4228 = vmatpush1.msra.mxu0 0.0
    %4229 = vmatprep.subr.mxu0 0.0
    %4230 = vmatpush1.msra.mxu0 0.0
    %4231 = vmatprep.subr.mxu0 0.0
    %4232 = vmatpush1.msra.mxu0 %v4200
    %4233 = vmatprep.subr.mxu0 0.0
    %4234 = vmatpush1.msra.mxu0 %v4198
    %4235 = vmatprep.subr.mxu0 0.0
    %4236 = vmatpush2.msra.mxu0 0.0
    %4237 = vmatprep.subr.mxu0 0.0
    %4238 = vmatpush2.msra.mxu0 0.0
    %4239 = vmatprep.subr.mxu0 0.0
    %4240 = vmatpush2.msra.mxu0 0.0
    %4241 = vmatprep.subr.mxu0 0.0
    %4242 = vmatpush2.msra.mxu0 0.0
    %4243 = vmatprep.subr.mxu0 0.0
    %4244 = vmatpush2.msra.mxu0 0.0
    %4245 = vmatprep.subr.mxu0 0.0
    %4246 = vmatpush2.msra.mxu0 0.0
    %4247 = vmatprep.subr.mxu0 0.0
    %4248 = vmatpush2.msra.mxu0 0.0
    %4249 = vmatprep.subr.mxu0 0.0
    %4250 = vmatpush2.msra.mxu0 0.0
    %4251 = vmatprep.subr.mxu0 0.0
    %4252 = vmatpush2.msra.mxu0 0.0
    %4253 = vmatprep.subr.mxu0 0.0
    %4254 = vmatpush2.msra.mxu0 0.0
    %4255 = vmatprep.subr.mxu0 0.0
    %4256 = vmatpush2.msra.mxu0 0.0
    %4257 = vmatprep.subr.mxu0 0.0
    %4258 = vmatpush2.msra.mxu0 0.0
    %4259 = vmatprep.subr.mxu0 0.0
    %4260 = vmatpush2.msra.mxu0 0.0
    %4261 = vmatprep.subr.mxu0 0.0
    %4262 = vmatpush2.msra.mxu0 0.0
    %4263 = vmatprep.subr.mxu0 0.0
    %4264 = vmatpush2.msra.mxu0 0.0
    %4265 = vmatprep.subr.mxu0 0.0
    %4266 = vmatpush2.msra.mxu0 0.0
    %4267 = vmatprep.mubr.f32.mxu0 0.0
    %4268 = vmatmul.mubr.f32.gmra.mxu0 %v4118
    %v4269 = vpop.f32.mrf.mxu0
    %v4270 = vadd.f32 0.0, %v4269
    %v4271 = vpop.f32.mrf.mxu0
    %4272 = vmatprep.mubr.f32.mxu0 0.0
    %4273 = vmatmul.mubr.f32.gmra.mxu0 %v4120
    %v4274 = vpop.f32.mrf.mxu0
    %v4275 = vadd.f32 0.0, %v4274
    %v4276 = vpop.f32.mrf.mxu0
    %4277 = vdwg.mxu0
    %4282 = vrot.lane.b32.xlu0 %v3843, 16
    %v4283 = vpop.permute.xlu0 %4282
    %4284 = vrot.lane.b32.xlu0 %v3848, 16
    %v4285 = vpop.permute.xlu0 %4284
    %4286 = vrot.lane.b32.xlu0 %v3926, 16
    %v4287 = vpop.permute.xlu0 %4286
    %4288 = vrot.lane.b32.xlu0 %v3931, 16
    %v4289 = vpop.permute.xlu0 %4288
    %4298 = vrot.lane.b32.xlu0 %v4017, 32
    %v4299 = vpop.permute.xlu0 %4298
    %4300 = vrot.lane.b32.xlu0 %v4022, 32
    %v4301 = vpop.permute.xlu0 %4300
    %4302 = vrot.lane.b32.xlu0 %v4098, 32
    %v4303 = vpop.permute.xlu0 %4302
    %4304 = vrot.lane.b32.xlu0 %v4103, 32
    %v4305 = vpop.permute.xlu0 %4304
    %4314 = vrot.lane.b32.xlu0 %v4189, 48
    %v4315 = vpop.permute.xlu0 %4314
    %4316 = vrot.lane.b32.xlu0 %v4194, 48
    %v4317 = vpop.permute.xlu0 %4316
    %4318 = vrot.lane.b32.xlu0 %v4270, 48
    %v4319 = vpop.permute.xlu0 %4318
    %4320 = vrot.lane.b32.xlu0 %v4275, 48
    %v4321 = vpop.permute.xlu0 %4320
    %v4326 = vsel %vm173, %v3675, %v4283
    %v4327 = vsel %vm173, %v3680, %v4285
    %v4328 = vsel %vm173, %v3750, %v4287
    %v4329 = vsel %vm173, %v3755, %v4289
    %v4330 = vsel %vm902, %v4326, %v4299
    %v4331 = vsel %vm902, %v4327, %v4301
    %v4332 = vsel %vm902, %v4328, %v4303
    %v4333 = vsel %vm902, %v4329, %v4305
    %v4334 = vsel %vm907, %v4330, %v4315
    %v4335 = vsel %vm907, %v4331, %v4317
    %v4336 = vsel %vm907, %v4332, %v4319
    %v4337 = vsel %vm907, %v4333, %v4321
    %s4338 = scalar_lea.vmem [#allocation7], 640
    %v4339 = vld [vmem:[%s4338] sm:$0xff]
    %v4340 = vld [vmem:[%s4338 + $0x8] sm:$0xff]
    %v4341 = vld [vmem:[%s4338 + $0x10] sm:$0xff]
    %v4342 = vld [vmem:[%s4338 + $0x18] sm:$0xff]
    %v4343 = vld [vmem:[%s4338 + $0x20] sm:$0xff]
    %v4344 = vld [vmem:[%s4338 + $0x28] sm:$0xff]
    %v4345 = vld [vmem:[%s4338 + $0x30] sm:$0xff]
    %v4346 = vld [vmem:[%s4338 + $0x38] sm:$0xff]
    %s4347 = scalar_lea.vmem [#allocation7], 704
    %v4348 = vld [vmem:[%s4347] sm:$0xff]
    %v4349 = vld [vmem:[%s4347 + $0x8] sm:$0xff]
    %v4350 = vld [vmem:[%s4347 + $0x10] sm:$0xff]
    %v4351 = vld [vmem:[%s4347 + $0x18] sm:$0xff]
    %v4352 = vld [vmem:[%s4347 + $0x20] sm:$0xff]
    %v4353 = vld [vmem:[%s4347 + $0x28] sm:$0xff]
    %v4354 = vld [vmem:[%s4347 + $0x30] sm:$0xff]
    %v4355 = vld [vmem:[%s4347 + $0x38] sm:$0xff]
    %4356 = vmatprep.subr.mxu0 0.0
    %4357 = vmatpush1.msra.mxu0 0.0
    %4358 = vmatprep.subr.mxu0 0.0
    %4359 = vmatpush1.msra.mxu0 0.0
    %4360 = vmatprep.subr.mxu0 0.0
    %4361 = vmatpush1.msra.mxu0 0.0
    %4362 = vmatprep.subr.mxu0 0.0
    %4363 = vmatpush1.msra.mxu0 0.0
    %4364 = vmatprep.subr.mxu0 0.0
    %4365 = vmatpush1.msra.mxu0 0.0
    %4366 = vmatprep.subr.mxu0 0.0
    %4367 = vmatpush1.msra.mxu0 0.0
    %4368 = vmatprep.subr.mxu0 0.0
    %4369 = vmatpush1.msra.mxu0 0.0
    %4370 = vmatprep.subr.mxu0 0.0
    %4371 = vmatpush1.msra.mxu0 0.0
    %4372 = vmatprep.subr.mxu0 0.0
    %4373 = vmatpush1.msra.mxu0 %v4346
    %4374 = vmatprep.subr.mxu0 0.0
    %4375 = vmatpush1.msra.mxu0 %v4345
    %4376 = vmatprep.subr.mxu0 0.0
    %4377 = vmatpush1.msra.mxu0 %v4344
    %4378 = vmatprep.subr.mxu0 0.0
    %4379 = vmatpush1.msra.mxu0 %v4343
    %4380 = vmatprep.subr.mxu0 0.0
    %4381 = vmatpush1.msra.mxu0 %v4342
    %4382 = vmatprep.subr.mxu0 0.0
    %4383 = vmatpush1.msra.mxu0 %v4341
    %4384 = vmatprep.subr.mxu0 0.0
    %4385 = vmatpush1.msra.mxu0 %v4340
    %4386 = vmatprep.subr.mxu0 0.0
    %4387 = vmatpush1.msra.mxu0 %v4339
    %4388 = vmatprep.subr.mxu0 0.0
    %4389 = vmatpush2.msra.mxu0 0.0
    %4390 = vmatprep.subr.mxu0 0.0
    %4391 = vmatpush2.msra.mxu0 0.0
    %4392 = vmatprep.subr.mxu0 0.0
    %4393 = vmatpush2.msra.mxu0 0.0
    %4394 = vmatprep.subr.mxu0 0.0
    %4395 = vmatpush2.msra.mxu0 0.0
    %4396 = vmatprep.subr.mxu0 0.0
    %4397 = vmatpush2.msra.mxu0 0.0
    %4398 = vmatprep.subr.mxu0 0.0
    %4399 = vmatpush2.msra.mxu0 0.0
    %4400 = vmatprep.subr.mxu0 0.0
    %4401 = vmatpush2.msra.mxu0 0.0
    %4402 = vmatprep.subr.mxu0 0.0
    %4403 = vmatpush2.msra.mxu0 0.0
    %4404 = vmatprep.subr.mxu0 0.0
    %4405 = vmatpush2.msra.mxu0 0.0
    %4406 = vmatprep.subr.mxu0 0.0
    %4407 = vmatpush2.msra.mxu0 0.0
    %4408 = vmatprep.subr.mxu0 0.0
    %4409 = vmatpush2.msra.mxu0 0.0
    %4410 = vmatprep.subr.mxu0 0.0
    %4411 = vmatpush2.msra.mxu0 0.0
    %4412 = vmatprep.subr.mxu0 0.0
    %4413 = vmatpush2.msra.mxu0 0.0
    %4414 = vmatprep.subr.mxu0 0.0
    %4415 = vmatpush2.msra.mxu0 0.0
    %4416 = vmatprep.subr.mxu0 0.0
    %4417 = vmatpush2.msra.mxu0 0.0
    %4418 = vmatprep.subr.mxu0 0.0
    %4419 = vmatpush2.msra.mxu0 0.0
    %4420 = vmatprep.mubr.f32.mxu0 0.0
    %4421 = vmatmul.mubr.f32.gmra.mxu0 %v3506
    %v4422 = vpop.f32.mrf.mxu0
    %v4423 = vadd.f32 0.0, %v4422
    %v4424 = vpop.f32.mrf.mxu0
    %4425 = vmatprep.mubr.f32.mxu0 0.0
    %4426 = vmatmul.mubr.f32.gmra.mxu0 %v3509
    %v4427 = vpop.f32.mrf.mxu0
    %v4428 = vadd.f32 0.0, %v4427
    %v4429 = vpop.f32.mrf.mxu0
    %4430 = vmatprep.mubr.f32.mxu0 0.0
    %4431 = vmatmul.mubr.f32.gmra.mxu0 %v3512
    %v4432 = vpop.f32.mrf.mxu0
    %v4433 = vadd.f32 0.0, %v4432
    %v4434 = vpop.f32.mrf.mxu0
    %4435 = vmatprep.mubr.f32.mxu0 0.0
    %4436 = vmatmul.mubr.f32.gmra.mxu0 %v3515
    %v4437 = vpop.f32.mrf.mxu0
    %v4438 = vadd.f32 0.0, %v4437
    %v4439 = vpop.f32.mrf.mxu0
    %4440 = vdwg.mxu0
    %v4442 = vsel %vm173, %v4348, 0
    %v4445 = vsel %vm173, %v4349, 0
    %4447 = vmatprep.subr.mxu0 0.0
    %4448 = vmatpush1.msra.mxu0 0.0
    %4449 = vmatprep.subr.mxu0 0.0
    %4450 = vmatpush1.msra.mxu0 0.0
    %4451 = vmatprep.subr.mxu0 0.0
    %4452 = vmatpush1.msra.mxu0 0.0
    %4453 = vmatprep.subr.mxu0 0.0
    %4454 = vmatpush1.msra.mxu0 0.0
    %4455 = vmatprep.subr.mxu0 0.0
    %4456 = vmatpush1.msra.mxu0 0.0
    %4457 = vmatprep.subr.mxu0 0.0
    %4458 = vmatpush1.msra.mxu0 0.0
    %4459 = vmatprep.subr.mxu0 0.0
    %4460 = vmatpush1.msra.mxu0 0.0
    %4461 = vmatprep.subr.mxu0 0.0
    %4462 = vmatpush1.msra.mxu0 0.0
    %4463 = vmatprep.subr.mxu0 0.0
    %4464 = vmatpush1.msra.mxu0 0.0
    %4465 = vmatprep.subr.mxu0 0.0
    %4466 = vmatpush1.msra.mxu0 0.0
    %4467 = vmatprep.subr.mxu0 0.0
    %4468 = vmatpush1.msra.mxu0 0.0
    %4469 = vmatprep.subr.mxu0 0.0
    %4470 = vmatpush1.msra.mxu0 0.0
    %4471 = vmatprep.subr.mxu0 0.0
    %4472 = vmatpush1.msra.mxu0 0.0
    %4473 = vmatprep.subr.mxu0 0.0
    %4474 = vmatpush1.msra.mxu0 0.0
    %4475 = vmatprep.subr.mxu0 0.0
    %4476 = vmatpush1.msra.mxu0 %v4428
    %4477 = vmatprep.subr.mxu0 0.0
    %4478 = vmatpush1.msra.mxu0 %v4423
    %4479 = vmatprep.subr.mxu0 0.0
    %4480 = vmatpush2.msra.mxu0 0.0
    %4481 = vmatprep.subr.mxu0 0.0
    %4482 = vmatpush2.msra.mxu0 0.0
    %4483 = vmatprep.subr.mxu0 0.0
    %4484 = vmatpush2.msra.mxu0 0.0
    %4485 = vmatprep.subr.mxu0 0.0
    %4486 = vmatpush2.msra.mxu0 0.0
    %4487 = vmatprep.subr.mxu0 0.0
    %4488 = vmatpush2.msra.mxu0 0.0
    %4489 = vmatprep.subr.mxu0 0.0
    %4490 = vmatpush2.msra.mxu0 0.0
    %4491 = vmatprep.subr.mxu0 0.0
    %4492 = vmatpush2.msra.mxu0 0.0
    %4493 = vmatprep.subr.mxu0 0.0
    %4494 = vmatpush2.msra.mxu0 0.0
    %4495 = vmatprep.subr.mxu0 0.0
    %4496 = vmatpush2.msra.mxu0 0.0
    %4497 = vmatprep.subr.mxu0 0.0
    %4498 = vmatpush2.msra.mxu0 0.0
    %4499 = vmatprep.subr.mxu0 0.0
    %4500 = vmatpush2.msra.mxu0 0.0
    %4501 = vmatprep.subr.mxu0 0.0
    %4502 = vmatpush2.msra.mxu0 0.0
    %4503 = vmatprep.subr.mxu0 0.0
    %4504 = vmatpush2.msra.mxu0 0.0
    %4505 = vmatprep.subr.mxu0 0.0
    %4506 = vmatpush2.msra.mxu0 0.0
    %4507 = vmatprep.subr.mxu0 0.0
    %4508 = vmatpush2.msra.mxu0 0.0
    %4509 = vmatprep.subr.mxu0 0.0
    %4510 = vmatpush2.msra.mxu0 0.0
    %4511 = vmatprep.mubr.f32.mxu0 0.0
    %4512 = vmatmul.mubr.f32.gmra.mxu0 %v4442
    %v4513 = vpop.f32.mrf.mxu0
    %v4514 = vadd.f32 0.0, %v4513
    %v4515 = vpop.f32.mrf.mxu0
    %4516 = vmatprep.mubr.f32.mxu0 0.0
    %4517 = vmatmul.mubr.f32.gmra.mxu0 %v4445
    %v4518 = vpop.f32.mrf.mxu0
    %v4519 = vadd.f32 0.0, %v4518
    %v4520 = vpop.f32.mrf.mxu0
    %4521 = vdwg.mxu0
    %4522 = vmatprep.subr.mxu0 0.0
    %4523 = vmatpush1.msra.mxu0 0.0
    %4524 = vmatprep.subr.mxu0 0.0
    %4525 = vmatpush1.msra.mxu0 0.0
    %4526 = vmatprep.subr.mxu0 0.0
    %4527 = vmatpush1.msra.mxu0 0.0
    %4528 = vmatprep.subr.mxu0 0.0
    %4529 = vmatpush1.msra.mxu0 0.0
    %4530 = vmatprep.subr.mxu0 0.0
    %4531 = vmatpush1.msra.mxu0 0.0
    %4532 = vmatprep.subr.mxu0 0.0
    %4533 = vmatpush1.msra.mxu0 0.0
    %4534 = vmatprep.subr.mxu0 0.0
    %4535 = vmatpush1.msra.mxu0 0.0
    %4536 = vmatprep.subr.mxu0 0.0
    %4537 = vmatpush1.msra.mxu0 0.0
    %4538 = vmatprep.subr.mxu0 0.0
    %4539 = vmatpush1.msra.mxu0 0.0
    %4540 = vmatprep.subr.mxu0 0.0
    %4541 = vmatpush1.msra.mxu0 0.0
    %4542 = vmatprep.subr.mxu0 0.0
    %4543 = vmatpush1.msra.mxu0 0.0
    %4544 = vmatprep.subr.mxu0 0.0
    %4545 = vmatpush1.msra.mxu0 0.0
    %4546 = vmatprep.subr.mxu0 0.0
    %4547 = vmatpush1.msra.mxu0 0.0
    %4548 = vmatprep.subr.mxu0 0.0
    %4549 = vmatpush1.msra.mxu0 0.0
    %4550 = vmatprep.subr.mxu0 0.0
    %4551 = vmatpush1.msra.mxu0 %v4438
    %4552 = vmatprep.subr.mxu0 0.0
    %4553 = vmatpush1.msra.mxu0 %v4433
    %4554 = vmatprep.subr.mxu0 0.0
    %4555 = vmatpush2.msra.mxu0 0.0
    %4556 = vmatprep.subr.mxu0 0.0
    %4557 = vmatpush2.msra.mxu0 0.0
    %4558 = vmatprep.subr.mxu0 0.0
    %4559 = vmatpush2.msra.mxu0 0.0
    %4560 = vmatprep.subr.mxu0 0.0
    %4561 = vmatpush2.msra.mxu0 0.0
    %4562 = vmatprep.subr.mxu0 0.0
    %4563 = vmatpush2.msra.mxu0 0.0
    %4564 = vmatprep.subr.mxu0 0.0
    %4565 = vmatpush2.msra.mxu0 0.0
    %4566 = vmatprep.subr.mxu0 0.0
    %4567 = vmatpush2.msra.mxu0 0.0
    %4568 = vmatprep.subr.mxu0 0.0
    %4569 = vmatpush2.msra.mxu0 0.0
    %4570 = vmatprep.subr.mxu0 0.0
    %4571 = vmatpush2.msra.mxu0 0.0
    %4572 = vmatprep.subr.mxu0 0.0
    %4573 = vmatpush2.msra.mxu0 0.0
    %4574 = vmatprep.subr.mxu0 0.0
    %4575 = vmatpush2.msra.mxu0 0.0
    %4576 = vmatprep.subr.mxu0 0.0
    %4577 = vmatpush2.msra.mxu0 0.0
    %4578 = vmatprep.subr.mxu0 0.0
    %4579 = vmatpush2.msra.mxu0 0.0
    %4580 = vmatprep.subr.mxu0 0.0
    %4581 = vmatpush2.msra.mxu0 0.0
    %4582 = vmatprep.subr.mxu0 0.0
    %4583 = vmatpush2.msra.mxu0 0.0
    %4584 = vmatprep.subr.mxu0 0.0
    %4585 = vmatpush2.msra.mxu0 0.0
    %4586 = vmatprep.mubr.f32.mxu0 0.0
    %4587 = vmatmul.mubr.f32.gmra.mxu0 %v4442
    %v4588 = vpop.f32.mrf.mxu0
    %v4589 = vadd.f32 0.0, %v4588
    %v4590 = vpop.f32.mrf.mxu0
    %4591 = vmatprep.mubr.f32.mxu0 0.0
    %4592 = vmatmul.mubr.f32.gmra.mxu0 %v4445
    %v4593 = vpop.f32.mrf.mxu0
    %v4594 = vadd.f32 0.0, %v4593
    %v4595 = vpop.f32.mrf.mxu0
    %4596 = vdwg.mxu0
    %4599 = vrot.lane.b32.xlu0 %v4350, 112
    %v4600 = vpop.permute.xlu0 %4599
    %4601 = vrot.lane.b32.xlu0 %v4351, 112
    %v4602 = vpop.permute.xlu0 %4601
    %4605 = vrot.lane.b32.xlu0 %v4423, 112
    %v4606 = vpop.permute.xlu0 %4605
    %4607 = vrot.lane.b32.xlu0 %v4428, 112
    %v4608 = vpop.permute.xlu0 %4607
    %v4611 = vsel %vm173, %v4600, 0
    %v4613 = vsel %vm173, %v4602, 0
    %4615 = vmatprep.subr.mxu0 0.0
    %4616 = vmatpush1.msra.mxu0 0.0
    %4617 = vmatprep.subr.mxu0 0.0
    %4618 = vmatpush1.msra.mxu0 0.0
    %4619 = vmatprep.subr.mxu0 0.0
    %4620 = vmatpush1.msra.mxu0 0.0
    %4621 = vmatprep.subr.mxu0 0.0
    %4622 = vmatpush1.msra.mxu0 0.0
    %4623 = vmatprep.subr.mxu0 0.0
    %4624 = vmatpush1.msra.mxu0 0.0
    %4625 = vmatprep.subr.mxu0 0.0
    %4626 = vmatpush1.msra.mxu0 0.0
    %4627 = vmatprep.subr.mxu0 0.0
    %4628 = vmatpush1.msra.mxu0 0.0
    %4629 = vmatprep.subr.mxu0 0.0
    %4630 = vmatpush1.msra.mxu0 0.0
    %4631 = vmatprep.subr.mxu0 0.0
    %4632 = vmatpush1.msra.mxu0 0.0
    %4633 = vmatprep.subr.mxu0 0.0
    %4634 = vmatpush1.msra.mxu0 0.0
    %4635 = vmatprep.subr.mxu0 0.0
    %4636 = vmatpush1.msra.mxu0 0.0
    %4637 = vmatprep.subr.mxu0 0.0
    %4638 = vmatpush1.msra.mxu0 0.0
    %4639 = vmatprep.subr.mxu0 0.0
    %4640 = vmatpush1.msra.mxu0 0.0
    %4641 = vmatprep.subr.mxu0 0.0
    %4642 = vmatpush1.msra.mxu0 0.0
    %4643 = vmatprep.subr.mxu0 0.0
    %4644 = vmatpush1.msra.mxu0 %v4608
    %4645 = vmatprep.subr.mxu0 0.0
    %4646 = vmatpush1.msra.mxu0 %v4606
    %4647 = vmatprep.subr.mxu0 0.0
    %4648 = vmatpush2.msra.mxu0 0.0
    %4649 = vmatprep.subr.mxu0 0.0
    %4650 = vmatpush2.msra.mxu0 0.0
    %4651 = vmatprep.subr.mxu0 0.0
    %4652 = vmatpush2.msra.mxu0 0.0
    %4653 = vmatprep.subr.mxu0 0.0
    %4654 = vmatpush2.msra.mxu0 0.0
    %4655 = vmatprep.subr.mxu0 0.0
    %4656 = vmatpush2.msra.mxu0 0.0
    %4657 = vmatprep.subr.mxu0 0.0
    %4658 = vmatpush2.msra.mxu0 0.0
    %4659 = vmatprep.subr.mxu0 0.0
    %4660 = vmatpush2.msra.mxu0 0.0
    %4661 = vmatprep.subr.mxu0 0.0
    %4662 = vmatpush2.msra.mxu0 0.0
    %4663 = vmatprep.subr.mxu0 0.0
    %4664 = vmatpush2.msra.mxu0 0.0
    %4665 = vmatprep.subr.mxu0 0.0
    %4666 = vmatpush2.msra.mxu0 0.0
    %4667 = vmatprep.subr.mxu0 0.0
    %4668 = vmatpush2.msra.mxu0 0.0
    %4669 = vmatprep.subr.mxu0 0.0
    %4670 = vmatpush2.msra.mxu0 0.0
    %4671 = vmatprep.subr.mxu0 0.0
    %4672 = vmatpush2.msra.mxu0 0.0
    %4673 = vmatprep.subr.mxu0 0.0
    %4674 = vmatpush2.msra.mxu0 0.0
    %4675 = vmatprep.subr.mxu0 0.0
    %4676 = vmatpush2.msra.mxu0 0.0
    %4677 = vmatprep.subr.mxu0 0.0
    %4678 = vmatpush2.msra.mxu0 0.0
    %4679 = vmatprep.mubr.f32.mxu0 0.0
    %4680 = vmatmul.mubr.f32.gmra.mxu0 %v4611
    %v4681 = vpop.f32.mrf.mxu0
    %v4682 = vadd.f32 0.0, %v4681
    %v4683 = vpop.f32.mrf.mxu0
    %4684 = vmatprep.mubr.f32.mxu0 0.0
    %4685 = vmatmul.mubr.f32.gmra.mxu0 %v4613
    %v4686 = vpop.f32.mrf.mxu0
    %v4687 = vadd.f32 0.0, %v4686
    %v4688 = vpop.f32.mrf.mxu0
    %4689 = vdwg.mxu0
    %4692 = vrot.lane.b32.xlu0 %v4433, 112
    %v4693 = vpop.permute.xlu0 %4692
    %4694 = vrot.lane.b32.xlu0 %v4438, 112
    %v4695 = vpop.permute.xlu0 %4694
    %4698 = vmatprep.subr.mxu0 0.0
    %4699 = vmatpush1.msra.mxu0 0.0
    %4700 = vmatprep.subr.mxu0 0.0
    %4701 = vmatpush1.msra.mxu0 0.0
    %4702 = vmatprep.subr.mxu0 0.0
    %4703 = vmatpush1.msra.mxu0 0.0
    %4704 = vmatprep.subr.mxu0 0.0
    %4705 = vmatpush1.msra.mxu0 0.0
    %4706 = vmatprep.subr.mxu0 0.0
    %4707 = vmatpush1.msra.mxu0 0.0
    %4708 = vmatprep.subr.mxu0 0.0
    %4709 = vmatpush1.msra.mxu0 0.0
    %4710 = vmatprep.subr.mxu0 0.0
    %4711 = vmatpush1.msra.mxu0 0.0
    %4712 = vmatprep.subr.mxu0 0.0
    %4713 = vmatpush1.msra.mxu0 0.0
    %4714 = vmatprep.subr.mxu0 0.0
    %4715 = vmatpush1.msra.mxu0 0.0
    %4716 = vmatprep.subr.mxu0 0.0
    %4717 = vmatpush1.msra.mxu0 0.0
    %4718 = vmatprep.subr.mxu0 0.0
    %4719 = vmatpush1.msra.mxu0 0.0
    %4720 = vmatprep.subr.mxu0 0.0
    %4721 = vmatpush1.msra.mxu0 0.0
    %4722 = vmatprep.subr.mxu0 0.0
    %4723 = vmatpush1.msra.mxu0 0.0
    %4724 = vmatprep.subr.mxu0 0.0
    %4725 = vmatpush1.msra.mxu0 0.0
    %4726 = vmatprep.subr.mxu0 0.0
    %4727 = vmatpush1.msra.mxu0 %v4695
    %4728 = vmatprep.subr.mxu0 0.0
    %4729 = vmatpush1.msra.mxu0 %v4693
    %4730 = vmatprep.subr.mxu0 0.0
    %4731 = vmatpush2.msra.mxu0 0.0
    %4732 = vmatprep.subr.mxu0 0.0
    %4733 = vmatpush2.msra.mxu0 0.0
    %4734 = vmatprep.subr.mxu0 0.0
    %4735 = vmatpush2.msra.mxu0 0.0
    %4736 = vmatprep.subr.mxu0 0.0
    %4737 = vmatpush2.msra.mxu0 0.0
    %4738 = vmatprep.subr.mxu0 0.0
    %4739 = vmatpush2.msra.mxu0 0.0
    %4740 = vmatprep.subr.mxu0 0.0
    %4741 = vmatpush2.msra.mxu0 0.0
    %4742 = vmatprep.subr.mxu0 0.0
    %4743 = vmatpush2.msra.mxu0 0.0
    %4744 = vmatprep.subr.mxu0 0.0
    %4745 = vmatpush2.msra.mxu0 0.0
    %4746 = vmatprep.subr.mxu0 0.0
    %4747 = vmatpush2.msra.mxu0 0.0
    %4748 = vmatprep.subr.mxu0 0.0
    %4749 = vmatpush2.msra.mxu0 0.0
    %4750 = vmatprep.subr.mxu0 0.0
    %4751 = vmatpush2.msra.mxu0 0.0
    %4752 = vmatprep.subr.mxu0 0.0
    %4753 = vmatpush2.msra.mxu0 0.0
    %4754 = vmatprep.subr.mxu0 0.0
    %4755 = vmatpush2.msra.mxu0 0.0
    %4756 = vmatprep.subr.mxu0 0.0
    %4757 = vmatpush2.msra.mxu0 0.0
    %4758 = vmatprep.subr.mxu0 0.0
    %4759 = vmatpush2.msra.mxu0 0.0
    %4760 = vmatprep.subr.mxu0 0.0
    %4761 = vmatpush2.msra.mxu0 0.0
    %4762 = vmatprep.mubr.f32.mxu0 0.0
    %4763 = vmatmul.mubr.f32.gmra.mxu0 %v4611
    %v4764 = vpop.f32.mrf.mxu0
    %v4765 = vadd.f32 0.0, %v4764
    %v4766 = vpop.f32.mrf.mxu0
    %4767 = vmatprep.mubr.f32.mxu0 0.0
    %4768 = vmatmul.mubr.f32.gmra.mxu0 %v4613
    %v4769 = vpop.f32.mrf.mxu0
    %v4770 = vadd.f32 0.0, %v4769
    %v4771 = vpop.f32.mrf.mxu0
    %4772 = vdwg.mxu0
    %4775 = vrot.lane.b32.xlu0 %v4352, 96
    %v4776 = vpop.permute.xlu0 %4775
    %4777 = vrot.lane.b32.xlu0 %v4353, 96
    %v4778 = vpop.permute.xlu0 %4777
    %4779 = vrot.lane.b32.xlu0 %v4423, 96
    %v4780 = vpop.permute.xlu0 %4779
    %4781 = vrot.lane.b32.xlu0 %v4428, 96
    %v4782 = vpop.permute.xlu0 %4781
    %v4785 = vsel %vm173, %v4776, 0
    %v4787 = vsel %vm173, %v4778, 0
    %4789 = vmatprep.subr.mxu0 0.0
    %4790 = vmatpush1.msra.mxu0 0.0
    %4791 = vmatprep.subr.mxu0 0.0
    %4792 = vmatpush1.msra.mxu0 0.0
    %4793 = vmatprep.subr.mxu0 0.0
    %4794 = vmatpush1.msra.mxu0 0.0
    %4795 = vmatprep.subr.mxu0 0.0
    %4796 = vmatpush1.msra.mxu0 0.0
    %4797 = vmatprep.subr.mxu0 0.0
    %4798 = vmatpush1.msra.mxu0 0.0
    %4799 = vmatprep.subr.mxu0 0.0
    %4800 = vmatpush1.msra.mxu0 0.0
    %4801 = vmatprep.subr.mxu0 0.0
    %4802 = vmatpush1.msra.mxu0 0.0
    %4803 = vmatprep.subr.mxu0 0.0
    %4804 = vmatpush1.msra.mxu0 0.0
    %4805 = vmatprep.subr.mxu0 0.0
    %4806 = vmatpush1.msra.mxu0 0.0
    %4807 = vmatprep.subr.mxu0 0.0
    %4808 = vmatpush1.msra.mxu0 0.0
    %4809 = vmatprep.subr.mxu0 0.0
    %4810 = vmatpush1.msra.mxu0 0.0
    %4811 = vmatprep.subr.mxu0 0.0
    %4812 = vmatpush1.msra.mxu0 0.0
    %4813 = vmatprep.subr.mxu0 0.0
    %4814 = vmatpush1.msra.mxu0 0.0
    %4815 = vmatprep.subr.mxu0 0.0
    %4816 = vmatpush1.msra.mxu0 0.0
    %4817 = vmatprep.subr.mxu0 0.0
    %4818 = vmatpush1.msra.mxu0 %v4782
    %4819 = vmatprep.subr.mxu0 0.0
    %4820 = vmatpush1.msra.mxu0 %v4780
    %4821 = vmatprep.subr.mxu0 0.0
    %4822 = vmatpush2.msra.mxu0 0.0
    %4823 = vmatprep.subr.mxu0 0.0
    %4824 = vmatpush2.msra.mxu0 0.0
    %4825 = vmatprep.subr.mxu0 0.0
    %4826 = vmatpush2.msra.mxu0 0.0
    %4827 = vmatprep.subr.mxu0 0.0
    %4828 = vmatpush2.msra.mxu0 0.0
    %4829 = vmatprep.subr.mxu0 0.0
    %4830 = vmatpush2.msra.mxu0 0.0
    %4831 = vmatprep.subr.mxu0 0.0
    %4832 = vmatpush2.msra.mxu0 0.0
    %4833 = vmatprep.subr.mxu0 0.0
    %4834 = vmatpush2.msra.mxu0 0.0
    %4835 = vmatprep.subr.mxu0 0.0
    %4836 = vmatpush2.msra.mxu0 0.0
    %4837 = vmatprep.subr.mxu0 0.0
    %4838 = vmatpush2.msra.mxu0 0.0
    %4839 = vmatprep.subr.mxu0 0.0
    %4840 = vmatpush2.msra.mxu0 0.0
    %4841 = vmatprep.subr.mxu0 0.0
    %4842 = vmatpush2.msra.mxu0 0.0
    %4843 = vmatprep.subr.mxu0 0.0
    %4844 = vmatpush2.msra.mxu0 0.0
    %4845 = vmatprep.subr.mxu0 0.0
    %4846 = vmatpush2.msra.mxu0 0.0
    %4847 = vmatprep.subr.mxu0 0.0
    %4848 = vmatpush2.msra.mxu0 0.0
    %4849 = vmatprep.subr.mxu0 0.0
    %4850 = vmatpush2.msra.mxu0 0.0
    %4851 = vmatprep.subr.mxu0 0.0
    %4852 = vmatpush2.msra.mxu0 0.0
    %4853 = vmatprep.mubr.f32.mxu0 0.0
    %4854 = vmatmul.mubr.f32.gmra.mxu0 %v4785
    %v4855 = vpop.f32.mrf.mxu0
    %v4856 = vadd.f32 0.0, %v4855
    %v4857 = vpop.f32.mrf.mxu0
    %4858 = vmatprep.mubr.f32.mxu0 0.0
    %4859 = vmatmul.mubr.f32.gmra.mxu0 %v4787
    %v4860 = vpop.f32.mrf.mxu0
    %v4861 = vadd.f32 0.0, %v4860
    %v4862 = vpop.f32.mrf.mxu0
    %4863 = vdwg.mxu0
    %4864 = vrot.lane.b32.xlu0 %v4433, 96
    %v4865 = vpop.permute.xlu0 %4864
    %4866 = vrot.lane.b32.xlu0 %v4438, 96
    %v4867 = vpop.permute.xlu0 %4866
    %4870 = vmatprep.subr.mxu0 0.0
    %4871 = vmatpush1.msra.mxu0 0.0
    %4872 = vmatprep.subr.mxu0 0.0
    %4873 = vmatpush1.msra.mxu0 0.0
    %4874 = vmatprep.subr.mxu0 0.0
    %4875 = vmatpush1.msra.mxu0 0.0
    %4876 = vmatprep.subr.mxu0 0.0
    %4877 = vmatpush1.msra.mxu0 0.0
    %4878 = vmatprep.subr.mxu0 0.0
    %4879 = vmatpush1.msra.mxu0 0.0
    %4880 = vmatprep.subr.mxu0 0.0
    %4881 = vmatpush1.msra.mxu0 0.0
    %4882 = vmatprep.subr.mxu0 0.0
    %4883 = vmatpush1.msra.mxu0 0.0
    %4884 = vmatprep.subr.mxu0 0.0
    %4885 = vmatpush1.msra.mxu0 0.0
    %4886 = vmatprep.subr.mxu0 0.0
    %4887 = vmatpush1.msra.mxu0 0.0
    %4888 = vmatprep.subr.mxu0 0.0
    %4889 = vmatpush1.msra.mxu0 0.0
    %4890 = vmatprep.subr.mxu0 0.0
    %4891 = vmatpush1.msra.mxu0 0.0
    %4892 = vmatprep.subr.mxu0 0.0
    %4893 = vmatpush1.msra.mxu0 0.0
    %4894 = vmatprep.subr.mxu0 0.0
    %4895 = vmatpush1.msra.mxu0 0.0
    %4896 = vmatprep.subr.mxu0 0.0
    %4897 = vmatpush1.msra.mxu0 0.0
    %4898 = vmatprep.subr.mxu0 0.0
    %4899 = vmatpush1.msra.mxu0 %v4867
    %4900 = vmatprep.subr.mxu0 0.0
    %4901 = vmatpush1.msra.mxu0 %v4865
    %4902 = vmatprep.subr.mxu0 0.0
    %4903 = vmatpush2.msra.mxu0 0.0
    %4904 = vmatprep.subr.mxu0 0.0
    %4905 = vmatpush2.msra.mxu0 0.0
    %4906 = vmatprep.subr.mxu0 0.0
    %4907 = vmatpush2.msra.mxu0 0.0
    %4908 = vmatprep.subr.mxu0 0.0
    %4909 = vmatpush2.msra.mxu0 0.0
    %4910 = vmatprep.subr.mxu0 0.0
    %4911 = vmatpush2.msra.mxu0 0.0
    %4912 = vmatprep.subr.mxu0 0.0
    %4913 = vmatpush2.msra.mxu0 0.0
    %4914 = vmatprep.subr.mxu0 0.0
    %4915 = vmatpush2.msra.mxu0 0.0
    %4916 = vmatprep.subr.mxu0 0.0
    %4917 = vmatpush2.msra.mxu0 0.0
    %4918 = vmatprep.subr.mxu0 0.0
    %4919 = vmatpush2.msra.mxu0 0.0
    %4920 = vmatprep.subr.mxu0 0.0
    %4921 = vmatpush2.msra.mxu0 0.0
    %4922 = vmatprep.subr.mxu0 0.0
    %4923 = vmatpush2.msra.mxu0 0.0
    %4924 = vmatprep.subr.mxu0 0.0
    %4925 = vmatpush2.msra.mxu0 0.0
    %4926 = vmatprep.subr.mxu0 0.0
    %4927 = vmatpush2.msra.mxu0 0.0
    %4928 = vmatprep.subr.mxu0 0.0
    %4929 = vmatpush2.msra.mxu0 0.0
    %4930 = vmatprep.subr.mxu0 0.0
    %4931 = vmatpush2.msra.mxu0 0.0
    %4932 = vmatprep.subr.mxu0 0.0
    %4933 = vmatpush2.msra.mxu0 0.0
    %4934 = vmatprep.mubr.f32.mxu0 0.0
    %4935 = vmatmul.mubr.f32.gmra.mxu0 %v4785
    %v4936 = vpop.f32.mrf.mxu0
    %v4937 = vadd.f32 0.0, %v4936
    %v4938 = vpop.f32.mrf.mxu0
    %4939 = vmatprep.mubr.f32.mxu0 0.0
    %4940 = vmatmul.mubr.f32.gmra.mxu0 %v4787
    %v4941 = vpop.f32.mrf.mxu0
    %v4942 = vadd.f32 0.0, %v4941
    %v4943 = vpop.f32.mrf.mxu0
    %4944 = vdwg.mxu0
    %4947 = vrot.lane.b32.xlu0 %v4354, 80
    %v4948 = vpop.permute.xlu0 %4947
    %4949 = vrot.lane.b32.xlu0 %v4355, 80
    %v4950 = vpop.permute.xlu0 %4949
    %4951 = vrot.lane.b32.xlu0 %v4423, 80
    %v4952 = vpop.permute.xlu0 %4951
    %4953 = vrot.lane.b32.xlu0 %v4428, 80
    %v4954 = vpop.permute.xlu0 %4953
    %v4957 = vsel %vm173, %v4948, 0
    %v4959 = vsel %vm173, %v4950, 0
    %4961 = vmatprep.subr.mxu0 0.0
    %4962 = vmatpush1.msra.mxu0 0.0
    %4963 = vmatprep.subr.mxu0 0.0
    %4964 = vmatpush1.msra.mxu0 0.0
    %4965 = vmatprep.subr.mxu0 0.0
    %4966 = vmatpush1.msra.mxu0 0.0
    %4967 = vmatprep.subr.mxu0 0.0
    %4968 = vmatpush1.msra.mxu0 0.0
    %4969 = vmatprep.subr.mxu0 0.0
    %4970 = vmatpush1.msra.mxu0 0.0
    %4971 = vmatprep.subr.mxu0 0.0
    %4972 = vmatpush1.msra.mxu0 0.0
    %4973 = vmatprep.subr.mxu0 0.0
    %4974 = vmatpush1.msra.mxu0 0.0
    %4975 = vmatprep.subr.mxu0 0.0
    %4976 = vmatpush1.msra.mxu0 0.0
    %4977 = vmatprep.subr.mxu0 0.0
    %4978 = vmatpush1.msra.mxu0 0.0
    %4979 = vmatprep.subr.mxu0 0.0
    %4980 = vmatpush1.msra.mxu0 0.0
    %4981 = vmatprep.subr.mxu0 0.0
    %4982 = vmatpush1.msra.mxu0 0.0
    %4983 = vmatprep.subr.mxu0 0.0
    %4984 = vmatpush1.msra.mxu0 0.0
    %4985 = vmatprep.subr.mxu0 0.0
    %4986 = vmatpush1.msra.mxu0 0.0
    %4987 = vmatprep.subr.mxu0 0.0
    %4988 = vmatpush1.msra.mxu0 0.0
    %4989 = vmatprep.subr.mxu0 0.0
    %4990 = vmatpush1.msra.mxu0 %v4954
    %4991 = vmatprep.subr.mxu0 0.0
    %4992 = vmatpush1.msra.mxu0 %v4952
    %4993 = vmatprep.subr.mxu0 0.0
    %4994 = vmatpush2.msra.mxu0 0.0
    %4995 = vmatprep.subr.mxu0 0.0
    %4996 = vmatpush2.msra.mxu0 0.0
    %4997 = vmatprep.subr.mxu0 0.0
    %4998 = vmatpush2.msra.mxu0 0.0
    %4999 = vmatprep.subr.mxu0 0.0
    %5000 = vmatpush2.msra.mxu0 0.0
    %5001 = vmatprep.subr.mxu0 0.0
    %5002 = vmatpush2.msra.mxu0 0.0
    %5003 = vmatprep.subr.mxu0 0.0
    %5004 = vmatpush2.msra.mxu0 0.0
    %5005 = vmatprep.subr.mxu0 0.0
    %5006 = vmatpush2.msra.mxu0 0.0
    %5007 = vmatprep.subr.mxu0 0.0
    %5008 = vmatpush2.msra.mxu0 0.0
    %5009 = vmatprep.subr.mxu0 0.0
    %5010 = vmatpush2.msra.mxu0 0.0
    %5011 = vmatprep.subr.mxu0 0.0
    %5012 = vmatpush2.msra.mxu0 0.0
    %5013 = vmatprep.subr.mxu0 0.0
    %5014 = vmatpush2.msra.mxu0 0.0
    %5015 = vmatprep.subr.mxu0 0.0
    %5016 = vmatpush2.msra.mxu0 0.0
    %5017 = vmatprep.subr.mxu0 0.0
    %5018 = vmatpush2.msra.mxu0 0.0
    %5019 = vmatprep.subr.mxu0 0.0
    %5020 = vmatpush2.msra.mxu0 0.0
    %5021 = vmatprep.subr.mxu0 0.0
    %5022 = vmatpush2.msra.mxu0 0.0
    %5023 = vmatprep.subr.mxu0 0.0
    %5024 = vmatpush2.msra.mxu0 0.0
    %5025 = vmatprep.mubr.f32.mxu0 0.0
    %5026 = vmatmul.mubr.f32.gmra.mxu0 %v4957
    %v5027 = vpop.f32.mrf.mxu0
    %v5028 = vadd.f32 0.0, %v5027
    %v5029 = vpop.f32.mrf.mxu0
    %5030 = vmatprep.mubr.f32.mxu0 0.0
    %5031 = vmatmul.mubr.f32.gmra.mxu0 %v4959
    %v5032 = vpop.f32.mrf.mxu0
    %v5033 = vadd.f32 0.0, %v5032
    %v5034 = vpop.f32.mrf.mxu0
    %5035 = vdwg.mxu0
    %5036 = vrot.lane.b32.xlu0 %v4433, 80
    %v5037 = vpop.permute.xlu0 %5036
    %5038 = vrot.lane.b32.xlu0 %v4438, 80
    %v5039 = vpop.permute.xlu0 %5038
    %5042 = vmatprep.subr.mxu0 0.0
    %5043 = vmatpush1.msra.mxu0 0.0
    %5044 = vmatprep.subr.mxu0 0.0
    %5045 = vmatpush1.msra.mxu0 0.0
    %5046 = vmatprep.subr.mxu0 0.0
    %5047 = vmatpush1.msra.mxu0 0.0
    %5048 = vmatprep.subr.mxu0 0.0
    %5049 = vmatpush1.msra.mxu0 0.0
    %5050 = vmatprep.subr.mxu0 0.0
    %5051 = vmatpush1.msra.mxu0 0.0
    %5052 = vmatprep.subr.mxu0 0.0
    %5053 = vmatpush1.msra.mxu0 0.0
    %5054 = vmatprep.subr.mxu0 0.0
    %5055 = vmatpush1.msra.mxu0 0.0
    %5056 = vmatprep.subr.mxu0 0.0
    %5057 = vmatpush1.msra.mxu0 0.0
    %5058 = vmatprep.subr.mxu0 0.0
    %5059 = vmatpush1.msra.mxu0 0.0
    %5060 = vmatprep.subr.mxu0 0.0
    %5061 = vmatpush1.msra.mxu0 0.0
    %5062 = vmatprep.subr.mxu0 0.0
    %5063 = vmatpush1.msra.mxu0 0.0
    %5064 = vmatprep.subr.mxu0 0.0
    %5065 = vmatpush1.msra.mxu0 0.0
    %5066 = vmatprep.subr.mxu0 0.0
    %5067 = vmatpush1.msra.mxu0 0.0
    %5068 = vmatprep.subr.mxu0 0.0
    %5069 = vmatpush1.msra.mxu0 0.0
    %5070 = vmatprep.subr.mxu0 0.0
    %5071 = vmatpush1.msra.mxu0 %v5039
    %5072 = vmatprep.subr.mxu0 0.0
    %5073 = vmatpush1.msra.mxu0 %v5037
    %5074 = vmatprep.subr.mxu0 0.0
    %5075 = vmatpush2.msra.mxu0 0.0
    %5076 = vmatprep.subr.mxu0 0.0
    %5077 = vmatpush2.msra.mxu0 0.0
    %5078 = vmatprep.subr.mxu0 0.0
    %5079 = vmatpush2.msra.mxu0 0.0
    %5080 = vmatprep.subr.mxu0 0.0
    %5081 = vmatpush2.msra.mxu0 0.0
    %5082 = vmatprep.subr.mxu0 0.0
    %5083 = vmatpush2.msra.mxu0 0.0
    %5084 = vmatprep.subr.mxu0 0.0
    %5085 = vmatpush2.msra.mxu0 0.0
    %5086 = vmatprep.subr.mxu0 0.0
    %5087 = vmatpush2.msra.mxu0 0.0
    %5088 = vmatprep.subr.mxu0 0.0
    %5089 = vmatpush2.msra.mxu0 0.0
    %5090 = vmatprep.subr.mxu0 0.0
    %5091 = vmatpush2.msra.mxu0 0.0
    %5092 = vmatprep.subr.mxu0 0.0
    %5093 = vmatpush2.msra.mxu0 0.0
    %5094 = vmatprep.subr.mxu0 0.0
    %5095 = vmatpush2.msra.mxu0 0.0
    %5096 = vmatprep.subr.mxu0 0.0
    %5097 = vmatpush2.msra.mxu0 0.0
    %5098 = vmatprep.subr.mxu0 0.0
    %5099 = vmatpush2.msra.mxu0 0.0
    %5100 = vmatprep.subr.mxu0 0.0
    %5101 = vmatpush2.msra.mxu0 0.0
    %5102 = vmatprep.subr.mxu0 0.0
    %5103 = vmatpush2.msra.mxu0 0.0
    %5104 = vmatprep.subr.mxu0 0.0
    %5105 = vmatpush2.msra.mxu0 0.0
    %5106 = vmatprep.mubr.f32.mxu0 0.0
    %5107 = vmatmul.mubr.f32.gmra.mxu0 %v4957
    %v5108 = vpop.f32.mrf.mxu0
    %v5109 = vadd.f32 0.0, %v5108
    %v5110 = vpop.f32.mrf.mxu0
    %5111 = vmatprep.mubr.f32.mxu0 0.0
    %5112 = vmatmul.mubr.f32.gmra.mxu0 %v4959
    %v5113 = vpop.f32.mrf.mxu0
    %v5114 = vadd.f32 0.0, %v5113
    %v5115 = vpop.f32.mrf.mxu0
    %5116 = vdwg.mxu0
    %5121 = vrot.lane.b32.xlu0 %v4682, 16
    %v5122 = vpop.permute.xlu0 %5121
    %5123 = vrot.lane.b32.xlu0 %v4687, 16
    %v5124 = vpop.permute.xlu0 %5123
    %5125 = vrot.lane.b32.xlu0 %v4765, 16
    %v5126 = vpop.permute.xlu0 %5125
    %5127 = vrot.lane.b32.xlu0 %v4770, 16
    %v5128 = vpop.permute.xlu0 %5127
    %5137 = vrot.lane.b32.xlu0 %v4856, 32
    %v5138 = vpop.permute.xlu0 %5137
    %5139 = vrot.lane.b32.xlu0 %v4861, 32
    %v5140 = vpop.permute.xlu0 %5139
    %5141 = vrot.lane.b32.xlu0 %v4937, 32
    %v5142 = vpop.permute.xlu0 %5141
    %5143 = vrot.lane.b32.xlu0 %v4942, 32
    %v5144 = vpop.permute.xlu0 %5143
    %5153 = vrot.lane.b32.xlu0 %v5028, 48
    %v5154 = vpop.permute.xlu0 %5153
    %5155 = vrot.lane.b32.xlu0 %v5033, 48
    %v5156 = vpop.permute.xlu0 %5155
    %5157 = vrot.lane.b32.xlu0 %v5109, 48
    %v5158 = vpop.permute.xlu0 %5157
    %5159 = vrot.lane.b32.xlu0 %v5114, 48
    %v5160 = vpop.permute.xlu0 %5159
    %v5165 = vsel %vm173, %v4514, %v5122
    %v5166 = vsel %vm173, %v4519, %v5124
    %v5167 = vsel %vm173, %v4589, %v5126
    %v5168 = vsel %vm173, %v4594, %v5128
    %v5169 = vsel %vm902, %v5165, %v5138
    %v5170 = vsel %vm902, %v5166, %v5140
    %v5171 = vsel %vm902, %v5167, %v5142
    %v5172 = vsel %vm902, %v5168, %v5144
    %v5173 = vsel %vm907, %v5169, %v5154
    %v5174 = vsel %vm907, %v5170, %v5156
    %v5175 = vsel %vm907, %v5171, %v5158
    %v5176 = vsel %vm907, %v5172, %v5160
    %v5177 = vstv %s3484
    %v5178 = vmul.f32 %v5177, %v1764
    %v5179 = vmul.f32 %v5177, %v1765
    %v5180 = vmul.f32 %v5177, %v1766
    %v5181 = vmul.f32 %v5177, %v1767
    %v5182 = vstv %s3485
    %v5183 = vmul.f32 %v5182, %v4334
    %v5184 = vmul.f32 %v5182, %v4335
    %v5185 = vmul.f32 %v5182, %v4336
    %v5186 = vmul.f32 %v5182, %v4337
    %v5187 = vadd.f32 %v5178, %v5183
    %v5188 = vadd.f32 %v5179, %v5184
    %v5189 = vadd.f32 %v5180, %v5185
    %v5190 = vadd.f32 %v5181, %v5186
    %v5191 = vstv %s3486
    %v5192 = vmul.f32 %v5191, %v5173
    %v5193 = vmul.f32 %v5191, %v5174
    %v5194 = vmul.f32 %v5191, %v5175
    %v5195 = vmul.f32 %v5191, %v5176
    %v5196 = vadd.f32 %v5187, %v5192
    %v5197 = vadd.f32 %v5188, %v5193
    %v5198 = vadd.f32 %v5189, %v5194
    %v5199 = vadd.f32 %v5190, %v5195
    %v5200 = vadd.f32 %v3480, %v5196
    %v5201 = vadd.f32 %v3481, %v5197
    %v5202 = vadd.f32 %v3482, %v5198
    %v5203 = vadd.f32 %v3483, %v5199
    %v5204 = vmul.f32 %v5200, 0.5
    %v5205 = vmul.f32 %v5201, 0.5
    %v5206 = vmul.f32 %v5202, 0.5
    %v5207 = vmul.f32 %v5203, 0.5
    %s5208 = sld [smem:[#allocation2 + $0x6]]
    %s5209 = sld [smem:[#allocation2 + $0x7]]
    %s5210 = sld [smem:[#allocation2 + $0x8]]
    %s5211 = scalar_lea.vmem [#allocation7], 768
    %v5212 = vld [vmem:[%s5211] sm:$0xff]
    %v5213 = vld [vmem:[%s5211 + $0x8] sm:$0xff]
    %v5214 = vld [vmem:[%s5211 + $0x10] sm:$0xff]
    %v5215 = vld [vmem:[%s5211 + $0x18] sm:$0xff]
    %v5216 = vld [vmem:[%s5211 + $0x20] sm:$0xff]
    %v5217 = vld [vmem:[%s5211 + $0x28] sm:$0xff]
    %v5218 = vld [vmem:[%s5211 + $0x30] sm:$0xff]
    %v5219 = vld [vmem:[%s5211 + $0x38] sm:$0xff]
    %s5220 = scalar_lea.vmem [#allocation7], 832
    %v5221 = vld [vmem:[%s5220] sm:$0xff]
    %v5222 = vld [vmem:[%s5220 + $0x8] sm:$0xff]
    %v5223 = vld [vmem:[%s5220 + $0x10] sm:$0xff]
    %v5224 = vld [vmem:[%s5220 + $0x18] sm:$0xff]
    %v5225 = vld [vmem:[%s5220 + $0x20] sm:$0xff]
    %v5226 = vld [vmem:[%s5220 + $0x28] sm:$0xff]
    %v5227 = vld [vmem:[%s5220 + $0x30] sm:$0xff]
    %v5228 = vld [vmem:[%s5220 + $0x38] sm:$0xff]
    %5229 = vmatprep.subr.mxu0 0.0
    %5230 = vmatpush1.msra.mxu0 0.0
    %5231 = vmatprep.subr.mxu0 0.0
    %5232 = vmatpush1.msra.mxu0 0.0
    %5233 = vmatprep.subr.mxu0 0.0
    %5234 = vmatpush1.msra.mxu0 0.0
    %5235 = vmatprep.subr.mxu0 0.0
    %5236 = vmatpush1.msra.mxu0 0.0
    %5237 = vmatprep.subr.mxu0 0.0
    %5238 = vmatpush1.msra.mxu0 0.0
    %5239 = vmatprep.subr.mxu0 0.0
    %5240 = vmatpush1.msra.mxu0 0.0
    %5241 = vmatprep.subr.mxu0 0.0
    %5242 = vmatpush1.msra.mxu0 0.0
    %5243 = vmatprep.subr.mxu0 0.0
    %5244 = vmatpush1.msra.mxu0 0.0
    %5245 = vmatprep.subr.mxu0 0.0
    %5246 = vmatpush1.msra.mxu0 %v5219
    %5247 = vmatprep.subr.mxu0 0.0
    %5248 = vmatpush1.msra.mxu0 %v5218
    %5249 = vmatprep.subr.mxu0 0.0
    %5250 = vmatpush1.msra.mxu0 %v5217
    %5251 = vmatprep.subr.mxu0 0.0
    %5252 = vmatpush1.msra.mxu0 %v5216
    %5253 = vmatprep.subr.mxu0 0.0
    %5254 = vmatpush1.msra.mxu0 %v5215
    %5255 = vmatprep.subr.mxu0 0.0
    %5256 = vmatpush1.msra.mxu0 %v5214
    %5257 = vmatprep.subr.mxu0 0.0
    %5258 = vmatpush1.msra.mxu0 %v5213
    %5259 = vmatprep.subr.mxu0 0.0
    %5260 = vmatpush1.msra.mxu0 %v5212
    %5261 = vmatprep.subr.mxu0 0.0
    %5262 = vmatpush2.msra.mxu0 0.0
    %5263 = vmatprep.subr.mxu0 0.0
    %5264 = vmatpush2.msra.mxu0 0.0
    %5265 = vmatprep.subr.mxu0 0.0
    %5266 = vmatpush2.msra.mxu0 0.0
    %5267 = vmatprep.subr.mxu0 0.0
    %5268 = vmatpush2.msra.mxu0 0.0
    %5269 = vmatprep.subr.mxu0 0.0
    %5270 = vmatpush2.msra.mxu0 0.0
    %5271 = vmatprep.subr.mxu0 0.0
    %5272 = vmatpush2.msra.mxu0 0.0
    %5273 = vmatprep.subr.mxu0 0.0
    %5274 = vmatpush2.msra.mxu0 0.0
    %5275 = vmatprep.subr.mxu0 0.0
    %5276 = vmatpush2.msra.mxu0 0.0
    %5277 = vmatprep.subr.mxu0 0.0
    %5278 = vmatpush2.msra.mxu0 0.0
    %5279 = vmatprep.subr.mxu0 0.0
    %5280 = vmatpush2.msra.mxu0 0.0
    %5281 = vmatprep.subr.mxu0 0.0
    %5282 = vmatpush2.msra.mxu0 0.0
    %5283 = vmatprep.subr.mxu0 0.0
    %5284 = vmatpush2.msra.mxu0 0.0
    %5285 = vmatprep.subr.mxu0 0.0
    %5286 = vmatpush2.msra.mxu0 0.0
    %5287 = vmatprep.subr.mxu0 0.0
    %5288 = vmatpush2.msra.mxu0 0.0
    %5289 = vmatprep.subr.mxu0 0.0
    %5290 = vmatpush2.msra.mxu0 0.0
    %5291 = vmatprep.subr.mxu0 0.0
    %5292 = vmatpush2.msra.mxu0 0.0
    %5293 = vmatprep.mubr.f32.mxu0 0.0
    %5294 = vmatmul.mubr.f32.gmra.mxu0 %v1790
    %v5295 = vpop.f32.mrf.mxu0
    %v5296 = vadd.f32 0.0, %v5295
    %v5297 = vpop.f32.mrf.mxu0
    %5298 = vmatprep.mubr.f32.mxu0 0.0
    %5299 = vmatmul.mubr.f32.gmra.mxu0 %v1793
    %v5300 = vpop.f32.mrf.mxu0
    %v5301 = vadd.f32 0.0, %v5300
    %v5302 = vpop.f32.mrf.mxu0
    %5303 = vmatprep.mubr.f32.mxu0 0.0
    %5304 = vmatmul.mubr.f32.gmra.mxu0 %v1796
    %v5305 = vpop.f32.mrf.mxu0
    %v5306 = vadd.f32 0.0, %v5305
    %v5307 = vpop.f32.mrf.mxu0
    %5308 = vmatprep.mubr.f32.mxu0 0.0
    %5309 = vmatmul.mubr.f32.gmra.mxu0 %v1799
    %v5310 = vpop.f32.mrf.mxu0
    %v5311 = vadd.f32 0.0, %v5310
    %v5312 = vpop.f32.mrf.mxu0
    %5313 = vdwg.mxu0
    %v5315 = vsel %vm173, %v5221, 0
    %v5318 = vsel %vm173, %v5222, 0
    %5320 = vmatprep.subr.mxu0 0.0
    %5321 = vmatpush1.msra.mxu0 0.0
    %5322 = vmatprep.subr.mxu0 0.0
    %5323 = vmatpush1.msra.mxu0 0.0
    %5324 = vmatprep.subr.mxu0 0.0
    %5325 = vmatpush1.msra.mxu0 0.0
    %5326 = vmatprep.subr.mxu0 0.0
    %5327 = vmatpush1.msra.mxu0 0.0
    %5328 = vmatprep.subr.mxu0 0.0
    %5329 = vmatpush1.msra.mxu0 0.0
    %5330 = vmatprep.subr.mxu0 0.0
    %5331 = vmatpush1.msra.mxu0 0.0
    %5332 = vmatprep.subr.mxu0 0.0
    %5333 = vmatpush1.msra.mxu0 0.0
    %5334 = vmatprep.subr.mxu0 0.0
    %5335 = vmatpush1.msra.mxu0 0.0
    %5336 = vmatprep.subr.mxu0 0.0
    %5337 = vmatpush1.msra.mxu0 0.0
    %5338 = vmatprep.subr.mxu0 0.0
    %5339 = vmatpush1.msra.mxu0 0.0
    %5340 = vmatprep.subr.mxu0 0.0
    %5341 = vmatpush1.msra.mxu0 0.0
    %5342 = vmatprep.subr.mxu0 0.0
    %5343 = vmatpush1.msra.mxu0 0.0
    %5344 = vmatprep.subr.mxu0 0.0
    %5345 = vmatpush1.msra.mxu0 0.0
    %5346 = vmatprep.subr.mxu0 0.0
    %5347 = vmatpush1.msra.mxu0 0.0
    %5348 = vmatprep.subr.mxu0 0.0
    %5349 = vmatpush1.msra.mxu0 %v5301
    %5350 = vmatprep.subr.mxu0 0.0
    %5351 = vmatpush1.msra.mxu0 %v5296
    %5352 = vmatprep.subr.mxu0 0.0
    %5353 = vmatpush2.msra.mxu0 0.0
    %5354 = vmatprep.subr.mxu0 0.0
    %5355 = vmatpush2.msra.mxu0 0.0
    %5356 = vmatprep.subr.mxu0 0.0
    %5357 = vmatpush2.msra.mxu0 0.0
    %5358 = vmatprep.subr.mxu0 0.0
    %5359 = vmatpush2.msra.mxu0 0.0
    %5360 = vmatprep.subr.mxu0 0.0
    %5361 = vmatpush2.msra.mxu0 0.0
    %5362 = vmatprep.subr.mxu0 0.0
    %5363 = vmatpush2.msra.mxu0 0.0
    %5364 = vmatprep.subr.mxu0 0.0
    %5365 = vmatpush2.msra.mxu0 0.0
    %5366 = vmatprep.subr.mxu0 0.0
    %5367 = vmatpush2.msra.mxu0 0.0
    %5368 = vmatprep.subr.mxu0 0.0
    %5369 = vmatpush2.msra.mxu0 0.0
    %5370 = vmatprep.subr.mxu0 0.0
    %5371 = vmatpush2.msra.mxu0 0.0
    %5372 = vmatprep.subr.mxu0 0.0
    %5373 = vmatpush2.msra.mxu0 0.0
    %5374 = vmatprep.subr.mxu0 0.0
    %5375 = vmatpush2.msra.mxu0 0.0
    %5376 = vmatprep.subr.mxu0 0.0
    %5377 = vmatpush2.msra.mxu0 0.0
    %5378 = vmatprep.subr.mxu0 0.0
    %5379 = vmatpush2.msra.mxu0 0.0
    %5380 = vmatprep.subr.mxu0 0.0
    %5381 = vmatpush2.msra.mxu0 0.0
    %5382 = vmatprep.subr.mxu0 0.0
    %5383 = vmatpush2.msra.mxu0 0.0
    %5384 = vmatprep.mubr.f32.mxu0 0.0
    %5385 = vmatmul.mubr.f32.gmra.mxu0 %v5315
    %v5386 = vpop.f32.mrf.mxu0
    %v5387 = vadd.f32 0.0, %v5386
    %v5388 = vpop.f32.mrf.mxu0
    %5389 = vmatprep.mubr.f32.mxu0 0.0
    %5390 = vmatmul.mubr.f32.gmra.mxu0 %v5318
    %v5391 = vpop.f32.mrf.mxu0
    %v5392 = vadd.f32 0.0, %v5391
    %v5393 = vpop.f32.mrf.mxu0
    %5394 = vdwg.mxu0
    %5395 = vmatprep.subr.mxu0 0.0
    %5396 = vmatpush1.msra.mxu0 0.0
    %5397 = vmatprep.subr.mxu0 0.0
    %5398 = vmatpush1.msra.mxu0 0.0
    %5399 = vmatprep.subr.mxu0 0.0
    %5400 = vmatpush1.msra.mxu0 0.0
    %5401 = vmatprep.subr.mxu0 0.0
    %5402 = vmatpush1.msra.mxu0 0.0
    %5403 = vmatprep.subr.mxu0 0.0
    %5404 = vmatpush1.msra.mxu0 0.0
    %5405 = vmatprep.subr.mxu0 0.0
    %5406 = vmatpush1.msra.mxu0 0.0
    %5407 = vmatprep.subr.mxu0 0.0
    %5408 = vmatpush1.msra.mxu0 0.0
    %5409 = vmatprep.subr.mxu0 0.0
    %5410 = vmatpush1.msra.mxu0 0.0
    %5411 = vmatprep.subr.mxu0 0.0
    %5412 = vmatpush1.msra.mxu0 0.0
    %5413 = vmatprep.subr.mxu0 0.0
    %5414 = vmatpush1.msra.mxu0 0.0
    %5415 = vmatprep.subr.mxu0 0.0
    %5416 = vmatpush1.msra.mxu0 0.0
    %5417 = vmatprep.subr.mxu0 0.0
    %5418 = vmatpush1.msra.mxu0 0.0
    %5419 = vmatprep.subr.mxu0 0.0
    %5420 = vmatpush1.msra.mxu0 0.0
    %5421 = vmatprep.subr.mxu0 0.0
    %5422 = vmatpush1.msra.mxu0 0.0
    %5423 = vmatprep.subr.mxu0 0.0
    %5424 = vmatpush1.msra.mxu0 %v5311
    %5425 = vmatprep.subr.mxu0 0.0
    %5426 = vmatpush1.msra.mxu0 %v5306
    %5427 = vmatprep.subr.mxu0 0.0
    %5428 = vmatpush2.msra.mxu0 0.0
    %5429 = vmatprep.subr.mxu0 0.0
    %5430 = vmatpush2.msra.mxu0 0.0
    %5431 = vmatprep.subr.mxu0 0.0
    %5432 = vmatpush2.msra.mxu0 0.0
    %5433 = vmatprep.subr.mxu0 0.0
    %5434 = vmatpush2.msra.mxu0 0.0
    %5435 = vmatprep.subr.mxu0 0.0
    %5436 = vmatpush2.msra.mxu0 0.0
    %5437 = vmatprep.subr.mxu0 0.0
    %5438 = vmatpush2.msra.mxu0 0.0
    %5439 = vmatprep.subr.mxu0 0.0
    %5440 = vmatpush2.msra.mxu0 0.0
    %5441 = vmatprep.subr.mxu0 0.0
    %5442 = vmatpush2.msra.mxu0 0.0
    %5443 = vmatprep.subr.mxu0 0.0
    %5444 = vmatpush2.msra.mxu0 0.0
    %5445 = vmatprep.subr.mxu0 0.0
    %5446 = vmatpush2.msra.mxu0 0.0
    %5447 = vmatprep.subr.mxu0 0.0
    %5448 = vmatpush2.msra.mxu0 0.0
    %5449 = vmatprep.subr.mxu0 0.0
    %5450 = vmatpush2.msra.mxu0 0.0
    %5451 = vmatprep.subr.mxu0 0.0
    %5452 = vmatpush2.msra.mxu0 0.0
    %5453 = vmatprep.subr.mxu0 0.0
    %5454 = vmatpush2.msra.mxu0 0.0
    %5455 = vmatprep.subr.mxu0 0.0
    %5456 = vmatpush2.msra.mxu0 0.0
    %5457 = vmatprep.subr.mxu0 0.0
    %5458 = vmatpush2.msra.mxu0 0.0
    %5459 = vmatprep.mubr.f32.mxu0 0.0
    %5460 = vmatmul.mubr.f32.gmra.mxu0 %v5315
    %v5461 = vpop.f32.mrf.mxu0
    %v5462 = vadd.f32 0.0, %v5461
    %v5463 = vpop.f32.mrf.mxu0
    %5464 = vmatprep.mubr.f32.mxu0 0.0
    %5465 = vmatmul.mubr.f32.gmra.mxu0 %v5318
    %v5466 = vpop.f32.mrf.mxu0
    %v5467 = vadd.f32 0.0, %v5466
    %v5468 = vpop.f32.mrf.mxu0
    %5469 = vdwg.mxu0
    %5472 = vrot.lane.b32.xlu0 %v5223, 112
    %v5473 = vpop.permute.xlu0 %5472
    %5474 = vrot.lane.b32.xlu0 %v5224, 112
    %v5475 = vpop.permute.xlu0 %5474
    %5478 = vrot.lane.b32.xlu0 %v5296, 112
    %v5479 = vpop.permute.xlu0 %5478
    %5480 = vrot.lane.b32.xlu0 %v5301, 112
    %v5481 = vpop.permute.xlu0 %5480
    %v5484 = vsel %vm173, %v5473, 0
    %v5486 = vsel %vm173, %v5475, 0
    %5488 = vmatprep.subr.mxu0 0.0
    %5489 = vmatpush1.msra.mxu0 0.0
    %5490 = vmatprep.subr.mxu0 0.0
    %5491 = vmatpush1.msra.mxu0 0.0
    %5492 = vmatprep.subr.mxu0 0.0
    %5493 = vmatpush1.msra.mxu0 0.0
    %5494 = vmatprep.subr.mxu0 0.0
    %5495 = vmatpush1.msra.mxu0 0.0
    %5496 = vmatprep.subr.mxu0 0.0
    %5497 = vmatpush1.msra.mxu0 0.0
    %5498 = vmatprep.subr.mxu0 0.0
    %5499 = vmatpush1.msra.mxu0 0.0
    %5500 = vmatprep.subr.mxu0 0.0
    %5501 = vmatpush1.msra.mxu0 0.0
    %5502 = vmatprep.subr.mxu0 0.0
    %5503 = vmatpush1.msra.mxu0 0.0
    %5504 = vmatprep.subr.mxu0 0.0
    %5505 = vmatpush1.msra.mxu0 0.0
    %5506 = vmatprep.subr.mxu0 0.0
    %5507 = vmatpush1.msra.mxu0 0.0
    %5508 = vmatprep.subr.mxu0 0.0
    %5509 = vmatpush1.msra.mxu0 0.0
    %5510 = vmatprep.subr.mxu0 0.0
    %5511 = vmatpush1.msra.mxu0 0.0
    %5512 = vmatprep.subr.mxu0 0.0
    %5513 = vmatpush1.msra.mxu0 0.0
    %5514 = vmatprep.subr.mxu0 0.0
    %5515 = vmatpush1.msra.mxu0 0.0
    %5516 = vmatprep.subr.mxu0 0.0
    %5517 = vmatpush1.msra.mxu0 %v5481
    %5518 = vmatprep.subr.mxu0 0.0
    %5519 = vmatpush1.msra.mxu0 %v5479
    %5520 = vmatprep.subr.mxu0 0.0
    %5521 = vmatpush2.msra.mxu0 0.0
    %5522 = vmatprep.subr.mxu0 0.0
    %5523 = vmatpush2.msra.mxu0 0.0
    %5524 = vmatprep.subr.mxu0 0.0
    %5525 = vmatpush2.msra.mxu0 0.0
    %5526 = vmatprep.subr.mxu0 0.0
    %5527 = vmatpush2.msra.mxu0 0.0
    %5528 = vmatprep.subr.mxu0 0.0
    %5529 = vmatpush2.msra.mxu0 0.0
    %5530 = vmatprep.subr.mxu0 0.0
    %5531 = vmatpush2.msra.mxu0 0.0
    %5532 = vmatprep.subr.mxu0 0.0
    %5533 = vmatpush2.msra.mxu0 0.0
    %5534 = vmatprep.subr.mxu0 0.0
    %5535 = vmatpush2.msra.mxu0 0.0
    %5536 = vmatprep.subr.mxu0 0.0
    %5537 = vmatpush2.msra.mxu0 0.0
    %5538 = vmatprep.subr.mxu0 0.0
    %5539 = vmatpush2.msra.mxu0 0.0
    %5540 = vmatprep.subr.mxu0 0.0
    %5541 = vmatpush2.msra.mxu0 0.0
    %5542 = vmatprep.subr.mxu0 0.0
    %5543 = vmatpush2.msra.mxu0 0.0
    %5544 = vmatprep.subr.mxu0 0.0
    %5545 = vmatpush2.msra.mxu0 0.0
    %5546 = vmatprep.subr.mxu0 0.0
    %5547 = vmatpush2.msra.mxu0 0.0
    %5548 = vmatprep.subr.mxu0 0.0
    %5549 = vmatpush2.msra.mxu0 0.0
    %5550 = vmatprep.subr.mxu0 0.0
    %5551 = vmatpush2.msra.mxu0 0.0
    %5552 = vmatprep.mubr.f32.mxu0 0.0
    %5553 = vmatmul.mubr.f32.gmra.mxu0 %v5484
    %v5554 = vpop.f32.mrf.mxu0
    %v5555 = vadd.f32 0.0, %v5554
    %v5556 = vpop.f32.mrf.mxu0
    %5557 = vmatprep.mubr.f32.mxu0 0.0
    %5558 = vmatmul.mubr.f32.gmra.mxu0 %v5486
    %v5559 = vpop.f32.mrf.mxu0
    %v5560 = vadd.f32 0.0, %v5559
    %v5561 = vpop.f32.mrf.mxu0
    %5562 = vdwg.mxu0
    %5565 = vrot.lane.b32.xlu0 %v5306, 112
    %v5566 = vpop.permute.xlu0 %5565
    %5567 = vrot.lane.b32.xlu0 %v5311, 112
    %v5568 = vpop.permute.xlu0 %5567
    %5571 = vmatprep.subr.mxu0 0.0
    %5572 = vmatpush1.msra.mxu0 0.0
    %5573 = vmatprep.subr.mxu0 0.0
    %5574 = vmatpush1.msra.mxu0 0.0
    %5575 = vmatprep.subr.mxu0 0.0
    %5576 = vmatpush1.msra.mxu0 0.0
    %5577 = vmatprep.subr.mxu0 0.0
    %5578 = vmatpush1.msra.mxu0 0.0
    %5579 = vmatprep.subr.mxu0 0.0
    %5580 = vmatpush1.msra.mxu0 0.0
    %5581 = vmatprep.subr.mxu0 0.0
    %5582 = vmatpush1.msra.mxu0 0.0
    %5583 = vmatprep.subr.mxu0 0.0
    %5584 = vmatpush1.msra.mxu0 0.0
    %5585 = vmatprep.subr.mxu0 0.0
    %5586 = vmatpush1.msra.mxu0 0.0
    %5587 = vmatprep.subr.mxu0 0.0
    %5588 = vmatpush1.msra.mxu0 0.0
    %5589 = vmatprep.subr.mxu0 0.0
    %5590 = vmatpush1.msra.mxu0 0.0
    %5591 = vmatprep.subr.mxu0 0.0
    %5592 = vmatpush1.msra.mxu0 0.0
    %5593 = vmatprep.subr.mxu0 0.0
    %5594 = vmatpush1.msra.mxu0 0.0
    %5595 = vmatprep.subr.mxu0 0.0
    %5596 = vmatpush1.msra.mxu0 0.0
    %5597 = vmatprep.subr.mxu0 0.0
    %5598 = vmatpush1.msra.mxu0 0.0
    %5599 = vmatprep.subr.mxu0 0.0
    %5600 = vmatpush1.msra.mxu0 %v5568
    %5601 = vmatprep.subr.mxu0 0.0
    %5602 = vmatpush1.msra.mxu0 %v5566
    %5603 = vmatprep.subr.mxu0 0.0
    %5604 = vmatpush2.msra.mxu0 0.0
    %5605 = vmatprep.subr.mxu0 0.0
    %5606 = vmatpush2.msra.mxu0 0.0
    %5607 = vmatprep.subr.mxu0 0.0
    %5608 = vmatpush2.msra.mxu0 0.0
    %5609 = vmatprep.subr.mxu0 0.0
    %5610 = vmatpush2.msra.mxu0 0.0
    %5611 = vmatprep.subr.mxu0 0.0
    %5612 = vmatpush2.msra.mxu0 0.0
    %5613 = vmatprep.subr.mxu0 0.0
    %5614 = vmatpush2.msra.mxu0 0.0
    %5615 = vmatprep.subr.mxu0 0.0
    %5616 = vmatpush2.msra.mxu0 0.0
    %5617 = vmatprep.subr.mxu0 0.0
    %5618 = vmatpush2.msra.mxu0 0.0
    %5619 = vmatprep.subr.mxu0 0.0
    %5620 = vmatpush2.msra.mxu0 0.0
    %5621 = vmatprep.subr.mxu0 0.0
    %5622 = vmatpush2.msra.mxu0 0.0
    %5623 = vmatprep.subr.mxu0 0.0
    %5624 = vmatpush2.msra.mxu0 0.0
    %5625 = vmatprep.subr.mxu0 0.0
    %5626 = vmatpush2.msra.mxu0 0.0
    %5627 = vmatprep.subr.mxu0 0.0
    %5628 = vmatpush2.msra.mxu0 0.0
    %5629 = vmatprep.subr.mxu0 0.0
    %5630 = vmatpush2.msra.mxu0 0.0
    %5631 = vmatprep.subr.mxu0 0.0
    %5632 = vmatpush2.msra.mxu0 0.0
    %5633 = vmatprep.subr.mxu0 0.0
    %5634 = vmatpush2.msra.mxu0 0.0
    %5635 = vmatprep.mubr.f32.mxu0 0.0
    %5636 = vmatmul.mubr.f32.gmra.mxu0 %v5484
    %v5637 = vpop.f32.mrf.mxu0
    %v5638 = vadd.f32 0.0, %v5637
    %v5639 = vpop.f32.mrf.mxu0
    %5640 = vmatprep.mubr.f32.mxu0 0.0
    %5641 = vmatmul.mubr.f32.gmra.mxu0 %v5486
    %v5642 = vpop.f32.mrf.mxu0
    %v5643 = vadd.f32 0.0, %v5642
    %v5644 = vpop.f32.mrf.mxu0
    %5645 = vdwg.mxu0
    %5648 = vrot.lane.b32.xlu0 %v5225, 96
    %v5649 = vpop.permute.xlu0 %5648
    %5650 = vrot.lane.b32.xlu0 %v5226, 96
    %v5651 = vpop.permute.xlu0 %5650
    %5652 = vrot.lane.b32.xlu0 %v5296, 96
    %v5653 = vpop.permute.xlu0 %5652
    %5654 = vrot.lane.b32.xlu0 %v5301, 96
    %v5655 = vpop.permute.xlu0 %5654
    %v5658 = vsel %vm173, %v5649, 0
    %v5660 = vsel %vm173, %v5651, 0
    %5662 = vmatprep.subr.mxu0 0.0
    %5663 = vmatpush1.msra.mxu0 0.0
    %5664 = vmatprep.subr.mxu0 0.0
    %5665 = vmatpush1.msra.mxu0 0.0
    %5666 = vmatprep.subr.mxu0 0.0
    %5667 = vmatpush1.msra.mxu0 0.0
    %5668 = vmatprep.subr.mxu0 0.0
    %5669 = vmatpush1.msra.mxu0 0.0
    %5670 = vmatprep.subr.mxu0 0.0
    %5671 = vmatpush1.msra.mxu0 0.0
    %5672 = vmatprep.subr.mxu0 0.0
    %5673 = vmatpush1.msra.mxu0 0.0
    %5674 = vmatprep.subr.mxu0 0.0
    %5675 = vmatpush1.msra.mxu0 0.0
    %5676 = vmatprep.subr.mxu0 0.0
    %5677 = vmatpush1.msra.mxu0 0.0
    %5678 = vmatprep.subr.mxu0 0.0
    %5679 = vmatpush1.msra.mxu0 0.0
    %5680 = vmatprep.subr.mxu0 0.0
    %5681 = vmatpush1.msra.mxu0 0.0
    %5682 = vmatprep.subr.mxu0 0.0
    %5683 = vmatpush1.msra.mxu0 0.0
    %5684 = vmatprep.subr.mxu0 0.0
    %5685 = vmatpush1.msra.mxu0 0.0
    %5686 = vmatprep.subr.mxu0 0.0
    %5687 = vmatpush1.msra.mxu0 0.0
    %5688 = vmatprep.subr.mxu0 0.0
    %5689 = vmatpush1.msra.mxu0 0.0
    %5690 = vmatprep.subr.mxu0 0.0
    %5691 = vmatpush1.msra.mxu0 %v5655
    %5692 = vmatprep.subr.mxu0 0.0
    %5693 = vmatpush1.msra.mxu0 %v5653
    %5694 = vmatprep.subr.mxu0 0.0
    %5695 = vmatpush2.msra.mxu0 0.0
    %5696 = vmatprep.subr.mxu0 0.0
    %5697 = vmatpush2.msra.mxu0 0.0
    %5698 = vmatprep.subr.mxu0 0.0
    %5699 = vmatpush2.msra.mxu0 0.0
    %5700 = vmatprep.subr.mxu0 0.0
    %5701 = vmatpush2.msra.mxu0 0.0
    %5702 = vmatprep.subr.mxu0 0.0
    %5703 = vmatpush2.msra.mxu0 0.0
    %5704 = vmatprep.subr.mxu0 0.0
    %5705 = vmatpush2.msra.mxu0 0.0
    %5706 = vmatprep.subr.mxu0 0.0
    %5707 = vmatpush2.msra.mxu0 0.0
    %5708 = vmatprep.subr.mxu0 0.0
    %5709 = vmatpush2.msra.mxu0 0.0
    %5710 = vmatprep.subr.mxu0 0.0
    %5711 = vmatpush2.msra.mxu0 0.0
    %5712 = vmatprep.subr.mxu0 0.0
    %5713 = vmatpush2.msra.mxu0 0.0
    %5714 = vmatprep.subr.mxu0 0.0
    %5715 = vmatpush2.msra.mxu0 0.0
    %5716 = vmatprep.subr.mxu0 0.0
    %5717 = vmatpush2.msra.mxu0 0.0
    %5718 = vmatprep.subr.mxu0 0.0
    %5719 = vmatpush2.msra.mxu0 0.0
    %5720 = vmatprep.subr.mxu0 0.0
    %5721 = vmatpush2.msra.mxu0 0.0
    %5722 = vmatprep.subr.mxu0 0.0
    %5723 = vmatpush2.msra.mxu0 0.0
    %5724 = vmatprep.subr.mxu0 0.0
    %5725 = vmatpush2.msra.mxu0 0.0
    %5726 = vmatprep.mubr.f32.mxu0 0.0
    %5727 = vmatmul.mubr.f32.gmra.mxu0 %v5658
    %v5728 = vpop.f32.mrf.mxu0
    %v5729 = vadd.f32 0.0, %v5728
    %v5730 = vpop.f32.mrf.mxu0
    %5731 = vmatprep.mubr.f32.mxu0 0.0
    %5732 = vmatmul.mubr.f32.gmra.mxu0 %v5660
    %v5733 = vpop.f32.mrf.mxu0
    %v5734 = vadd.f32 0.0, %v5733
    %v5735 = vpop.f32.mrf.mxu0
    %5736 = vdwg.mxu0
    %5737 = vrot.lane.b32.xlu0 %v5306, 96
    %v5738 = vpop.permute.xlu0 %5737
    %5739 = vrot.lane.b32.xlu0 %v5311, 96
    %v5740 = vpop.permute.xlu0 %5739
    %5743 = vmatprep.subr.mxu0 0.0
    %5744 = vmatpush1.msra.mxu0 0.0
    %5745 = vmatprep.subr.mxu0 0.0
    %5746 = vmatpush1.msra.mxu0 0.0
    %5747 = vmatprep.subr.mxu0 0.0
    %5748 = vmatpush1.msra.mxu0 0.0
    %5749 = vmatprep.subr.mxu0 0.0
    %5750 = vmatpush1.msra.mxu0 0.0
    %5751 = vmatprep.subr.mxu0 0.0
    %5752 = vmatpush1.msra.mxu0 0.0
    %5753 = vmatprep.subr.mxu0 0.0
    %5754 = vmatpush1.msra.mxu0 0.0
    %5755 = vmatprep.subr.mxu0 0.0
    %5756 = vmatpush1.msra.mxu0 0.0
    %5757 = vmatprep.subr.mxu0 0.0
    %5758 = vmatpush1.msra.mxu0 0.0
    %5759 = vmatprep.subr.mxu0 0.0
    %5760 = vmatpush1.msra.mxu0 0.0
    %5761 = vmatprep.subr.mxu0 0.0
    %5762 = vmatpush1.msra.mxu0 0.0
    %5763 = vmatprep.subr.mxu0 0.0
    %5764 = vmatpush1.msra.mxu0 0.0
    %5765 = vmatprep.subr.mxu0 0.0
    %5766 = vmatpush1.msra.mxu0 0.0
    %5767 = vmatprep.subr.mxu0 0.0
    %5768 = vmatpush1.msra.mxu0 0.0
    %5769 = vmatprep.subr.mxu0 0.0
    %5770 = vmatpush1.msra.mxu0 0.0
    %5771 = vmatprep.subr.mxu0 0.0
    %5772 = vmatpush1.msra.mxu0 %v5740
    %5773 = vmatprep.subr.mxu0 0.0
    %5774 = vmatpush1.msra.mxu0 %v5738
    %5775 = vmatprep.subr.mxu0 0.0
    %5776 = vmatpush2.msra.mxu0 0.0
    %5777 = vmatprep.subr.mxu0 0.0
    %5778 = vmatpush2.msra.mxu0 0.0
    %5779 = vmatprep.subr.mxu0 0.0
    %5780 = vmatpush2.msra.mxu0 0.0
    %5781 = vmatprep.subr.mxu0 0.0
    %5782 = vmatpush2.msra.mxu0 0.0
    %5783 = vmatprep.subr.mxu0 0.0
    %5784 = vmatpush2.msra.mxu0 0.0
    %5785 = vmatprep.subr.mxu0 0.0
    %5786 = vmatpush2.msra.mxu0 0.0
    %5787 = vmatprep.subr.mxu0 0.0
    %5788 = vmatpush2.msra.mxu0 0.0
    %5789 = vmatprep.subr.mxu0 0.0
    %5790 = vmatpush2.msra.mxu0 0.0
    %5791 = vmatprep.subr.mxu0 0.0
    %5792 = vmatpush2.msra.mxu0 0.0
    %5793 = vmatprep.subr.mxu0 0.0
    %5794 = vmatpush2.msra.mxu0 0.0
    %5795 = vmatprep.subr.mxu0 0.0
    %5796 = vmatpush2.msra.mxu0 0.0
    %5797 = vmatprep.subr.mxu0 0.0
    %5798 = vmatpush2.msra.mxu0 0.0
    %5799 = vmatprep.subr.mxu0 0.0
    %5800 = vmatpush2.msra.mxu0 0.0
    %5801 = vmatprep.subr.mxu0 0.0
    %5802 = vmatpush2.msra.mxu0 0.0
    %5803 = vmatprep.subr.mxu0 0.0
    %5804 = vmatpush2.msra.mxu0 0.0
    %5805 = vmatprep.subr.mxu0 0.0
    %5806 = vmatpush2.msra.mxu0 0.0
    %5807 = vmatprep.mubr.f32.mxu0 0.0
    %5808 = vmatmul.mubr.f32.gmra.mxu0 %v5658
    %v5809 = vpop.f32.mrf.mxu0
    %v5810 = vadd.f32 0.0, %v5809
    %v5811 = vpop.f32.mrf.mxu0
    %5812 = vmatprep.mubr.f32.mxu0 0.0
    %5813 = vmatmul.mubr.f32.gmra.mxu0 %v5660
    %v5814 = vpop.f32.mrf.mxu0
    %v5815 = vadd.f32 0.0, %v5814
    %v5816 = vpop.f32.mrf.mxu0
    %5817 = vdwg.mxu0
    %5820 = vrot.lane.b32.xlu0 %v5227, 80
    %v5821 = vpop.permute.xlu0 %5820
    %5822 = vrot.lane.b32.xlu0 %v5228, 80
    %v5823 = vpop.permute.xlu0 %5822
    %5824 = vrot.lane.b32.xlu0 %v5296, 80
    %v5825 = vpop.permute.xlu0 %5824
    %5826 = vrot.lane.b32.xlu0 %v5301, 80
    %v5827 = vpop.permute.xlu0 %5826
    %v5830 = vsel %vm173, %v5821, 0
    %v5832 = vsel %vm173, %v5823, 0
    %5834 = vmatprep.subr.mxu0 0.0
    %5835 = vmatpush1.msra.mxu0 0.0
    %5836 = vmatprep.subr.mxu0 0.0
    %5837 = vmatpush1.msra.mxu0 0.0
    %5838 = vmatprep.subr.mxu0 0.0
    %5839 = vmatpush1.msra.mxu0 0.0
    %5840 = vmatprep.subr.mxu0 0.0
    %5841 = vmatpush1.msra.mxu0 0.0
    %5842 = vmatprep.subr.mxu0 0.0
    %5843 = vmatpush1.msra.mxu0 0.0
    %5844 = vmatprep.subr.mxu0 0.0
    %5845 = vmatpush1.msra.mxu0 0.0
    %5846 = vmatprep.subr.mxu0 0.0
    %5847 = vmatpush1.msra.mxu0 0.0
    %5848 = vmatprep.subr.mxu0 0.0
    %5849 = vmatpush1.msra.mxu0 0.0
    %5850 = vmatprep.subr.mxu0 0.0
    %5851 = vmatpush1.msra.mxu0 0.0
    %5852 = vmatprep.subr.mxu0 0.0
    %5853 = vmatpush1.msra.mxu0 0.0
    %5854 = vmatprep.subr.mxu0 0.0
    %5855 = vmatpush1.msra.mxu0 0.0
    %5856 = vmatprep.subr.mxu0 0.0
    %5857 = vmatpush1.msra.mxu0 0.0
    %5858 = vmatprep.subr.mxu0 0.0
    %5859 = vmatpush1.msra.mxu0 0.0
    %5860 = vmatprep.subr.mxu0 0.0
    %5861 = vmatpush1.msra.mxu0 0.0
    %5862 = vmatprep.subr.mxu0 0.0
    %5863 = vmatpush1.msra.mxu0 %v5827
    %5864 = vmatprep.subr.mxu0 0.0
    %5865 = vmatpush1.msra.mxu0 %v5825
    %5866 = vmatprep.subr.mxu0 0.0
    %5867 = vmatpush2.msra.mxu0 0.0
    %5868 = vmatprep.subr.mxu0 0.0
    %5869 = vmatpush2.msra.mxu0 0.0
    %5870 = vmatprep.subr.mxu0 0.0
    %5871 = vmatpush2.msra.mxu0 0.0
    %5872 = vmatprep.subr.mxu0 0.0
    %5873 = vmatpush2.msra.mxu0 0.0
    %5874 = vmatprep.subr.mxu0 0.0
    %5875 = vmatpush2.msra.mxu0 0.0
    %5876 = vmatprep.subr.mxu0 0.0
    %5877 = vmatpush2.msra.mxu0 0.0
    %5878 = vmatprep.subr.mxu0 0.0
    %5879 = vmatpush2.msra.mxu0 0.0
    %5880 = vmatprep.subr.mxu0 0.0
    %5881 = vmatpush2.msra.mxu0 0.0
    %5882 = vmatprep.subr.mxu0 0.0
    %5883 = vmatpush2.msra.mxu0 0.0
    %5884 = vmatprep.subr.mxu0 0.0
    %5885 = vmatpush2.msra.mxu0 0.0
    %5886 = vmatprep.subr.mxu0 0.0
    %5887 = vmatpush2.msra.mxu0 0.0
    %5888 = vmatprep.subr.mxu0 0.0
    %5889 = vmatpush2.msra.mxu0 0.0
    %5890 = vmatprep.subr.mxu0 0.0
    %5891 = vmatpush2.msra.mxu0 0.0
    %5892 = vmatprep.subr.mxu0 0.0
    %5893 = vmatpush2.msra.mxu0 0.0
    %5894 = vmatprep.subr.mxu0 0.0
    %5895 = vmatpush2.msra.mxu0 0.0
    %5896 = vmatprep.subr.mxu0 0.0
    %5897 = vmatpush2.msra.mxu0 0.0
    %5898 = vmatprep.mubr.f32.mxu0 0.0
    %5899 = vmatmul.mubr.f32.gmra.mxu0 %v5830
    %v5900 = vpop.f32.mrf.mxu0
    %v5901 = vadd.f32 0.0, %v5900
    %v5902 = vpop.f32.mrf.mxu0
    %5903 = vmatprep.mubr.f32.mxu0 0.0
    %5904 = vmatmul.mubr.f32.gmra.mxu0 %v5832
    %v5905 = vpop.f32.mrf.mxu0
    %v5906 = vadd.f32 0.0, %v5905
    %v5907 = vpop.f32.mrf.mxu0
    %5908 = vdwg.mxu0
    %5909 = vrot.lane.b32.xlu0 %v5306, 80
    %v5910 = vpop.permute.xlu0 %5909
    %5911 = vrot.lane.b32.xlu0 %v5311, 80
    %v5912 = vpop.permute.xlu0 %5911
    %5915 = vmatprep.subr.mxu0 0.0
    %5916 = vmatpush1.msra.mxu0 0.0
    %5917 = vmatprep.subr.mxu0 0.0
    %5918 = vmatpush1.msra.mxu0 0.0
    %5919 = vmatprep.subr.mxu0 0.0
    %5920 = vmatpush1.msra.mxu0 0.0
    %5921 = vmatprep.subr.mxu0 0.0
    %5922 = vmatpush1.msra.mxu0 0.0
    %5923 = vmatprep.subr.mxu0 0.0
    %5924 = vmatpush1.msra.mxu0 0.0
    %5925 = vmatprep.subr.mxu0 0.0
    %5926 = vmatpush1.msra.mxu0 0.0
    %5927 = vmatprep.subr.mxu0 0.0
    %5928 = vmatpush1.msra.mxu0 0.0
    %5929 = vmatprep.subr.mxu0 0.0
    %5930 = vmatpush1.msra.mxu0 0.0
    %5931 = vmatprep.subr.mxu0 0.0
    %5932 = vmatpush1.msra.mxu0 0.0
    %5933 = vmatprep.subr.mxu0 0.0
    %5934 = vmatpush1.msra.mxu0 0.0
    %5935 = vmatprep.subr.mxu0 0.0
    %5936 = vmatpush1.msra.mxu0 0.0
    %5937 = vmatprep.subr.mxu0 0.0
    %5938 = vmatpush1.msra.mxu0 0.0
    %5939 = vmatprep.subr.mxu0 0.0
    %5940 = vmatpush1.msra.mxu0 0.0
    %5941 = vmatprep.subr.mxu0 0.0
    %5942 = vmatpush1.msra.mxu0 0.0
    %5943 = vmatprep.subr.mxu0 0.0
    %5944 = vmatpush1.msra.mxu0 %v5912
    %5945 = vmatprep.subr.mxu0 0.0
    %5946 = vmatpush1.msra.mxu0 %v5910
    %5947 = vmatprep.subr.mxu0 0.0
    %5948 = vmatpush2.msra.mxu0 0.0
    %5949 = vmatprep.subr.mxu0 0.0
    %5950 = vmatpush2.msra.mxu0 0.0
    %5951 = vmatprep.subr.mxu0 0.0
    %5952 = vmatpush2.msra.mxu0 0.0
    %5953 = vmatprep.subr.mxu0 0.0
    %5954 = vmatpush2.msra.mxu0 0.0
    %5955 = vmatprep.subr.mxu0 0.0
    %5956 = vmatpush2.msra.mxu0 0.0
    %5957 = vmatprep.subr.mxu0 0.0
    %5958 = vmatpush2.msra.mxu0 0.0
    %5959 = vmatprep.subr.mxu0 0.0
    %5960 = vmatpush2.msra.mxu0 0.0
    %5961 = vmatprep.subr.mxu0 0.0
    %5962 = vmatpush2.msra.mxu0 0.0
    %5963 = vmatprep.subr.mxu0 0.0
    %5964 = vmatpush2.msra.mxu0 0.0
    %5965 = vmatprep.subr.mxu0 0.0
    %5966 = vmatpush2.msra.mxu0 0.0
    %5967 = vmatprep.subr.mxu0 0.0
    %5968 = vmatpush2.msra.mxu0 0.0
    %5969 = vmatprep.subr.mxu0 0.0
    %5970 = vmatpush2.msra.mxu0 0.0
    %5971 = vmatprep.subr.mxu0 0.0
    %5972 = vmatpush2.msra.mxu0 0.0
    %5973 = vmatprep.subr.mxu0 0.0
    %5974 = vmatpush2.msra.mxu0 0.0
    %5975 = vmatprep.subr.mxu0 0.0
    %5976 = vmatpush2.msra.mxu0 0.0
    %5977 = vmatprep.subr.mxu0 0.0
    %5978 = vmatpush2.msra.mxu0 0.0
    %5979 = vmatprep.mubr.f32.mxu0 0.0
    %5980 = vmatmul.mubr.f32.gmra.mxu0 %v5830
    %v5981 = vpop.f32.mrf.mxu0
    %v5982 = vadd.f32 0.0, %v5981
    %v5983 = vpop.f32.mrf.mxu0
    %5984 = vmatprep.mubr.f32.mxu0 0.0
    %5985 = vmatmul.mubr.f32.gmra.mxu0 %v5832
    %v5986 = vpop.f32.mrf.mxu0
    %v5987 = vadd.f32 0.0, %v5986
    %v5988 = vpop.f32.mrf.mxu0
    %5989 = vdwg.mxu0
    %5994 = vrot.lane.b32.xlu0 %v5555, 16
    %v5995 = vpop.permute.xlu0 %5994
    %5996 = vrot.lane.b32.xlu0 %v5560, 16
    %v5997 = vpop.permute.xlu0 %5996
    %5998 = vrot.lane.b32.xlu0 %v5638, 16
    %v5999 = vpop.permute.xlu0 %5998
    %6000 = vrot.lane.b32.xlu0 %v5643, 16
    %v6001 = vpop.permute.xlu0 %6000
    %6010 = vrot.lane.b32.xlu0 %v5729, 32
    %v6011 = vpop.permute.xlu0 %6010
    %6012 = vrot.lane.b32.xlu0 %v5734, 32
    %v6013 = vpop.permute.xlu0 %6012
    %6014 = vrot.lane.b32.xlu0 %v5810, 32
    %v6015 = vpop.permute.xlu0 %6014
    %6016 = vrot.lane.b32.xlu0 %v5815, 32
    %v6017 = vpop.permute.xlu0 %6016
    %6026 = vrot.lane.b32.xlu0 %v5901, 48
    %v6027 = vpop.permute.xlu0 %6026
    %6028 = vrot.lane.b32.xlu0 %v5906, 48
    %v6029 = vpop.permute.xlu0 %6028
    %6030 = vrot.lane.b32.xlu0 %v5982, 48
    %v6031 = vpop.permute.xlu0 %6030
    %6032 = vrot.lane.b32.xlu0 %v5987, 48
    %v6033 = vpop.permute.xlu0 %6032
    %v6038 = vsel %vm173, %v5387, %v5995
    %v6039 = vsel %vm173, %v5392, %v5997
    %v6040 = vsel %vm173, %v5462, %v5999
    %v6041 = vsel %vm173, %v5467, %v6001
    %v6042 = vsel %vm902, %v6038, %v6011
    %v6043 = vsel %vm902, %v6039, %v6013
    %v6044 = vsel %vm902, %v6040, %v6015
    %v6045 = vsel %vm902, %v6041, %v6017
    %v6046 = vsel %vm907, %v6042, %v6027
    %v6047 = vsel %vm907, %v6043, %v6029
    %v6048 = vsel %vm907, %v6044, %v6031
    %v6049 = vsel %vm907, %v6045, %v6033
    %s6050 = scalar_lea.vmem [#allocation7], 896
    %v6051 = vld [vmem:[%s6050] sm:$0xff]
    %v6052 = vld [vmem:[%s6050 + $0x8] sm:$0xff]
    %v6053 = vld [vmem:[%s6050 + $0x10] sm:$0xff]
    %v6054 = vld [vmem:[%s6050 + $0x18] sm:$0xff]
    %v6055 = vld [vmem:[%s6050 + $0x20] sm:$0xff]
    %v6056 = vld [vmem:[%s6050 + $0x28] sm:$0xff]
    %v6057 = vld [vmem:[%s6050 + $0x30] sm:$0xff]
    %v6058 = vld [vmem:[%s6050 + $0x38] sm:$0xff]
    %s6059 = scalar_lea.vmem [#allocation7], 960
    %v6060 = vld [vmem:[%s6059] sm:$0xff]
    %v6061 = vld [vmem:[%s6059 + $0x8] sm:$0xff]
    %v6062 = vld [vmem:[%s6059 + $0x10] sm:$0xff]
    %v6063 = vld [vmem:[%s6059 + $0x18] sm:$0xff]
    %v6064 = vld [vmem:[%s6059 + $0x20] sm:$0xff]
    %v6065 = vld [vmem:[%s6059 + $0x28] sm:$0xff]
    %v6066 = vld [vmem:[%s6059 + $0x30] sm:$0xff]
    %v6067 = vld [vmem:[%s6059 + $0x38] sm:$0xff]
    %6068 = vmatprep.subr.mxu0 0.0
    %6069 = vmatpush1.msra.mxu0 0.0
    %6070 = vmatprep.subr.mxu0 0.0
    %6071 = vmatpush1.msra.mxu0 0.0
    %6072 = vmatprep.subr.mxu0 0.0
    %6073 = vmatpush1.msra.mxu0 0.0
    %6074 = vmatprep.subr.mxu0 0.0
    %6075 = vmatpush1.msra.mxu0 0.0
    %6076 = vmatprep.subr.mxu0 0.0
    %6077 = vmatpush1.msra.mxu0 0.0
    %6078 = vmatprep.subr.mxu0 0.0
    %6079 = vmatpush1.msra.mxu0 0.0
    %6080 = vmatprep.subr.mxu0 0.0
    %6081 = vmatpush1.msra.mxu0 0.0
    %6082 = vmatprep.subr.mxu0 0.0
    %6083 = vmatpush1.msra.mxu0 0.0
    %6084 = vmatprep.subr.mxu0 0.0
    %6085 = vmatpush1.msra.mxu0 %v6058
    %6086 = vmatprep.subr.mxu0 0.0
    %6087 = vmatpush1.msra.mxu0 %v6057
    %6088 = vmatprep.subr.mxu0 0.0
    %6089 = vmatpush1.msra.mxu0 %v6056
    %6090 = vmatprep.subr.mxu0 0.0
    %6091 = vmatpush1.msra.mxu0 %v6055
    %6092 = vmatprep.subr.mxu0 0.0
    %6093 = vmatpush1.msra.mxu0 %v6054
    %6094 = vmatprep.subr.mxu0 0.0
    %6095 = vmatpush1.msra.mxu0 %v6053
    %6096 = vmatprep.subr.mxu0 0.0
    %6097 = vmatpush1.msra.mxu0 %v6052
    %6098 = vmatprep.subr.mxu0 0.0
    %6099 = vmatpush1.msra.mxu0 %v6051
    %6100 = vmatprep.subr.mxu0 0.0
    %6101 = vmatpush2.msra.mxu0 0.0
    %6102 = vmatprep.subr.mxu0 0.0
    %6103 = vmatpush2.msra.mxu0 0.0
    %6104 = vmatprep.subr.mxu0 0.0
    %6105 = vmatpush2.msra.mxu0 0.0
    %6106 = vmatprep.subr.mxu0 0.0
    %6107 = vmatpush2.msra.mxu0 0.0
    %6108 = vmatprep.subr.mxu0 0.0
    %6109 = vmatpush2.msra.mxu0 0.0
    %6110 = vmatprep.subr.mxu0 0.0
    %6111 = vmatpush2.msra.mxu0 0.0
    %6112 = vmatprep.subr.mxu0 0.0
    %6113 = vmatpush2.msra.mxu0 0.0
    %6114 = vmatprep.subr.mxu0 0.0
    %6115 = vmatpush2.msra.mxu0 0.0
    %6116 = vmatprep.subr.mxu0 0.0
    %6117 = vmatpush2.msra.mxu0 0.0
    %6118 = vmatprep.subr.mxu0 0.0
    %6119 = vmatpush2.msra.mxu0 0.0
    %6120 = vmatprep.subr.mxu0 0.0
    %6121 = vmatpush2.msra.mxu0 0.0
    %6122 = vmatprep.subr.mxu0 0.0
    %6123 = vmatpush2.msra.mxu0 0.0
    %6124 = vmatprep.subr.mxu0 0.0
    %6125 = vmatpush2.msra.mxu0 0.0
    %6126 = vmatprep.subr.mxu0 0.0
    %6127 = vmatpush2.msra.mxu0 0.0
    %6128 = vmatprep.subr.mxu0 0.0
    %6129 = vmatpush2.msra.mxu0 0.0
    %6130 = vmatprep.subr.mxu0 0.0
    %6131 = vmatpush2.msra.mxu0 0.0
    %6132 = vmatprep.mubr.f32.mxu0 0.0
    %6133 = vmatmul.mubr.f32.gmra.mxu0 %v1790
    %v6134 = vpop.f32.mrf.mxu0
    %v6135 = vadd.f32 0.0, %v6134
    %v6136 = vpop.f32.mrf.mxu0
    %6137 = vmatprep.mubr.f32.mxu0 0.0
    %6138 = vmatmul.mubr.f32.gmra.mxu0 %v1793
    %v6139 = vpop.f32.mrf.mxu0
    %v6140 = vadd.f32 0.0, %v6139
    %v6141 = vpop.f32.mrf.mxu0
    %6142 = vmatprep.mubr.f32.mxu0 0.0
    %6143 = vmatmul.mubr.f32.gmra.mxu0 %v1796
    %v6144 = vpop.f32.mrf.mxu0
    %v6145 = vadd.f32 0.0, %v6144
    %v6146 = vpop.f32.mrf.mxu0
    %6147 = vmatprep.mubr.f32.mxu0 0.0
    %6148 = vmatmul.mubr.f32.gmra.mxu0 %v1799
    %v6149 = vpop.f32.mrf.mxu0
    %v6150 = vadd.f32 0.0, %v6149
    %v6151 = vpop.f32.mrf.mxu0
    %6152 = vdwg.mxu0
    %v6154 = vsel %vm173, %v6060, 0
    %v6157 = vsel %vm173, %v6061, 0
    %6159 = vmatprep.subr.mxu0 0.0
    %6160 = vmatpush1.msra.mxu0 0.0
    %6161 = vmatprep.subr.mxu0 0.0
    %6162 = vmatpush1.msra.mxu0 0.0
    %6163 = vmatprep.subr.mxu0 0.0
    %6164 = vmatpush1.msra.mxu0 0.0
    %6165 = vmatprep.subr.mxu0 0.0
    %6166 = vmatpush1.msra.mxu0 0.0
    %6167 = vmatprep.subr.mxu0 0.0
    %6168 = vmatpush1.msra.mxu0 0.0
    %6169 = vmatprep.subr.mxu0 0.0
    %6170 = vmatpush1.msra.mxu0 0.0
    %6171 = vmatprep.subr.mxu0 0.0
    %6172 = vmatpush1.msra.mxu0 0.0
    %6173 = vmatprep.subr.mxu0 0.0
    %6174 = vmatpush1.msra.mxu0 0.0
    %6175 = vmatprep.subr.mxu0 0.0
    %6176 = vmatpush1.msra.mxu0 0.0
    %6177 = vmatprep.subr.mxu0 0.0
    %6178 = vmatpush1.msra.mxu0 0.0
    %6179 = vmatprep.subr.mxu0 0.0
    %6180 = vmatpush1.msra.mxu0 0.0
    %6181 = vmatprep.subr.mxu0 0.0
    %6182 = vmatpush1.msra.mxu0 0.0
    %6183 = vmatprep.subr.mxu0 0.0
    %6184 = vmatpush1.msra.mxu0 0.0
    %6185 = vmatprep.subr.mxu0 0.0
    %6186 = vmatpush1.msra.mxu0 0.0
    %6187 = vmatprep.subr.mxu0 0.0
    %6188 = vmatpush1.msra.mxu0 %v6140
    %6189 = vmatprep.subr.mxu0 0.0
    %6190 = vmatpush1.msra.mxu0 %v6135
    %6191 = vmatprep.subr.mxu0 0.0
    %6192 = vmatpush2.msra.mxu0 0.0
    %6193 = vmatprep.subr.mxu0 0.0
    %6194 = vmatpush2.msra.mxu0 0.0
    %6195 = vmatprep.subr.mxu0 0.0
    %6196 = vmatpush2.msra.mxu0 0.0
    %6197 = vmatprep.subr.mxu0 0.0
    %6198 = vmatpush2.msra.mxu0 0.0
    %6199 = vmatprep.subr.mxu0 0.0
    %6200 = vmatpush2.msra.mxu0 0.0
    %6201 = vmatprep.subr.mxu0 0.0
    %6202 = vmatpush2.msra.mxu0 0.0
    %6203 = vmatprep.subr.mxu0 0.0
    %6204 = vmatpush2.msra.mxu0 0.0
    %6205 = vmatprep.subr.mxu0 0.0
    %6206 = vmatpush2.msra.mxu0 0.0
    %6207 = vmatprep.subr.mxu0 0.0
    %6208 = vmatpush2.msra.mxu0 0.0
    %6209 = vmatprep.subr.mxu0 0.0
    %6210 = vmatpush2.msra.mxu0 0.0
    %6211 = vmatprep.subr.mxu0 0.0
    %6212 = vmatpush2.msra.mxu0 0.0
    %6213 = vmatprep.subr.mxu0 0.0
    %6214 = vmatpush2.msra.mxu0 0.0
    %6215 = vmatprep.subr.mxu0 0.0
    %6216 = vmatpush2.msra.mxu0 0.0
    %6217 = vmatprep.subr.mxu0 0.0
    %6218 = vmatpush2.msra.mxu0 0.0
    %6219 = vmatprep.subr.mxu0 0.0
    %6220 = vmatpush2.msra.mxu0 0.0
    %6221 = vmatprep.subr.mxu0 0.0
    %6222 = vmatpush2.msra.mxu0 0.0
    %6223 = vmatprep.mubr.f32.mxu0 0.0
    %6224 = vmatmul.mubr.f32.gmra.mxu0 %v6154
    %v6225 = vpop.f32.mrf.mxu0
    %v6226 = vadd.f32 0.0, %v6225
    %v6227 = vpop.f32.mrf.mxu0
    %6228 = vmatprep.mubr.f32.mxu0 0.0
    %6229 = vmatmul.mubr.f32.gmra.mxu0 %v6157
    %v6230 = vpop.f32.mrf.mxu0
    %v6231 = vadd.f32 0.0, %v6230
    %v6232 = vpop.f32.mrf.mxu0
    %6233 = vdwg.mxu0
    %6234 = vmatprep.subr.mxu0 0.0
    %6235 = vmatpush1.msra.mxu0 0.0
    %6236 = vmatprep.subr.mxu0 0.0
    %6237 = vmatpush1.msra.mxu0 0.0
    %6238 = vmatprep.subr.mxu0 0.0
    %6239 = vmatpush1.msra.mxu0 0.0
    %6240 = vmatprep.subr.mxu0 0.0
    %6241 = vmatpush1.msra.mxu0 0.0
    %6242 = vmatprep.subr.mxu0 0.0
    %6243 = vmatpush1.msra.mxu0 0.0
    %6244 = vmatprep.subr.mxu0 0.0
    %6245 = vmatpush1.msra.mxu0 0.0
    %6246 = vmatprep.subr.mxu0 0.0
    %6247 = vmatpush1.msra.mxu0 0.0
    %6248 = vmatprep.subr.mxu0 0.0
    %6249 = vmatpush1.msra.mxu0 0.0
    %6250 = vmatprep.subr.mxu0 0.0
    %6251 = vmatpush1.msra.mxu0 0.0
    %6252 = vmatprep.subr.mxu0 0.0
    %6253 = vmatpush1.msra.mxu0 0.0
    %6254 = vmatprep.subr.mxu0 0.0
    %6255 = vmatpush1.msra.mxu0 0.0
    %6256 = vmatprep.subr.mxu0 0.0
    %6257 = vmatpush1.msra.mxu0 0.0
    %6258 = vmatprep.subr.mxu0 0.0
    %6259 = vmatpush1.msra.mxu0 0.0
    %6260 = vmatprep.subr.mxu0 0.0
    %6261 = vmatpush1.msra.mxu0 0.0
    %6262 = vmatprep.subr.mxu0 0.0
    %6263 = vmatpush1.msra.mxu0 %v6150
    %6264 = vmatprep.subr.mxu0 0.0
    %6265 = vmatpush1.msra.mxu0 %v6145
    %6266 = vmatprep.subr.mxu0 0.0
    %6267 = vmatpush2.msra.mxu0 0.0
    %6268 = vmatprep.subr.mxu0 0.0
    %6269 = vmatpush2.msra.mxu0 0.0
    %6270 = vmatprep.subr.mxu0 0.0
    %6271 = vmatpush2.msra.mxu0 0.0
    %6272 = vmatprep.subr.mxu0 0.0
    %6273 = vmatpush2.msra.mxu0 0.0
    %6274 = vmatprep.subr.mxu0 0.0
    %6275 = vmatpush2.msra.mxu0 0.0
    %6276 = vmatprep.subr.mxu0 0.0
    %6277 = vmatpush2.msra.mxu0 0.0
    %6278 = vmatprep.subr.mxu0 0.0
    %6279 = vmatpush2.msra.mxu0 0.0
    %6280 = vmatprep.subr.mxu0 0.0
    %6281 = vmatpush2.msra.mxu0 0.0
    %6282 = vmatprep.subr.mxu0 0.0
    %6283 = vmatpush2.msra.mxu0 0.0
    %6284 = vmatprep.subr.mxu0 0.0
    %6285 = vmatpush2.msra.mxu0 0.0
    %6286 = vmatprep.subr.mxu0 0.0
    %6287 = vmatpush2.msra.mxu0 0.0
    %6288 = vmatprep.subr.mxu0 0.0
    %6289 = vmatpush2.msra.mxu0 0.0
    %6290 = vmatprep.subr.mxu0 0.0
    %6291 = vmatpush2.msra.mxu0 0.0
    %6292 = vmatprep.subr.mxu0 0.0
    %6293 = vmatpush2.msra.mxu0 0.0
    %6294 = vmatprep.subr.mxu0 0.0
    %6295 = vmatpush2.msra.mxu0 0.0
    %6296 = vmatprep.subr.mxu0 0.0
    %6297 = vmatpush2.msra.mxu0 0.0
    %6298 = vmatprep.mubr.f32.mxu0 0.0
    %6299 = vmatmul.mubr.f32.gmra.mxu0 %v6154
    %v6300 = vpop.f32.mrf.mxu0
    %v6301 = vadd.f32 0.0, %v6300
    %v6302 = vpop.f32.mrf.mxu0
    %6303 = vmatprep.mubr.f32.mxu0 0.0
    %6304 = vmatmul.mubr.f32.gmra.mxu0 %v6157
    %v6305 = vpop.f32.mrf.mxu0
    %v6306 = vadd.f32 0.0, %v6305
    %v6307 = vpop.f32.mrf.mxu0
    %6308 = vdwg.mxu0
    %6311 = vrot.lane.b32.xlu0 %v6062, 112
    %v6312 = vpop.permute.xlu0 %6311
    %6313 = vrot.lane.b32.xlu0 %v6063, 112
    %v6314 = vpop.permute.xlu0 %6313
    %6317 = vrot.lane.b32.xlu0 %v6135, 112
    %v6318 = vpop.permute.xlu0 %6317
    %6319 = vrot.lane.b32.xlu0 %v6140, 112
    %v6320 = vpop.permute.xlu0 %6319
    %v6323 = vsel %vm173, %v6312, 0
    %v6325 = vsel %vm173, %v6314, 0
    %6327 = vmatprep.subr.mxu0 0.0
    %6328 = vmatpush1.msra.mxu0 0.0
    %6329 = vmatprep.subr.mxu0 0.0
    %6330 = vmatpush1.msra.mxu0 0.0
    %6331 = vmatprep.subr.mxu0 0.0
    %6332 = vmatpush1.msra.mxu0 0.0
    %6333 = vmatprep.subr.mxu0 0.0
    %6334 = vmatpush1.msra.mxu0 0.0
    %6335 = vmatprep.subr.mxu0 0.0
    %6336 = vmatpush1.msra.mxu0 0.0
    %6337 = vmatprep.subr.mxu0 0.0
    %6338 = vmatpush1.msra.mxu0 0.0
    %6339 = vmatprep.subr.mxu0 0.0
    %6340 = vmatpush1.msra.mxu0 0.0
    %6341 = vmatprep.subr.mxu0 0.0
    %6342 = vmatpush1.msra.mxu0 0.0
    %6343 = vmatprep.subr.mxu0 0.0
    %6344 = vmatpush1.msra.mxu0 0.0
    %6345 = vmatprep.subr.mxu0 0.0
    %6346 = vmatpush1.msra.mxu0 0.0
    %6347 = vmatprep.subr.mxu0 0.0
    %6348 = vmatpush1.msra.mxu0 0.0
    %6349 = vmatprep.subr.mxu0 0.0
    %6350 = vmatpush1.msra.mxu0 0.0
    %6351 = vmatprep.subr.mxu0 0.0
    %6352 = vmatpush1.msra.mxu0 0.0
    %6353 = vmatprep.subr.mxu0 0.0
    %6354 = vmatpush1.msra.mxu0 0.0
    %6355 = vmatprep.subr.mxu0 0.0
    %6356 = vmatpush1.msra.mxu0 %v6320
    %6357 = vmatprep.subr.mxu0 0.0
    %6358 = vmatpush1.msra.mxu0 %v6318
    %6359 = vmatprep.subr.mxu0 0.0
    %6360 = vmatpush2.msra.mxu0 0.0
    %6361 = vmatprep.subr.mxu0 0.0
    %6362 = vmatpush2.msra.mxu0 0.0
    %6363 = vmatprep.subr.mxu0 0.0
    %6364 = vmatpush2.msra.mxu0 0.0
    %6365 = vmatprep.subr.mxu0 0.0
    %6366 = vmatpush2.msra.mxu0 0.0
    %6367 = vmatprep.subr.mxu0 0.0
    %6368 = vmatpush2.msra.mxu0 0.0
    %6369 = vmatprep.subr.mxu0 0.0
    %6370 = vmatpush2.msra.mxu0 0.0
    %6371 = vmatprep.subr.mxu0 0.0
    %6372 = vmatpush2.msra.mxu0 0.0
    %6373 = vmatprep.subr.mxu0 0.0
    %6374 = vmatpush2.msra.mxu0 0.0
    %6375 = vmatprep.subr.mxu0 0.0
    %6376 = vmatpush2.msra.mxu0 0.0
    %6377 = vmatprep.subr.mxu0 0.0
    %6378 = vmatpush2.msra.mxu0 0.0
    %6379 = vmatprep.subr.mxu0 0.0
    %6380 = vmatpush2.msra.mxu0 0.0
    %6381 = vmatprep.subr.mxu0 0.0
    %6382 = vmatpush2.msra.mxu0 0.0
    %6383 = vmatprep.subr.mxu0 0.0
    %6384 = vmatpush2.msra.mxu0 0.0
    %6385 = vmatprep.subr.mxu0 0.0
    %6386 = vmatpush2.msra.mxu0 0.0
    %6387 = vmatprep.subr.mxu0 0.0
    %6388 = vmatpush2.msra.mxu0 0.0
    %6389 = vmatprep.subr.mxu0 0.0
    %6390 = vmatpush2.msra.mxu0 0.0
    %6391 = vmatprep.mubr.f32.mxu0 0.0
    %6392 = vmatmul.mubr.f32.gmra.mxu0 %v6323
    %v6393 = vpop.f32.mrf.mxu0
    %v6394 = vadd.f32 0.0, %v6393
    %v6395 = vpop.f32.mrf.mxu0
    %6396 = vmatprep.mubr.f32.mxu0 0.0
    %6397 = vmatmul.mubr.f32.gmra.mxu0 %v6325
    %v6398 = vpop.f32.mrf.mxu0
    %v6399 = vadd.f32 0.0, %v6398
    %v6400 = vpop.f32.mrf.mxu0
    %6401 = vdwg.mxu0
    %6404 = vrot.lane.b32.xlu0 %v6145, 112
    %v6405 = vpop.permute.xlu0 %6404
    %6406 = vrot.lane.b32.xlu0 %v6150, 112
    %v6407 = vpop.permute.xlu0 %6406
    %6410 = vmatprep.subr.mxu0 0.0
    %6411 = vmatpush1.msra.mxu0 0.0
    %6412 = vmatprep.subr.mxu0 0.0
    %6413 = vmatpush1.msra.mxu0 0.0
    %6414 = vmatprep.subr.mxu0 0.0
    %6415 = vmatpush1.msra.mxu0 0.0
    %6416 = vmatprep.subr.mxu0 0.0
    %6417 = vmatpush1.msra.mxu0 0.0
    %6418 = vmatprep.subr.mxu0 0.0
    %6419 = vmatpush1.msra.mxu0 0.0
    %6420 = vmatprep.subr.mxu0 0.0
    %6421 = vmatpush1.msra.mxu0 0.0
    %6422 = vmatprep.subr.mxu0 0.0
    %6423 = vmatpush1.msra.mxu0 0.0
    %6424 = vmatprep.subr.mxu0 0.0
    %6425 = vmatpush1.msra.mxu0 0.0
    %6426 = vmatprep.subr.mxu0 0.0
    %6427 = vmatpush1.msra.mxu0 0.0
    %6428 = vmatprep.subr.mxu0 0.0
    %6429 = vmatpush1.msra.mxu0 0.0
    %6430 = vmatprep.subr.mxu0 0.0
    %6431 = vmatpush1.msra.mxu0 0.0
    %6432 = vmatprep.subr.mxu0 0.0
    %6433 = vmatpush1.msra.mxu0 0.0
    %6434 = vmatprep.subr.mxu0 0.0
    %6435 = vmatpush1.msra.mxu0 0.0
    %6436 = vmatprep.subr.mxu0 0.0
    %6437 = vmatpush1.msra.mxu0 0.0
    %6438 = vmatprep.subr.mxu0 0.0
    %6439 = vmatpush1.msra.mxu0 %v6407
    %6440 = vmatprep.subr.mxu0 0.0
    %6441 = vmatpush1.msra.mxu0 %v6405
    %6442 = vmatprep.subr.mxu0 0.0
    %6443 = vmatpush2.msra.mxu0 0.0
    %6444 = vmatprep.subr.mxu0 0.0
    %6445 = vmatpush2.msra.mxu0 0.0
    %6446 = vmatprep.subr.mxu0 0.0
    %6447 = vmatpush2.msra.mxu0 0.0
    %6448 = vmatprep.subr.mxu0 0.0
    %6449 = vmatpush2.msra.mxu0 0.0
    %6450 = vmatprep.subr.mxu0 0.0
    %6451 = vmatpush2.msra.mxu0 0.0
    %6452 = vmatprep.subr.mxu0 0.0
    %6453 = vmatpush2.msra.mxu0 0.0
    %6454 = vmatprep.subr.mxu0 0.0
    %6455 = vmatpush2.msra.mxu0 0.0
    %6456 = vmatprep.subr.mxu0 0.0
    %6457 = vmatpush2.msra.mxu0 0.0
    %6458 = vmatprep.subr.mxu0 0.0
    %6459 = vmatpush2.msra.mxu0 0.0
    %6460 = vmatprep.subr.mxu0 0.0
    %6461 = vmatpush2.msra.mxu0 0.0
    %6462 = vmatprep.subr.mxu0 0.0
    %6463 = vmatpush2.msra.mxu0 0.0
    %6464 = vmatprep.subr.mxu0 0.0
    %6465 = vmatpush2.msra.mxu0 0.0
    %6466 = vmatprep.subr.mxu0 0.0
    %6467 = vmatpush2.msra.mxu0 0.0
    %6468 = vmatprep.subr.mxu0 0.0
    %6469 = vmatpush2.msra.mxu0 0.0
    %6470 = vmatprep.subr.mxu0 0.0
    %6471 = vmatpush2.msra.mxu0 0.0
    %6472 = vmatprep.subr.mxu0 0.0
    %6473 = vmatpush2.msra.mxu0 0.0
    %6474 = vmatprep.mubr.f32.mxu0 0.0
    %6475 = vmatmul.mubr.f32.gmra.mxu0 %v6323
    %v6476 = vpop.f32.mrf.mxu0
    %v6477 = vadd.f32 0.0, %v6476
    %v6478 = vpop.f32.mrf.mxu0
    %6479 = vmatprep.mubr.f32.mxu0 0.0
    %6480 = vmatmul.mubr.f32.gmra.mxu0 %v6325
    %v6481 = vpop.f32.mrf.mxu0
    %v6482 = vadd.f32 0.0, %v6481
    %v6483 = vpop.f32.mrf.mxu0
    %6484 = vdwg.mxu0
    %6487 = vrot.lane.b32.xlu0 %v6064, 96
    %v6488 = vpop.permute.xlu0 %6487
    %6489 = vrot.lane.b32.xlu0 %v6065, 96
    %v6490 = vpop.permute.xlu0 %6489
    %6491 = vrot.lane.b32.xlu0 %v6135, 96
    %v6492 = vpop.permute.xlu0 %6491
    %6493 = vrot.lane.b32.xlu0 %v6140, 96
    %v6494 = vpop.permute.xlu0 %6493
    %v6497 = vsel %vm173, %v6488, 0
    %v6499 = vsel %vm173, %v6490, 0
    %6501 = vmatprep.subr.mxu0 0.0
    %6502 = vmatpush1.msra.mxu0 0.0
    %6503 = vmatprep.subr.mxu0 0.0
    %6504 = vmatpush1.msra.mxu0 0.0
    %6505 = vmatprep.subr.mxu0 0.0
    %6506 = vmatpush1.msra.mxu0 0.0
    %6507 = vmatprep.subr.mxu0 0.0
    %6508 = vmatpush1.msra.mxu0 0.0
    %6509 = vmatprep.subr.mxu0 0.0
    %6510 = vmatpush1.msra.mxu0 0.0
    %6511 = vmatprep.subr.mxu0 0.0
    %6512 = vmatpush1.msra.mxu0 0.0
    %6513 = vmatprep.subr.mxu0 0.0
    %6514 = vmatpush1.msra.mxu0 0.0
    %6515 = vmatprep.subr.mxu0 0.0
    %6516 = vmatpush1.msra.mxu0 0.0
    %6517 = vmatprep.subr.mxu0 0.0
    %6518 = vmatpush1.msra.mxu0 0.0
    %6519 = vmatprep.subr.mxu0 0.0
    %6520 = vmatpush1.msra.mxu0 0.0
    %6521 = vmatprep.subr.mxu0 0.0
    %6522 = vmatpush1.msra.mxu0 0.0
    %6523 = vmatprep.subr.mxu0 0.0
    %6524 = vmatpush1.msra.mxu0 0.0
    %6525 = vmatprep.subr.mxu0 0.0
    %6526 = vmatpush1.msra.mxu0 0.0
    %6527 = vmatprep.subr.mxu0 0.0
    %6528 = vmatpush1.msra.mxu0 0.0
    %6529 = vmatprep.subr.mxu0 0.0
    %6530 = vmatpush1.msra.mxu0 %v6494
    %6531 = vmatprep.subr.mxu0 0.0
    %6532 = vmatpush1.msra.mxu0 %v6492
    %6533 = vmatprep.subr.mxu0 0.0
    %6534 = vmatpush2.msra.mxu0 0.0
    %6535 = vmatprep.subr.mxu0 0.0
    %6536 = vmatpush2.msra.mxu0 0.0
    %6537 = vmatprep.subr.mxu0 0.0
    %6538 = vmatpush2.msra.mxu0 0.0
    %6539 = vmatprep.subr.mxu0 0.0
    %6540 = vmatpush2.msra.mxu0 0.0
    %6541 = vmatprep.subr.mxu0 0.0
    %6542 = vmatpush2.msra.mxu0 0.0
    %6543 = vmatprep.subr.mxu0 0.0
    %6544 = vmatpush2.msra.mxu0 0.0
    %6545 = vmatprep.subr.mxu0 0.0
    %6546 = vmatpush2.msra.mxu0 0.0
    %6547 = vmatprep.subr.mxu0 0.0
    %6548 = vmatpush2.msra.mxu0 0.0
    %6549 = vmatprep.subr.mxu0 0.0
    %6550 = vmatpush2.msra.mxu0 0.0
    %6551 = vmatprep.subr.mxu0 0.0
    %6552 = vmatpush2.msra.mxu0 0.0
    %6553 = vmatprep.subr.mxu0 0.0
    %6554 = vmatpush2.msra.mxu0 0.0
    %6555 = vmatprep.subr.mxu0 0.0
    %6556 = vmatpush2.msra.mxu0 0.0
    %6557 = vmatprep.subr.mxu0 0.0
    %6558 = vmatpush2.msra.mxu0 0.0
    %6559 = vmatprep.subr.mxu0 0.0
    %6560 = vmatpush2.msra.mxu0 0.0
    %6561 = vmatprep.subr.mxu0 0.0
    %6562 = vmatpush2.msra.mxu0 0.0
    %6563 = vmatprep.subr.mxu0 0.0
    %6564 = vmatpush2.msra.mxu0 0.0
    %6565 = vmatprep.mubr.f32.mxu0 0.0
    %6566 = vmatmul.mubr.f32.gmra.mxu0 %v6497
    %v6567 = vpop.f32.mrf.mxu0
    %v6568 = vadd.f32 0.0, %v6567
    %v6569 = vpop.f32.mrf.mxu0
    %6570 = vmatprep.mubr.f32.mxu0 0.0
    %6571 = vmatmul.mubr.f32.gmra.mxu0 %v6499
    %v6572 = vpop.f32.mrf.mxu0
    %v6573 = vadd.f32 0.0, %v6572
    %v6574 = vpop.f32.mrf.mxu0
    %6575 = vdwg.mxu0
    %6576 = vrot.lane.b32.xlu0 %v6145, 96
    %v6577 = vpop.permute.xlu0 %6576
    %6578 = vrot.lane.b32.xlu0 %v6150, 96
    %v6579 = vpop.permute.xlu0 %6578
    %6582 = vmatprep.subr.mxu0 0.0
    %6583 = vmatpush1.msra.mxu0 0.0
    %6584 = vmatprep.subr.mxu0 0.0
    %6585 = vmatpush1.msra.mxu0 0.0
    %6586 = vmatprep.subr.mxu0 0.0
    %6587 = vmatpush1.msra.mxu0 0.0
    %6588 = vmatprep.subr.mxu0 0.0
    %6589 = vmatpush1.msra.mxu0 0.0
    %6590 = vmatprep.subr.mxu0 0.0
    %6591 = vmatpush1.msra.mxu0 0.0
    %6592 = vmatprep.subr.mxu0 0.0
    %6593 = vmatpush1.msra.mxu0 0.0
    %6594 = vmatprep.subr.mxu0 0.0
    %6595 = vmatpush1.msra.mxu0 0.0
    %6596 = vmatprep.subr.mxu0 0.0
    %6597 = vmatpush1.msra.mxu0 0.0
    %6598 = vmatprep.subr.mxu0 0.0
    %6599 = vmatpush1.msra.mxu0 0.0
    %6600 = vmatprep.subr.mxu0 0.0
    %6601 = vmatpush1.msra.mxu0 0.0
    %6602 = vmatprep.subr.mxu0 0.0
    %6603 = vmatpush1.msra.mxu0 0.0
    %6604 = vmatprep.subr.mxu0 0.0
    %6605 = vmatpush1.msra.mxu0 0.0
    %6606 = vmatprep.subr.mxu0 0.0
    %6607 = vmatpush1.msra.mxu0 0.0
    %6608 = vmatprep.subr.mxu0 0.0
    %6609 = vmatpush1.msra.mxu0 0.0
    %6610 = vmatprep.subr.mxu0 0.0
    %6611 = vmatpush1.msra.mxu0 %v6579
    %6612 = vmatprep.subr.mxu0 0.0
    %6613 = vmatpush1.msra.mxu0 %v6577
    %6614 = vmatprep.subr.mxu0 0.0
    %6615 = vmatpush2.msra.mxu0 0.0
    %6616 = vmatprep.subr.mxu0 0.0
    %6617 = vmatpush2.msra.mxu0 0.0
    %6618 = vmatprep.subr.mxu0 0.0
    %6619 = vmatpush2.msra.mxu0 0.0
    %6620 = vmatprep.subr.mxu0 0.0
    %6621 = vmatpush2.msra.mxu0 0.0
    %6622 = vmatprep.subr.mxu0 0.0
    %6623 = vmatpush2.msra.mxu0 0.0
    %6624 = vmatprep.subr.mxu0 0.0
    %6625 = vmatpush2.msra.mxu0 0.0
    %6626 = vmatprep.subr.mxu0 0.0
    %6627 = vmatpush2.msra.mxu0 0.0
    %6628 = vmatprep.subr.mxu0 0.0
    %6629 = vmatpush2.msra.mxu0 0.0
    %6630 = vmatprep.subr.mxu0 0.0
    %6631 = vmatpush2.msra.mxu0 0.0
    %6632 = vmatprep.subr.mxu0 0.0
    %6633 = vmatpush2.msra.mxu0 0.0
    %6634 = vmatprep.subr.mxu0 0.0
    %6635 = vmatpush2.msra.mxu0 0.0
    %6636 = vmatprep.subr.mxu0 0.0
    %6637 = vmatpush2.msra.mxu0 0.0
    %6638 = vmatprep.subr.mxu0 0.0
    %6639 = vmatpush2.msra.mxu0 0.0
    %6640 = vmatprep.subr.mxu0 0.0
    %6641 = vmatpush2.msra.mxu0 0.0
    %6642 = vmatprep.subr.mxu0 0.0
    %6643 = vmatpush2.msra.mxu0 0.0
    %6644 = vmatprep.subr.mxu0 0.0
    %6645 = vmatpush2.msra.mxu0 0.0
    %6646 = vmatprep.mubr.f32.mxu0 0.0
    %6647 = vmatmul.mubr.f32.gmra.mxu0 %v6497
    %v6648 = vpop.f32.mrf.mxu0
    %v6649 = vadd.f32 0.0, %v6648
    %v6650 = vpop.f32.mrf.mxu0
    %6651 = vmatprep.mubr.f32.mxu0 0.0
    %6652 = vmatmul.mubr.f32.gmra.mxu0 %v6499
    %v6653 = vpop.f32.mrf.mxu0
    %v6654 = vadd.f32 0.0, %v6653
    %v6655 = vpop.f32.mrf.mxu0
    %6656 = vdwg.mxu0
    %6659 = vrot.lane.b32.xlu0 %v6066, 80
    %v6660 = vpop.permute.xlu0 %6659
    %6661 = vrot.lane.b32.xlu0 %v6067, 80
    %v6662 = vpop.permute.xlu0 %6661
    %6663 = vrot.lane.b32.xlu0 %v6135, 80
    %v6664 = vpop.permute.xlu0 %6663
    %6665 = vrot.lane.b32.xlu0 %v6140, 80
    %v6666 = vpop.permute.xlu0 %6665
    %v6669 = vsel %vm173, %v6660, 0
    %v6671 = vsel %vm173, %v6662, 0
    %6673 = vmatprep.subr.mxu0 0.0
    %6674 = vmatpush1.msra.mxu0 0.0
    %6675 = vmatprep.subr.mxu0 0.0
    %6676 = vmatpush1.msra.mxu0 0.0
    %6677 = vmatprep.subr.mxu0 0.0
    %6678 = vmatpush1.msra.mxu0 0.0
    %6679 = vmatprep.subr.mxu0 0.0
    %6680 = vmatpush1.msra.mxu0 0.0
    %6681 = vmatprep.subr.mxu0 0.0
    %6682 = vmatpush1.msra.mxu0 0.0
    %6683 = vmatprep.subr.mxu0 0.0
    %6684 = vmatpush1.msra.mxu0 0.0
    %6685 = vmatprep.subr.mxu0 0.0
    %6686 = vmatpush1.msra.mxu0 0.0
    %6687 = vmatprep.subr.mxu0 0.0
    %6688 = vmatpush1.msra.mxu0 0.0
    %6689 = vmatprep.subr.mxu0 0.0
    %6690 = vmatpush1.msra.mxu0 0.0
    %6691 = vmatprep.subr.mxu0 0.0
    %6692 = vmatpush1.msra.mxu0 0.0
    %6693 = vmatprep.subr.mxu0 0.0
    %6694 = vmatpush1.msra.mxu0 0.0
    %6695 = vmatprep.subr.mxu0 0.0
    %6696 = vmatpush1.msra.mxu0 0.0
    %6697 = vmatprep.subr.mxu0 0.0
    %6698 = vmatpush1.msra.mxu0 0.0
    %6699 = vmatprep.subr.mxu0 0.0
    %6700 = vmatpush1.msra.mxu0 0.0
    %6701 = vmatprep.subr.mxu0 0.0
    %6702 = vmatpush1.msra.mxu0 %v6666
    %6703 = vmatprep.subr.mxu0 0.0
    %6704 = vmatpush1.msra.mxu0 %v6664
    %6705 = vmatprep.subr.mxu0 0.0
    %6706 = vmatpush2.msra.mxu0 0.0
    %6707 = vmatprep.subr.mxu0 0.0
    %6708 = vmatpush2.msra.mxu0 0.0
    %6709 = vmatprep.subr.mxu0 0.0
    %6710 = vmatpush2.msra.mxu0 0.0
    %6711 = vmatprep.subr.mxu0 0.0
    %6712 = vmatpush2.msra.mxu0 0.0
    %6713 = vmatprep.subr.mxu0 0.0
    %6714 = vmatpush2.msra.mxu0 0.0
    %6715 = vmatprep.subr.mxu0 0.0
    %6716 = vmatpush2.msra.mxu0 0.0
    %6717 = vmatprep.subr.mxu0 0.0
    %6718 = vmatpush2.msra.mxu0 0.0
    %6719 = vmatprep.subr.mxu0 0.0
    %6720 = vmatpush2.msra.mxu0 0.0
    %6721 = vmatprep.subr.mxu0 0.0
    %6722 = vmatpush2.msra.mxu0 0.0
    %6723 = vmatprep.subr.mxu0 0.0
    %6724 = vmatpush2.msra.mxu0 0.0
    %6725 = vmatprep.subr.mxu0 0.0
    %6726 = vmatpush2.msra.mxu0 0.0
    %6727 = vmatprep.subr.mxu0 0.0
    %6728 = vmatpush2.msra.mxu0 0.0
    %6729 = vmatprep.subr.mxu0 0.0
    %6730 = vmatpush2.msra.mxu0 0.0
    %6731 = vmatprep.subr.mxu0 0.0
    %6732 = vmatpush2.msra.mxu0 0.0
    %6733 = vmatprep.subr.mxu0 0.0
    %6734 = vmatpush2.msra.mxu0 0.0
    %6735 = vmatprep.subr.mxu0 0.0
    %6736 = vmatpush2.msra.mxu0 0.0
    %6737 = vmatprep.mubr.f32.mxu0 0.0
    %6738 = vmatmul.mubr.f32.gmra.mxu0 %v6669
    %v6739 = vpop.f32.mrf.mxu0
    %v6740 = vadd.f32 0.0, %v6739
    %v6741 = vpop.f32.mrf.mxu0
    %6742 = vmatprep.mubr.f32.mxu0 0.0
    %6743 = vmatmul.mubr.f32.gmra.mxu0 %v6671
    %v6744 = vpop.f32.mrf.mxu0
    %v6745 = vadd.f32 0.0, %v6744
    %v6746 = vpop.f32.mrf.mxu0
    %6747 = vdwg.mxu0
    %6748 = vrot.lane.b32.xlu0 %v6145, 80
    %v6749 = vpop.permute.xlu0 %6748
    %6750 = vrot.lane.b32.xlu0 %v6150, 80
    %v6751 = vpop.permute.xlu0 %6750
    %6754 = vmatprep.subr.mxu0 0.0
    %6755 = vmatpush1.msra.mxu0 0.0
    %6756 = vmatprep.subr.mxu0 0.0
    %6757 = vmatpush1.msra.mxu0 0.0
    %6758 = vmatprep.subr.mxu0 0.0
    %6759 = vmatpush1.msra.mxu0 0.0
    %6760 = vmatprep.subr.mxu0 0.0
    %6761 = vmatpush1.msra.mxu0 0.0
    %6762 = vmatprep.subr.mxu0 0.0
    %6763 = vmatpush1.msra.mxu0 0.0
    %6764 = vmatprep.subr.mxu0 0.0
    %6765 = vmatpush1.msra.mxu0 0.0
    %6766 = vmatprep.subr.mxu0 0.0
    %6767 = vmatpush1.msra.mxu0 0.0
    %6768 = vmatprep.subr.mxu0 0.0
    %6769 = vmatpush1.msra.mxu0 0.0
    %6770 = vmatprep.subr.mxu0 0.0
    %6771 = vmatpush1.msra.mxu0 0.0
    %6772 = vmatprep.subr.mxu0 0.0
    %6773 = vmatpush1.msra.mxu0 0.0
    %6774 = vmatprep.subr.mxu0 0.0
    %6775 = vmatpush1.msra.mxu0 0.0
    %6776 = vmatprep.subr.mxu0 0.0
    %6777 = vmatpush1.msra.mxu0 0.0
    %6778 = vmatprep.subr.mxu0 0.0
    %6779 = vmatpush1.msra.mxu0 0.0
    %6780 = vmatprep.subr.mxu0 0.0
    %6781 = vmatpush1.msra.mxu0 0.0
    %6782 = vmatprep.subr.mxu0 0.0
    %6783 = vmatpush1.msra.mxu0 %v6751
    %6784 = vmatprep.subr.mxu0 0.0
    %6785 = vmatpush1.msra.mxu0 %v6749
    %6786 = vmatprep.subr.mxu0 0.0
    %6787 = vmatpush2.msra.mxu0 0.0
    %6788 = vmatprep.subr.mxu0 0.0
    %6789 = vmatpush2.msra.mxu0 0.0
    %6790 = vmatprep.subr.mxu0 0.0
    %6791 = vmatpush2.msra.mxu0 0.0
    %6792 = vmatprep.subr.mxu0 0.0
    %6793 = vmatpush2.msra.mxu0 0.0
    %6794 = vmatprep.subr.mxu0 0.0
    %6795 = vmatpush2.msra.mxu0 0.0
    %6796 = vmatprep.subr.mxu0 0.0
    %6797 = vmatpush2.msra.mxu0 0.0
    %6798 = vmatprep.subr.mxu0 0.0
    %6799 = vmatpush2.msra.mxu0 0.0
    %6800 = vmatprep.subr.mxu0 0.0
    %6801 = vmatpush2.msra.mxu0 0.0
    %6802 = vmatprep.subr.mxu0 0.0
    %6803 = vmatpush2.msra.mxu0 0.0
    %6804 = vmatprep.subr.mxu0 0.0
    %6805 = vmatpush2.msra.mxu0 0.0
    %6806 = vmatprep.subr.mxu0 0.0
    %6807 = vmatpush2.msra.mxu0 0.0
    %6808 = vmatprep.subr.mxu0 0.0
    %6809 = vmatpush2.msra.mxu0 0.0
    %6810 = vmatprep.subr.mxu0 0.0
    %6811 = vmatpush2.msra.mxu0 0.0
    %6812 = vmatprep.subr.mxu0 0.0
    %6813 = vmatpush2.msra.mxu0 0.0
    %6814 = vmatprep.subr.mxu0 0.0
    %6815 = vmatpush2.msra.mxu0 0.0
    %6816 = vmatprep.subr.mxu0 0.0
    %6817 = vmatpush2.msra.mxu0 0.0
    %6818 = vmatprep.mubr.f32.mxu0 0.0
    %6819 = vmatmul.mubr.f32.gmra.mxu0 %v6669
    %v6820 = vpop.f32.mrf.mxu0
    %v6821 = vadd.f32 0.0, %v6820
    %v6822 = vpop.f32.mrf.mxu0
    %6823 = vmatprep.mubr.f32.mxu0 0.0
    %6824 = vmatmul.mubr.f32.gmra.mxu0 %v6671
    %v6825 = vpop.f32.mrf.mxu0
    %v6826 = vadd.f32 0.0, %v6825
    %v6827 = vpop.f32.mrf.mxu0
    %6828 = vdwg.mxu0
    %6833 = vrot.lane.b32.xlu0 %v6394, 16
    %v6834 = vpop.permute.xlu0 %6833
    %6835 = vrot.lane.b32.xlu0 %v6399, 16
    %v6836 = vpop.permute.xlu0 %6835
    %6837 = vrot.lane.b32.xlu0 %v6477, 16
    %v6838 = vpop.permute.xlu0 %6837
    %6839 = vrot.lane.b32.xlu0 %v6482, 16
    %v6840 = vpop.permute.xlu0 %6839
    %6849 = vrot.lane.b32.xlu0 %v6568, 32
    %v6850 = vpop.permute.xlu0 %6849
    %6851 = vrot.lane.b32.xlu0 %v6573, 32
    %v6852 = vpop.permute.xlu0 %6851
    %6853 = vrot.lane.b32.xlu0 %v6649, 32
    %v6854 = vpop.permute.xlu0 %6853
    %6855 = vrot.lane.b32.xlu0 %v6654, 32
    %v6856 = vpop.permute.xlu0 %6855
    %6865 = vrot.lane.b32.xlu0 %v6740, 48
    %v6866 = vpop.permute.xlu0 %6865
    %6867 = vrot.lane.b32.xlu0 %v6745, 48
    %v6868 = vpop.permute.xlu0 %6867
    %6869 = vrot.lane.b32.xlu0 %v6821, 48
    %v6870 = vpop.permute.xlu0 %6869
    %6871 = vrot.lane.b32.xlu0 %v6826, 48
    %v6872 = vpop.permute.xlu0 %6871
    %v6877 = vsel %vm173, %v6226, %v6834
    %v6878 = vsel %vm173, %v6231, %v6836
    %v6879 = vsel %vm173, %v6301, %v6838
    %v6880 = vsel %vm173, %v6306, %v6840
    %v6881 = vsel %vm902, %v6877, %v6850
    %v6882 = vsel %vm902, %v6878, %v6852
    %v6883 = vsel %vm902, %v6879, %v6854
    %v6884 = vsel %vm902, %v6880, %v6856
    %v6885 = vsel %vm907, %v6881, %v6866
    %v6886 = vsel %vm907, %v6882, %v6868
    %v6887 = vsel %vm907, %v6883, %v6870
    %v6888 = vsel %vm907, %v6884, %v6872
    %v6889 = vstv %s5208
    %v6890 = vmul.f32 %v6889, %v908
    %v6891 = vmul.f32 %v6889, %v909
    %v6892 = vmul.f32 %v6889, %v910
    %v6893 = vmul.f32 %v6889, %v911
    %v6894 = vstv %s5209
    %v6895 = vmul.f32 %v6894, %v6046
    %v6896 = vmul.f32 %v6894, %v6047
    %v6897 = vmul.f32 %v6894, %v6048
    %v6898 = vmul.f32 %v6894, %v6049
    %v6899 = vadd.f32 %v6890, %v6895
    %v6900 = vadd.f32 %v6891, %v6896
    %v6901 = vadd.f32 %v6892, %v6897
    %v6902 = vadd.f32 %v6893, %v6898
    %v6903 = vstv %s5210
    %v6904 = vmul.f32 %v6903, %v6885
    %v6905 = vmul.f32 %v6903, %v6886
    %v6906 = vmul.f32 %v6903, %v6887
    %v6907 = vmul.f32 %v6903, %v6888
    %v6908 = vadd.f32 %v6899, %v6904
    %v6909 = vadd.f32 %v6900, %v6905
    %v6910 = vadd.f32 %v6901, %v6906
    %v6911 = vadd.f32 %v6902, %v6907
    %s6912 = sld [smem:[#allocation2 + $0x9]]
    %s6913 = sld [smem:[#allocation2 + $0xa]]
    %s6914 = sld [smem:[#allocation2 + $0xb]]
    %s6915 = scalar_lea.vmem [#allocation7], 1024
    %v6916 = vld [vmem:[%s6915] sm:$0xff]
    %v6917 = vld [vmem:[%s6915 + $0x8] sm:$0xff]
    %v6918 = vld [vmem:[%s6915 + $0x10] sm:$0xff]
    %v6919 = vld [vmem:[%s6915 + $0x18] sm:$0xff]
    %v6920 = vld [vmem:[%s6915 + $0x20] sm:$0xff]
    %v6921 = vld [vmem:[%s6915 + $0x28] sm:$0xff]
    %v6922 = vld [vmem:[%s6915 + $0x30] sm:$0xff]
    %v6923 = vld [vmem:[%s6915 + $0x38] sm:$0xff]
    %s6924 = scalar_lea.vmem [#allocation7], 1088
    %v6925 = vld [vmem:[%s6924] sm:$0xff]
    %v6926 = vld [vmem:[%s6924 + $0x8] sm:$0xff]
    %v6927 = vld [vmem:[%s6924 + $0x10] sm:$0xff]
    %v6928 = vld [vmem:[%s6924 + $0x18] sm:$0xff]
    %v6929 = vld [vmem:[%s6924 + $0x20] sm:$0xff]
    %v6930 = vld [vmem:[%s6924 + $0x28] sm:$0xff]
    %v6931 = vld [vmem:[%s6924 + $0x30] sm:$0xff]
    %v6932 = vld [vmem:[%s6924 + $0x38] sm:$0xff]
    %6933 = vmatprep.subr.mxu0 0.0
    %6934 = vmatpush1.msra.mxu0 0.0
    %6935 = vmatprep.subr.mxu0 0.0
    %6936 = vmatpush1.msra.mxu0 0.0
    %6937 = vmatprep.subr.mxu0 0.0
    %6938 = vmatpush1.msra.mxu0 0.0
    %6939 = vmatprep.subr.mxu0 0.0
    %6940 = vmatpush1.msra.mxu0 0.0
    %6941 = vmatprep.subr.mxu0 0.0
    %6942 = vmatpush1.msra.mxu0 0.0
    %6943 = vmatprep.subr.mxu0 0.0
    %6944 = vmatpush1.msra.mxu0 0.0
    %6945 = vmatprep.subr.mxu0 0.0
    %6946 = vmatpush1.msra.mxu0 0.0
    %6947 = vmatprep.subr.mxu0 0.0
    %6948 = vmatpush1.msra.mxu0 0.0
    %6949 = vmatprep.subr.mxu0 0.0
    %6950 = vmatpush1.msra.mxu0 %v6923
    %6951 = vmatprep.subr.mxu0 0.0
    %6952 = vmatpush1.msra.mxu0 %v6922
    %6953 = vmatprep.subr.mxu0 0.0
    %6954 = vmatpush1.msra.mxu0 %v6921
    %6955 = vmatprep.subr.mxu0 0.0
    %6956 = vmatpush1.msra.mxu0 %v6920
    %6957 = vmatprep.subr.mxu0 0.0
    %6958 = vmatpush1.msra.mxu0 %v6919
    %6959 = vmatprep.subr.mxu0 0.0
    %6960 = vmatpush1.msra.mxu0 %v6918
    %6961 = vmatprep.subr.mxu0 0.0
    %6962 = vmatpush1.msra.mxu0 %v6917
    %6963 = vmatprep.subr.mxu0 0.0
    %6964 = vmatpush1.msra.mxu0 %v6916
    %6965 = vmatprep.subr.mxu0 0.0
    %6966 = vmatpush2.msra.mxu0 0.0
    %6967 = vmatprep.subr.mxu0 0.0
    %6968 = vmatpush2.msra.mxu0 0.0
    %6969 = vmatprep.subr.mxu0 0.0
    %6970 = vmatpush2.msra.mxu0 0.0
    %6971 = vmatprep.subr.mxu0 0.0
    %6972 = vmatpush2.msra.mxu0 0.0
    %6973 = vmatprep.subr.mxu0 0.0
    %6974 = vmatpush2.msra.mxu0 0.0
    %6975 = vmatprep.subr.mxu0 0.0
    %6976 = vmatpush2.msra.mxu0 0.0
    %6977 = vmatprep.subr.mxu0 0.0
    %6978 = vmatpush2.msra.mxu0 0.0
    %6979 = vmatprep.subr.mxu0 0.0
    %6980 = vmatpush2.msra.mxu0 0.0
    %6981 = vmatprep.subr.mxu0 0.0
    %6982 = vmatpush2.msra.mxu0 0.0
    %6983 = vmatprep.subr.mxu0 0.0
    %6984 = vmatpush2.msra.mxu0 0.0
    %6985 = vmatprep.subr.mxu0 0.0
    %6986 = vmatpush2.msra.mxu0 0.0
    %6987 = vmatprep.subr.mxu0 0.0
    %6988 = vmatpush2.msra.mxu0 0.0
    %6989 = vmatprep.subr.mxu0 0.0
    %6990 = vmatpush2.msra.mxu0 0.0
    %6991 = vmatprep.subr.mxu0 0.0
    %6992 = vmatpush2.msra.mxu0 0.0
    %6993 = vmatprep.subr.mxu0 0.0
    %6994 = vmatpush2.msra.mxu0 0.0
    %6995 = vmatprep.subr.mxu0 0.0
    %6996 = vmatpush2.msra.mxu0 0.0
    %6997 = vmatprep.mubr.f32.mxu0 0.0
    %6998 = vmatmul.mubr.f32.gmra.mxu0 %v3506
    %v6999 = vpop.f32.mrf.mxu0
    %v7000 = vadd.f32 0.0, %v6999
    %v7001 = vpop.f32.mrf.mxu0
    %7002 = vmatprep.mubr.f32.mxu0 0.0
    %7003 = vmatmul.mubr.f32.gmra.mxu0 %v3509
    %v7004 = vpop.f32.mrf.mxu0
    %v7005 = vadd.f32 0.0, %v7004
    %v7006 = vpop.f32.mrf.mxu0
    %7007 = vmatprep.mubr.f32.mxu0 0.0
    %7008 = vmatmul.mubr.f32.gmra.mxu0 %v3512
    %v7009 = vpop.f32.mrf.mxu0
    %v7010 = vadd.f32 0.0, %v7009
    %v7011 = vpop.f32.mrf.mxu0
    %7012 = vmatprep.mubr.f32.mxu0 0.0
    %7013 = vmatmul.mubr.f32.gmra.mxu0 %v3515
    %v7014 = vpop.f32.mrf.mxu0
    %v7015 = vadd.f32 0.0, %v7014
    %v7016 = vpop.f32.mrf.mxu0
    %7017 = vdwg.mxu0
    %v7019 = vsel %vm173, %v6925, 0
    %v7022 = vsel %vm173, %v6926, 0
    %7024 = vmatprep.subr.mxu0 0.0
    %7025 = vmatpush1.msra.mxu0 0.0
    %7026 = vmatprep.subr.mxu0 0.0
    %7027 = vmatpush1.msra.mxu0 0.0
    %7028 = vmatprep.subr.mxu0 0.0
    %7029 = vmatpush1.msra.mxu0 0.0
    %7030 = vmatprep.subr.mxu0 0.0
    %7031 = vmatpush1.msra.mxu0 0.0
    %7032 = vmatprep.subr.mxu0 0.0
    %7033 = vmatpush1.msra.mxu0 0.0
    %7034 = vmatprep.subr.mxu0 0.0
    %7035 = vmatpush1.msra.mxu0 0.0
    %7036 = vmatprep.subr.mxu0 0.0
    %7037 = vmatpush1.msra.mxu0 0.0
    %7038 = vmatprep.subr.mxu0 0.0
    %7039 = vmatpush1.msra.mxu0 0.0
    %7040 = vmatprep.subr.mxu0 0.0
    %7041 = vmatpush1.msra.mxu0 0.0
    %7042 = vmatprep.subr.mxu0 0.0
    %7043 = vmatpush1.msra.mxu0 0.0
    %7044 = vmatprep.subr.mxu0 0.0
    %7045 = vmatpush1.msra.mxu0 0.0
    %7046 = vmatprep.subr.mxu0 0.0
    %7047 = vmatpush1.msra.mxu0 0.0
    %7048 = vmatprep.subr.mxu0 0.0
    %7049 = vmatpush1.msra.mxu0 0.0
    %7050 = vmatprep.subr.mxu0 0.0
    %7051 = vmatpush1.msra.mxu0 0.0
    %7052 = vmatprep.subr.mxu0 0.0
    %7053 = vmatpush1.msra.mxu0 %v7005
    %7054 = vmatprep.subr.mxu0 0.0
    %7055 = vmatpush1.msra.mxu0 %v7000
    %7056 = vmatprep.subr.mxu0 0.0
    %7057 = vmatpush2.msra.mxu0 0.0
    %7058 = vmatprep.subr.mxu0 0.0
    %7059 = vmatpush2.msra.mxu0 0.0
    %7060 = vmatprep.subr.mxu0 0.0
    %7061 = vmatpush2.msra.mxu0 0.0
    %7062 = vmatprep.subr.mxu0 0.0
    %7063 = vmatpush2.msra.mxu0 0.0
    %7064 = vmatprep.subr.mxu0 0.0
    %7065 = vmatpush2.msra.mxu0 0.0
    %7066 = vmatprep.subr.mxu0 0.0
    %7067 = vmatpush2.msra.mxu0 0.0
    %7068 = vmatprep.subr.mxu0 0.0
    %7069 = vmatpush2.msra.mxu0 0.0
    %7070 = vmatprep.subr.mxu0 0.0
    %7071 = vmatpush2.msra.mxu0 0.0
    %7072 = vmatprep.subr.mxu0 0.0
    %7073 = vmatpush2.msra.mxu0 0.0
    %7074 = vmatprep.subr.mxu0 0.0
    %7075 = vmatpush2.msra.mxu0 0.0
    %7076 = vmatprep.subr.mxu0 0.0
    %7077 = vmatpush2.msra.mxu0 0.0
    %7078 = vmatprep.subr.mxu0 0.0
    %7079 = vmatpush2.msra.mxu0 0.0
    %7080 = vmatprep.subr.mxu0 0.0
    %7081 = vmatpush2.msra.mxu0 0.0
    %7082 = vmatprep.subr.mxu0 0.0
    %7083 = vmatpush2.msra.mxu0 0.0
    %7084 = vmatprep.subr.mxu0 0.0
    %7085 = vmatpush2.msra.mxu0 0.0
    %7086 = vmatprep.subr.mxu0 0.0
    %7087 = vmatpush2.msra.mxu0 0.0
    %7088 = vmatprep.mubr.f32.mxu0 0.0
    %7089 = vmatmul.mubr.f32.gmra.mxu0 %v7019
    %v7090 = vpop.f32.mrf.mxu0
    %v7091 = vadd.f32 0.0, %v7090
    %v7092 = vpop.f32.mrf.mxu0
    %7093 = vmatprep.mubr.f32.mxu0 0.0
    %7094 = vmatmul.mubr.f32.gmra.mxu0 %v7022
    %v7095 = vpop.f32.mrf.mxu0
    %v7096 = vadd.f32 0.0, %v7095
    %v7097 = vpop.f32.mrf.mxu0
    %7098 = vdwg.mxu0
    %7099 = vmatprep.subr.mxu0 0.0
    %7100 = vmatpush1.msra.mxu0 0.0
    %7101 = vmatprep.subr.mxu0 0.0
    %7102 = vmatpush1.msra.mxu0 0.0
    %7103 = vmatprep.subr.mxu0 0.0
    %7104 = vmatpush1.msra.mxu0 0.0
    %7105 = vmatprep.subr.mxu0 0.0
    %7106 = vmatpush1.msra.mxu0 0.0
    %7107 = vmatprep.subr.mxu0 0.0
    %7108 = vmatpush1.msra.mxu0 0.0
    %7109 = vmatprep.subr.mxu0 0.0
    %7110 = vmatpush1.msra.mxu0 0.0
    %7111 = vmatprep.subr.mxu0 0.0
    %7112 = vmatpush1.msra.mxu0 0.0
    %7113 = vmatprep.subr.mxu0 0.0
    %7114 = vmatpush1.msra.mxu0 0.0
    %7115 = vmatprep.subr.mxu0 0.0
    %7116 = vmatpush1.msra.mxu0 0.0
    %7117 = vmatprep.subr.mxu0 0.0
    %7118 = vmatpush1.msra.mxu0 0.0
    %7119 = vmatprep.subr.mxu0 0.0
    %7120 = vmatpush1.msra.mxu0 0.0
    %7121 = vmatprep.subr.mxu0 0.0
    %7122 = vmatpush1.msra.mxu0 0.0
    %7123 = vmatprep.subr.mxu0 0.0
    %7124 = vmatpush1.msra.mxu0 0.0
    %7125 = vmatprep.subr.mxu0 0.0
    %7126 = vmatpush1.msra.mxu0 0.0
    %7127 = vmatprep.subr.mxu0 0.0
    %7128 = vmatpush1.msra.mxu0 %v7015
    %7129 = vmatprep.subr.mxu0 0.0
    %7130 = vmatpush1.msra.mxu0 %v7010
    %7131 = vmatprep.subr.mxu0 0.0
    %7132 = vmatpush2.msra.mxu0 0.0
    %7133 = vmatprep.subr.mxu0 0.0
    %7134 = vmatpush2.msra.mxu0 0.0
    %7135 = vmatprep.subr.mxu0 0.0
    %7136 = vmatpush2.msra.mxu0 0.0
    %7137 = vmatprep.subr.mxu0 0.0
    %7138 = vmatpush2.msra.mxu0 0.0
    %7139 = vmatprep.subr.mxu0 0.0
    %7140 = vmatpush2.msra.mxu0 0.0
    %7141 = vmatprep.subr.mxu0 0.0
    %7142 = vmatpush2.msra.mxu0 0.0
    %7143 = vmatprep.subr.mxu0 0.0
    %7144 = vmatpush2.msra.mxu0 0.0
    %7145 = vmatprep.subr.mxu0 0.0
    %7146 = vmatpush2.msra.mxu0 0.0
    %7147 = vmatprep.subr.mxu0 0.0
    %7148 = vmatpush2.msra.mxu0 0.0
    %7149 = vmatprep.subr.mxu0 0.0
    %7150 = vmatpush2.msra.mxu0 0.0
    %7151 = vmatprep.subr.mxu0 0.0
    %7152 = vmatpush2.msra.mxu0 0.0
    %7153 = vmatprep.subr.mxu0 0.0
    %7154 = vmatpush2.msra.mxu0 0.0
    %7155 = vmatprep.subr.mxu0 0.0
    %7156 = vmatpush2.msra.mxu0 0.0
    %7157 = vmatprep.subr.mxu0 0.0
    %7158 = vmatpush2.msra.mxu0 0.0
    %7159 = vmatprep.subr.mxu0 0.0
    %7160 = vmatpush2.msra.mxu0 0.0
    %7161 = vmatprep.subr.mxu0 0.0
    %7162 = vmatpush2.msra.mxu0 0.0
    %7163 = vmatprep.mubr.f32.mxu0 0.0
    %7164 = vmatmul.mubr.f32.gmra.mxu0 %v7019
    %v7165 = vpop.f32.mrf.mxu0
    %v7166 = vadd.f32 0.0, %v7165
    %v7167 = vpop.f32.mrf.mxu0
    %7168 = vmatprep.mubr.f32.mxu0 0.0
    %7169 = vmatmul.mubr.f32.gmra.mxu0 %v7022
    %v7170 = vpop.f32.mrf.mxu0
    %v7171 = vadd.f32 0.0, %v7170
    %v7172 = vpop.f32.mrf.mxu0
    %7173 = vdwg.mxu0
    %7176 = vrot.lane.b32.xlu0 %v6927, 112
    %v7177 = vpop.permute.xlu0 %7176
    %7178 = vrot.lane.b32.xlu0 %v6928, 112
    %v7179 = vpop.permute.xlu0 %7178
    %7182 = vrot.lane.b32.xlu0 %v7000, 112
    %v7183 = vpop.permute.xlu0 %7182
    %7184 = vrot.lane.b32.xlu0 %v7005, 112
    %v7185 = vpop.permute.xlu0 %7184
    %v7188 = vsel %vm173, %v7177, 0
    %v7190 = vsel %vm173, %v7179, 0
    %7192 = vmatprep.subr.mxu0 0.0
    %7193 = vmatpush1.msra.mxu0 0.0
    %7194 = vmatprep.subr.mxu0 0.0
    %7195 = vmatpush1.msra.mxu0 0.0
    %7196 = vmatprep.subr.mxu0 0.0
    %7197 = vmatpush1.msra.mxu0 0.0
    %7198 = vmatprep.subr.mxu0 0.0
    %7199 = vmatpush1.msra.mxu0 0.0
    %7200 = vmatprep.subr.mxu0 0.0
    %7201 = vmatpush1.msra.mxu0 0.0
    %7202 = vmatprep.subr.mxu0 0.0
    %7203 = vmatpush1.msra.mxu0 0.0
    %7204 = vmatprep.subr.mxu0 0.0
    %7205 = vmatpush1.msra.mxu0 0.0
    %7206 = vmatprep.subr.mxu0 0.0
    %7207 = vmatpush1.msra.mxu0 0.0
    %7208 = vmatprep.subr.mxu0 0.0
    %7209 = vmatpush1.msra.mxu0 0.0
    %7210 = vmatprep.subr.mxu0 0.0
    %7211 = vmatpush1.msra.mxu0 0.0
    %7212 = vmatprep.subr.mxu0 0.0
    %7213 = vmatpush1.msra.mxu0 0.0
    %7214 = vmatprep.subr.mxu0 0.0
    %7215 = vmatpush1.msra.mxu0 0.0
    %7216 = vmatprep.subr.mxu0 0.0
    %7217 = vmatpush1.msra.mxu0 0.0
    %7218 = vmatprep.subr.mxu0 0.0
    %7219 = vmatpush1.msra.mxu0 0.0
    %7220 = vmatprep.subr.mxu0 0.0
    %7221 = vmatpush1.msra.mxu0 %v7185
    %7222 = vmatprep.subr.mxu0 0.0
    %7223 = vmatpush1.msra.mxu0 %v7183
    %7224 = vmatprep.subr.mxu0 0.0
    %7225 = vmatpush2.msra.mxu0 0.0
    %7226 = vmatprep.subr.mxu0 0.0
    %7227 = vmatpush2.msra.mxu0 0.0
    %7228 = vmatprep.subr.mxu0 0.0
    %7229 = vmatpush2.msra.mxu0 0.0
    %7230 = vmatprep.subr.mxu0 0.0
    %7231 = vmatpush2.msra.mxu0 0.0
    %7232 = vmatprep.subr.mxu0 0.0
    %7233 = vmatpush2.msra.mxu0 0.0
    %7234 = vmatprep.subr.mxu0 0.0
    %7235 = vmatpush2.msra.mxu0 0.0
    %7236 = vmatprep.subr.mxu0 0.0
    %7237 = vmatpush2.msra.mxu0 0.0
    %7238 = vmatprep.subr.mxu0 0.0
    %7239 = vmatpush2.msra.mxu0 0.0
    %7240 = vmatprep.subr.mxu0 0.0
    %7241 = vmatpush2.msra.mxu0 0.0
    %7242 = vmatprep.subr.mxu0 0.0
    %7243 = vmatpush2.msra.mxu0 0.0
    %7244 = vmatprep.subr.mxu0 0.0
    %7245 = vmatpush2.msra.mxu0 0.0
    %7246 = vmatprep.subr.mxu0 0.0
    %7247 = vmatpush2.msra.mxu0 0.0
    %7248 = vmatprep.subr.mxu0 0.0
    %7249 = vmatpush2.msra.mxu0 0.0
    %7250 = vmatprep.subr.mxu0 0.0
    %7251 = vmatpush2.msra.mxu0 0.0
    %7252 = vmatprep.subr.mxu0 0.0
    %7253 = vmatpush2.msra.mxu0 0.0
    %7254 = vmatprep.subr.mxu0 0.0
    %7255 = vmatpush2.msra.mxu0 0.0
    %7256 = vmatprep.mubr.f32.mxu0 0.0
    %7257 = vmatmul.mubr.f32.gmra.mxu0 %v7188
    %v7258 = vpop.f32.mrf.mxu0
    %v7259 = vadd.f32 0.0, %v7258
    %v7260 = vpop.f32.mrf.mxu0
    %7261 = vmatprep.mubr.f32.mxu0 0.0
    %7262 = vmatmul.mubr.f32.gmra.mxu0 %v7190
    %v7263 = vpop.f32.mrf.mxu0
    %v7264 = vadd.f32 0.0, %v7263
    %v7265 = vpop.f32.mrf.mxu0
    %7266 = vdwg.mxu0
    %7269 = vrot.lane.b32.xlu0 %v7010, 112
    %v7270 = vpop.permute.xlu0 %7269
    %7271 = vrot.lane.b32.xlu0 %v7015, 112
    %v7272 = vpop.permute.xlu0 %7271
    %7275 = vmatprep.subr.mxu0 0.0
    %7276 = vmatpush1.msra.mxu0 0.0
    %7277 = vmatprep.subr.mxu0 0.0
    %7278 = vmatpush1.msra.mxu0 0.0
    %7279 = vmatprep.subr.mxu0 0.0
    %7280 = vmatpush1.msra.mxu0 0.0
    %7281 = vmatprep.subr.mxu0 0.0
    %7282 = vmatpush1.msra.mxu0 0.0
    %7283 = vmatprep.subr.mxu0 0.0
    %7284 = vmatpush1.msra.mxu0 0.0
    %7285 = vmatprep.subr.mxu0 0.0
    %7286 = vmatpush1.msra.mxu0 0.0
    %7287 = vmatprep.subr.mxu0 0.0
    %7288 = vmatpush1.msra.mxu0 0.0
    %7289 = vmatprep.subr.mxu0 0.0
    %7290 = vmatpush1.msra.mxu0 0.0
    %7291 = vmatprep.subr.mxu0 0.0
    %7292 = vmatpush1.msra.mxu0 0.0
    %7293 = vmatprep.subr.mxu0 0.0
    %7294 = vmatpush1.msra.mxu0 0.0
    %7295 = vmatprep.subr.mxu0 0.0
    %7296 = vmatpush1.msra.mxu0 0.0
    %7297 = vmatprep.subr.mxu0 0.0
    %7298 = vmatpush1.msra.mxu0 0.0
    %7299 = vmatprep.subr.mxu0 0.0
    %7300 = vmatpush1.msra.mxu0 0.0
    %7301 = vmatprep.subr.mxu0 0.0
    %7302 = vmatpush1.msra.mxu0 0.0
    %7303 = vmatprep.subr.mxu0 0.0
    %7304 = vmatpush1.msra.mxu0 %v7272
    %7305 = vmatprep.subr.mxu0 0.0
    %7306 = vmatpush1.msra.mxu0 %v7270
    %7307 = vmatprep.subr.mxu0 0.0
    %7308 = vmatpush2.msra.mxu0 0.0
    %7309 = vmatprep.subr.mxu0 0.0
    %7310 = vmatpush2.msra.mxu0 0.0
    %7311 = vmatprep.subr.mxu0 0.0
    %7312 = vmatpush2.msra.mxu0 0.0
    %7313 = vmatprep.subr.mxu0 0.0
    %7314 = vmatpush2.msra.mxu0 0.0
    %7315 = vmatprep.subr.mxu0 0.0
    %7316 = vmatpush2.msra.mxu0 0.0
    %7317 = vmatprep.subr.mxu0 0.0
    %7318 = vmatpush2.msra.mxu0 0.0
    %7319 = vmatprep.subr.mxu0 0.0
    %7320 = vmatpush2.msra.mxu0 0.0
    %7321 = vmatprep.subr.mxu0 0.0
    %7322 = vmatpush2.msra.mxu0 0.0
    %7323 = vmatprep.subr.mxu0 0.0
    %7324 = vmatpush2.msra.mxu0 0.0
    %7325 = vmatprep.subr.mxu0 0.0
    %7326 = vmatpush2.msra.mxu0 0.0
    %7327 = vmatprep.subr.mxu0 0.0
    %7328 = vmatpush2.msra.mxu0 0.0
    %7329 = vmatprep.subr.mxu0 0.0
    %7330 = vmatpush2.msra.mxu0 0.0
    %7331 = vmatprep.subr.mxu0 0.0
    %7332 = vmatpush2.msra.mxu0 0.0
    %7333 = vmatprep.subr.mxu0 0.0
    %7334 = vmatpush2.msra.mxu0 0.0
    %7335 = vmatprep.subr.mxu0 0.0
    %7336 = vmatpush2.msra.mxu0 0.0
    %7337 = vmatprep.subr.mxu0 0.0
    %7338 = vmatpush2.msra.mxu0 0.0
    %7339 = vmatprep.mubr.f32.mxu0 0.0
    %7340 = vmatmul.mubr.f32.gmra.mxu0 %v7188
    %v7341 = vpop.f32.mrf.mxu0
    %v7342 = vadd.f32 0.0, %v7341
    %v7343 = vpop.f32.mrf.mxu0
    %7344 = vmatprep.mubr.f32.mxu0 0.0
    %7345 = vmatmul.mubr.f32.gmra.mxu0 %v7190
    %v7346 = vpop.f32.mrf.mxu0
    %v7347 = vadd.f32 0.0, %v7346
    %v7348 = vpop.f32.mrf.mxu0
    %7349 = vdwg.mxu0
    %7352 = vrot.lane.b32.xlu0 %v6929, 96
    %v7353 = vpop.permute.xlu0 %7352
    %7354 = vrot.lane.b32.xlu0 %v6930, 96
    %v7355 = vpop.permute.xlu0 %7354
    %7356 = vrot.lane.b32.xlu0 %v7000, 96
    %v7357 = vpop.permute.xlu0 %7356
    %7358 = vrot.lane.b32.xlu0 %v7005, 96
    %v7359 = vpop.permute.xlu0 %7358
    %v7362 = vsel %vm173, %v7353, 0
    %v7364 = vsel %vm173, %v7355, 0
    %7366 = vmatprep.subr.mxu0 0.0
    %7367 = vmatpush1.msra.mxu0 0.0
    %7368 = vmatprep.subr.mxu0 0.0
    %7369 = vmatpush1.msra.mxu0 0.0
    %7370 = vmatprep.subr.mxu0 0.0
    %7371 = vmatpush1.msra.mxu0 0.0
    %7372 = vmatprep.subr.mxu0 0.0
    %7373 = vmatpush1.msra.mxu0 0.0
    %7374 = vmatprep.subr.mxu0 0.0
    %7375 = vmatpush1.msra.mxu0 0.0
    %7376 = vmatprep.subr.mxu0 0.0
    %7377 = vmatpush1.msra.mxu0 0.0
    %7378 = vmatprep.subr.mxu0 0.0
    %7379 = vmatpush1.msra.mxu0 0.0
    %7380 = vmatprep.subr.mxu0 0.0
    %7381 = vmatpush1.msra.mxu0 0.0
    %7382 = vmatprep.subr.mxu0 0.0
    %7383 = vmatpush1.msra.mxu0 0.0
    %7384 = vmatprep.subr.mxu0 0.0
    %7385 = vmatpush1.msra.mxu0 0.0
    %7386 = vmatprep.subr.mxu0 0.0
    %7387 = vmatpush1.msra.mxu0 0.0
    %7388 = vmatprep.subr.mxu0 0.0
    %7389 = vmatpush1.msra.mxu0 0.0
    %7390 = vmatprep.subr.mxu0 0.0
    %7391 = vmatpush1.msra.mxu0 0.0
    %7392 = vmatprep.subr.mxu0 0.0
    %7393 = vmatpush1.msra.mxu0 0.0
    %7394 = vmatprep.subr.mxu0 0.0
    %7395 = vmatpush1.msra.mxu0 %v7359
    %7396 = vmatprep.subr.mxu0 0.0
    %7397 = vmatpush1.msra.mxu0 %v7357
    %7398 = vmatprep.subr.mxu0 0.0
    %7399 = vmatpush2.msra.mxu0 0.0
    %7400 = vmatprep.subr.mxu0 0.0
    %7401 = vmatpush2.msra.mxu0 0.0
    %7402 = vmatprep.subr.mxu0 0.0
    %7403 = vmatpush2.msra.mxu0 0.0
    %7404 = vmatprep.subr.mxu0 0.0
    %7405 = vmatpush2.msra.mxu0 0.0
    %7406 = vmatprep.subr.mxu0 0.0
    %7407 = vmatpush2.msra.mxu0 0.0
    %7408 = vmatprep.subr.mxu0 0.0
    %7409 = vmatpush2.msra.mxu0 0.0
    %7410 = vmatprep.subr.mxu0 0.0
    %7411 = vmatpush2.msra.mxu0 0.0
    %7412 = vmatprep.subr.mxu0 0.0
    %7413 = vmatpush2.msra.mxu0 0.0
    %7414 = vmatprep.subr.mxu0 0.0
    %7415 = vmatpush2.msra.mxu0 0.0
    %7416 = vmatprep.subr.mxu0 0.0
    %7417 = vmatpush2.msra.mxu0 0.0
    %7418 = vmatprep.subr.mxu0 0.0
    %7419 = vmatpush2.msra.mxu0 0.0
    %7420 = vmatprep.subr.mxu0 0.0
    %7421 = vmatpush2.msra.mxu0 0.0
    %7422 = vmatprep.subr.mxu0 0.0
    %7423 = vmatpush2.msra.mxu0 0.0
    %7424 = vmatprep.subr.mxu0 0.0
    %7425 = vmatpush2.msra.mxu0 0.0
    %7426 = vmatprep.subr.mxu0 0.0
    %7427 = vmatpush2.msra.mxu0 0.0
    %7428 = vmatprep.subr.mxu0 0.0
    %7429 = vmatpush2.msra.mxu0 0.0
    %7430 = vmatprep.mubr.f32.mxu0 0.0
    %7431 = vmatmul.mubr.f32.gmra.mxu0 %v7362
    %v7432 = vpop.f32.mrf.mxu0
    %v7433 = vadd.f32 0.0, %v7432
    %v7434 = vpop.f32.mrf.mxu0
    %7435 = vmatprep.mubr.f32.mxu0 0.0
    %7436 = vmatmul.mubr.f32.gmra.mxu0 %v7364
    %v7437 = vpop.f32.mrf.mxu0
    %v7438 = vadd.f32 0.0, %v7437
    %v7439 = vpop.f32.mrf.mxu0
    %7440 = vdwg.mxu0
    %7441 = vrot.lane.b32.xlu0 %v7010, 96
    %v7442 = vpop.permute.xlu0 %7441
    %7443 = vrot.lane.b32.xlu0 %v7015, 96
    %v7444 = vpop.permute.xlu0 %7443
    %7447 = vmatprep.subr.mxu0 0.0
    %7448 = vmatpush1.msra.mxu0 0.0
    %7449 = vmatprep.subr.mxu0 0.0
    %7450 = vmatpush1.msra.mxu0 0.0
    %7451 = vmatprep.subr.mxu0 0.0
    %7452 = vmatpush1.msra.mxu0 0.0
    %7453 = vmatprep.subr.mxu0 0.0
    %7454 = vmatpush1.msra.mxu0 0.0
    %7455 = vmatprep.subr.mxu0 0.0
    %7456 = vmatpush1.msra.mxu0 0.0
    %7457 = vmatprep.subr.mxu0 0.0
    %7458 = vmatpush1.msra.mxu0 0.0
    %7459 = vmatprep.subr.mxu0 0.0
    %7460 = vmatpush1.msra.mxu0 0.0
    %7461 = vmatprep.subr.mxu0 0.0
    %7462 = vmatpush1.msra.mxu0 0.0
    %7463 = vmatprep.subr.mxu0 0.0
    %7464 = vmatpush1.msra.mxu0 0.0
    %7465 = vmatprep.subr.mxu0 0.0
    %7466 = vmatpush1.msra.mxu0 0.0
    %7467 = vmatprep.subr.mxu0 0.0
    %7468 = vmatpush1.msra.mxu0 0.0
    %7469 = vmatprep.subr.mxu0 0.0
    %7470 = vmatpush1.msra.mxu0 0.0
    %7471 = vmatprep.subr.mxu0 0.0
    %7472 = vmatpush1.msra.mxu0 0.0
    %7473 = vmatprep.subr.mxu0 0.0
    %7474 = vmatpush1.msra.mxu0 0.0
    %7475 = vmatprep.subr.mxu0 0.0
    %7476 = vmatpush1.msra.mxu0 %v7444
    %7477 = vmatprep.subr.mxu0 0.0
    %7478 = vmatpush1.msra.mxu0 %v7442
    %7479 = vmatprep.subr.mxu0 0.0
    %7480 = vmatpush2.msra.mxu0 0.0
    %7481 = vmatprep.subr.mxu0 0.0
    %7482 = vmatpush2.msra.mxu0 0.0
    %7483 = vmatprep.subr.mxu0 0.0
    %7484 = vmatpush2.msra.mxu0 0.0
    %7485 = vmatprep.subr.mxu0 0.0
    %7486 = vmatpush2.msra.mxu0 0.0
    %7487 = vmatprep.subr.mxu0 0.0
    %7488 = vmatpush2.msra.mxu0 0.0
    %7489 = vmatprep.subr.mxu0 0.0
    %7490 = vmatpush2.msra.mxu0 0.0
    %7491 = vmatprep.subr.mxu0 0.0
    %7492 = vmatpush2.msra.mxu0 0.0
    %7493 = vmatprep.subr.mxu0 0.0
    %7494 = vmatpush2.msra.mxu0 0.0
    %7495 = vmatprep.subr.mxu0 0.0
    %7496 = vmatpush2.msra.mxu0 0.0
    %7497 = vmatprep.subr.mxu0 0.0
    %7498 = vmatpush2.msra.mxu0 0.0
    %7499 = vmatprep.subr.mxu0 0.0
    %7500 = vmatpush2.msra.mxu0 0.0
    %7501 = vmatprep.subr.mxu0 0.0
    %7502 = vmatpush2.msra.mxu0 0.0
    %7503 = vmatprep.subr.mxu0 0.0
    %7504 = vmatpush2.msra.mxu0 0.0
    %7505 = vmatprep.subr.mxu0 0.0
    %7506 = vmatpush2.msra.mxu0 0.0
    %7507 = vmatprep.subr.mxu0 0.0
    %7508 = vmatpush2.msra.mxu0 0.0
    %7509 = vmatprep.subr.mxu0 0.0
    %7510 = vmatpush2.msra.mxu0 0.0
    %7511 = vmatprep.mubr.f32.mxu0 0.0
    %7512 = vmatmul.mubr.f32.gmra.mxu0 %v7362
    %v7513 = vpop.f32.mrf.mxu0
    %v7514 = vadd.f32 0.0, %v7513
    %v7515 = vpop.f32.mrf.mxu0
    %7516 = vmatprep.mubr.f32.mxu0 0.0
    %7517 = vmatmul.mubr.f32.gmra.mxu0 %v7364
    %v7518 = vpop.f32.mrf.mxu0
    %v7519 = vadd.f32 0.0, %v7518
    %v7520 = vpop.f32.mrf.mxu0
    %7521 = vdwg.mxu0
    %7524 = vrot.lane.b32.xlu0 %v6931, 80
    %v7525 = vpop.permute.xlu0 %7524
    %7526 = vrot.lane.b32.xlu0 %v6932, 80
    %v7527 = vpop.permute.xlu0 %7526
    %7528 = vrot.lane.b32.xlu0 %v7000, 80
    %v7529 = vpop.permute.xlu0 %7528
    %7530 = vrot.lane.b32.xlu0 %v7005, 80
    %v7531 = vpop.permute.xlu0 %7530
    %v7534 = vsel %vm173, %v7525, 0
    %v7536 = vsel %vm173, %v7527, 0
    %7538 = vmatprep.subr.mxu0 0.0
    %7539 = vmatpush1.msra.mxu0 0.0
    %7540 = vmatprep.subr.mxu0 0.0
    %7541 = vmatpush1.msra.mxu0 0.0
    %7542 = vmatprep.subr.mxu0 0.0
    %7543 = vmatpush1.msra.mxu0 0.0
    %7544 = vmatprep.subr.mxu0 0.0
    %7545 = vmatpush1.msra.mxu0 0.0
    %7546 = vmatprep.subr.mxu0 0.0
    %7547 = vmatpush1.msra.mxu0 0.0
    %7548 = vmatprep.subr.mxu0 0.0
    %7549 = vmatpush1.msra.mxu0 0.0
    %7550 = vmatprep.subr.mxu0 0.0
    %7551 = vmatpush1.msra.mxu0 0.0
    %7552 = vmatprep.subr.mxu0 0.0
    %7553 = vmatpush1.msra.mxu0 0.0
    %7554 = vmatprep.subr.mxu0 0.0
    %7555 = vmatpush1.msra.mxu0 0.0
    %7556 = vmatprep.subr.mxu0 0.0
    %7557 = vmatpush1.msra.mxu0 0.0
    %7558 = vmatprep.subr.mxu0 0.0
    %7559 = vmatpush1.msra.mxu0 0.0
    %7560 = vmatprep.subr.mxu0 0.0
    %7561 = vmatpush1.msra.mxu0 0.0
    %7562 = vmatprep.subr.mxu0 0.0
    %7563 = vmatpush1.msra.mxu0 0.0
    %7564 = vmatprep.subr.mxu0 0.0
    %7565 = vmatpush1.msra.mxu0 0.0
    %7566 = vmatprep.subr.mxu0 0.0
    %7567 = vmatpush1.msra.mxu0 %v7531
    %7568 = vmatprep.subr.mxu0 0.0
    %7569 = vmatpush1.msra.mxu0 %v7529
    %7570 = vmatprep.subr.mxu0 0.0
    %7571 = vmatpush2.msra.mxu0 0.0
    %7572 = vmatprep.subr.mxu0 0.0
    %7573 = vmatpush2.msra.mxu0 0.0
    %7574 = vmatprep.subr.mxu0 0.0
    %7575 = vmatpush2.msra.mxu0 0.0
    %7576 = vmatprep.subr.mxu0 0.0
    %7577 = vmatpush2.msra.mxu0 0.0
    %7578 = vmatprep.subr.mxu0 0.0
    %7579 = vmatpush2.msra.mxu0 0.0
    %7580 = vmatprep.subr.mxu0 0.0
    %7581 = vmatpush2.msra.mxu0 0.0
    %7582 = vmatprep.subr.mxu0 0.0
    %7583 = vmatpush2.msra.mxu0 0.0
    %7584 = vmatprep.subr.mxu0 0.0
    %7585 = vmatpush2.msra.mxu0 0.0
    %7586 = vmatprep.subr.mxu0 0.0
    %7587 = vmatpush2.msra.mxu0 0.0
    %7588 = vmatprep.subr.mxu0 0.0
    %7589 = vmatpush2.msra.mxu0 0.0
    %7590 = vmatprep.subr.mxu0 0.0
    %7591 = vmatpush2.msra.mxu0 0.0
    %7592 = vmatprep.subr.mxu0 0.0
    %7593 = vmatpush2.msra.mxu0 0.0
    %7594 = vmatprep.subr.mxu0 0.0
    %7595 = vmatpush2.msra.mxu0 0.0
    %7596 = vmatprep.subr.mxu0 0.0
    %7597 = vmatpush2.msra.mxu0 0.0
    %7598 = vmatprep.subr.mxu0 0.0
    %7599 = vmatpush2.msra.mxu0 0.0
    %7600 = vmatprep.subr.mxu0 0.0
    %7601 = vmatpush2.msra.mxu0 0.0
    %7602 = vmatprep.mubr.f32.mxu0 0.0
    %7603 = vmatmul.mubr.f32.gmra.mxu0 %v7534
    %v7604 = vpop.f32.mrf.mxu0
    %v7605 = vadd.f32 0.0, %v7604
    %v7606 = vpop.f32.mrf.mxu0
    %7607 = vmatprep.mubr.f32.mxu0 0.0
    %7608 = vmatmul.mubr.f32.gmra.mxu0 %v7536
    %v7609 = vpop.f32.mrf.mxu0
    %v7610 = vadd.f32 0.0, %v7609
    %v7611 = vpop.f32.mrf.mxu0
    %7612 = vdwg.mxu0
    %7613 = vrot.lane.b32.xlu0 %v7010, 80
    %v7614 = vpop.permute.xlu0 %7613
    %7615 = vrot.lane.b32.xlu0 %v7015, 80
    %v7616 = vpop.permute.xlu0 %7615
    %7619 = vmatprep.subr.mxu0 0.0
    %7620 = vmatpush1.msra.mxu0 0.0
    %7621 = vmatprep.subr.mxu0 0.0
    %7622 = vmatpush1.msra.mxu0 0.0
    %7623 = vmatprep.subr.mxu0 0.0
    %7624 = vmatpush1.msra.mxu0 0.0
    %7625 = vmatprep.subr.mxu0 0.0
    %7626 = vmatpush1.msra.mxu0 0.0
    %7627 = vmatprep.subr.mxu0 0.0
    %7628 = vmatpush1.msra.mxu0 0.0
    %7629 = vmatprep.subr.mxu0 0.0
    %7630 = vmatpush1.msra.mxu0 0.0
    %7631 = vmatprep.subr.mxu0 0.0
    %7632 = vmatpush1.msra.mxu0 0.0
    %7633 = vmatprep.subr.mxu0 0.0
    %7634 = vmatpush1.msra.mxu0 0.0
    %7635 = vmatprep.subr.mxu0 0.0
    %7636 = vmatpush1.msra.mxu0 0.0
    %7637 = vmatprep.subr.mxu0 0.0
    %7638 = vmatpush1.msra.mxu0 0.0
    %7639 = vmatprep.subr.mxu0 0.0
    %7640 = vmatpush1.msra.mxu0 0.0
    %7641 = vmatprep.subr.mxu0 0.0
    %7642 = vmatpush1.msra.mxu0 0.0
    %7643 = vmatprep.subr.mxu0 0.0
    %7644 = vmatpush1.msra.mxu0 0.0
    %7645 = vmatprep.subr.mxu0 0.0
    %7646 = vmatpush1.msra.mxu0 0.0
    %7647 = vmatprep.subr.mxu0 0.0
    %7648 = vmatpush1.msra.mxu0 %v7616
    %7649 = vmatprep.subr.mxu0 0.0
    %7650 = vmatpush1.msra.mxu0 %v7614
    %7651 = vmatprep.subr.mxu0 0.0
    %7652 = vmatpush2.msra.mxu0 0.0
    %7653 = vmatprep.subr.mxu0 0.0
    %7654 = vmatpush2.msra.mxu0 0.0
    %7655 = vmatprep.subr.mxu0 0.0
    %7656 = vmatpush2.msra.mxu0 0.0
    %7657 = vmatprep.subr.mxu0 0.0
    %7658 = vmatpush2.msra.mxu0 0.0
    %7659 = vmatprep.subr.mxu0 0.0
    %7660 = vmatpush2.msra.mxu0 0.0
    %7661 = vmatprep.subr.mxu0 0.0
    %7662 = vmatpush2.msra.mxu0 0.0
    %7663 = vmatprep.subr.mxu0 0.0
    %7664 = vmatpush2.msra.mxu0 0.0
    %7665 = vmatprep.subr.mxu0 0.0
    %7666 = vmatpush2.msra.mxu0 0.0
    %7667 = vmatprep.subr.mxu0 0.0
    %7668 = vmatpush2.msra.mxu0 0.0
    %7669 = vmatprep.subr.mxu0 0.0
    %7670 = vmatpush2.msra.mxu0 0.0
    %7671 = vmatprep.subr.mxu0 0.0
    %7672 = vmatpush2.msra.mxu0 0.0
    %7673 = vmatprep.subr.mxu0 0.0
    %7674 = vmatpush2.msra.mxu0 0.0
    %7675 = vmatprep.subr.mxu0 0.0
    %7676 = vmatpush2.msra.mxu0 0.0
    %7677 = vmatprep.subr.mxu0 0.0
    %7678 = vmatpush2.msra.mxu0 0.0
    %7679 = vmatprep.subr.mxu0 0.0
    %7680 = vmatpush2.msra.mxu0 0.0
    %7681 = vmatprep.subr.mxu0 0.0
    %7682 = vmatpush2.msra.mxu0 0.0
    %7683 = vmatprep.mubr.f32.mxu0 0.0
    %7684 = vmatmul.mubr.f32.gmra.mxu0 %v7534
    %v7685 = vpop.f32.mrf.mxu0
    %v7686 = vadd.f32 0.0, %v7685
    %v7687 = vpop.f32.mrf.mxu0
    %7688 = vmatprep.mubr.f32.mxu0 0.0
    %7689 = vmatmul.mubr.f32.gmra.mxu0 %v7536
    %v7690 = vpop.f32.mrf.mxu0
    %v7691 = vadd.f32 0.0, %v7690
    %v7692 = vpop.f32.mrf.mxu0
    %7693 = vdwg.mxu0
    %7698 = vrot.lane.b32.xlu0 %v7259, 16
    %v7699 = vpop.permute.xlu0 %7698
    %7700 = vrot.lane.b32.xlu0 %v7264, 16
    %v7701 = vpop.permute.xlu0 %7700
    %7702 = vrot.lane.b32.xlu0 %v7342, 16
    %v7703 = vpop.permute.xlu0 %7702
    %7704 = vrot.lane.b32.xlu0 %v7347, 16
    %v7705 = vpop.permute.xlu0 %7704
    %7714 = vrot.lane.b32.xlu0 %v7433, 32
    %v7715 = vpop.permute.xlu0 %7714
    %7716 = vrot.lane.b32.xlu0 %v7438, 32
    %v7717 = vpop.permute.xlu0 %7716
    %7718 = vrot.lane.b32.xlu0 %v7514, 32
    %v7719 = vpop.permute.xlu0 %7718
    %7720 = vrot.lane.b32.xlu0 %v7519, 32
    %v7721 = vpop.permute.xlu0 %7720
    %7730 = vrot.lane.b32.xlu0 %v7605, 48
    %v7731 = vpop.permute.xlu0 %7730
    %7732 = vrot.lane.b32.xlu0 %v7610, 48
    %v7733 = vpop.permute.xlu0 %7732
    %7734 = vrot.lane.b32.xlu0 %v7686, 48
    %v7735 = vpop.permute.xlu0 %7734
    %7736 = vrot.lane.b32.xlu0 %v7691, 48
    %v7737 = vpop.permute.xlu0 %7736
    %v7742 = vsel %vm173, %v7091, %v7699
    %v7743 = vsel %vm173, %v7096, %v7701
    %v7744 = vsel %vm173, %v7166, %v7703
    %v7745 = vsel %vm173, %v7171, %v7705
    %v7746 = vsel %vm902, %v7742, %v7715
    %v7747 = vsel %vm902, %v7743, %v7717
    %v7748 = vsel %vm902, %v7744, %v7719
    %v7749 = vsel %vm902, %v7745, %v7721
    %v7750 = vsel %vm907, %v7746, %v7731
    %v7751 = vsel %vm907, %v7747, %v7733
    %v7752 = vsel %vm907, %v7748, %v7735
    %v7753 = vsel %vm907, %v7749, %v7737
    %s7754 = scalar_lea.vmem [#allocation7], 1152
    %v7755 = vld [vmem:[%s7754] sm:$0xff]
    %v7756 = vld [vmem:[%s7754 + $0x8] sm:$0xff]
    %v7757 = vld [vmem:[%s7754 + $0x10] sm:$0xff]
    %v7758 = vld [vmem:[%s7754 + $0x18] sm:$0xff]
    %v7759 = vld [vmem:[%s7754 + $0x20] sm:$0xff]
    %v7760 = vld [vmem:[%s7754 + $0x28] sm:$0xff]
    %v7761 = vld [vmem:[%s7754 + $0x30] sm:$0xff]
    %v7762 = vld [vmem:[%s7754 + $0x38] sm:$0xff]
    %s7763 = scalar_lea.vmem [#allocation7], 1216
    %v7764 = vld [vmem:[%s7763] sm:$0xff]
    %v7765 = vld [vmem:[%s7763 + $0x8] sm:$0xff]
    %v7766 = vld [vmem:[%s7763 + $0x10] sm:$0xff]
    %v7767 = vld [vmem:[%s7763 + $0x18] sm:$0xff]
    %v7768 = vld [vmem:[%s7763 + $0x20] sm:$0xff]
    %v7769 = vld [vmem:[%s7763 + $0x28] sm:$0xff]
    %v7770 = vld [vmem:[%s7763 + $0x30] sm:$0xff]
    %v7771 = vld [vmem:[%s7763 + $0x38] sm:$0xff]
    %7772 = vmatprep.subr.mxu0 0.0
    %7773 = vmatpush1.msra.mxu0 0.0
    %7774 = vmatprep.subr.mxu0 0.0
    %7775 = vmatpush1.msra.mxu0 0.0
    %7776 = vmatprep.subr.mxu0 0.0
    %7777 = vmatpush1.msra.mxu0 0.0
    %7778 = vmatprep.subr.mxu0 0.0
    %7779 = vmatpush1.msra.mxu0 0.0
    %7780 = vmatprep.subr.mxu0 0.0
    %7781 = vmatpush1.msra.mxu0 0.0
    %7782 = vmatprep.subr.mxu0 0.0
    %7783 = vmatpush1.msra.mxu0 0.0
    %7784 = vmatprep.subr.mxu0 0.0
    %7785 = vmatpush1.msra.mxu0 0.0
    %7786 = vmatprep.subr.mxu0 0.0
    %7787 = vmatpush1.msra.mxu0 0.0
    %7788 = vmatprep.subr.mxu0 0.0
    %7789 = vmatpush1.msra.mxu0 %v7762
    %7790 = vmatprep.subr.mxu0 0.0
    %7791 = vmatpush1.msra.mxu0 %v7761
    %7792 = vmatprep.subr.mxu0 0.0
    %7793 = vmatpush1.msra.mxu0 %v7760
    %7794 = vmatprep.subr.mxu0 0.0
    %7795 = vmatpush1.msra.mxu0 %v7759
    %7796 = vmatprep.subr.mxu0 0.0
    %7797 = vmatpush1.msra.mxu0 %v7758
    %7798 = vmatprep.subr.mxu0 0.0
    %7799 = vmatpush1.msra.mxu0 %v7757
    %7800 = vmatprep.subr.mxu0 0.0
    %7801 = vmatpush1.msra.mxu0 %v7756
    %7802 = vmatprep.subr.mxu0 0.0
    %7803 = vmatpush1.msra.mxu0 %v7755
    %7804 = vmatprep.subr.mxu0 0.0
    %7805 = vmatpush2.msra.mxu0 0.0
    %7806 = vmatprep.subr.mxu0 0.0
    %7807 = vmatpush2.msra.mxu0 0.0
    %7808 = vmatprep.subr.mxu0 0.0
    %7809 = vmatpush2.msra.mxu0 0.0
    %7810 = vmatprep.subr.mxu0 0.0
    %7811 = vmatpush2.msra.mxu0 0.0
    %7812 = vmatprep.subr.mxu0 0.0
    %7813 = vmatpush2.msra.mxu0 0.0
    %7814 = vmatprep.subr.mxu0 0.0
    %7815 = vmatpush2.msra.mxu0 0.0
    %7816 = vmatprep.subr.mxu0 0.0
    %7817 = vmatpush2.msra.mxu0 0.0
    %7818 = vmatprep.subr.mxu0 0.0
    %7819 = vmatpush2.msra.mxu0 0.0
    %7820 = vmatprep.subr.mxu0 0.0
    %7821 = vmatpush2.msra.mxu0 0.0
    %7822 = vmatprep.subr.mxu0 0.0
    %7823 = vmatpush2.msra.mxu0 0.0
    %7824 = vmatprep.subr.mxu0 0.0
    %7825 = vmatpush2.msra.mxu0 0.0
    %7826 = vmatprep.subr.mxu0 0.0
    %7827 = vmatpush2.msra.mxu0 0.0
    %7828 = vmatprep.subr.mxu0 0.0
    %7829 = vmatpush2.msra.mxu0 0.0
    %7830 = vmatprep.subr.mxu0 0.0
    %7831 = vmatpush2.msra.mxu0 0.0
    %7832 = vmatprep.subr.mxu0 0.0
    %7833 = vmatpush2.msra.mxu0 0.0
    %7834 = vmatprep.subr.mxu0 0.0
    %7835 = vmatpush2.msra.mxu0 0.0
    %7836 = vmatprep.mubr.f32.mxu0 0.0
    %7837 = vmatmul.mubr.f32.gmra.mxu0 %v3506
    %v7838 = vpop.f32.mrf.mxu0
    %v7839 = vadd.f32 0.0, %v7838
    %v7840 = vpop.f32.mrf.mxu0
    %7841 = vmatprep.mubr.f32.mxu0 0.0
    %7842 = vmatmul.mubr.f32.gmra.mxu0 %v3509
    %v7843 = vpop.f32.mrf.mxu0
    %v7844 = vadd.f32 0.0, %v7843
    %v7845 = vpop.f32.mrf.mxu0
    %7846 = vmatprep.mubr.f32.mxu0 0.0
    %7847 = vmatmul.mubr.f32.gmra.mxu0 %v3512
    %v7848 = vpop.f32.mrf.mxu0
    %v7849 = vadd.f32 0.0, %v7848
    %v7850 = vpop.f32.mrf.mxu0
    %7851 = vmatprep.mubr.f32.mxu0 0.0
    %7852 = vmatmul.mubr.f32.gmra.mxu0 %v3515
    %v7853 = vpop.f32.mrf.mxu0
    %v7854 = vadd.f32 0.0, %v7853
    %v7855 = vpop.f32.mrf.mxu0
    %7856 = vdwg.mxu0
    %v7858 = vsel %vm173, %v7764, 0
    %v7861 = vsel %vm173, %v7765, 0
    %7863 = vmatprep.subr.mxu0 0.0
    %7864 = vmatpush1.msra.mxu0 0.0
    %7865 = vmatprep.subr.mxu0 0.0
    %7866 = vmatpush1.msra.mxu0 0.0
    %7867 = vmatprep.subr.mxu0 0.0
    %7868 = vmatpush1.msra.mxu0 0.0
    %7869 = vmatprep.subr.mxu0 0.0
    %7870 = vmatpush1.msra.mxu0 0.0
    %7871 = vmatprep.subr.mxu0 0.0
    %7872 = vmatpush1.msra.mxu0 0.0
    %7873 = vmatprep.subr.mxu0 0.0
    %7874 = vmatpush1.msra.mxu0 0.0
    %7875 = vmatprep.subr.mxu0 0.0
    %7876 = vmatpush1.msra.mxu0 0.0
    %7877 = vmatprep.subr.mxu0 0.0
    %7878 = vmatpush1.msra.mxu0 0.0
    %7879 = vmatprep.subr.mxu0 0.0
    %7880 = vmatpush1.msra.mxu0 0.0
    %7881 = vmatprep.subr.mxu0 0.0
    %7882 = vmatpush1.msra.mxu0 0.0
    %7883 = vmatprep.subr.mxu0 0.0
    %7884 = vmatpush1.msra.mxu0 0.0
    %7885 = vmatprep.subr.mxu0 0.0
    %7886 = vmatpush1.msra.mxu0 0.0
    %7887 = vmatprep.subr.mxu0 0.0
    %7888 = vmatpush1.msra.mxu0 0.0
    %7889 = vmatprep.subr.mxu0 0.0
    %7890 = vmatpush1.msra.mxu0 0.0
    %7891 = vmatprep.subr.mxu0 0.0
    %7892 = vmatpush1.msra.mxu0 %v7844
    %7893 = vmatprep.subr.mxu0 0.0
    %7894 = vmatpush1.msra.mxu0 %v7839
    %7895 = vmatprep.subr.mxu0 0.0
    %7896 = vmatpush2.msra.mxu0 0.0
    %7897 = vmatprep.subr.mxu0 0.0
    %7898 = vmatpush2.msra.mxu0 0.0
    %7899 = vmatprep.subr.mxu0 0.0
    %7900 = vmatpush2.msra.mxu0 0.0
    %7901 = vmatprep.subr.mxu0 0.0
    %7902 = vmatpush2.msra.mxu0 0.0
    %7903 = vmatprep.subr.mxu0 0.0
    %7904 = vmatpush2.msra.mxu0 0.0
    %7905 = vmatprep.subr.mxu0 0.0
    %7906 = vmatpush2.msra.mxu0 0.0
    %7907 = vmatprep.subr.mxu0 0.0
    %7908 = vmatpush2.msra.mxu0 0.0
    %7909 = vmatprep.subr.mxu0 0.0
    %7910 = vmatpush2.msra.mxu0 0.0
    %7911 = vmatprep.subr.mxu0 0.0
    %7912 = vmatpush2.msra.mxu0 0.0
    %7913 = vmatprep.subr.mxu0 0.0
    %7914 = vmatpush2.msra.mxu0 0.0
    %7915 = vmatprep.subr.mxu0 0.0
    %7916 = vmatpush2.msra.mxu0 0.0
    %7917 = vmatprep.subr.mxu0 0.0
    %7918 = vmatpush2.msra.mxu0 0.0
    %7919 = vmatprep.subr.mxu0 0.0
    %7920 = vmatpush2.msra.mxu0 0.0
    %7921 = vmatprep.subr.mxu0 0.0
    %7922 = vmatpush2.msra.mxu0 0.0
    %7923 = vmatprep.subr.mxu0 0.0
    %7924 = vmatpush2.msra.mxu0 0.0
    %7925 = vmatprep.subr.mxu0 0.0
    %7926 = vmatpush2.msra.mxu0 0.0
    %7927 = vmatprep.mubr.f32.mxu0 0.0
    %7928 = vmatmul.mubr.f32.gmra.mxu0 %v7858
    %v7929 = vpop.f32.mrf.mxu0
    %v7930 = vadd.f32 0.0, %v7929
    %v7931 = vpop.f32.mrf.mxu0
    %7932 = vmatprep.mubr.f32.mxu0 0.0
    %7933 = vmatmul.mubr.f32.gmra.mxu0 %v7861
    %v7934 = vpop.f32.mrf.mxu0
    %v7935 = vadd.f32 0.0, %v7934
    %v7936 = vpop.f32.mrf.mxu0
    %7937 = vdwg.mxu0
    %7938 = vmatprep.subr.mxu0 0.0
    %7939 = vmatpush1.msra.mxu0 0.0
    %7940 = vmatprep.subr.mxu0 0.0
    %7941 = vmatpush1.msra.mxu0 0.0
    %7942 = vmatprep.subr.mxu0 0.0
    %7943 = vmatpush1.msra.mxu0 0.0
    %7944 = vmatprep.subr.mxu0 0.0
    %7945 = vmatpush1.msra.mxu0 0.0
    %7946 = vmatprep.subr.mxu0 0.0
    %7947 = vmatpush1.msra.mxu0 0.0
    %7948 = vmatprep.subr.mxu0 0.0
    %7949 = vmatpush1.msra.mxu0 0.0
    %7950 = vmatprep.subr.mxu0 0.0
    %7951 = vmatpush1.msra.mxu0 0.0
    %7952 = vmatprep.subr.mxu0 0.0
    %7953 = vmatpush1.msra.mxu0 0.0
    %7954 = vmatprep.subr.mxu0 0.0
    %7955 = vmatpush1.msra.mxu0 0.0
    %7956 = vmatprep.subr.mxu0 0.0
    %7957 = vmatpush1.msra.mxu0 0.0
    %7958 = vmatprep.subr.mxu0 0.0
    %7959 = vmatpush1.msra.mxu0 0.0
    %7960 = vmatprep.subr.mxu0 0.0
    %7961 = vmatpush1.msra.mxu0 0.0
    %7962 = vmatprep.subr.mxu0 0.0
    %7963 = vmatpush1.msra.mxu0 0.0
    %7964 = vmatprep.subr.mxu0 0.0
    %7965 = vmatpush1.msra.mxu0 0.0
    %7966 = vmatprep.subr.mxu0 0.0
    %7967 = vmatpush1.msra.mxu0 %v7854
    %7968 = vmatprep.subr.mxu0 0.0
    %7969 = vmatpush1.msra.mxu0 %v7849
    %7970 = vmatprep.subr.mxu0 0.0
    %7971 = vmatpush2.msra.mxu0 0.0
    %7972 = vmatprep.subr.mxu0 0.0
    %7973 = vmatpush2.msra.mxu0 0.0
    %7974 = vmatprep.subr.mxu0 0.0
    %7975 = vmatpush2.msra.mxu0 0.0
    %7976 = vmatprep.subr.mxu0 0.0
    %7977 = vmatpush2.msra.mxu0 0.0
    %7978 = vmatprep.subr.mxu0 0.0
    %7979 = vmatpush2.msra.mxu0 0.0
    %7980 = vmatprep.subr.mxu0 0.0
    %7981 = vmatpush2.msra.mxu0 0.0
    %7982 = vmatprep.subr.mxu0 0.0
    %7983 = vmatpush2.msra.mxu0 0.0
    %7984 = vmatprep.subr.mxu0 0.0
    %7985 = vmatpush2.msra.mxu0 0.0
    %7986 = vmatprep.subr.mxu0 0.0
    %7987 = vmatpush2.msra.mxu0 0.0
    %7988 = vmatprep.subr.mxu0 0.0
    %7989 = vmatpush2.msra.mxu0 0.0
    %7990 = vmatprep.subr.mxu0 0.0
    %7991 = vmatpush2.msra.mxu0 0.0
    %7992 = vmatprep.subr.mxu0 0.0
    %7993 = vmatpush2.msra.mxu0 0.0
    %7994 = vmatprep.subr.mxu0 0.0
    %7995 = vmatpush2.msra.mxu0 0.0
    %7996 = vmatprep.subr.mxu0 0.0
    %7997 = vmatpush2.msra.mxu0 0.0
    %7998 = vmatprep.subr.mxu0 0.0
    %7999 = vmatpush2.msra.mxu0 0.0
    %8000 = vmatprep.subr.mxu0 0.0
    %8001 = vmatpush2.msra.mxu0 0.0
    %8002 = vmatprep.mubr.f32.mxu0 0.0
    %8003 = vmatmul.mubr.f32.gmra.mxu0 %v7858
    %v8004 = vpop.f32.mrf.mxu0
    %v8005 = vadd.f32 0.0, %v8004
    %v8006 = vpop.f32.mrf.mxu0
    %8007 = vmatprep.mubr.f32.mxu0 0.0
    %8008 = vmatmul.mubr.f32.gmra.mxu0 %v7861
    %v8009 = vpop.f32.mrf.mxu0
    %v8010 = vadd.f32 0.0, %v8009
    %v8011 = vpop.f32.mrf.mxu0
    %8012 = vdwg.mxu0
    %8015 = vrot.lane.b32.xlu0 %v7766, 112
    %v8016 = vpop.permute.xlu0 %8015
    %8017 = vrot.lane.b32.xlu0 %v7767, 112
    %v8018 = vpop.permute.xlu0 %8017
    %8021 = vrot.lane.b32.xlu0 %v7839, 112
    %v8022 = vpop.permute.xlu0 %8021
    %8023 = vrot.lane.b32.xlu0 %v7844, 112
    %v8024 = vpop.permute.xlu0 %8023
    %v8027 = vsel %vm173, %v8016, 0
    %v8029 = vsel %vm173, %v8018, 0
    %8031 = vmatprep.subr.mxu0 0.0
    %8032 = vmatpush1.msra.mxu0 0.0
    %8033 = vmatprep.subr.mxu0 0.0
    %8034 = vmatpush1.msra.mxu0 0.0
    %8035 = vmatprep.subr.mxu0 0.0
    %8036 = vmatpush1.msra.mxu0 0.0
    %8037 = vmatprep.subr.mxu0 0.0
    %8038 = vmatpush1.msra.mxu0 0.0
    %8039 = vmatprep.subr.mxu0 0.0
    %8040 = vmatpush1.msra.mxu0 0.0
    %8041 = vmatprep.subr.mxu0 0.0
    %8042 = vmatpush1.msra.mxu0 0.0
    %8043 = vmatprep.subr.mxu0 0.0
    %8044 = vmatpush1.msra.mxu0 0.0
    %8045 = vmatprep.subr.mxu0 0.0
    %8046 = vmatpush1.msra.mxu0 0.0
    %8047 = vmatprep.subr.mxu0 0.0
    %8048 = vmatpush1.msra.mxu0 0.0
    %8049 = vmatprep.subr.mxu0 0.0
    %8050 = vmatpush1.msra.mxu0 0.0
    %8051 = vmatprep.subr.mxu0 0.0
    %8052 = vmatpush1.msra.mxu0 0.0
    %8053 = vmatprep.subr.mxu0 0.0
    %8054 = vmatpush1.msra.mxu0 0.0
    %8055 = vmatprep.subr.mxu0 0.0
    %8056 = vmatpush1.msra.mxu0 0.0
    %8057 = vmatprep.subr.mxu0 0.0
    %8058 = vmatpush1.msra.mxu0 0.0
    %8059 = vmatprep.subr.mxu0 0.0
    %8060 = vmatpush1.msra.mxu0 %v8024
    %8061 = vmatprep.subr.mxu0 0.0
    %8062 = vmatpush1.msra.mxu0 %v8022
    %8063 = vmatprep.subr.mxu0 0.0
    %8064 = vmatpush2.msra.mxu0 0.0
    %8065 = vmatprep.subr.mxu0 0.0
    %8066 = vmatpush2.msra.mxu0 0.0
    %8067 = vmatprep.subr.mxu0 0.0
    %8068 = vmatpush2.msra.mxu0 0.0
    %8069 = vmatprep.subr.mxu0 0.0
    %8070 = vmatpush2.msra.mxu0 0.0
    %8071 = vmatprep.subr.mxu0 0.0
    %8072 = vmatpush2.msra.mxu0 0.0
    %8073 = vmatprep.subr.mxu0 0.0
    %8074 = vmatpush2.msra.mxu0 0.0
    %8075 = vmatprep.subr.mxu0 0.0
    %8076 = vmatpush2.msra.mxu0 0.0
    %8077 = vmatprep.subr.mxu0 0.0
    %8078 = vmatpush2.msra.mxu0 0.0
    %8079 = vmatprep.subr.mxu0 0.0
    %8080 = vmatpush2.msra.mxu0 0.0
    %8081 = vmatprep.subr.mxu0 0.0
    %8082 = vmatpush2.msra.mxu0 0.0
    %8083 = vmatprep.subr.mxu0 0.0
    %8084 = vmatpush2.msra.mxu0 0.0
    %8085 = vmatprep.subr.mxu0 0.0
    %8086 = vmatpush2.msra.mxu0 0.0
    %8087 = vmatprep.subr.mxu0 0.0
    %8088 = vmatpush2.msra.mxu0 0.0
    %8089 = vmatprep.subr.mxu0 0.0
    %8090 = vmatpush2.msra.mxu0 0.0
    %8091 = vmatprep.subr.mxu0 0.0
    %8092 = vmatpush2.msra.mxu0 0.0
    %8093 = vmatprep.subr.mxu0 0.0
    %8094 = vmatpush2.msra.mxu0 0.0
    %8095 = vmatprep.mubr.f32.mxu0 0.0
    %8096 = vmatmul.mubr.f32.gmra.mxu0 %v8027
    %v8097 = vpop.f32.mrf.mxu0
    %v8098 = vadd.f32 0.0, %v8097
    %v8099 = vpop.f32.mrf.mxu0
    %8100 = vmatprep.mubr.f32.mxu0 0.0
    %8101 = vmatmul.mubr.f32.gmra.mxu0 %v8029
    %v8102 = vpop.f32.mrf.mxu0
    %v8103 = vadd.f32 0.0, %v8102
    %v8104 = vpop.f32.mrf.mxu0
    %8105 = vdwg.mxu0
    %8108 = vrot.lane.b32.xlu0 %v7849, 112
    %v8109 = vpop.permute.xlu0 %8108
    %8110 = vrot.lane.b32.xlu0 %v7854, 112
    %v8111 = vpop.permute.xlu0 %8110
    %8114 = vmatprep.subr.mxu0 0.0
    %8115 = vmatpush1.msra.mxu0 0.0
    %8116 = vmatprep.subr.mxu0 0.0
    %8117 = vmatpush1.msra.mxu0 0.0
    %8118 = vmatprep.subr.mxu0 0.0
    %8119 = vmatpush1.msra.mxu0 0.0
    %8120 = vmatprep.subr.mxu0 0.0
    %8121 = vmatpush1.msra.mxu0 0.0
    %8122 = vmatprep.subr.mxu0 0.0
    %8123 = vmatpush1.msra.mxu0 0.0
    %8124 = vmatprep.subr.mxu0 0.0
    %8125 = vmatpush1.msra.mxu0 0.0
    %8126 = vmatprep.subr.mxu0 0.0
    %8127 = vmatpush1.msra.mxu0 0.0
    %8128 = vmatprep.subr.mxu0 0.0
    %8129 = vmatpush1.msra.mxu0 0.0
    %8130 = vmatprep.subr.mxu0 0.0
    %8131 = vmatpush1.msra.mxu0 0.0
    %8132 = vmatprep.subr.mxu0 0.0
    %8133 = vmatpush1.msra.mxu0 0.0
    %8134 = vmatprep.subr.mxu0 0.0
    %8135 = vmatpush1.msra.mxu0 0.0
    %8136 = vmatprep.subr.mxu0 0.0
    %8137 = vmatpush1.msra.mxu0 0.0
    %8138 = vmatprep.subr.mxu0 0.0
    %8139 = vmatpush1.msra.mxu0 0.0
    %8140 = vmatprep.subr.mxu0 0.0
    %8141 = vmatpush1.msra.mxu0 0.0
    %8142 = vmatprep.subr.mxu0 0.0
    %8143 = vmatpush1.msra.mxu0 %v8111
    %8144 = vmatprep.subr.mxu0 0.0
    %8145 = vmatpush1.msra.mxu0 %v8109
    %8146 = vmatprep.subr.mxu0 0.0
    %8147 = vmatpush2.msra.mxu0 0.0
    %8148 = vmatprep.subr.mxu0 0.0
    %8149 = vmatpush2.msra.mxu0 0.0
    %8150 = vmatprep.subr.mxu0 0.0
    %8151 = vmatpush2.msra.mxu0 0.0
    %8152 = vmatprep.subr.mxu0 0.0
    %8153 = vmatpush2.msra.mxu0 0.0
    %8154 = vmatprep.subr.mxu0 0.0
    %8155 = vmatpush2.msra.mxu0 0.0
    %8156 = vmatprep.subr.mxu0 0.0
    %8157 = vmatpush2.msra.mxu0 0.0
    %8158 = vmatprep.subr.mxu0 0.0
    %8159 = vmatpush2.msra.mxu0 0.0
    %8160 = vmatprep.subr.mxu0 0.0
    %8161 = vmatpush2.msra.mxu0 0.0
    %8162 = vmatprep.subr.mxu0 0.0
    %8163 = vmatpush2.msra.mxu0 0.0
    %8164 = vmatprep.subr.mxu0 0.0
    %8165 = vmatpush2.msra.mxu0 0.0
    %8166 = vmatprep.subr.mxu0 0.0
    %8167 = vmatpush2.msra.mxu0 0.0
    %8168 = vmatprep.subr.mxu0 0.0
    %8169 = vmatpush2.msra.mxu0 0.0
    %8170 = vmatprep.subr.mxu0 0.0
    %8171 = vmatpush2.msra.mxu0 0.0
    %8172 = vmatprep.subr.mxu0 0.0
    %8173 = vmatpush2.msra.mxu0 0.0
    %8174 = vmatprep.subr.mxu0 0.0
    %8175 = vmatpush2.msra.mxu0 0.0
    %8176 = vmatprep.subr.mxu0 0.0
    %8177 = vmatpush2.msra.mxu0 0.0
    %8178 = vmatprep.mubr.f32.mxu0 0.0
    %8179 = vmatmul.mubr.f32.gmra.mxu0 %v8027
    %v8180 = vpop.f32.mrf.mxu0
    %v8181 = vadd.f32 0.0, %v8180
    %v8182 = vpop.f32.mrf.mxu0
    %8183 = vmatprep.mubr.f32.mxu0 0.0
    %8184 = vmatmul.mubr.f32.gmra.mxu0 %v8029
    %v8185 = vpop.f32.mrf.mxu0
    %v8186 = vadd.f32 0.0, %v8185
    %v8187 = vpop.f32.mrf.mxu0
    %8188 = vdwg.mxu0
    %8191 = vrot.lane.b32.xlu0 %v7768, 96
    %v8192 = vpop.permute.xlu0 %8191
    %8193 = vrot.lane.b32.xlu0 %v7769, 96
    %v8194 = vpop.permute.xlu0 %8193
    %8195 = vrot.lane.b32.xlu0 %v7839, 96
    %v8196 = vpop.permute.xlu0 %8195
    %8197 = vrot.lane.b32.xlu0 %v7844, 96
    %v8198 = vpop.permute.xlu0 %8197
    %v8201 = vsel %vm173, %v8192, 0
    %v8203 = vsel %vm173, %v8194, 0
    %8205 = vmatprep.subr.mxu0 0.0
    %8206 = vmatpush1.msra.mxu0 0.0
    %8207 = vmatprep.subr.mxu0 0.0
    %8208 = vmatpush1.msra.mxu0 0.0
    %8209 = vmatprep.subr.mxu0 0.0
    %8210 = vmatpush1.msra.mxu0 0.0
    %8211 = vmatprep.subr.mxu0 0.0
    %8212 = vmatpush1.msra.mxu0 0.0
    %8213 = vmatprep.subr.mxu0 0.0
    %8214 = vmatpush1.msra.mxu0 0.0
    %8215 = vmatprep.subr.mxu0 0.0
    %8216 = vmatpush1.msra.mxu0 0.0
    %8217 = vmatprep.subr.mxu0 0.0
    %8218 = vmatpush1.msra.mxu0 0.0
    %8219 = vmatprep.subr.mxu0 0.0
    %8220 = vmatpush1.msra.mxu0 0.0
    %8221 = vmatprep.subr.mxu0 0.0
    %8222 = vmatpush1.msra.mxu0 0.0
    %8223 = vmatprep.subr.mxu0 0.0
    %8224 = vmatpush1.msra.mxu0 0.0
    %8225 = vmatprep.subr.mxu0 0.0
    %8226 = vmatpush1.msra.mxu0 0.0
    %8227 = vmatprep.subr.mxu0 0.0
    %8228 = vmatpush1.msra.mxu0 0.0
    %8229 = vmatprep.subr.mxu0 0.0
    %8230 = vmatpush1.msra.mxu0 0.0
    %8231 = vmatprep.subr.mxu0 0.0
    %8232 = vmatpush1.msra.mxu0 0.0
    %8233 = vmatprep.subr.mxu0 0.0
    %8234 = vmatpush1.msra.mxu0 %v8198
    %8235 = vmatprep.subr.mxu0 0.0
    %8236 = vmatpush1.msra.mxu0 %v8196
    %8237 = vmatprep.subr.mxu0 0.0
    %8238 = vmatpush2.msra.mxu0 0.0
    %8239 = vmatprep.subr.mxu0 0.0
    %8240 = vmatpush2.msra.mxu0 0.0
    %8241 = vmatprep.subr.mxu0 0.0
    %8242 = vmatpush2.msra.mxu0 0.0
    %8243 = vmatprep.subr.mxu0 0.0
    %8244 = vmatpush2.msra.mxu0 0.0
    %8245 = vmatprep.subr.mxu0 0.0
    %8246 = vmatpush2.msra.mxu0 0.0
    %8247 = vmatprep.subr.mxu0 0.0
    %8248 = vmatpush2.msra.mxu0 0.0
    %8249 = vmatprep.subr.mxu0 0.0
    %8250 = vmatpush2.msra.mxu0 0.0
    %8251 = vmatprep.subr.mxu0 0.0
    %8252 = vmatpush2.msra.mxu0 0.0
    %8253 = vmatprep.subr.mxu0 0.0
    %8254 = vmatpush2.msra.mxu0 0.0
    %8255 = vmatprep.subr.mxu0 0.0
    %8256 = vmatpush2.msra.mxu0 0.0
    %8257 = vmatprep.subr.mxu0 0.0
    %8258 = vmatpush2.msra.mxu0 0.0
    %8259 = vmatprep.subr.mxu0 0.0
    %8260 = vmatpush2.msra.mxu0 0.0
    %8261 = vmatprep.subr.mxu0 0.0
    %8262 = vmatpush2.msra.mxu0 0.0
    %8263 = vmatprep.subr.mxu0 0.0
    %8264 = vmatpush2.msra.mxu0 0.0
    %8265 = vmatprep.subr.mxu0 0.0
    %8266 = vmatpush2.msra.mxu0 0.0
    %8267 = vmatprep.subr.mxu0 0.0
    %8268 = vmatpush2.msra.mxu0 0.0
    %8269 = vmatprep.mubr.f32.mxu0 0.0
    %8270 = vmatmul.mubr.f32.gmra.mxu0 %v8201
    %v8271 = vpop.f32.mrf.mxu0
    %v8272 = vadd.f32 0.0, %v8271
    %v8273 = vpop.f32.mrf.mxu0
    %8274 = vmatprep.mubr.f32.mxu0 0.0
    %8275 = vmatmul.mubr.f32.gmra.mxu0 %v8203
    %v8276 = vpop.f32.mrf.mxu0
    %v8277 = vadd.f32 0.0, %v8276
    %v8278 = vpop.f32.mrf.mxu0
    %8279 = vdwg.mxu0
    %8280 = vrot.lane.b32.xlu0 %v7849, 96
    %v8281 = vpop.permute.xlu0 %8280
    %8282 = vrot.lane.b32.xlu0 %v7854, 96
    %v8283 = vpop.permute.xlu0 %8282
    %8286 = vmatprep.subr.mxu0 0.0
    %8287 = vmatpush1.msra.mxu0 0.0
    %8288 = vmatprep.subr.mxu0 0.0
    %8289 = vmatpush1.msra.mxu0 0.0
    %8290 = vmatprep.subr.mxu0 0.0
    %8291 = vmatpush1.msra.mxu0 0.0
    %8292 = vmatprep.subr.mxu0 0.0
    %8293 = vmatpush1.msra.mxu0 0.0
    %8294 = vmatprep.subr.mxu0 0.0
    %8295 = vmatpush1.msra.mxu0 0.0
    %8296 = vmatprep.subr.mxu0 0.0
    %8297 = vmatpush1.msra.mxu0 0.0
    %8298 = vmatprep.subr.mxu0 0.0
    %8299 = vmatpush1.msra.mxu0 0.0
    %8300 = vmatprep.subr.mxu0 0.0
    %8301 = vmatpush1.msra.mxu0 0.0
    %8302 = vmatprep.subr.mxu0 0.0
    %8303 = vmatpush1.msra.mxu0 0.0
    %8304 = vmatprep.subr.mxu0 0.0
    %8305 = vmatpush1.msra.mxu0 0.0
    %8306 = vmatprep.subr.mxu0 0.0
    %8307 = vmatpush1.msra.mxu0 0.0
    %8308 = vmatprep.subr.mxu0 0.0
    %8309 = vmatpush1.msra.mxu0 0.0
    %8310 = vmatprep.subr.mxu0 0.0
    %8311 = vmatpush1.msra.mxu0 0.0
    %8312 = vmatprep.subr.mxu0 0.0
    %8313 = vmatpush1.msra.mxu0 0.0
    %8314 = vmatprep.subr.mxu0 0.0
    %8315 = vmatpush1.msra.mxu0 %v8283
    %8316 = vmatprep.subr.mxu0 0.0
    %8317 = vmatpush1.msra.mxu0 %v8281
    %8318 = vmatprep.subr.mxu0 0.0
    %8319 = vmatpush2.msra.mxu0 0.0
    %8320 = vmatprep.subr.mxu0 0.0
    %8321 = vmatpush2.msra.mxu0 0.0
    %8322 = vmatprep.subr.mxu0 0.0
    %8323 = vmatpush2.msra.mxu0 0.0
    %8324 = vmatprep.subr.mxu0 0.0
    %8325 = vmatpush2.msra.mxu0 0.0
    %8326 = vmatprep.subr.mxu0 0.0
    %8327 = vmatpush2.msra.mxu0 0.0
    %8328 = vmatprep.subr.mxu0 0.0
    %8329 = vmatpush2.msra.mxu0 0.0
    %8330 = vmatprep.subr.mxu0 0.0
    %8331 = vmatpush2.msra.mxu0 0.0
    %8332 = vmatprep.subr.mxu0 0.0
    %8333 = vmatpush2.msra.mxu0 0.0
    %8334 = vmatprep.subr.mxu0 0.0
    %8335 = vmatpush2.msra.mxu0 0.0
    %8336 = vmatprep.subr.mxu0 0.0
    %8337 = vmatpush2.msra.mxu0 0.0
    %8338 = vmatprep.subr.mxu0 0.0
    %8339 = vmatpush2.msra.mxu0 0.0
    %8340 = vmatprep.subr.mxu0 0.0
    %8341 = vmatpush2.msra.mxu0 0.0
    %8342 = vmatprep.subr.mxu0 0.0
    %8343 = vmatpush2.msra.mxu0 0.0
    %8344 = vmatprep.subr.mxu0 0.0
    %8345 = vmatpush2.msra.mxu0 0.0
    %8346 = vmatprep.subr.mxu0 0.0
    %8347 = vmatpush2.msra.mxu0 0.0
    %8348 = vmatprep.subr.mxu0 0.0
    %8349 = vmatpush2.msra.mxu0 0.0
    %8350 = vmatprep.mubr.f32.mxu0 0.0
    %8351 = vmatmul.mubr.f32.gmra.mxu0 %v8201
    %v8352 = vpop.f32.mrf.mxu0
    %v8353 = vadd.f32 0.0, %v8352
    %v8354 = vpop.f32.mrf.mxu0
    %8355 = vmatprep.mubr.f32.mxu0 0.0
    %8356 = vmatmul.mubr.f32.gmra.mxu0 %v8203
    %v8357 = vpop.f32.mrf.mxu0
    %v8358 = vadd.f32 0.0, %v8357
    %v8359 = vpop.f32.mrf.mxu0
    %8360 = vdwg.mxu0
    %8363 = vrot.lane.b32.xlu0 %v7770, 80
    %v8364 = vpop.permute.xlu0 %8363
    %8365 = vrot.lane.b32.xlu0 %v7771, 80
    %v8366 = vpop.permute.xlu0 %8365
    %8367 = vrot.lane.b32.xlu0 %v7839, 80
    %v8368 = vpop.permute.xlu0 %8367
    %8369 = vrot.lane.b32.xlu0 %v7844, 80
    %v8370 = vpop.permute.xlu0 %8369
    %v8373 = vsel %vm173, %v8364, 0
    %v8375 = vsel %vm173, %v8366, 0
    %8377 = vmatprep.subr.mxu0 0.0
    %8378 = vmatpush1.msra.mxu0 0.0
    %8379 = vmatprep.subr.mxu0 0.0
    %8380 = vmatpush1.msra.mxu0 0.0
    %8381 = vmatprep.subr.mxu0 0.0
    %8382 = vmatpush1.msra.mxu0 0.0
    %8383 = vmatprep.subr.mxu0 0.0
    %8384 = vmatpush1.msra.mxu0 0.0
    %8385 = vmatprep.subr.mxu0 0.0
    %8386 = vmatpush1.msra.mxu0 0.0
    %8387 = vmatprep.subr.mxu0 0.0
    %8388 = vmatpush1.msra.mxu0 0.0
    %8389 = vmatprep.subr.mxu0 0.0
    %8390 = vmatpush1.msra.mxu0 0.0
    %8391 = vmatprep.subr.mxu0 0.0
    %8392 = vmatpush1.msra.mxu0 0.0
    %8393 = vmatprep.subr.mxu0 0.0
    %8394 = vmatpush1.msra.mxu0 0.0
    %8395 = vmatprep.subr.mxu0 0.0
    %8396 = vmatpush1.msra.mxu0 0.0
    %8397 = vmatprep.subr.mxu0 0.0
    %8398 = vmatpush1.msra.mxu0 0.0
    %8399 = vmatprep.subr.mxu0 0.0
    %8400 = vmatpush1.msra.mxu0 0.0
    %8401 = vmatprep.subr.mxu0 0.0
    %8402 = vmatpush1.msra.mxu0 0.0
    %8403 = vmatprep.subr.mxu0 0.0
    %8404 = vmatpush1.msra.mxu0 0.0
    %8405 = vmatprep.subr.mxu0 0.0
    %8406 = vmatpush1.msra.mxu0 %v8370
    %8407 = vmatprep.subr.mxu0 0.0
    %8408 = vmatpush1.msra.mxu0 %v8368
    %8409 = vmatprep.subr.mxu0 0.0
    %8410 = vmatpush2.msra.mxu0 0.0
    %8411 = vmatprep.subr.mxu0 0.0
    %8412 = vmatpush2.msra.mxu0 0.0
    %8413 = vmatprep.subr.mxu0 0.0
    %8414 = vmatpush2.msra.mxu0 0.0
    %8415 = vmatprep.subr.mxu0 0.0
    %8416 = vmatpush2.msra.mxu0 0.0
    %8417 = vmatprep.subr.mxu0 0.0
    %8418 = vmatpush2.msra.mxu0 0.0
    %8419 = vmatprep.subr.mxu0 0.0
    %8420 = vmatpush2.msra.mxu0 0.0
    %8421 = vmatprep.subr.mxu0 0.0
    %8422 = vmatpush2.msra.mxu0 0.0
    %8423 = vmatprep.subr.mxu0 0.0
    %8424 = vmatpush2.msra.mxu0 0.0
    %8425 = vmatprep.subr.mxu0 0.0
    %8426 = vmatpush2.msra.mxu0 0.0
    %8427 = vmatprep.subr.mxu0 0.0
    %8428 = vmatpush2.msra.mxu0 0.0
    %8429 = vmatprep.subr.mxu0 0.0
    %8430 = vmatpush2.msra.mxu0 0.0
    %8431 = vmatprep.subr.mxu0 0.0
    %8432 = vmatpush2.msra.mxu0 0.0
    %8433 = vmatprep.subr.mxu0 0.0
    %8434 = vmatpush2.msra.mxu0 0.0
    %8435 = vmatprep.subr.mxu0 0.0
    %8436 = vmatpush2.msra.mxu0 0.0
    %8437 = vmatprep.subr.mxu0 0.0
    %8438 = vmatpush2.msra.mxu0 0.0
    %8439 = vmatprep.subr.mxu0 0.0
    %8440 = vmatpush2.msra.mxu0 0.0
    %8441 = vmatprep.mubr.f32.mxu0 0.0
    %8442 = vmatmul.mubr.f32.gmra.mxu0 %v8373
    %v8443 = vpop.f32.mrf.mxu0
    %v8444 = vadd.f32 0.0, %v8443
    %v8445 = vpop.f32.mrf.mxu0
    %8446 = vmatprep.mubr.f32.mxu0 0.0
    %8447 = vmatmul.mubr.f32.gmra.mxu0 %v8375
    %v8448 = vpop.f32.mrf.mxu0
    %v8449 = vadd.f32 0.0, %v8448
    %v8450 = vpop.f32.mrf.mxu0
    %8451 = vdwg.mxu0
    %8452 = vrot.lane.b32.xlu0 %v7849, 80
    %v8453 = vpop.permute.xlu0 %8452
    %8454 = vrot.lane.b32.xlu0 %v7854, 80
    %v8455 = vpop.permute.xlu0 %8454
    %8458 = vmatprep.subr.mxu0 0.0
    %8459 = vmatpush1.msra.mxu0 0.0
    %8460 = vmatprep.subr.mxu0 0.0
    %8461 = vmatpush1.msra.mxu0 0.0
    %8462 = vmatprep.subr.mxu0 0.0
    %8463 = vmatpush1.msra.mxu0 0.0
    %8464 = vmatprep.subr.mxu0 0.0
    %8465 = vmatpush1.msra.mxu0 0.0
    %8466 = vmatprep.subr.mxu0 0.0
    %8467 = vmatpush1.msra.mxu0 0.0
    %8468 = vmatprep.subr.mxu0 0.0
    %8469 = vmatpush1.msra.mxu0 0.0
    %8470 = vmatprep.subr.mxu0 0.0
    %8471 = vmatpush1.msra.mxu0 0.0
    %8472 = vmatprep.subr.mxu0 0.0
    %8473 = vmatpush1.msra.mxu0 0.0
    %8474 = vmatprep.subr.mxu0 0.0
    %8475 = vmatpush1.msra.mxu0 0.0
    %8476 = vmatprep.subr.mxu0 0.0
    %8477 = vmatpush1.msra.mxu0 0.0
    %8478 = vmatprep.subr.mxu0 0.0
    %8479 = vmatpush1.msra.mxu0 0.0
    %8480 = vmatprep.subr.mxu0 0.0
    %8481 = vmatpush1.msra.mxu0 0.0
    %8482 = vmatprep.subr.mxu0 0.0
    %8483 = vmatpush1.msra.mxu0 0.0
    %8484 = vmatprep.subr.mxu0 0.0
    %8485 = vmatpush1.msra.mxu0 0.0
    %8486 = vmatprep.subr.mxu0 0.0
    %8487 = vmatpush1.msra.mxu0 %v8455
    %8488 = vmatprep.subr.mxu0 0.0
    %8489 = vmatpush1.msra.mxu0 %v8453
    %8490 = vmatprep.subr.mxu0 0.0
    %8491 = vmatpush2.msra.mxu0 0.0
    %8492 = vmatprep.subr.mxu0 0.0
    %8493 = vmatpush2.msra.mxu0 0.0
    %8494 = vmatprep.subr.mxu0 0.0
    %8495 = vmatpush2.msra.mxu0 0.0
    %8496 = vmatprep.subr.mxu0 0.0
    %8497 = vmatpush2.msra.mxu0 0.0
    %8498 = vmatprep.subr.mxu0 0.0
    %8499 = vmatpush2.msra.mxu0 0.0
    %8500 = vmatprep.subr.mxu0 0.0
    %8501 = vmatpush2.msra.mxu0 0.0
    %8502 = vmatprep.subr.mxu0 0.0
    %8503 = vmatpush2.msra.mxu0 0.0
    %8504 = vmatprep.subr.mxu0 0.0
    %8505 = vmatpush2.msra.mxu0 0.0
    %8506 = vmatprep.subr.mxu0 0.0
    %8507 = vmatpush2.msra.mxu0 0.0
    %8508 = vmatprep.subr.mxu0 0.0
    %8509 = vmatpush2.msra.mxu0 0.0
    %8510 = vmatprep.subr.mxu0 0.0
    %8511 = vmatpush2.msra.mxu0 0.0
    %8512 = vmatprep.subr.mxu0 0.0
    %8513 = vmatpush2.msra.mxu0 0.0
    %8514 = vmatprep.subr.mxu0 0.0
    %8515 = vmatpush2.msra.mxu0 0.0
    %8516 = vmatprep.subr.mxu0 0.0
    %8517 = vmatpush2.msra.mxu0 0.0
    %8518 = vmatprep.subr.mxu0 0.0
    %8519 = vmatpush2.msra.mxu0 0.0
    %8520 = vmatprep.subr.mxu0 0.0
    %8521 = vmatpush2.msra.mxu0 0.0
    %8522 = vmatprep.mubr.f32.mxu0 0.0
    %8523 = vmatmul.mubr.f32.gmra.mxu0 %v8373
    %v8524 = vpop.f32.mrf.mxu0
    %v8525 = vadd.f32 0.0, %v8524
    %v8526 = vpop.f32.mrf.mxu0
    %8527 = vmatprep.mubr.f32.mxu0 0.0
    %8528 = vmatmul.mubr.f32.gmra.mxu0 %v8375
    %v8529 = vpop.f32.mrf.mxu0
    %v8530 = vadd.f32 0.0, %v8529
    %v8531 = vpop.f32.mrf.mxu0
    %8532 = vdwg.mxu0
    %8537 = vrot.lane.b32.xlu0 %v8098, 16
    %v8538 = vpop.permute.xlu0 %8537
    %8539 = vrot.lane.b32.xlu0 %v8103, 16
    %v8540 = vpop.permute.xlu0 %8539
    %8541 = vrot.lane.b32.xlu0 %v8181, 16
    %v8542 = vpop.permute.xlu0 %8541
    %8543 = vrot.lane.b32.xlu0 %v8186, 16
    %v8544 = vpop.permute.xlu0 %8543
    %8553 = vrot.lane.b32.xlu0 %v8272, 32
    %v8554 = vpop.permute.xlu0 %8553
    %8555 = vrot.lane.b32.xlu0 %v8277, 32
    %v8556 = vpop.permute.xlu0 %8555
    %8557 = vrot.lane.b32.xlu0 %v8353, 32
    %v8558 = vpop.permute.xlu0 %8557
    %8559 = vrot.lane.b32.xlu0 %v8358, 32
    %v8560 = vpop.permute.xlu0 %8559
    %8569 = vrot.lane.b32.xlu0 %v8444, 48
    %v8570 = vpop.permute.xlu0 %8569
    %8571 = vrot.lane.b32.xlu0 %v8449, 48
    %v8572 = vpop.permute.xlu0 %8571
    %8573 = vrot.lane.b32.xlu0 %v8525, 48
    %v8574 = vpop.permute.xlu0 %8573
    %8575 = vrot.lane.b32.xlu0 %v8530, 48
    %v8576 = vpop.permute.xlu0 %8575
    %v8581 = vsel %vm173, %v7930, %v8538
    %v8582 = vsel %vm173, %v7935, %v8540
    %v8583 = vsel %vm173, %v8005, %v8542
    %v8584 = vsel %vm173, %v8010, %v8544
    %v8585 = vsel %vm902, %v8581, %v8554
    %v8586 = vsel %vm902, %v8582, %v8556
    %v8587 = vsel %vm902, %v8583, %v8558
    %v8588 = vsel %vm902, %v8584, %v8560
    %v8589 = vsel %vm907, %v8585, %v8570
    %v8590 = vsel %vm907, %v8586, %v8572
    %v8591 = vsel %vm907, %v8587, %v8574
    %v8592 = vsel %vm907, %v8588, %v8576
    %v8593 = vstv %s6912
    %v8594 = vmul.f32 %v8593, %v1764
    %v8595 = vmul.f32 %v8593, %v1765
    %v8596 = vmul.f32 %v8593, %v1766
    %v8597 = vmul.f32 %v8593, %v1767
    %v8598 = vstv %s6913
    %v8599 = vmul.f32 %v8598, %v7750
    %v8600 = vmul.f32 %v8598, %v7751
    %v8601 = vmul.f32 %v8598, %v7752
    %v8602 = vmul.f32 %v8598, %v7753
    %v8603 = vadd.f32 %v8594, %v8599
    %v8604 = vadd.f32 %v8595, %v8600
    %v8605 = vadd.f32 %v8596, %v8601
    %v8606 = vadd.f32 %v8597, %v8602
    %v8607 = vstv %s6914
    %v8608 = vmul.f32 %v8607, %v8589
    %v8609 = vmul.f32 %v8607, %v8590
    %v8610 = vmul.f32 %v8607, %v8591
    %v8611 = vmul.f32 %v8607, %v8592
    %v8612 = vadd.f32 %v8603, %v8608
    %v8613 = vadd.f32 %v8604, %v8609
    %v8614 = vadd.f32 %v8605, %v8610
    %v8615 = vadd.f32 %v8606, %v8611
    %s8616 = sld [smem:[#allocation2 + $0xc]]
    %s8617 = sld [smem:[#allocation2 + $0xd]]
    %s8618 = sld [smem:[#allocation2 + $0xe]]
    %s8619 = scalar_lea.vmem [#allocation7], 1280
    %v8620 = vld [vmem:[%s8619] sm:$0xff]
    %v8621 = vld [vmem:[%s8619 + $0x8] sm:$0xff]
    %v8622 = vld [vmem:[%s8619 + $0x10] sm:$0xff]
    %v8623 = vld [vmem:[%s8619 + $0x18] sm:$0xff]
    %v8624 = vld [vmem:[%s8619 + $0x20] sm:$0xff]
    %v8625 = vld [vmem:[%s8619 + $0x28] sm:$0xff]
    %v8626 = vld [vmem:[%s8619 + $0x30] sm:$0xff]
    %v8627 = vld [vmem:[%s8619 + $0x38] sm:$0xff]
    %s8628 = scalar_lea.vmem [#allocation7], 1344
    %v8629 = vld [vmem:[%s8628] sm:$0xff]
    %v8630 = vld [vmem:[%s8628 + $0x8] sm:$0xff]
    %v8631 = vld [vmem:[%s8628 + $0x10] sm:$0xff]
    %v8632 = vld [vmem:[%s8628 + $0x18] sm:$0xff]
    %v8633 = vld [vmem:[%s8628 + $0x20] sm:$0xff]
    %v8634 = vld [vmem:[%s8628 + $0x28] sm:$0xff]
    %v8635 = vld [vmem:[%s8628 + $0x30] sm:$0xff]
    %v8636 = vld [vmem:[%s8628 + $0x38] sm:$0xff]
    %v8638 = vsel %vm75, %v5204, 0
    %v8641 = vsel %vm75, %v5205, 0
    %v8644 = vsel %vm75, %v5206, 0
    %v8647 = vsel %vm75, %v5207, 0
    %8649 = vmatprep.subr.mxu0 0.0
    %8650 = vmatpush1.msra.mxu0 0.0
    %8651 = vmatprep.subr.mxu0 0.0
    %8652 = vmatpush1.msra.mxu0 0.0
    %8653 = vmatprep.subr.mxu0 0.0
    %8654 = vmatpush1.msra.mxu0 0.0
    %8655 = vmatprep.subr.mxu0 0.0
    %8656 = vmatpush1.msra.mxu0 0.0
    %8657 = vmatprep.subr.mxu0 0.0
    %8658 = vmatpush1.msra.mxu0 0.0
    %8659 = vmatprep.subr.mxu0 0.0
    %8660 = vmatpush1.msra.mxu0 0.0
    %8661 = vmatprep.subr.mxu0 0.0
    %8662 = vmatpush1.msra.mxu0 0.0
    %8663 = vmatprep.subr.mxu0 0.0
    %8664 = vmatpush1.msra.mxu0 0.0
    %8665 = vmatprep.subr.mxu0 0.0
    %8666 = vmatpush1.msra.mxu0 %v8627
    %8667 = vmatprep.subr.mxu0 0.0
    %8668 = vmatpush1.msra.mxu0 %v8626
    %8669 = vmatprep.subr.mxu0 0.0
    %8670 = vmatpush1.msra.mxu0 %v8625
    %8671 = vmatprep.subr.mxu0 0.0
    %8672 = vmatpush1.msra.mxu0 %v8624
    %8673 = vmatprep.subr.mxu0 0.0
    %8674 = vmatpush1.msra.mxu0 %v8623
    %8675 = vmatprep.subr.mxu0 0.0
    %8676 = vmatpush1.msra.mxu0 %v8622
    %8677 = vmatprep.subr.mxu0 0.0
    %8678 = vmatpush1.msra.mxu0 %v8621
    %8679 = vmatprep.subr.mxu0 0.0
    %8680 = vmatpush1.msra.mxu0 %v8620
    %8681 = vmatprep.subr.mxu0 0.0
    %8682 = vmatpush2.msra.mxu0 0.0
    %8683 = vmatprep.subr.mxu0 0.0
    %8684 = vmatpush2.msra.mxu0 0.0
    %8685 = vmatprep.subr.mxu0 0.0
    %8686 = vmatpush2.msra.mxu0 0.0
    %8687 = vmatprep.subr.mxu0 0.0
    %8688 = vmatpush2.msra.mxu0 0.0
    %8689 = vmatprep.subr.mxu0 0.0
    %8690 = vmatpush2.msra.mxu0 0.0
    %8691 = vmatprep.subr.mxu0 0.0
    %8692 = vmatpush2.msra.mxu0 0.0
    %8693 = vmatprep.subr.mxu0 0.0
    %8694 = vmatpush2.msra.mxu0 0.0
    %8695 = vmatprep.subr.mxu0 0.0
    %8696 = vmatpush2.msra.mxu0 0.0
    %8697 = vmatprep.subr.mxu0 0.0
    %8698 = vmatpush2.msra.mxu0 0.0
    %8699 = vmatprep.subr.mxu0 0.0
    %8700 = vmatpush2.msra.mxu0 0.0
    %8701 = vmatprep.subr.mxu0 0.0
    %8702 = vmatpush2.msra.mxu0 0.0
    %8703 = vmatprep.subr.mxu0 0.0
    %8704 = vmatpush2.msra.mxu0 0.0
    %8705 = vmatprep.subr.mxu0 0.0
    %8706 = vmatpush2.msra.mxu0 0.0
    %8707 = vmatprep.subr.mxu0 0.0
    %8708 = vmatpush2.msra.mxu0 0.0
    %8709 = vmatprep.subr.mxu0 0.0
    %8710 = vmatpush2.msra.mxu0 0.0
    %8711 = vmatprep.subr.mxu0 0.0
    %8712 = vmatpush2.msra.mxu0 0.0
    %8713 = vmatprep.mubr.f32.mxu0 0.0
    %8714 = vmatmul.mubr.f32.gmra.mxu0 %v8638
    %v8715 = vpop.f32.mrf.mxu0
    %v8716 = vadd.f32 0.0, %v8715
    %v8717 = vpop.f32.mrf.mxu0
    %8718 = vmatprep.mubr.f32.mxu0 0.0
    %8719 = vmatmul.mubr.f32.gmra.mxu0 %v8641
    %v8720 = vpop.f32.mrf.mxu0
    %v8721 = vadd.f32 0.0, %v8720
    %v8722 = vpop.f32.mrf.mxu0
    %8723 = vmatprep.mubr.f32.mxu0 0.0
    %8724 = vmatmul.mubr.f32.gmra.mxu0 %v8644
    %v8725 = vpop.f32.mrf.mxu0
    %v8726 = vadd.f32 0.0, %v8725
    %v8727 = vpop.f32.mrf.mxu0
    %8728 = vmatprep.mubr.f32.mxu0 0.0
    %8729 = vmatmul.mubr.f32.gmra.mxu0 %v8647
    %v8730 = vpop.f32.mrf.mxu0
    %v8731 = vadd.f32 0.0, %v8730
    %v8732 = vpop.f32.mrf.mxu0
    %8733 = vdwg.mxu0
    %v8735 = vsel %vm173, %v8629, 0
    %v8738 = vsel %vm173, %v8630, 0
    %8740 = vmatprep.subr.mxu0 0.0
    %8741 = vmatpush1.msra.mxu0 0.0
    %8742 = vmatprep.subr.mxu0 0.0
    %8743 = vmatpush1.msra.mxu0 0.0
    %8744 = vmatprep.subr.mxu0 0.0
    %8745 = vmatpush1.msra.mxu0 0.0
    %8746 = vmatprep.subr.mxu0 0.0
    %8747 = vmatpush1.msra.mxu0 0.0
    %8748 = vmatprep.subr.mxu0 0.0
    %8749 = vmatpush1.msra.mxu0 0.0
    %8750 = vmatprep.subr.mxu0 0.0
    %8751 = vmatpush1.msra.mxu0 0.0
    %8752 = vmatprep.subr.mxu0 0.0
    %8753 = vmatpush1.msra.mxu0 0.0
    %8754 = vmatprep.subr.mxu0 0.0
    %8755 = vmatpush1.msra.mxu0 0.0
    %8756 = vmatprep.subr.mxu0 0.0
    %8757 = vmatpush1.msra.mxu0 0.0
    %8758 = vmatprep.subr.mxu0 0.0
    %8759 = vmatpush1.msra.mxu0 0.0
    %8760 = vmatprep.subr.mxu0 0.0
    %8761 = vmatpush1.msra.mxu0 0.0
    %8762 = vmatprep.subr.mxu0 0.0
    %8763 = vmatpush1.msra.mxu0 0.0
    %8764 = vmatprep.subr.mxu0 0.0
    %8765 = vmatpush1.msra.mxu0 0.0
    %8766 = vmatprep.subr.mxu0 0.0
    %8767 = vmatpush1.msra.mxu0 0.0
    %8768 = vmatprep.subr.mxu0 0.0
    %8769 = vmatpush1.msra.mxu0 %v8721
    %8770 = vmatprep.subr.mxu0 0.0
    %8771 = vmatpush1.msra.mxu0 %v8716
    %8772 = vmatprep.subr.mxu0 0.0
    %8773 = vmatpush2.msra.mxu0 0.0
    %8774 = vmatprep.subr.mxu0 0.0
    %8775 = vmatpush2.msra.mxu0 0.0
    %8776 = vmatprep.subr.mxu0 0.0
    %8777 = vmatpush2.msra.mxu0 0.0
    %8778 = vmatprep.subr.mxu0 0.0
    %8779 = vmatpush2.msra.mxu0 0.0
    %8780 = vmatprep.subr.mxu0 0.0
    %8781 = vmatpush2.msra.mxu0 0.0
    %8782 = vmatprep.subr.mxu0 0.0
    %8783 = vmatpush2.msra.mxu0 0.0
    %8784 = vmatprep.subr.mxu0 0.0
    %8785 = vmatpush2.msra.mxu0 0.0
    %8786 = vmatprep.subr.mxu0 0.0
    %8787 = vmatpush2.msra.mxu0 0.0
    %8788 = vmatprep.subr.mxu0 0.0
    %8789 = vmatpush2.msra.mxu0 0.0
    %8790 = vmatprep.subr.mxu0 0.0
    %8791 = vmatpush2.msra.mxu0 0.0
    %8792 = vmatprep.subr.mxu0 0.0
    %8793 = vmatpush2.msra.mxu0 0.0
    %8794 = vmatprep.subr.mxu0 0.0
    %8795 = vmatpush2.msra.mxu0 0.0
    %8796 = vmatprep.subr.mxu0 0.0
    %8797 = vmatpush2.msra.mxu0 0.0
    %8798 = vmatprep.subr.mxu0 0.0
    %8799 = vmatpush2.msra.mxu0 0.0
    %8800 = vmatprep.subr.mxu0 0.0
    %8801 = vmatpush2.msra.mxu0 0.0
    %8802 = vmatprep.subr.mxu0 0.0
    %8803 = vmatpush2.msra.mxu0 0.0
    %8804 = vmatprep.mubr.f32.mxu0 0.0
    %8805 = vmatmul.mubr.f32.gmra.mxu0 %v8735
    %v8806 = vpop.f32.mrf.mxu0
    %v8807 = vadd.f32 0.0, %v8806
    %v8808 = vpop.f32.mrf.mxu0
    %8809 = vmatprep.mubr.f32.mxu0 0.0
    %8810 = vmatmul.mubr.f32.gmra.mxu0 %v8738
    %v8811 = vpop.f32.mrf.mxu0
    %v8812 = vadd.f32 0.0, %v8811
    %v8813 = vpop.f32.mrf.mxu0
    %8814 = vdwg.mxu0
    %8815 = vmatprep.subr.mxu0 0.0
    %8816 = vmatpush1.msra.mxu0 0.0
    %8817 = vmatprep.subr.mxu0 0.0
    %8818 = vmatpush1.msra.mxu0 0.0
    %8819 = vmatprep.subr.mxu0 0.0
    %8820 = vmatpush1.msra.mxu0 0.0
    %8821 = vmatprep.subr.mxu0 0.0
    %8822 = vmatpush1.msra.mxu0 0.0
    %8823 = vmatprep.subr.mxu0 0.0
    %8824 = vmatpush1.msra.mxu0 0.0
    %8825 = vmatprep.subr.mxu0 0.0
    %8826 = vmatpush1.msra.mxu0 0.0
    %8827 = vmatprep.subr.mxu0 0.0
    %8828 = vmatpush1.msra.mxu0 0.0
    %8829 = vmatprep.subr.mxu0 0.0
    %8830 = vmatpush1.msra.mxu0 0.0
    %8831 = vmatprep.subr.mxu0 0.0
    %8832 = vmatpush1.msra.mxu0 0.0
    %8833 = vmatprep.subr.mxu0 0.0
    %8834 = vmatpush1.msra.mxu0 0.0
    %8835 = vmatprep.subr.mxu0 0.0
    %8836 = vmatpush1.msra.mxu0 0.0
    %8837 = vmatprep.subr.mxu0 0.0
    %8838 = vmatpush1.msra.mxu0 0.0
    %8839 = vmatprep.subr.mxu0 0.0
    %8840 = vmatpush1.msra.mxu0 0.0
    %8841 = vmatprep.subr.mxu0 0.0
    %8842 = vmatpush1.msra.mxu0 0.0
    %8843 = vmatprep.subr.mxu0 0.0
    %8844 = vmatpush1.msra.mxu0 %v8731
    %8845 = vmatprep.subr.mxu0 0.0
    %8846 = vmatpush1.msra.mxu0 %v8726
    %8847 = vmatprep.subr.mxu0 0.0
    %8848 = vmatpush2.msra.mxu0 0.0
    %8849 = vmatprep.subr.mxu0 0.0
    %8850 = vmatpush2.msra.mxu0 0.0
    %8851 = vmatprep.subr.mxu0 0.0
    %8852 = vmatpush2.msra.mxu0 0.0
    %8853 = vmatprep.subr.mxu0 0.0
    %8854 = vmatpush2.msra.mxu0 0.0
    %8855 = vmatprep.subr.mxu0 0.0
    %8856 = vmatpush2.msra.mxu0 0.0
    %8857 = vmatprep.subr.mxu0 0.0
    %8858 = vmatpush2.msra.mxu0 0.0
    %8859 = vmatprep.subr.mxu0 0.0
    %8860 = vmatpush2.msra.mxu0 0.0
    %8861 = vmatprep.subr.mxu0 0.0
    %8862 = vmatpush2.msra.mxu0 0.0
    %8863 = vmatprep.subr.mxu0 0.0
    %8864 = vmatpush2.msra.mxu0 0.0
    %8865 = vmatprep.subr.mxu0 0.0
    %8866 = vmatpush2.msra.mxu0 0.0
    %8867 = vmatprep.subr.mxu0 0.0
    %8868 = vmatpush2.msra.mxu0 0.0
    %8869 = vmatprep.subr.mxu0 0.0
    %8870 = vmatpush2.msra.mxu0 0.0
    %8871 = vmatprep.subr.mxu0 0.0
    %8872 = vmatpush2.msra.mxu0 0.0
    %8873 = vmatprep.subr.mxu0 0.0
    %8874 = vmatpush2.msra.mxu0 0.0
    %8875 = vmatprep.subr.mxu0 0.0
    %8876 = vmatpush2.msra.mxu0 0.0
    %8877 = vmatprep.subr.mxu0 0.0
    %8878 = vmatpush2.msra.mxu0 0.0
    %8879 = vmatprep.mubr.f32.mxu0 0.0
    %8880 = vmatmul.mubr.f32.gmra.mxu0 %v8735
    %v8881 = vpop.f32.mrf.mxu0
    %v8882 = vadd.f32 0.0, %v8881
    %v8883 = vpop.f32.mrf.mxu0
    %8884 = vmatprep.mubr.f32.mxu0 0.0
    %8885 = vmatmul.mubr.f32.gmra.mxu0 %v8738
    %v8886 = vpop.f32.mrf.mxu0
    %v8887 = vadd.f32 0.0, %v8886
    %v8888 = vpop.f32.mrf.mxu0
    %8889 = vdwg.mxu0
    %8892 = vrot.lane.b32.xlu0 %v8631, 112
    %v8893 = vpop.permute.xlu0 %8892
    %8894 = vrot.lane.b32.xlu0 %v8632, 112
    %v8895 = vpop.permute.xlu0 %8894
    %8898 = vrot.lane.b32.xlu0 %v8716, 112
    %v8899 = vpop.permute.xlu0 %8898
    %8900 = vrot.lane.b32.xlu0 %v8721, 112
    %v8901 = vpop.permute.xlu0 %8900
    %v8904 = vsel %vm173, %v8893, 0
    %v8906 = vsel %vm173, %v8895, 0
    %8908 = vmatprep.subr.mxu0 0.0
    %8909 = vmatpush1.msra.mxu0 0.0
    %8910 = vmatprep.subr.mxu0 0.0
    %8911 = vmatpush1.msra.mxu0 0.0
    %8912 = vmatprep.subr.mxu0 0.0
    %8913 = vmatpush1.msra.mxu0 0.0
    %8914 = vmatprep.subr.mxu0 0.0
    %8915 = vmatpush1.msra.mxu0 0.0
    %8916 = vmatprep.subr.mxu0 0.0
    %8917 = vmatpush1.msra.mxu0 0.0
    %8918 = vmatprep.subr.mxu0 0.0
    %8919 = vmatpush1.msra.mxu0 0.0
    %8920 = vmatprep.subr.mxu0 0.0
    %8921 = vmatpush1.msra.mxu0 0.0
    %8922 = vmatprep.subr.mxu0 0.0
    %8923 = vmatpush1.msra.mxu0 0.0
    %8924 = vmatprep.subr.mxu0 0.0
    %8925 = vmatpush1.msra.mxu0 0.0
    %8926 = vmatprep.subr.mxu0 0.0
    %8927 = vmatpush1.msra.mxu0 0.0
    %8928 = vmatprep.subr.mxu0 0.0
    %8929 = vmatpush1.msra.mxu0 0.0
    %8930 = vmatprep.subr.mxu0 0.0
    %8931 = vmatpush1.msra.mxu0 0.0
    %8932 = vmatprep.subr.mxu0 0.0
    %8933 = vmatpush1.msra.mxu0 0.0
    %8934 = vmatprep.subr.mxu0 0.0
    %8935 = vmatpush1.msra.mxu0 0.0
    %8936 = vmatprep.subr.mxu0 0.0
    %8937 = vmatpush1.msra.mxu0 %v8901
    %8938 = vmatprep.subr.mxu0 0.0
    %8939 = vmatpush1.msra.mxu0 %v8899
    %8940 = vmatprep.subr.mxu0 0.0
    %8941 = vmatpush2.msra.mxu0 0.0
    %8942 = vmatprep.subr.mxu0 0.0
    %8943 = vmatpush2.msra.mxu0 0.0
    %8944 = vmatprep.subr.mxu0 0.0
    %8945 = vmatpush2.msra.mxu0 0.0
    %8946 = vmatprep.subr.mxu0 0.0
    %8947 = vmatpush2.msra.mxu0 0.0
    %8948 = vmatprep.subr.mxu0 0.0
    %8949 = vmatpush2.msra.mxu0 0.0
    %8950 = vmatprep.subr.mxu0 0.0
    %8951 = vmatpush2.msra.mxu0 0.0
    %8952 = vmatprep.subr.mxu0 0.0
    %8953 = vmatpush2.msra.mxu0 0.0
    %8954 = vmatprep.subr.mxu0 0.0
    %8955 = vmatpush2.msra.mxu0 0.0
    %8956 = vmatprep.subr.mxu0 0.0
    %8957 = vmatpush2.msra.mxu0 0.0
    %8958 = vmatprep.subr.mxu0 0.0
    %8959 = vmatpush2.msra.mxu0 0.0
    %8960 = vmatprep.subr.mxu0 0.0
    %8961 = vmatpush2.msra.mxu0 0.0
    %8962 = vmatprep.subr.mxu0 0.0
    %8963 = vmatpush2.msra.mxu0 0.0
    %8964 = vmatprep.subr.mxu0 0.0
    %8965 = vmatpush2.msra.mxu0 0.0
    %8966 = vmatprep.subr.mxu0 0.0
    %8967 = vmatpush2.msra.mxu0 0.0
    %8968 = vmatprep.subr.mxu0 0.0
    %8969 = vmatpush2.msra.mxu0 0.0
    %8970 = vmatprep.subr.mxu0 0.0
    %8971 = vmatpush2.msra.mxu0 0.0
    %8972 = vmatprep.mubr.f32.mxu0 0.0
    %8973 = vmatmul.mubr.f32.gmra.mxu0 %v8904
    %v8974 = vpop.f32.mrf.mxu0
    %v8975 = vadd.f32 0.0, %v8974
    %v8976 = vpop.f32.mrf.mxu0
    %8977 = vmatprep.mubr.f32.mxu0 0.0
    %8978 = vmatmul.mubr.f32.gmra.mxu0 %v8906
    %v8979 = vpop.f32.mrf.mxu0
    %v8980 = vadd.f32 0.0, %v8979
    %v8981 = vpop.f32.mrf.mxu0
    %8982 = vdwg.mxu0
    %8985 = vrot.lane.b32.xlu0 %v8726, 112
    %v8986 = vpop.permute.xlu0 %8985
    %8987 = vrot.lane.b32.xlu0 %v8731, 112
    %v8988 = vpop.permute.xlu0 %8987
    %8991 = vmatprep.subr.mxu0 0.0
    %8992 = vmatpush1.msra.mxu0 0.0
    %8993 = vmatprep.subr.mxu0 0.0
    %8994 = vmatpush1.msra.mxu0 0.0
    %8995 = vmatprep.subr.mxu0 0.0
    %8996 = vmatpush1.msra.mxu0 0.0
    %8997 = vmatprep.subr.mxu0 0.0
    %8998 = vmatpush1.msra.mxu0 0.0
    %8999 = vmatprep.subr.mxu0 0.0
    %9000 = vmatpush1.msra.mxu0 0.0
    %9001 = vmatprep.subr.mxu0 0.0
    %9002 = vmatpush1.msra.mxu0 0.0
    %9003 = vmatprep.subr.mxu0 0.0
    %9004 = vmatpush1.msra.mxu0 0.0
    %9005 = vmatprep.subr.mxu0 0.0
    %9006 = vmatpush1.msra.mxu0 0.0
    %9007 = vmatprep.subr.mxu0 0.0
    %9008 = vmatpush1.msra.mxu0 0.0
    %9009 = vmatprep.subr.mxu0 0.0
    %9010 = vmatpush1.msra.mxu0 0.0
    %9011 = vmatprep.subr.mxu0 0.0
    %9012 = vmatpush1.msra.mxu0 0.0
    %9013 = vmatprep.subr.mxu0 0.0
    %9014 = vmatpush1.msra.mxu0 0.0
    %9015 = vmatprep.subr.mxu0 0.0
    %9016 = vmatpush1.msra.mxu0 0.0
    %9017 = vmatprep.subr.mxu0 0.0
    %9018 = vmatpush1.msra.mxu0 0.0
    %9019 = vmatprep.subr.mxu0 0.0
    %9020 = vmatpush1.msra.mxu0 %v8988
    %9021 = vmatprep.subr.mxu0 0.0
    %9022 = vmatpush1.msra.mxu0 %v8986
    %9023 = vmatprep.subr.mxu0 0.0
    %9024 = vmatpush2.msra.mxu0 0.0
    %9025 = vmatprep.subr.mxu0 0.0
    %9026 = vmatpush2.msra.mxu0 0.0
    %9027 = vmatprep.subr.mxu0 0.0
    %9028 = vmatpush2.msra.mxu0 0.0
    %9029 = vmatprep.subr.mxu0 0.0
    %9030 = vmatpush2.msra.mxu0 0.0
    %9031 = vmatprep.subr.mxu0 0.0
    %9032 = vmatpush2.msra.mxu0 0.0
    %9033 = vmatprep.subr.mxu0 0.0
    %9034 = vmatpush2.msra.mxu0 0.0
    %9035 = vmatprep.subr.mxu0 0.0
    %9036 = vmatpush2.msra.mxu0 0.0
    %9037 = vmatprep.subr.mxu0 0.0
    %9038 = vmatpush2.msra.mxu0 0.0
    %9039 = vmatprep.subr.mxu0 0.0
    %9040 = vmatpush2.msra.mxu0 0.0
    %9041 = vmatprep.subr.mxu0 0.0
    %9042 = vmatpush2.msra.mxu0 0.0
    %9043 = vmatprep.subr.mxu0 0.0
    %9044 = vmatpush2.msra.mxu0 0.0
    %9045 = vmatprep.subr.mxu0 0.0
    %9046 = vmatpush2.msra.mxu0 0.0
    %9047 = vmatprep.subr.mxu0 0.0
    %9048 = vmatpush2.msra.mxu0 0.0
    %9049 = vmatprep.subr.mxu0 0.0
    %9050 = vmatpush2.msra.mxu0 0.0
    %9051 = vmatprep.subr.mxu0 0.0
    %9052 = vmatpush2.msra.mxu0 0.0
    %9053 = vmatprep.subr.mxu0 0.0
    %9054 = vmatpush2.msra.mxu0 0.0
    %9055 = vmatprep.mubr.f32.mxu0 0.0
    %9056 = vmatmul.mubr.f32.gmra.mxu0 %v8904
    %v9057 = vpop.f32.mrf.mxu0
    %v9058 = vadd.f32 0.0, %v9057
    %v9059 = vpop.f32.mrf.mxu0
    %9060 = vmatprep.mubr.f32.mxu0 0.0
    %9061 = vmatmul.mubr.f32.gmra.mxu0 %v8906
    %v9062 = vpop.f32.mrf.mxu0
    %v9063 = vadd.f32 0.0, %v9062
    %v9064 = vpop.f32.mrf.mxu0
    %9065 = vdwg.mxu0
    %9068 = vrot.lane.b32.xlu0 %v8633, 96
    %v9069 = vpop.permute.xlu0 %9068
    %9070 = vrot.lane.b32.xlu0 %v8634, 96
    %v9071 = vpop.permute.xlu0 %9070
    %9072 = vrot.lane.b32.xlu0 %v8716, 96
    %v9073 = vpop.permute.xlu0 %9072
    %9074 = vrot.lane.b32.xlu0 %v8721, 96
    %v9075 = vpop.permute.xlu0 %9074
    %v9078 = vsel %vm173, %v9069, 0
    %v9080 = vsel %vm173, %v9071, 0
    %9082 = vmatprep.subr.mxu0 0.0
    %9083 = vmatpush1.msra.mxu0 0.0
    %9084 = vmatprep.subr.mxu0 0.0
    %9085 = vmatpush1.msra.mxu0 0.0
    %9086 = vmatprep.subr.mxu0 0.0
    %9087 = vmatpush1.msra.mxu0 0.0
    %9088 = vmatprep.subr.mxu0 0.0
    %9089 = vmatpush1.msra.mxu0 0.0
    %9090 = vmatprep.subr.mxu0 0.0
    %9091 = vmatpush1.msra.mxu0 0.0
    %9092 = vmatprep.subr.mxu0 0.0
    %9093 = vmatpush1.msra.mxu0 0.0
    %9094 = vmatprep.subr.mxu0 0.0
    %9095 = vmatpush1.msra.mxu0 0.0
    %9096 = vmatprep.subr.mxu0 0.0
    %9097 = vmatpush1.msra.mxu0 0.0
    %9098 = vmatprep.subr.mxu0 0.0
    %9099 = vmatpush1.msra.mxu0 0.0
    %9100 = vmatprep.subr.mxu0 0.0
    %9101 = vmatpush1.msra.mxu0 0.0
    %9102 = vmatprep.subr.mxu0 0.0
    %9103 = vmatpush1.msra.mxu0 0.0
    %9104 = vmatprep.subr.mxu0 0.0
    %9105 = vmatpush1.msra.mxu0 0.0
    %9106 = vmatprep.subr.mxu0 0.0
    %9107 = vmatpush1.msra.mxu0 0.0
    %9108 = vmatprep.subr.mxu0 0.0
    %9109 = vmatpush1.msra.mxu0 0.0
    %9110 = vmatprep.subr.mxu0 0.0
    %9111 = vmatpush1.msra.mxu0 %v9075
    %9112 = vmatprep.subr.mxu0 0.0
    %9113 = vmatpush1.msra.mxu0 %v9073
    %9114 = vmatprep.subr.mxu0 0.0
    %9115 = vmatpush2.msra.mxu0 0.0
    %9116 = vmatprep.subr.mxu0 0.0
    %9117 = vmatpush2.msra.mxu0 0.0
    %9118 = vmatprep.subr.mxu0 0.0
    %9119 = vmatpush2.msra.mxu0 0.0
    %9120 = vmatprep.subr.mxu0 0.0
    %9121 = vmatpush2.msra.mxu0 0.0
    %9122 = vmatprep.subr.mxu0 0.0
    %9123 = vmatpush2.msra.mxu0 0.0
    %9124 = vmatprep.subr.mxu0 0.0
    %9125 = vmatpush2.msra.mxu0 0.0
    %9126 = vmatprep.subr.mxu0 0.0
    %9127 = vmatpush2.msra.mxu0 0.0
    %9128 = vmatprep.subr.mxu0 0.0
    %9129 = vmatpush2.msra.mxu0 0.0
    %9130 = vmatprep.subr.mxu0 0.0
    %9131 = vmatpush2.msra.mxu0 0.0
    %9132 = vmatprep.subr.mxu0 0.0
    %9133 = vmatpush2.msra.mxu0 0.0
    %9134 = vmatprep.subr.mxu0 0.0
    %9135 = vmatpush2.msra.mxu0 0.0
    %9136 = vmatprep.subr.mxu0 0.0
    %9137 = vmatpush2.msra.mxu0 0.0
    %9138 = vmatprep.subr.mxu0 0.0
    %9139 = vmatpush2.msra.mxu0 0.0
    %9140 = vmatprep.subr.mxu0 0.0
    %9141 = vmatpush2.msra.mxu0 0.0
    %9142 = vmatprep.subr.mxu0 0.0
    %9143 = vmatpush2.msra.mxu0 0.0
    %9144 = vmatprep.subr.mxu0 0.0
    %9145 = vmatpush2.msra.mxu0 0.0
    %9146 = vmatprep.mubr.f32.mxu0 0.0
    %9147 = vmatmul.mubr.f32.gmra.mxu0 %v9078
    %v9148 = vpop.f32.mrf.mxu0
    %v9149 = vadd.f32 0.0, %v9148
    %v9150 = vpop.f32.mrf.mxu0
    %9151 = vmatprep.mubr.f32.mxu0 0.0
    %9152 = vmatmul.mubr.f32.gmra.mxu0 %v9080
    %v9153 = vpop.f32.mrf.mxu0
    %v9154 = vadd.f32 0.0, %v9153
    %v9155 = vpop.f32.mrf.mxu0
    %9156 = vdwg.mxu0
    %9157 = vrot.lane.b32.xlu0 %v8726, 96
    %v9158 = vpop.permute.xlu0 %9157
    %9159 = vrot.lane.b32.xlu0 %v8731, 96
    %v9160 = vpop.permute.xlu0 %9159
    %9163 = vmatprep.subr.mxu0 0.0
    %9164 = vmatpush1.msra.mxu0 0.0
    %9165 = vmatprep.subr.mxu0 0.0
    %9166 = vmatpush1.msra.mxu0 0.0
    %9167 = vmatprep.subr.mxu0 0.0
    %9168 = vmatpush1.msra.mxu0 0.0
    %9169 = vmatprep.subr.mxu0 0.0
    %9170 = vmatpush1.msra.mxu0 0.0
    %9171 = vmatprep.subr.mxu0 0.0
    %9172 = vmatpush1.msra.mxu0 0.0
    %9173 = vmatprep.subr.mxu0 0.0
    %9174 = vmatpush1.msra.mxu0 0.0
    %9175 = vmatprep.subr.mxu0 0.0
    %9176 = vmatpush1.msra.mxu0 0.0
    %9177 = vmatprep.subr.mxu0 0.0
    %9178 = vmatpush1.msra.mxu0 0.0
    %9179 = vmatprep.subr.mxu0 0.0
    %9180 = vmatpush1.msra.mxu0 0.0
    %9181 = vmatprep.subr.mxu0 0.0
    %9182 = vmatpush1.msra.mxu0 0.0
    %9183 = vmatprep.subr.mxu0 0.0
    %9184 = vmatpush1.msra.mxu0 0.0
    %9185 = vmatprep.subr.mxu0 0.0
    %9186 = vmatpush1.msra.mxu0 0.0
    %9187 = vmatprep.subr.mxu0 0.0
    %9188 = vmatpush1.msra.mxu0 0.0
    %9189 = vmatprep.subr.mxu0 0.0
    %9190 = vmatpush1.msra.mxu0 0.0
    %9191 = vmatprep.subr.mxu0 0.0
    %9192 = vmatpush1.msra.mxu0 %v9160
    %9193 = vmatprep.subr.mxu0 0.0
    %9194 = vmatpush1.msra.mxu0 %v9158
    %9195 = vmatprep.subr.mxu0 0.0
    %9196 = vmatpush2.msra.mxu0 0.0
    %9197 = vmatprep.subr.mxu0 0.0
    %9198 = vmatpush2.msra.mxu0 0.0
    %9199 = vmatprep.subr.mxu0 0.0
    %9200 = vmatpush2.msra.mxu0 0.0
    %9201 = vmatprep.subr.mxu0 0.0
    %9202 = vmatpush2.msra.mxu0 0.0
    %9203 = vmatprep.subr.mxu0 0.0
    %9204 = vmatpush2.msra.mxu0 0.0
    %9205 = vmatprep.subr.mxu0 0.0
    %9206 = vmatpush2.msra.mxu0 0.0
    %9207 = vmatprep.subr.mxu0 0.0
    %9208 = vmatpush2.msra.mxu0 0.0
    %9209 = vmatprep.subr.mxu0 0.0
    %9210 = vmatpush2.msra.mxu0 0.0
    %9211 = vmatprep.subr.mxu0 0.0
    %9212 = vmatpush2.msra.mxu0 0.0
    %9213 = vmatprep.subr.mxu0 0.0
    %9214 = vmatpush2.msra.mxu0 0.0
    %9215 = vmatprep.subr.mxu0 0.0
    %9216 = vmatpush2.msra.mxu0 0.0
    %9217 = vmatprep.subr.mxu0 0.0
    %9218 = vmatpush2.msra.mxu0 0.0
    %9219 = vmatprep.subr.mxu0 0.0
    %9220 = vmatpush2.msra.mxu0 0.0
    %9221 = vmatprep.subr.mxu0 0.0
    %9222 = vmatpush2.msra.mxu0 0.0
    %9223 = vmatprep.subr.mxu0 0.0
    %9224 = vmatpush2.msra.mxu0 0.0
    %9225 = vmatprep.subr.mxu0 0.0
    %9226 = vmatpush2.msra.mxu0 0.0
    %9227 = vmatprep.mubr.f32.mxu0 0.0
    %9228 = vmatmul.mubr.f32.gmra.mxu0 %v9078
    %v9229 = vpop.f32.mrf.mxu0
    %v9230 = vadd.f32 0.0, %v9229
    %v9231 = vpop.f32.mrf.mxu0
    %9232 = vmatprep.mubr.f32.mxu0 0.0
    %9233 = vmatmul.mubr.f32.gmra.mxu0 %v9080
    %v9234 = vpop.f32.mrf.mxu0
    %v9235 = vadd.f32 0.0, %v9234
    %v9236 = vpop.f32.mrf.mxu0
    %9237 = vdwg.mxu0
    %9240 = vrot.lane.b32.xlu0 %v8635, 80
    %v9241 = vpop.permute.xlu0 %9240
    %9242 = vrot.lane.b32.xlu0 %v8636, 80
    %v9243 = vpop.permute.xlu0 %9242
    %9244 = vrot.lane.b32.xlu0 %v8716, 80
    %v9245 = vpop.permute.xlu0 %9244
    %9246 = vrot.lane.b32.xlu0 %v8721, 80
    %v9247 = vpop.permute.xlu0 %9246
    %v9250 = vsel %vm173, %v9241, 0
    %v9252 = vsel %vm173, %v9243, 0
    %9254 = vmatprep.subr.mxu0 0.0
    %9255 = vmatpush1.msra.mxu0 0.0
    %9256 = vmatprep.subr.mxu0 0.0
    %9257 = vmatpush1.msra.mxu0 0.0
    %9258 = vmatprep.subr.mxu0 0.0
    %9259 = vmatpush1.msra.mxu0 0.0
    %9260 = vmatprep.subr.mxu0 0.0
    %9261 = vmatpush1.msra.mxu0 0.0
    %9262 = vmatprep.subr.mxu0 0.0
    %9263 = vmatpush1.msra.mxu0 0.0
    %9264 = vmatprep.subr.mxu0 0.0
    %9265 = vmatpush1.msra.mxu0 0.0
    %9266 = vmatprep.subr.mxu0 0.0
    %9267 = vmatpush1.msra.mxu0 0.0
    %9268 = vmatprep.subr.mxu0 0.0
    %9269 = vmatpush1.msra.mxu0 0.0
    %9270 = vmatprep.subr.mxu0 0.0
    %9271 = vmatpush1.msra.mxu0 0.0
    %9272 = vmatprep.subr.mxu0 0.0
    %9273 = vmatpush1.msra.mxu0 0.0
    %9274 = vmatprep.subr.mxu0 0.0
    %9275 = vmatpush1.msra.mxu0 0.0
    %9276 = vmatprep.subr.mxu0 0.0
    %9277 = vmatpush1.msra.mxu0 0.0
    %9278 = vmatprep.subr.mxu0 0.0
    %9279 = vmatpush1.msra.mxu0 0.0
    %9280 = vmatprep.subr.mxu0 0.0
    %9281 = vmatpush1.msra.mxu0 0.0
    %9282 = vmatprep.subr.mxu0 0.0
    %9283 = vmatpush1.msra.mxu0 %v9247
    %9284 = vmatprep.subr.mxu0 0.0
    %9285 = vmatpush1.msra.mxu0 %v9245
    %9286 = vmatprep.subr.mxu0 0.0
    %9287 = vmatpush2.msra.mxu0 0.0
    %9288 = vmatprep.subr.mxu0 0.0
    %9289 = vmatpush2.msra.mxu0 0.0
    %9290 = vmatprep.subr.mxu0 0.0
    %9291 = vmatpush2.msra.mxu0 0.0
    %9292 = vmatprep.subr.mxu0 0.0
    %9293 = vmatpush2.msra.mxu0 0.0
    %9294 = vmatprep.subr.mxu0 0.0
    %9295 = vmatpush2.msra.mxu0 0.0
    %9296 = vmatprep.subr.mxu0 0.0
    %9297 = vmatpush2.msra.mxu0 0.0
    %9298 = vmatprep.subr.mxu0 0.0
    %9299 = vmatpush2.msra.mxu0 0.0
    %9300 = vmatprep.subr.mxu0 0.0
    %9301 = vmatpush2.msra.mxu0 0.0
    %9302 = vmatprep.subr.mxu0 0.0
    %9303 = vmatpush2.msra.mxu0 0.0
    %9304 = vmatprep.subr.mxu0 0.0
    %9305 = vmatpush2.msra.mxu0 0.0
    %9306 = vmatprep.subr.mxu0 0.0
    %9307 = vmatpush2.msra.mxu0 0.0
    %9308 = vmatprep.subr.mxu0 0.0
    %9309 = vmatpush2.msra.mxu0 0.0
    %9310 = vmatprep.subr.mxu0 0.0
    %9311 = vmatpush2.msra.mxu0 0.0
    %9312 = vmatprep.subr.mxu0 0.0
    %9313 = vmatpush2.msra.mxu0 0.0
    %9314 = vmatprep.subr.mxu0 0.0
    %9315 = vmatpush2.msra.mxu0 0.0
    %9316 = vmatprep.subr.mxu0 0.0
    %9317 = vmatpush2.msra.mxu0 0.0
    %9318 = vmatprep.mubr.f32.mxu0 0.0
    %9319 = vmatmul.mubr.f32.gmra.mxu0 %v9250
    %v9320 = vpop.f32.mrf.mxu0
    %v9321 = vadd.f32 0.0, %v9320
    %v9322 = vpop.f32.mrf.mxu0
    %9323 = vmatprep.mubr.f32.mxu0 0.0
    %9324 = vmatmul.mubr.f32.gmra.mxu0 %v9252
    %v9325 = vpop.f32.mrf.mxu0
    %v9326 = vadd.f32 0.0, %v9325
    %v9327 = vpop.f32.mrf.mxu0
    %9328 = vdwg.mxu0
    %9329 = vrot.lane.b32.xlu0 %v8726, 80
    %v9330 = vpop.permute.xlu0 %9329
    %9331 = vrot.lane.b32.xlu0 %v8731, 80
    %v9332 = vpop.permute.xlu0 %9331
    %9335 = vmatprep.subr.mxu0 0.0
    %9336 = vmatpush1.msra.mxu0 0.0
    %9337 = vmatprep.subr.mxu0 0.0
    %9338 = vmatpush1.msra.mxu0 0.0
    %9339 = vmatprep.subr.mxu0 0.0
    %9340 = vmatpush1.msra.mxu0 0.0
    %9341 = vmatprep.subr.mxu0 0.0
    %9342 = vmatpush1.msra.mxu0 0.0
    %9343 = vmatprep.subr.mxu0 0.0
    %9344 = vmatpush1.msra.mxu0 0.0
    %9345 = vmatprep.subr.mxu0 0.0
    %9346 = vmatpush1.msra.mxu0 0.0
    %9347 = vmatprep.subr.mxu0 0.0
    %9348 = vmatpush1.msra.mxu0 0.0
    %9349 = vmatprep.subr.mxu0 0.0
    %9350 = vmatpush1.msra.mxu0 0.0
    %9351 = vmatprep.subr.mxu0 0.0
    %9352 = vmatpush1.msra.mxu0 0.0
    %9353 = vmatprep.subr.mxu0 0.0
    %9354 = vmatpush1.msra.mxu0 0.0
    %9355 = vmatprep.subr.mxu0 0.0
    %9356 = vmatpush1.msra.mxu0 0.0
    %9357 = vmatprep.subr.mxu0 0.0
    %9358 = vmatpush1.msra.mxu0 0.0
    %9359 = vmatprep.subr.mxu0 0.0
    %9360 = vmatpush1.msra.mxu0 0.0
    %9361 = vmatprep.subr.mxu0 0.0
    %9362 = vmatpush1.msra.mxu0 0.0
    %9363 = vmatprep.subr.mxu0 0.0
    %9364 = vmatpush1.msra.mxu0 %v9332
    %9365 = vmatprep.subr.mxu0 0.0
    %9366 = vmatpush1.msra.mxu0 %v9330
    %9367 = vmatprep.subr.mxu0 0.0
    %9368 = vmatpush2.msra.mxu0 0.0
    %9369 = vmatprep.subr.mxu0 0.0
    %9370 = vmatpush2.msra.mxu0 0.0
    %9371 = vmatprep.subr.mxu0 0.0
    %9372 = vmatpush2.msra.mxu0 0.0
    %9373 = vmatprep.subr.mxu0 0.0
    %9374 = vmatpush2.msra.mxu0 0.0
    %9375 = vmatprep.subr.mxu0 0.0
    %9376 = vmatpush2.msra.mxu0 0.0
    %9377 = vmatprep.subr.mxu0 0.0
    %9378 = vmatpush2.msra.mxu0 0.0
    %9379 = vmatprep.subr.mxu0 0.0
    %9380 = vmatpush2.msra.mxu0 0.0
    %9381 = vmatprep.subr.mxu0 0.0
    %9382 = vmatpush2.msra.mxu0 0.0
    %9383 = vmatprep.subr.mxu0 0.0
    %9384 = vmatpush2.msra.mxu0 0.0
    %9385 = vmatprep.subr.mxu0 0.0
    %9386 = vmatpush2.msra.mxu0 0.0
    %9387 = vmatprep.subr.mxu0 0.0
    %9388 = vmatpush2.msra.mxu0 0.0
    %9389 = vmatprep.subr.mxu0 0.0
    %9390 = vmatpush2.msra.mxu0 0.0
    %9391 = vmatprep.subr.mxu0 0.0
    %9392 = vmatpush2.msra.mxu0 0.0
    %9393 = vmatprep.subr.mxu0 0.0
    %9394 = vmatpush2.msra.mxu0 0.0
    %9395 = vmatprep.subr.mxu0 0.0
    %9396 = vmatpush2.msra.mxu0 0.0
    %9397 = vmatprep.subr.mxu0 0.0
    %9398 = vmatpush2.msra.mxu0 0.0
    %9399 = vmatprep.mubr.f32.mxu0 0.0
    %9400 = vmatmul.mubr.f32.gmra.mxu0 %v9250
    %v9401 = vpop.f32.mrf.mxu0
    %v9402 = vadd.f32 0.0, %v9401
    %v9403 = vpop.f32.mrf.mxu0
    %9404 = vmatprep.mubr.f32.mxu0 0.0
    %9405 = vmatmul.mubr.f32.gmra.mxu0 %v9252
    %v9406 = vpop.f32.mrf.mxu0
    %v9407 = vadd.f32 0.0, %v9406
    %v9408 = vpop.f32.mrf.mxu0
    %9409 = vdwg.mxu0
    %9414 = vrot.lane.b32.xlu0 %v8975, 16
    %v9415 = vpop.permute.xlu0 %9414
    %9416 = vrot.lane.b32.xlu0 %v8980, 16
    %v9417 = vpop.permute.xlu0 %9416
    %9418 = vrot.lane.b32.xlu0 %v9058, 16
    %v9419 = vpop.permute.xlu0 %9418
    %9420 = vrot.lane.b32.xlu0 %v9063, 16
    %v9421 = vpop.permute.xlu0 %9420
    %9430 = vrot.lane.b32.xlu0 %v9149, 32
    %v9431 = vpop.permute.xlu0 %9430
    %9432 = vrot.lane.b32.xlu0 %v9154, 32
    %v9433 = vpop.permute.xlu0 %9432
    %9434 = vrot.lane.b32.xlu0 %v9230, 32
    %v9435 = vpop.permute.xlu0 %9434
    %9436 = vrot.lane.b32.xlu0 %v9235, 32
    %v9437 = vpop.permute.xlu0 %9436
    %9446 = vrot.lane.b32.xlu0 %v9321, 48
    %v9447 = vpop.permute.xlu0 %9446
    %9448 = vrot.lane.b32.xlu0 %v9326, 48
    %v9449 = vpop.permute.xlu0 %9448
    %9450 = vrot.lane.b32.xlu0 %v9402, 48
    %v9451 = vpop.permute.xlu0 %9450
    %9452 = vrot.lane.b32.xlu0 %v9407, 48
    %v9453 = vpop.permute.xlu0 %9452
    %v9458 = vsel %vm173, %v8807, %v9415
    %v9459 = vsel %vm173, %v8812, %v9417
    %v9460 = vsel %vm173, %v8882, %v9419
    %v9461 = vsel %vm173, %v8887, %v9421
    %v9462 = vsel %vm902, %v9458, %v9431
    %v9463 = vsel %vm902, %v9459, %v9433
    %v9464 = vsel %vm902, %v9460, %v9435
    %v9465 = vsel %vm902, %v9461, %v9437
    %v9466 = vsel %vm907, %v9462, %v9447
    %v9467 = vsel %vm907, %v9463, %v9449
    %v9468 = vsel %vm907, %v9464, %v9451
    %v9469 = vsel %vm907, %v9465, %v9453
    %s9470 = scalar_lea.vmem [#allocation7], 1408
    %v9471 = vld [vmem:[%s9470] sm:$0xff]
    %v9472 = vld [vmem:[%s9470 + $0x8] sm:$0xff]
    %v9473 = vld [vmem:[%s9470 + $0x10] sm:$0xff]
    %v9474 = vld [vmem:[%s9470 + $0x18] sm:$0xff]
    %v9475 = vld [vmem:[%s9470 + $0x20] sm:$0xff]
    %v9476 = vld [vmem:[%s9470 + $0x28] sm:$0xff]
    %v9477 = vld [vmem:[%s9470 + $0x30] sm:$0xff]
    %v9478 = vld [vmem:[%s9470 + $0x38] sm:$0xff]
    %s9479 = scalar_lea.vmem [#allocation7], 1472
    %v9480 = vld [vmem:[%s9479] sm:$0xff]
    %v9481 = vld [vmem:[%s9479 + $0x8] sm:$0xff]
    %v9482 = vld [vmem:[%s9479 + $0x10] sm:$0xff]
    %v9483 = vld [vmem:[%s9479 + $0x18] sm:$0xff]
    %v9484 = vld [vmem:[%s9479 + $0x20] sm:$0xff]
    %v9485 = vld [vmem:[%s9479 + $0x28] sm:$0xff]
    %v9486 = vld [vmem:[%s9479 + $0x30] sm:$0xff]
    %v9487 = vld [vmem:[%s9479 + $0x38] sm:$0xff]
    %9488 = vmatprep.subr.mxu0 0.0
    %9489 = vmatpush1.msra.mxu0 0.0
    %9490 = vmatprep.subr.mxu0 0.0
    %9491 = vmatpush1.msra.mxu0 0.0
    %9492 = vmatprep.subr.mxu0 0.0
    %9493 = vmatpush1.msra.mxu0 0.0
    %9494 = vmatprep.subr.mxu0 0.0
    %9495 = vmatpush1.msra.mxu0 0.0
    %9496 = vmatprep.subr.mxu0 0.0
    %9497 = vmatpush1.msra.mxu0 0.0
    %9498 = vmatprep.subr.mxu0 0.0
    %9499 = vmatpush1.msra.mxu0 0.0
    %9500 = vmatprep.subr.mxu0 0.0
    %9501 = vmatpush1.msra.mxu0 0.0
    %9502 = vmatprep.subr.mxu0 0.0
    %9503 = vmatpush1.msra.mxu0 0.0
    %9504 = vmatprep.subr.mxu0 0.0
    %9505 = vmatpush1.msra.mxu0 %v9478
    %9506 = vmatprep.subr.mxu0 0.0
    %9507 = vmatpush1.msra.mxu0 %v9477
    %9508 = vmatprep.subr.mxu0 0.0
    %9509 = vmatpush1.msra.mxu0 %v9476
    %9510 = vmatprep.subr.mxu0 0.0
    %9511 = vmatpush1.msra.mxu0 %v9475
    %9512 = vmatprep.subr.mxu0 0.0
    %9513 = vmatpush1.msra.mxu0 %v9474
    %9514 = vmatprep.subr.mxu0 0.0
    %9515 = vmatpush1.msra.mxu0 %v9473
    %9516 = vmatprep.subr.mxu0 0.0
    %9517 = vmatpush1.msra.mxu0 %v9472
    %9518 = vmatprep.subr.mxu0 0.0
    %9519 = vmatpush1.msra.mxu0 %v9471
    %9520 = vmatprep.subr.mxu0 0.0
    %9521 = vmatpush2.msra.mxu0 0.0
    %9522 = vmatprep.subr.mxu0 0.0
    %9523 = vmatpush2.msra.mxu0 0.0
    %9524 = vmatprep.subr.mxu0 0.0
    %9525 = vmatpush2.msra.mxu0 0.0
    %9526 = vmatprep.subr.mxu0 0.0
    %9527 = vmatpush2.msra.mxu0 0.0
    %9528 = vmatprep.subr.mxu0 0.0
    %9529 = vmatpush2.msra.mxu0 0.0
    %9530 = vmatprep.subr.mxu0 0.0
    %9531 = vmatpush2.msra.mxu0 0.0
    %9532 = vmatprep.subr.mxu0 0.0
    %9533 = vmatpush2.msra.mxu0 0.0
    %9534 = vmatprep.subr.mxu0 0.0
    %9535 = vmatpush2.msra.mxu0 0.0
    %9536 = vmatprep.subr.mxu0 0.0
    %9537 = vmatpush2.msra.mxu0 0.0
    %9538 = vmatprep.subr.mxu0 0.0
    %9539 = vmatpush2.msra.mxu0 0.0
    %9540 = vmatprep.subr.mxu0 0.0
    %9541 = vmatpush2.msra.mxu0 0.0
    %9542 = vmatprep.subr.mxu0 0.0
    %9543 = vmatpush2.msra.mxu0 0.0
    %9544 = vmatprep.subr.mxu0 0.0
    %9545 = vmatpush2.msra.mxu0 0.0
    %9546 = vmatprep.subr.mxu0 0.0
    %9547 = vmatpush2.msra.mxu0 0.0
    %9548 = vmatprep.subr.mxu0 0.0
    %9549 = vmatpush2.msra.mxu0 0.0
    %9550 = vmatprep.subr.mxu0 0.0
    %9551 = vmatpush2.msra.mxu0 0.0
    %9552 = vmatprep.mubr.f32.mxu0 0.0
    %9553 = vmatmul.mubr.f32.gmra.mxu0 %v8638
    %v9554 = vpop.f32.mrf.mxu0
    %v9555 = vadd.f32 0.0, %v9554
    %v9556 = vpop.f32.mrf.mxu0
    %9557 = vmatprep.mubr.f32.mxu0 0.0
    %9558 = vmatmul.mubr.f32.gmra.mxu0 %v8641
    %v9559 = vpop.f32.mrf.mxu0
    %v9560 = vadd.f32 0.0, %v9559
    %v9561 = vpop.f32.mrf.mxu0
    %9562 = vmatprep.mubr.f32.mxu0 0.0
    %9563 = vmatmul.mubr.f32.gmra.mxu0 %v8644
    %v9564 = vpop.f32.mrf.mxu0
    %v9565 = vadd.f32 0.0, %v9564
    %v9566 = vpop.f32.mrf.mxu0
    %9567 = vmatprep.mubr.f32.mxu0 0.0
    %9568 = vmatmul.mubr.f32.gmra.mxu0 %v8647
    %v9569 = vpop.f32.mrf.mxu0
    %v9570 = vadd.f32 0.0, %v9569
    %v9571 = vpop.f32.mrf.mxu0
    %9572 = vdwg.mxu0
    %v9574 = vsel %vm173, %v9480, 0
    %v9577 = vsel %vm173, %v9481, 0
    %9579 = vmatprep.subr.mxu0 0.0
    %9580 = vmatpush1.msra.mxu0 0.0
    %9581 = vmatprep.subr.mxu0 0.0
    %9582 = vmatpush1.msra.mxu0 0.0
    %9583 = vmatprep.subr.mxu0 0.0
    %9584 = vmatpush1.msra.mxu0 0.0
    %9585 = vmatprep.subr.mxu0 0.0
    %9586 = vmatpush1.msra.mxu0 0.0
    %9587 = vmatprep.subr.mxu0 0.0
    %9588 = vmatpush1.msra.mxu0 0.0
    %9589 = vmatprep.subr.mxu0 0.0
    %9590 = vmatpush1.msra.mxu0 0.0
    %9591 = vmatprep.subr.mxu0 0.0
    %9592 = vmatpush1.msra.mxu0 0.0
    %9593 = vmatprep.subr.mxu0 0.0
    %9594 = vmatpush1.msra.mxu0 0.0
    %9595 = vmatprep.subr.mxu0 0.0
    %9596 = vmatpush1.msra.mxu0 0.0
    %9597 = vmatprep.subr.mxu0 0.0
    %9598 = vmatpush1.msra.mxu0 0.0
    %9599 = vmatprep.subr.mxu0 0.0
    %9600 = vmatpush1.msra.mxu0 0.0
    %9601 = vmatprep.subr.mxu0 0.0
    %9602 = vmatpush1.msra.mxu0 0.0
    %9603 = vmatprep.subr.mxu0 0.0
    %9604 = vmatpush1.msra.mxu0 0.0
    %9605 = vmatprep.subr.mxu0 0.0
    %9606 = vmatpush1.msra.mxu0 0.0
    %9607 = vmatprep.subr.mxu0 0.0
    %9608 = vmatpush1.msra.mxu0 %v9560
    %9609 = vmatprep.subr.mxu0 0.0
    %9610 = vmatpush1.msra.mxu0 %v9555
    %9611 = vmatprep.subr.mxu0 0.0
    %9612 = vmatpush2.msra.mxu0 0.0
    %9613 = vmatprep.subr.mxu0 0.0
    %9614 = vmatpush2.msra.mxu0 0.0
    %9615 = vmatprep.subr.mxu0 0.0
    %9616 = vmatpush2.msra.mxu0 0.0
    %9617 = vmatprep.subr.mxu0 0.0
    %9618 = vmatpush2.msra.mxu0 0.0
    %9619 = vmatprep.subr.mxu0 0.0
    %9620 = vmatpush2.msra.mxu0 0.0
    %9621 = vmatprep.subr.mxu0 0.0
    %9622 = vmatpush2.msra.mxu0 0.0
    %9623 = vmatprep.subr.mxu0 0.0
    %9624 = vmatpush2.msra.mxu0 0.0
    %9625 = vmatprep.subr.mxu0 0.0
    %9626 = vmatpush2.msra.mxu0 0.0
    %9627 = vmatprep.subr.mxu0 0.0
    %9628 = vmatpush2.msra.mxu0 0.0
    %9629 = vmatprep.subr.mxu0 0.0
    %9630 = vmatpush2.msra.mxu0 0.0
    %9631 = vmatprep.subr.mxu0 0.0
    %9632 = vmatpush2.msra.mxu0 0.0
    %9633 = vmatprep.subr.mxu0 0.0
    %9634 = vmatpush2.msra.mxu0 0.0
    %9635 = vmatprep.subr.mxu0 0.0
    %9636 = vmatpush2.msra.mxu0 0.0
    %9637 = vmatprep.subr.mxu0 0.0
    %9638 = vmatpush2.msra.mxu0 0.0
    %9639 = vmatprep.subr.mxu0 0.0
    %9640 = vmatpush2.msra.mxu0 0.0
    %9641 = vmatprep.subr.mxu0 0.0
    %9642 = vmatpush2.msra.mxu0 0.0
    %9643 = vmatprep.mubr.f32.mxu0 0.0
    %9644 = vmatmul.mubr.f32.gmra.mxu0 %v9574
    %v9645 = vpop.f32.mrf.mxu0
    %v9646 = vadd.f32 0.0, %v9645
    %v9647 = vpop.f32.mrf.mxu0
    %9648 = vmatprep.mubr.f32.mxu0 0.0
    %9649 = vmatmul.mubr.f32.gmra.mxu0 %v9577
    %v9650 = vpop.f32.mrf.mxu0
    %v9651 = vadd.f32 0.0, %v9650
    %v9652 = vpop.f32.mrf.mxu0
    %9653 = vdwg.mxu0
    %9654 = vmatprep.subr.mxu0 0.0
    %9655 = vmatpush1.msra.mxu0 0.0
    %9656 = vmatprep.subr.mxu0 0.0
    %9657 = vmatpush1.msra.mxu0 0.0
    %9658 = vmatprep.subr.mxu0 0.0
    %9659 = vmatpush1.msra.mxu0 0.0
    %9660 = vmatprep.subr.mxu0 0.0
    %9661 = vmatpush1.msra.mxu0 0.0
    %9662 = vmatprep.subr.mxu0 0.0
    %9663 = vmatpush1.msra.mxu0 0.0
    %9664 = vmatprep.subr.mxu0 0.0
    %9665 = vmatpush1.msra.mxu0 0.0
    %9666 = vmatprep.subr.mxu0 0.0
    %9667 = vmatpush1.msra.mxu0 0.0
    %9668 = vmatprep.subr.mxu0 0.0
    %9669 = vmatpush1.msra.mxu0 0.0
    %9670 = vmatprep.subr.mxu0 0.0
    %9671 = vmatpush1.msra.mxu0 0.0
    %9672 = vmatprep.subr.mxu0 0.0
    %9673 = vmatpush1.msra.mxu0 0.0
    %9674 = vmatprep.subr.mxu0 0.0
    %9675 = vmatpush1.msra.mxu0 0.0
    %9676 = vmatprep.subr.mxu0 0.0
    %9677 = vmatpush1.msra.mxu0 0.0
    %9678 = vmatprep.subr.mxu0 0.0
    %9679 = vmatpush1.msra.mxu0 0.0
    %9680 = vmatprep.subr.mxu0 0.0
    %9681 = vmatpush1.msra.mxu0 0.0
    %9682 = vmatprep.subr.mxu0 0.0
    %9683 = vmatpush1.msra.mxu0 %v9570
    %9684 = vmatprep.subr.mxu0 0.0
    %9685 = vmatpush1.msra.mxu0 %v9565
    %9686 = vmatprep.subr.mxu0 0.0
    %9687 = vmatpush2.msra.mxu0 0.0
    %9688 = vmatprep.subr.mxu0 0.0
    %9689 = vmatpush2.msra.mxu0 0.0
    %9690 = vmatprep.subr.mxu0 0.0
    %9691 = vmatpush2.msra.mxu0 0.0
    %9692 = vmatprep.subr.mxu0 0.0
    %9693 = vmatpush2.msra.mxu0 0.0
    %9694 = vmatprep.subr.mxu0 0.0
    %9695 = vmatpush2.msra.mxu0 0.0
    %9696 = vmatprep.subr.mxu0 0.0
    %9697 = vmatpush2.msra.mxu0 0.0
    %9698 = vmatprep.subr.mxu0 0.0
    %9699 = vmatpush2.msra.mxu0 0.0
    %9700 = vmatprep.subr.mxu0 0.0
    %9701 = vmatpush2.msra.mxu0 0.0
    %9702 = vmatprep.subr.mxu0 0.0
    %9703 = vmatpush2.msra.mxu0 0.0
    %9704 = vmatprep.subr.mxu0 0.0
    %9705 = vmatpush2.msra.mxu0 0.0
    %9706 = vmatprep.subr.mxu0 0.0
    %9707 = vmatpush2.msra.mxu0 0.0
    %9708 = vmatprep.subr.mxu0 0.0
    %9709 = vmatpush2.msra.mxu0 0.0
    %9710 = vmatprep.subr.mxu0 0.0
    %9711 = vmatpush2.msra.mxu0 0.0
    %9712 = vmatprep.subr.mxu0 0.0
    %9713 = vmatpush2.msra.mxu0 0.0
    %9714 = vmatprep.subr.mxu0 0.0
    %9715 = vmatpush2.msra.mxu0 0.0
    %9716 = vmatprep.subr.mxu0 0.0
    %9717 = vmatpush2.msra.mxu0 0.0
    %9718 = vmatprep.mubr.f32.mxu0 0.0
    %9719 = vmatmul.mubr.f32.gmra.mxu0 %v9574
    %v9720 = vpop.f32.mrf.mxu0
    %v9721 = vadd.f32 0.0, %v9720
    %v9722 = vpop.f32.mrf.mxu0
    %9723 = vmatprep.mubr.f32.mxu0 0.0
    %9724 = vmatmul.mubr.f32.gmra.mxu0 %v9577
    %v9725 = vpop.f32.mrf.mxu0
    %v9726 = vadd.f32 0.0, %v9725
    %v9727 = vpop.f32.mrf.mxu0
    %9728 = vdwg.mxu0
    %9731 = vrot.lane.b32.xlu0 %v9482, 112
    %v9732 = vpop.permute.xlu0 %9731
    %9733 = vrot.lane.b32.xlu0 %v9483, 112
    %v9734 = vpop.permute.xlu0 %9733
    %9737 = vrot.lane.b32.xlu0 %v9555, 112
    %v9738 = vpop.permute.xlu0 %9737
    %9739 = vrot.lane.b32.xlu0 %v9560, 112
    %v9740 = vpop.permute.xlu0 %9739
    %v9743 = vsel %vm173, %v9732, 0
    %v9745 = vsel %vm173, %v9734, 0
    %9747 = vmatprep.subr.mxu0 0.0
    %9748 = vmatpush1.msra.mxu0 0.0
    %9749 = vmatprep.subr.mxu0 0.0
    %9750 = vmatpush1.msra.mxu0 0.0
    %9751 = vmatprep.subr.mxu0 0.0
    %9752 = vmatpush1.msra.mxu0 0.0
    %9753 = vmatprep.subr.mxu0 0.0
    %9754 = vmatpush1.msra.mxu0 0.0
    %9755 = vmatprep.subr.mxu0 0.0
    %9756 = vmatpush1.msra.mxu0 0.0
    %9757 = vmatprep.subr.mxu0 0.0
    %9758 = vmatpush1.msra.mxu0 0.0
    %9759 = vmatprep.subr.mxu0 0.0
    %9760 = vmatpush1.msra.mxu0 0.0
    %9761 = vmatprep.subr.mxu0 0.0
    %9762 = vmatpush1.msra.mxu0 0.0
    %9763 = vmatprep.subr.mxu0 0.0
    %9764 = vmatpush1.msra.mxu0 0.0
    %9765 = vmatprep.subr.mxu0 0.0
    %9766 = vmatpush1.msra.mxu0 0.0
    %9767 = vmatprep.subr.mxu0 0.0
    %9768 = vmatpush1.msra.mxu0 0.0
    %9769 = vmatprep.subr.mxu0 0.0
    %9770 = vmatpush1.msra.mxu0 0.0
    %9771 = vmatprep.subr.mxu0 0.0
    %9772 = vmatpush1.msra.mxu0 0.0
    %9773 = vmatprep.subr.mxu0 0.0
    %9774 = vmatpush1.msra.mxu0 0.0
    %9775 = vmatprep.subr.mxu0 0.0
    %9776 = vmatpush1.msra.mxu0 %v9740
    %9777 = vmatprep.subr.mxu0 0.0
    %9778 = vmatpush1.msra.mxu0 %v9738
    %9779 = vmatprep.subr.mxu0 0.0
    %9780 = vmatpush2.msra.mxu0 0.0
    %9781 = vmatprep.subr.mxu0 0.0
    %9782 = vmatpush2.msra.mxu0 0.0
    %9783 = vmatprep.subr.mxu0 0.0
    %9784 = vmatpush2.msra.mxu0 0.0
    %9785 = vmatprep.subr.mxu0 0.0
    %9786 = vmatpush2.msra.mxu0 0.0
    %9787 = vmatprep.subr.mxu0 0.0
    %9788 = vmatpush2.msra.mxu0 0.0
    %9789 = vmatprep.subr.mxu0 0.0
    %9790 = vmatpush2.msra.mxu0 0.0
    %9791 = vmatprep.subr.mxu0 0.0
    %9792 = vmatpush2.msra.mxu0 0.0
    %9793 = vmatprep.subr.mxu0 0.0
    %9794 = vmatpush2.msra.mxu0 0.0
    %9795 = vmatprep.subr.mxu0 0.0
    %9796 = vmatpush2.msra.mxu0 0.0
    %9797 = vmatprep.subr.mxu0 0.0
    %9798 = vmatpush2.msra.mxu0 0.0
    %9799 = vmatprep.subr.mxu0 0.0
    %9800 = vmatpush2.msra.mxu0 0.0
    %9801 = vmatprep.subr.mxu0 0.0
    %9802 = vmatpush2.msra.mxu0 0.0
    %9803 = vmatprep.subr.mxu0 0.0
    %9804 = vmatpush2.msra.mxu0 0.0
    %9805 = vmatprep.subr.mxu0 0.0
    %9806 = vmatpush2.msra.mxu0 0.0
    %9807 = vmatprep.subr.mxu0 0.0
    %9808 = vmatpush2.msra.mxu0 0.0
    %9809 = vmatprep.subr.mxu0 0.0
    %9810 = vmatpush2.msra.mxu0 0.0
    %9811 = vmatprep.mubr.f32.mxu0 0.0
    %9812 = vmatmul.mubr.f32.gmra.mxu0 %v9743
    %v9813 = vpop.f32.mrf.mxu0
    %v9814 = vadd.f32 0.0, %v9813
    %v9815 = vpop.f32.mrf.mxu0
    %9816 = vmatprep.mubr.f32.mxu0 0.0
    %9817 = vmatmul.mubr.f32.gmra.mxu0 %v9745
    %v9818 = vpop.f32.mrf.mxu0
    %v9819 = vadd.f32 0.0, %v9818
    %v9820 = vpop.f32.mrf.mxu0
    %9821 = vdwg.mxu0
    %9824 = vrot.lane.b32.xlu0 %v9565, 112
    %v9825 = vpop.permute.xlu0 %9824
    %9826 = vrot.lane.b32.xlu0 %v9570, 112
    %v9827 = vpop.permute.xlu0 %9826
    %9830 = vmatprep.subr.mxu0 0.0
    %9831 = vmatpush1.msra.mxu0 0.0
    %9832 = vmatprep.subr.mxu0 0.0
    %9833 = vmatpush1.msra.mxu0 0.0
    %9834 = vmatprep.subr.mxu0 0.0
    %9835 = vmatpush1.msra.mxu0 0.0
    %9836 = vmatprep.subr.mxu0 0.0
    %9837 = vmatpush1.msra.mxu0 0.0
    %9838 = vmatprep.subr.mxu0 0.0
    %9839 = vmatpush1.msra.mxu0 0.0
    %9840 = vmatprep.subr.mxu0 0.0
    %9841 = vmatpush1.msra.mxu0 0.0
    %9842 = vmatprep.subr.mxu0 0.0
    %9843 = vmatpush1.msra.mxu0 0.0
    %9844 = vmatprep.subr.mxu0 0.0
    %9845 = vmatpush1.msra.mxu0 0.0
    %9846 = vmatprep.subr.mxu0 0.0
    %9847 = vmatpush1.msra.mxu0 0.0
    %9848 = vmatprep.subr.mxu0 0.0
    %9849 = vmatpush1.msra.mxu0 0.0
    %9850 = vmatprep.subr.mxu0 0.0
    %9851 = vmatpush1.msra.mxu0 0.0
    %9852 = vmatprep.subr.mxu0 0.0
    %9853 = vmatpush1.msra.mxu0 0.0
    %9854 = vmatprep.subr.mxu0 0.0
    %9855 = vmatpush1.msra.mxu0 0.0
    %9856 = vmatprep.subr.mxu0 0.0
    %9857 = vmatpush1.msra.mxu0 0.0
    %9858 = vmatprep.subr.mxu0 0.0
    %9859 = vmatpush1.msra.mxu0 %v9827
    %9860 = vmatprep.subr.mxu0 0.0
    %9861 = vmatpush1.msra.mxu0 %v9825
    %9862 = vmatprep.subr.mxu0 0.0
    %9863 = vmatpush2.msra.mxu0 0.0
    %9864 = vmatprep.subr.mxu0 0.0
    %9865 = vmatpush2.msra.mxu0 0.0
    %9866 = vmatprep.subr.mxu0 0.0
    %9867 = vmatpush2.msra.mxu0 0.0
    %9868 = vmatprep.subr.mxu0 0.0
    %9869 = vmatpush2.msra.mxu0 0.0
    %9870 = vmatprep.subr.mxu0 0.0
    %9871 = vmatpush2.msra.mxu0 0.0
    %9872 = vmatprep.subr.mxu0 0.0
    %9873 = vmatpush2.msra.mxu0 0.0
    %9874 = vmatprep.subr.mxu0 0.0
    %9875 = vmatpush2.msra.mxu0 0.0
    %9876 = vmatprep.subr.mxu0 0.0
    %9877 = vmatpush2.msra.mxu0 0.0
    %9878 = vmatprep.subr.mxu0 0.0
    %9879 = vmatpush2.msra.mxu0 0.0
    %9880 = vmatprep.subr.mxu0 0.0
    %9881 = vmatpush2.msra.mxu0 0.0
    %9882 = vmatprep.subr.mxu0 0.0
    %9883 = vmatpush2.msra.mxu0 0.0
    %9884 = vmatprep.subr.mxu0 0.0
    %9885 = vmatpush2.msra.mxu0 0.0
    %9886 = vmatprep.subr.mxu0 0.0
    %9887 = vmatpush2.msra.mxu0 0.0
    %9888 = vmatprep.subr.mxu0 0.0
    %9889 = vmatpush2.msra.mxu0 0.0
    %9890 = vmatprep.subr.mxu0 0.0
    %9891 = vmatpush2.msra.mxu0 0.0
    %9892 = vmatprep.subr.mxu0 0.0
    %9893 = vmatpush2.msra.mxu0 0.0
    %9894 = vmatprep.mubr.f32.mxu0 0.0
    %9895 = vmatmul.mubr.f32.gmra.mxu0 %v9743
    %v9896 = vpop.f32.mrf.mxu0
    %v9897 = vadd.f32 0.0, %v9896
    %v9898 = vpop.f32.mrf.mxu0
    %9899 = vmatprep.mubr.f32.mxu0 0.0
    %9900 = vmatmul.mubr.f32.gmra.mxu0 %v9745
    %v9901 = vpop.f32.mrf.mxu0
    %v9902 = vadd.f32 0.0, %v9901
    %v9903 = vpop.f32.mrf.mxu0
    %9904 = vdwg.mxu0
    %9907 = vrot.lane.b32.xlu0 %v9484, 96
    %v9908 = vpop.permute.xlu0 %9907
    %9909 = vrot.lane.b32.xlu0 %v9485, 96
    %v9910 = vpop.permute.xlu0 %9909
    %9911 = vrot.lane.b32.xlu0 %v9555, 96
    %v9912 = vpop.permute.xlu0 %9911
    %9913 = vrot.lane.b32.xlu0 %v9560, 96
    %v9914 = vpop.permute.xlu0 %9913
    %v9917 = vsel %vm173, %v9908, 0
    %v9919 = vsel %vm173, %v9910, 0
    %9921 = vmatprep.subr.mxu0 0.0
    %9922 = vmatpush1.msra.mxu0 0.0
    %9923 = vmatprep.subr.mxu0 0.0
    %9924 = vmatpush1.msra.mxu0 0.0
    %9925 = vmatprep.subr.mxu0 0.0
    %9926 = vmatpush1.msra.mxu0 0.0
    %9927 = vmatprep.subr.mxu0 0.0
    %9928 = vmatpush1.msra.mxu0 0.0
    %9929 = vmatprep.subr.mxu0 0.0
    %9930 = vmatpush1.msra.mxu0 0.0
    %9931 = vmatprep.subr.mxu0 0.0
    %9932 = vmatpush1.msra.mxu0 0.0
    %9933 = vmatprep.subr.mxu0 0.0
    %9934 = vmatpush1.msra.mxu0 0.0
    %9935 = vmatprep.subr.mxu0 0.0
    %9936 = vmatpush1.msra.mxu0 0.0
    %9937 = vmatprep.subr.mxu0 0.0
    %9938 = vmatpush1.msra.mxu0 0.0
    %9939 = vmatprep.subr.mxu0 0.0
    %9940 = vmatpush1.msra.mxu0 0.0
    %9941 = vmatprep.subr.mxu0 0.0
    %9942 = vmatpush1.msra.mxu0 0.0
    %9943 = vmatprep.subr.mxu0 0.0
    %9944 = vmatpush1.msra.mxu0 0.0
    %9945 = vmatprep.subr.mxu0 0.0
    %9946 = vmatpush1.msra.mxu0 0.0
    %9947 = vmatprep.subr.mxu0 0.0
    %9948 = vmatpush1.msra.mxu0 0.0
    %9949 = vmatprep.subr.mxu0 0.0
    %9950 = vmatpush1.msra.mxu0 %v9914
    %9951 = vmatprep.subr.mxu0 0.0
    %9952 = vmatpush1.msra.mxu0 %v9912
    %9953 = vmatprep.subr.mxu0 0.0
    %9954 = vmatpush2.msra.mxu0 0.0
    %9955 = vmatprep.subr.mxu0 0.0
    %9956 = vmatpush2.msra.mxu0 0.0
    %9957 = vmatprep.subr.mxu0 0.0
    %9958 = vmatpush2.msra.mxu0 0.0
    %9959 = vmatprep.subr.mxu0 0.0
    %9960 = vmatpush2.msra.mxu0 0.0
    %9961 = vmatprep.subr.mxu0 0.0
    %9962 = vmatpush2.msra.mxu0 0.0
    %9963 = vmatprep.subr.mxu0 0.0
    %9964 = vmatpush2.msra.mxu0 0.0
    %9965 = vmatprep.subr.mxu0 0.0
    %9966 = vmatpush2.msra.mxu0 0.0
    %9967 = vmatprep.subr.mxu0 0.0
    %9968 = vmatpush2.msra.mxu0 0.0
    %9969 = vmatprep.subr.mxu0 0.0
    %9970 = vmatpush2.msra.mxu0 0.0
    %9971 = vmatprep.subr.mxu0 0.0
    %9972 = vmatpush2.msra.mxu0 0.0
    %9973 = vmatprep.subr.mxu0 0.0
    %9974 = vmatpush2.msra.mxu0 0.0
    %9975 = vmatprep.subr.mxu0 0.0
    %9976 = vmatpush2.msra.mxu0 0.0
    %9977 = vmatprep.subr.mxu0 0.0
    %9978 = vmatpush2.msra.mxu0 0.0
    %9979 = vmatprep.subr.mxu0 0.0
    %9980 = vmatpush2.msra.mxu0 0.0
    %9981 = vmatprep.subr.mxu0 0.0
    %9982 = vmatpush2.msra.mxu0 0.0
    %9983 = vmatprep.subr.mxu0 0.0
    %9984 = vmatpush2.msra.mxu0 0.0
    %9985 = vmatprep.mubr.f32.mxu0 0.0
    %9986 = vmatmul.mubr.f32.gmra.mxu0 %v9917
    %v9987 = vpop.f32.mrf.mxu0
    %v9988 = vadd.f32 0.0, %v9987
    %v9989 = vpop.f32.mrf.mxu0
    %9990 = vmatprep.mubr.f32.mxu0 0.0
    %9991 = vmatmul.mubr.f32.gmra.mxu0 %v9919
    %v9992 = vpop.f32.mrf.mxu0
    %v9993 = vadd.f32 0.0, %v9992
    %v9994 = vpop.f32.mrf.mxu0
    %9995 = vdwg.mxu0
    %9996 = vrot.lane.b32.xlu0 %v9565, 96
    %v9997 = vpop.permute.xlu0 %9996
    %9998 = vrot.lane.b32.xlu0 %v9570, 96
    %v9999 = vpop.permute.xlu0 %9998
    %10002 = vmatprep.subr.mxu0 0.0
    %10003 = vmatpush1.msra.mxu0 0.0
    %10004 = vmatprep.subr.mxu0 0.0
    %10005 = vmatpush1.msra.mxu0 0.0
    %10006 = vmatprep.subr.mxu0 0.0
    %10007 = vmatpush1.msra.mxu0 0.0
    %10008 = vmatprep.subr.mxu0 0.0
    %10009 = vmatpush1.msra.mxu0 0.0
    %10010 = vmatprep.subr.mxu0 0.0
    %10011 = vmatpush1.msra.mxu0 0.0
    %10012 = vmatprep.subr.mxu0 0.0
    %10013 = vmatpush1.msra.mxu0 0.0
    %10014 = vmatprep.subr.mxu0 0.0
    %10015 = vmatpush1.msra.mxu0 0.0
    %10016 = vmatprep.subr.mxu0 0.0
    %10017 = vmatpush1.msra.mxu0 0.0
    %10018 = vmatprep.subr.mxu0 0.0
    %10019 = vmatpush1.msra.mxu0 0.0
    %10020 = vmatprep.subr.mxu0 0.0
    %10021 = vmatpush1.msra.mxu0 0.0
    %10022 = vmatprep.subr.mxu0 0.0
    %10023 = vmatpush1.msra.mxu0 0.0
    %10024 = vmatprep.subr.mxu0 0.0
    %10025 = vmatpush1.msra.mxu0 0.0
    %10026 = vmatprep.subr.mxu0 0.0
    %10027 = vmatpush1.msra.mxu0 0.0
    %10028 = vmatprep.subr.mxu0 0.0
    %10029 = vmatpush1.msra.mxu0 0.0
    %10030 = vmatprep.subr.mxu0 0.0
    %10031 = vmatpush1.msra.mxu0 %v9999
    %10032 = vmatprep.subr.mxu0 0.0
    %10033 = vmatpush1.msra.mxu0 %v9997
    %10034 = vmatprep.subr.mxu0 0.0
    %10035 = vmatpush2.msra.mxu0 0.0
    %10036 = vmatprep.subr.mxu0 0.0
    %10037 = vmatpush2.msra.mxu0 0.0
    %10038 = vmatprep.subr.mxu0 0.0
    %10039 = vmatpush2.msra.mxu0 0.0
    %10040 = vmatprep.subr.mxu0 0.0
    %10041 = vmatpush2.msra.mxu0 0.0
    %10042 = vmatprep.subr.mxu0 0.0
    %10043 = vmatpush2.msra.mxu0 0.0
    %10044 = vmatprep.subr.mxu0 0.0
    %10045 = vmatpush2.msra.mxu0 0.0
    %10046 = vmatprep.subr.mxu0 0.0
    %10047 = vmatpush2.msra.mxu0 0.0
    %10048 = vmatprep.subr.mxu0 0.0
    %10049 = vmatpush2.msra.mxu0 0.0
    %10050 = vmatprep.subr.mxu0 0.0
    %10051 = vmatpush2.msra.mxu0 0.0
    %10052 = vmatprep.subr.mxu0 0.0
    %10053 = vmatpush2.msra.mxu0 0.0
    %10054 = vmatprep.subr.mxu0 0.0
    %10055 = vmatpush2.msra.mxu0 0.0
    %10056 = vmatprep.subr.mxu0 0.0
    %10057 = vmatpush2.msra.mxu0 0.0
    %10058 = vmatprep.subr.mxu0 0.0
    %10059 = vmatpush2.msra.mxu0 0.0
    %10060 = vmatprep.subr.mxu0 0.0
    %10061 = vmatpush2.msra.mxu0 0.0
    %10062 = vmatprep.subr.mxu0 0.0
    %10063 = vmatpush2.msra.mxu0 0.0
    %10064 = vmatprep.subr.mxu0 0.0
    %10065 = vmatpush2.msra.mxu0 0.0
    %10066 = vmatprep.mubr.f32.mxu0 0.0
    %10067 = vmatmul.mubr.f32.gmra.mxu0 %v9917
    %v10068 = vpop.f32.mrf.mxu0
    %v10069 = vadd.f32 0.0, %v10068
    %v10070 = vpop.f32.mrf.mxu0
    %10071 = vmatprep.mubr.f32.mxu0 0.0
    %10072 = vmatmul.mubr.f32.gmra.mxu0 %v9919
    %v10073 = vpop.f32.mrf.mxu0
    %v10074 = vadd.f32 0.0, %v10073
    %v10075 = vpop.f32.mrf.mxu0
    %10076 = vdwg.mxu0
    %10079 = vrot.lane.b32.xlu0 %v9486, 80
    %v10080 = vpop.permute.xlu0 %10079
    %10081 = vrot.lane.b32.xlu0 %v9487, 80
    %v10082 = vpop.permute.xlu0 %10081
    %10083 = vrot.lane.b32.xlu0 %v9555, 80
    %v10084 = vpop.permute.xlu0 %10083
    %10085 = vrot.lane.b32.xlu0 %v9560, 80
    %v10086 = vpop.permute.xlu0 %10085
    %v10089 = vsel %vm173, %v10080, 0
    %v10091 = vsel %vm173, %v10082, 0
    %10093 = vmatprep.subr.mxu0 0.0
    %10094 = vmatpush1.msra.mxu0 0.0
    %10095 = vmatprep.subr.mxu0 0.0
    %10096 = vmatpush1.msra.mxu0 0.0
    %10097 = vmatprep.subr.mxu0 0.0
    %10098 = vmatpush1.msra.mxu0 0.0
    %10099 = vmatprep.subr.mxu0 0.0
    %10100 = vmatpush1.msra.mxu0 0.0
    %10101 = vmatprep.subr.mxu0 0.0
    %10102 = vmatpush1.msra.mxu0 0.0
    %10103 = vmatprep.subr.mxu0 0.0
    %10104 = vmatpush1.msra.mxu0 0.0
    %10105 = vmatprep.subr.mxu0 0.0
    %10106 = vmatpush1.msra.mxu0 0.0
    %10107 = vmatprep.subr.mxu0 0.0
    %10108 = vmatpush1.msra.mxu0 0.0
    %10109 = vmatprep.subr.mxu0 0.0
    %10110 = vmatpush1.msra.mxu0 0.0
    %10111 = vmatprep.subr.mxu0 0.0
    %10112 = vmatpush1.msra.mxu0 0.0
    %10113 = vmatprep.subr.mxu0 0.0
    %10114 = vmatpush1.msra.mxu0 0.0
    %10115 = vmatprep.subr.mxu0 0.0
    %10116 = vmatpush1.msra.mxu0 0.0
    %10117 = vmatprep.subr.mxu0 0.0
    %10118 = vmatpush1.msra.mxu0 0.0
    %10119 = vmatprep.subr.mxu0 0.0
    %10120 = vmatpush1.msra.mxu0 0.0
    %10121 = vmatprep.subr.mxu0 0.0
    %10122 = vmatpush1.msra.mxu0 %v10086
    %10123 = vmatprep.subr.mxu0 0.0
    %10124 = vmatpush1.msra.mxu0 %v10084
    %10125 = vmatprep.subr.mxu0 0.0
    %10126 = vmatpush2.msra.mxu0 0.0
    %10127 = vmatprep.subr.mxu0 0.0
    %10128 = vmatpush2.msra.mxu0 0.0
    %10129 = vmatprep.subr.mxu0 0.0
    %10130 = vmatpush2.msra.mxu0 0.0
    %10131 = vmatprep.subr.mxu0 0.0
    %10132 = vmatpush2.msra.mxu0 0.0
    %10133 = vmatprep.subr.mxu0 0.0
    %10134 = vmatpush2.msra.mxu0 0.0
    %10135 = vmatprep.subr.mxu0 0.0
    %10136 = vmatpush2.msra.mxu0 0.0
    %10137 = vmatprep.subr.mxu0 0.0
    %10138 = vmatpush2.msra.mxu0 0.0
    %10139 = vmatprep.subr.mxu0 0.0
    %10140 = vmatpush2.msra.mxu0 0.0
    %10141 = vmatprep.subr.mxu0 0.0
    %10142 = vmatpush2.msra.mxu0 0.0
    %10143 = vmatprep.subr.mxu0 0.0
    %10144 = vmatpush2.msra.mxu0 0.0
    %10145 = vmatprep.subr.mxu0 0.0
    %10146 = vmatpush2.msra.mxu0 0.0
    %10147 = vmatprep.subr.mxu0 0.0
    %10148 = vmatpush2.msra.mxu0 0.0
    %10149 = vmatprep.subr.mxu0 0.0
    %10150 = vmatpush2.msra.mxu0 0.0
    %10151 = vmatprep.subr.mxu0 0.0
    %10152 = vmatpush2.msra.mxu0 0.0
    %10153 = vmatprep.subr.mxu0 0.0
    %10154 = vmatpush2.msra.mxu0 0.0
    %10155 = vmatprep.subr.mxu0 0.0
    %10156 = vmatpush2.msra.mxu0 0.0
    %10157 = vmatprep.mubr.f32.mxu0 0.0
    %10158 = vmatmul.mubr.f32.gmra.mxu0 %v10089
    %v10159 = vpop.f32.mrf.mxu0
    %v10160 = vadd.f32 0.0, %v10159
    %v10161 = vpop.f32.mrf.mxu0
    %10162 = vmatprep.mubr.f32.mxu0 0.0
    %10163 = vmatmul.mubr.f32.gmra.mxu0 %v10091
    %v10164 = vpop.f32.mrf.mxu0
    %v10165 = vadd.f32 0.0, %v10164
    %v10166 = vpop.f32.mrf.mxu0
    %10167 = vdwg.mxu0
    %10168 = vrot.lane.b32.xlu0 %v9565, 80
    %v10169 = vpop.permute.xlu0 %10168
    %10170 = vrot.lane.b32.xlu0 %v9570, 80
    %v10171 = vpop.permute.xlu0 %10170
    %10174 = vmatprep.subr.mxu0 0.0
    %10175 = vmatpush1.msra.mxu0 0.0
    %10176 = vmatprep.subr.mxu0 0.0
    %10177 = vmatpush1.msra.mxu0 0.0
    %10178 = vmatprep.subr.mxu0 0.0
    %10179 = vmatpush1.msra.mxu0 0.0
    %10180 = vmatprep.subr.mxu0 0.0
    %10181 = vmatpush1.msra.mxu0 0.0
    %10182 = vmatprep.subr.mxu0 0.0
    %10183 = vmatpush1.msra.mxu0 0.0
    %10184 = vmatprep.subr.mxu0 0.0
    %10185 = vmatpush1.msra.mxu0 0.0
    %10186 = vmatprep.subr.mxu0 0.0
    %10187 = vmatpush1.msra.mxu0 0.0
    %10188 = vmatprep.subr.mxu0 0.0
    %10189 = vmatpush1.msra.mxu0 0.0
    %10190 = vmatprep.subr.mxu0 0.0
    %10191 = vmatpush1.msra.mxu0 0.0
    %10192 = vmatprep.subr.mxu0 0.0
    %10193 = vmatpush1.msra.mxu0 0.0
    %10194 = vmatprep.subr.mxu0 0.0
    %10195 = vmatpush1.msra.mxu0 0.0
    %10196 = vmatprep.subr.mxu0 0.0
    %10197 = vmatpush1.msra.mxu0 0.0
    %10198 = vmatprep.subr.mxu0 0.0
    %10199 = vmatpush1.msra.mxu0 0.0
    %10200 = vmatprep.subr.mxu0 0.0
    %10201 = vmatpush1.msra.mxu0 0.0
    %10202 = vmatprep.subr.mxu0 0.0
    %10203 = vmatpush1.msra.mxu0 %v10171
    %10204 = vmatprep.subr.mxu0 0.0
    %10205 = vmatpush1.msra.mxu0 %v10169
    %10206 = vmatprep.subr.mxu0 0.0
    %10207 = vmatpush2.msra.mxu0 0.0
    %10208 = vmatprep.subr.mxu0 0.0
    %10209 = vmatpush2.msra.mxu0 0.0
    %10210 = vmatprep.subr.mxu0 0.0
    %10211 = vmatpush2.msra.mxu0 0.0
    %10212 = vmatprep.subr.mxu0 0.0
    %10213 = vmatpush2.msra.mxu0 0.0
    %10214 = vmatprep.subr.mxu0 0.0
    %10215 = vmatpush2.msra.mxu0 0.0
    %10216 = vmatprep.subr.mxu0 0.0
    %10217 = vmatpush2.msra.mxu0 0.0
    %10218 = vmatprep.subr.mxu0 0.0
    %10219 = vmatpush2.msra.mxu0 0.0
    %10220 = vmatprep.subr.mxu0 0.0
    %10221 = vmatpush2.msra.mxu0 0.0
    %10222 = vmatprep.subr.mxu0 0.0
    %10223 = vmatpush2.msra.mxu0 0.0
    %10224 = vmatprep.subr.mxu0 0.0
    %10225 = vmatpush2.msra.mxu0 0.0
    %10226 = vmatprep.subr.mxu0 0.0
    %10227 = vmatpush2.msra.mxu0 0.0
    %10228 = vmatprep.subr.mxu0 0.0
    %10229 = vmatpush2.msra.mxu0 0.0
    %10230 = vmatprep.subr.mxu0 0.0
    %10231 = vmatpush2.msra.mxu0 0.0
    %10232 = vmatprep.subr.mxu0 0.0
    %10233 = vmatpush2.msra.mxu0 0.0
    %10234 = vmatprep.subr.mxu0 0.0
    %10235 = vmatpush2.msra.mxu0 0.0
    %10236 = vmatprep.subr.mxu0 0.0
    %10237 = vmatpush2.msra.mxu0 0.0
    %10238 = vmatprep.mubr.f32.mxu0 0.0
    %10239 = vmatmul.mubr.f32.gmra.mxu0 %v10089
    %v10240 = vpop.f32.mrf.mxu0
    %v10241 = vadd.f32 0.0, %v10240
    %v10242 = vpop.f32.mrf.mxu0
    %10243 = vmatprep.mubr.f32.mxu0 0.0
    %10244 = vmatmul.mubr.f32.gmra.mxu0 %v10091
    %v10245 = vpop.f32.mrf.mxu0
    %v10246 = vadd.f32 0.0, %v10245
    %v10247 = vpop.f32.mrf.mxu0
    %10248 = vdwg.mxu0
    %10253 = vrot.lane.b32.xlu0 %v9814, 16
    %v10254 = vpop.permute.xlu0 %10253
    %10255 = vrot.lane.b32.xlu0 %v9819, 16
    %v10256 = vpop.permute.xlu0 %10255
    %10257 = vrot.lane.b32.xlu0 %v9897, 16
    %v10258 = vpop.permute.xlu0 %10257
    %10259 = vrot.lane.b32.xlu0 %v9902, 16
    %v10260 = vpop.permute.xlu0 %10259
    %10269 = vrot.lane.b32.xlu0 %v9988, 32
    %v10270 = vpop.permute.xlu0 %10269
    %10271 = vrot.lane.b32.xlu0 %v9993, 32
    %v10272 = vpop.permute.xlu0 %10271
    %10273 = vrot.lane.b32.xlu0 %v10069, 32
    %v10274 = vpop.permute.xlu0 %10273
    %10275 = vrot.lane.b32.xlu0 %v10074, 32
    %v10276 = vpop.permute.xlu0 %10275
    %10285 = vrot.lane.b32.xlu0 %v10160, 48
    %v10286 = vpop.permute.xlu0 %10285
    %10287 = vrot.lane.b32.xlu0 %v10165, 48
    %v10288 = vpop.permute.xlu0 %10287
    %10289 = vrot.lane.b32.xlu0 %v10241, 48
    %v10290 = vpop.permute.xlu0 %10289
    %10291 = vrot.lane.b32.xlu0 %v10246, 48
    %v10292 = vpop.permute.xlu0 %10291
    %v10297 = vsel %vm173, %v9646, %v10254
    %v10298 = vsel %vm173, %v9651, %v10256
    %v10299 = vsel %vm173, %v9721, %v10258
    %v10300 = vsel %vm173, %v9726, %v10260
    %v10301 = vsel %vm902, %v10297, %v10270
    %v10302 = vsel %vm902, %v10298, %v10272
    %v10303 = vsel %vm902, %v10299, %v10274
    %v10304 = vsel %vm902, %v10300, %v10276
    %v10305 = vsel %vm907, %v10301, %v10286
    %v10306 = vsel %vm907, %v10302, %v10288
    %v10307 = vsel %vm907, %v10303, %v10290
    %v10308 = vsel %vm907, %v10304, %v10292
    %v10309 = vstv %s8616
    %v10310 = vmul.f32 %v10309, %v5204
    %v10311 = vmul.f32 %v10309, %v5205
    %v10312 = vmul.f32 %v10309, %v5206
    %v10313 = vmul.f32 %v10309, %v5207
    %v10314 = vstv %s8617
    %v10315 = vmul.f32 %v10314, %v9466
    %v10316 = vmul.f32 %v10314, %v9467
    %v10317 = vmul.f32 %v10314, %v9468
    %v10318 = vmul.f32 %v10314, %v9469
    %v10319 = vadd.f32 %v10310, %v10315
    %v10320 = vadd.f32 %v10311, %v10316
    %v10321 = vadd.f32 %v10312, %v10317
    %v10322 = vadd.f32 %v10313, %v10318
    %v10323 = vstv %s8618
    %v10324 = vmul.f32 %v10323, %v10305
    %v10325 = vmul.f32 %v10323, %v10306
    %v10326 = vmul.f32 %v10323, %v10307
    %v10327 = vmul.f32 %v10323, %v10308
    %v10328 = vadd.f32 %v10319, %v10324
    %v10329 = vadd.f32 %v10320, %v10325
    %v10330 = vadd.f32 %v10321, %v10326
    %v10331 = vadd.f32 %v10322, %v10327
    %v10332 = vadd.f32 %v6908, %v8612
    %v10333 = vadd.f32 %v6909, %v8613
    %v10334 = vadd.f32 %v6910, %v8614
    %v10335 = vadd.f32 %v6911, %v8615
    %v10336 = vadd.f32 %v10332, %v10328
    %v10337 = vadd.f32 %v10333, %v10329
    %v10338 = vadd.f32 %v10334, %v10330
    %v10339 = vadd.f32 %v10335, %v10331
    %v10340 = vmul.f32 %v10336, 0.33333334
    %v10341 = vmul.f32 %v10337, 0.33333334
    %v10342 = vmul.f32 %v10338, 0.33333334
    %v10343 = vmul.f32 %v10339, 0.33333334
    %10348 = vrot.lane.b32.xlu0 %v10340, 64
    %v10349 = vpop.permute.xlu0 %10348
    %10350 = vrot.lane.b32.xlu0 %v10341, 64
    %v10351 = vpop.permute.xlu0 %10350
    %10352 = vrot.lane.b32.xlu0 %v10342, 64
    %v10353 = vpop.permute.xlu0 %10352
    %10354 = vrot.lane.b32.xlu0 %v10343, 64
    %v10355 = vpop.permute.xlu0 %10354
    %v10360 = vsel %vm75, %v5204, %v10349
    %v10361 = vsel %vm75, %v5205, %v10351
    %v10362 = vsel %vm75, %v5206, %v10353
    %v10363 = vsel %vm75, %v5207, %v10355
    %10364 = vst [vmem:[#allocation9] sm:$0xff] %v10360
    %10365 = vst [vmem:[#allocation9 + $0x8] sm:$0xff] %v10361
    %10366 = vst [vmem:[#allocation9 + $0x10] sm:$0xff] %v10362
    %10367 = vst [vmem:[#allocation9 + $0x18] sm:$0xff] %v10363
    // Predicated region
    $region26: #{tpu_custom_call.1} parent=1 // pred_check
      _
    $region27: #{tpu_custom_call.1} parent=1 // pred_check_branch
      %10369 = sbr.rel (0) target = $region29
    $region28: #{tpu_custom_call.1} parent=1 // pred_region
      %s10371 = ssub.s32 512, 512
      %10372 = vsyncadd [#allocation4], %s10371
      %s10373 = sshll.u32 [#allocation9], 4
      %s10374 = int_to_ptr.vmem [resolvable:$true] %s10373
      %10379 = dma.vmem_to_hbm [thread:$0]  %s10374, 512, %s3, [#allocation4], 128, 128, 8
    $region29: #{tpu_custom_call.1} parent=1 // pred_fallthru
      _
    // Predicated region
    $region30: #{tpu_custom_call.1} parent=1 // pred_check
      _
    $region31: #{tpu_custom_call.1} parent=1 // pred_check_branch
      %10381 = sbr.rel (0) target = $region33
    $region32: #{tpu_custom_call.1} parent=1 // pred_region
      %10382 = dma.done [#allocation4], 512
    $region33: #{tpu_custom_call.1} parent=1 // pred_fallthru
      _
    %10383 = vsyncpa [#allocation3], 1
    %10384 = vsyncpa [#allocation8], 1
    %10385 = vsyncpa [#allocation4], 1
    %10386 = vsyncpa [#allocation5], 1

</llo_original>
